<compile_context>
chip_gen: v5e
topology: v5e:2x2
jax: 0.10.0
libtpu: 0.0.40
codegen_flags: <defaults>
</compile_context>

<pallas_src>
import functools

import numpy as np

import jax
import jax.numpy as jnp
from jax.experimental import pallas as pl
from jax.experimental.pallas import tpu as pltpu


def _vmem_spec():
    return pl.BlockSpec(memory_space=pltpu.MemorySpace.VMEM)


# ----------------------------------------------------------------------------
# Kernel 1: conv1 + ReLU + conv2 + ReLU for the whole batch in one shot.
#   p5   : (B*H*W, 32)   5x5 input patches (25 taps, zero-padded to 32) bf16
#   w1   : (32, 9*C1)    conv1 weight replicated per conv2 tap           bf16
#   b1   : (1, 9*C1)     conv1 bias tiled per tap                        f32
#   mask : (B*H*W, 9*C1) 1/0 zero-padding mask for conv2's taps          f32
#   w2   : (9*C1, C2)    conv2 weight in im2col (tap-major) order        bf16
#   b2   : (1, C2)                                                        f32
#   out  : (B*H*W, C2)                                                    bf16
# ----------------------------------------------------------------------------
def _conv_kernel(p5_ref, w1_ref, b1_ref, mask_ref, w2_ref, b2_ref, o_ref):
    # conv1 evaluated for all 9 conv2 taps at once: one MXU matmul (K=32,N=288).
    h1 = jnp.dot(p5_ref[...], w1_ref[...], preferred_element_type=jnp.float32)
    h1 = jnp.maximum(h1 + b1_ref[...], 0.0) * mask_ref[...]
    # conv2: one MXU matmul over the concatenated K = 9*C1 = 288 contraction.
    h2 = jnp.dot(h1.astype(jnp.bfloat16), w2_ref[...],
                 preferred_element_type=jnp.float32)
    o_ref[...] = jnp.maximum(h2 + b2_ref[...], 0.0).astype(o_ref.dtype)


def conv_stage(p5, w1big, b1tile, mask, w2cat, b2row):
    bhw = p5.shape[0]
    c2 = w2cat.shape[1]
    return pl.pallas_call(
        _conv_kernel,
        out_shape=jax.ShapeDtypeStruct((bhw, c2), jnp.bfloat16),
        in_specs=[_vmem_spec() for _ in range(6)],
        out_specs=_vmem_spec(),
    )(p5, w1big, b1tile, mask, w2cat, b2row)


# ----------------------------------------------------------------------------
# Kernel 2: fc1 + ReLU + fc2 + ReLU + fc3, all weights VMEM-resident.
#   x : (B, feat) bf16, w1:(feat,512) w2:(512,1024) w3:(1024,128pad) bf16,
#   biases (1, Ni) f32 -> out (B, 128pad) f32.
# ----------------------------------------------------------------------------
def _fc_kernel(x_ref, w1_ref, b1_ref, w2_ref, b2_ref, w3_ref, b3_ref, o_ref):
    h = jnp.dot(x_ref[...], w1_ref[...], preferred_element_type=jnp.float32)
    h = jnp.maximum(h + b1_ref[...], 0.0).astype(jnp.bfloat16)
    h = jnp.dot(h, w2_ref[...], preferred_element_type=jnp.float32)
    h = jnp.maximum(h + b2_ref[...], 0.0).astype(jnp.bfloat16)
    o_ref[...] = (jnp.dot(h, w3_ref[...], preferred_element_type=jnp.float32)
                  + b3_ref[...])


def fc_stage(x, w1, b1, w2, b2, w3, b3):
    m = x.shape[0]
    n3 = w3.shape[1]
    return pl.pallas_call(
        _fc_kernel,
        out_shape=jax.ShapeDtypeStruct((m, n3), jnp.float32),
        in_specs=[_vmem_spec() for _ in range(7)],
        out_specs=_vmem_spec(),
        compiler_params=pltpu.CompilerParams(vmem_limit_bytes=24 * 1024 * 1024),
    )(x, w1, b1, w2, b2, w3, b3)


# ----------------------------------------------------------------------------
# One-time weight preparation (hoisted out of the forward pass entirely).
# ----------------------------------------------------------------------------
def prepare_params(params, input_shape):
    _, H, W = input_shape
    HW = H * W
    c1w = np.asarray(params["conv1_w"], np.float32)   # (C1, 1, 3, 3)
    c1b = np.asarray(params["conv1_b"], np.float32)
    c2w = np.asarray(params["conv2_w"], np.float32)   # (C2, C1, 3, 3)
    c2b = np.asarray(params["conv2_b"], np.float32)
    C1, C2 = c1w.shape[0], c2w.shape[0]

    # conv1 weight replicated into conv2's 9 tap column-groups, indexed by the
    # 25 positions of a 5x5 input patch (zero-padded to K=32 for alignment).
    K5 = 32
    w1big = np.zeros((K5, 9 * C1), np.float32)
    b1tile = np.zeros((1, 9 * C1), np.float32)
    mask = np.zeros((HW, 9 * C1), np.float32)
    for dy in (-1, 0, 1):
        for dx in (-1, 0, 1):
            t = (dy + 1) * 3 + (dx + 1)
            b1tile[0, t * C1:(t + 1) * C1] = c1b
            for ky in range(3):
                for kx in range(3):
                    q = (dy + ky + 1) * 5 + (dx + kx + 1)   # 5x5 patch index
                    w1big[q, t * C1:(t + 1) * C1] = c1w[:, 0, ky, kx]
            for p in range(HW):
                y, x = p // W, p % W
                if 0 <= y + dy < H and 0 <= x + dx < W:
                    mask[p, t * C1:(t + 1) * C1] = 1.0

    # conv2 weight in im2col (tap-major, then C1) order.
    w2cat = c2w.transpose(2, 3, 1, 0).reshape(9 * C1, C2)

    # fc weights: fc1 columns permuted from torch's (c,h,w) flatten order to the
    # kernel's (h,w,c) order; fc2/fc3 transposed; fc3 padded to 128 output lanes.
    fc1w = np.asarray(params["fc1_w"], np.float32)    # (N1, C2*H*W)
    N1 = fc1w.shape[0]
    w_fc1 = fc1w.reshape(N1, C2, HW).transpose(2, 1, 0).reshape(HW * C2, N1)
    fc2w = np.asarray(params["fc2_w"], np.float32)    # (N2, N1)
    N2 = fc2w.shape[0]
    fc3w = np.asarray(params["fc3_w"], np.float32)    # (A, N2)
    A = fc3w.shape[0]
    n_pad = max(128, ((A + 127) // 128) * 128)
    w_fc3 = np.zeros((N2, n_pad), np.float32)
    w_fc3[:, :A] = fc3w.T
    b_fc3 = np.zeros((1, n_pad), np.float32)
    b_fc3[0, :A] = np.asarray(params["fc3_b"], np.float32)

    bf16 = jnp.bfloat16
    return {
        "w1big": jnp.asarray(w1big, bf16),
        "b1tile": jnp.asarray(b1tile, jnp.float32),
        "mask": jnp.asarray(mask, jnp.float32),
        "w2cat": jnp.asarray(w2cat, bf16),
        "b2": jnp.asarray(c2b.reshape(1, C2), jnp.float32),
        "w_fc1": jnp.asarray(w_fc1, bf16),
        "b_fc1": jnp.asarray(np.asarray(params["fc1_b"], np.float32)
                             .reshape(1, N1), jnp.float32),
        "w_fc2": jnp.asarray(fc2w.T, bf16),
        "b_fc2": jnp.asarray(np.asarray(params["fc2_b"], np.float32)
                             .reshape(1, N2), jnp.float32),
        "w_fc3": jnp.asarray(w_fc3, bf16),
        "b_fc3": jnp.asarray(b_fc3, jnp.float32),
    }


# ----------------------------------------------------------------------------
# Forward pass.
# ----------------------------------------------------------------------------
@functools.partial(jax.jit, static_argnames=("num_actions",))
def dqn_forward(prep, x_nchw, *, num_actions):
    B, _, H, W = x_nchw.shape
    HW = H * W

    # 5x5 im2col (pad=2) of the single-channel input; tap index q = a*5 + b.
    xp = jnp.pad(x_nchw[:, 0], ((0, 0), (2, 2), (2, 2)))
    cols = [xp[:, a:a + H, b:b + W] for a in range(5) for b in range(5)]
    p5 = jnp.stack(cols, axis=-1).reshape(B * HW, 25)
    p5 = jnp.pad(p5, ((0, 0), (0, 7))).astype(jnp.bfloat16)       # (B*HW, 32)

    mask = jnp.tile(prep["mask"], (B, 1))                          # (B*HW, 288)

    conv_out = conv_stage(p5, prep["w1big"], prep["b1tile"], mask,
                          prep["w2cat"], prep["b2"])               # (B*HW, C2)
    c2 = conv_out.shape[1]
    xf = conv_out.reshape(B, HW * c2)                              # (h,w,c) flat

    out = fc_stage(xf, prep["w_fc1"], prep["b_fc1"],
                   prep["w_fc2"], prep["b_fc2"],
                   prep["w_fc3"], prep["b_fc3"])                   # (B, n_pad)
    return out[:, :num_actions]


# ----------------------------------------------------------------------------
# Pure-JAX float32 reference and parameter init.
# ----------------------------------------------------------------------------
def dqn_reference(params, x):
    dn = ("NCHW", "OIHW", "NCHW")
    hp = jax.lax.Precision.HIGHEST
    h = jax.lax.conv_general_dilated(x, params["conv1_w"], (1, 1), "SAME",
                                     dimension_numbers=dn, precision=hp)
    h = jnp.maximum(h + params["conv1_b"][None, :, None, None], 0.0)
    h = jax.lax.conv_general_dilated(h, params["conv2_w"], (1, 1), "SAME",
                                     dimension_numbers=dn, precision=hp)
    h = jnp.maximum(h + params["conv2_b"][None, :, None, None], 0.0)
    h = h.reshape(h.shape[0], -1)
    h = jnp.maximum(jnp.dot(h, params["fc1_w"].T, precision=hp)
                    + params["fc1_b"], 0.0)
    h = jnp.maximum(jnp.dot(h, params["fc2_w"].T, precision=hp)
                    + params["fc2_b"], 0.0)
    return jnp.dot(h, params["fc3_w"].T, precision=hp) + params["fc3_b"]


def init_params(key, input_shape, num_actions):
    _, H, W = input_shape
    feat = 64 * H * W
    ks = jax.random.split(key, 10)

    def w(k, shape, fan_in):
        return jax.random.normal(k, shape, jnp.float32) * np.sqrt(2.0 / fan_in)

    def b(k, n, fan_in):
        bound = 1.0 / np.sqrt(fan_in)
        return jax.random.uniform(k, (n,), jnp.float32, -bound, bound)

    return {
        "conv1_w": w(ks[0], (32, 1, 3, 3), 9),
        "conv1_b": b(ks[1], 32, 9),
        "conv2_w": w(ks[2], (64, 32, 3, 3), 32 * 9),
        "conv2_b": b(ks[3], 64, 32 * 9),
        "fc1_w": w(ks[4], (512, feat), feat),          # torch Linear: [out, in]
        "fc1_b": b(ks[5], 512, feat),
        "fc2_w": w(ks[6], (1024, 512), 512),
        "fc2_b": b(ks[7], 1024, 512),
        "fc3_w": w(ks[8], (num_actions, 1024), 1024),
        "fc3_b": b(ks[9], num_actions, 1024),
    }


if __name__ == "__main__":
    input_shape = (1, 8, 8)   # (C, H, W): Conv2d(1, ...) and fc sizing
    num_actions = 4
    batch = 4

    key = jax.random.PRNGKey(0)
    kx, kp = jax.random.split(key)
    params = init_params(kp, input_shape, num_actions)
    x = jax.random.normal(kx, (batch,) + input_shape, jnp.float32)  # NCHW

    prep = prepare_params(params, input_shape)   # one-time weight prep (hoisted)

    out = jax.block_until_ready(dqn_forward(prep, x, num_actions=num_actions))
    ref = jax.block_until_ready(dqn_reference(params, x))

    assert out.shape == (batch, num_actions), out.shape
    max_err = float(jnp.max(jnp.abs(out - ref)))
    # bf16 weights/activations with f32 accumulation -> allow ~1-2% drift.
    assert jnp.allclose(out, ref, rtol=5e-2, atol=5e-2), max_err

    print("KERNEL_OK")
</pallas_src>

<mosaic_0001>
module attributes {stable_mosaic.version = 11 : i64} {
  func.func @_conv_kernel(%arg0: memref<256x32xbf16, #tpu.memory_space<vmem>>, %arg1: memref<32x288xbf16, #tpu.memory_space<vmem>>, %arg2: memref<1x288xf32, #tpu.memory_space<vmem>>, %arg3: memref<256x288xf32, #tpu.memory_space<vmem>>, %arg4: memref<288x64xbf16, #tpu.memory_space<vmem>>, %arg5: memref<1x64xf32, #tpu.memory_space<vmem>>, %arg6: memref<256x64xbf16, #tpu.memory_space<vmem>>) attributes {dimension_semantics = [], scalar_prefetch = 0 : i64, scratch_operands = 0 : i64, tpu.core_type = #tpu.core_type<tc>} {
    %c0 = arith.constant 0 : index
    %c0_0 = arith.constant 0 : index
    %0 = vector.load %arg0[%c0, %c0_0] : memref<256x32xbf16, #tpu.memory_space<vmem>>, vector<256x32xbf16>
    %c0_1 = arith.constant 0 : index
    %c0_2 = arith.constant 0 : index
    %1 = vector.load %arg1[%c0_1, %c0_2] : memref<32x288xbf16, #tpu.memory_space<vmem>>, vector<32x288xbf16>
    %cst = arith.constant dense<0.000000e+00> : vector<256x288xf32>
    %2 = tpu.matmul %0, %1, %cst {dimension_numbers = #tpu.dot_dimension_numbers<[1], [0], [0], [1], [0, 0, 1, 1], [], []>} : vector<256x32xbf16>, vector<32x288xbf16>, vector<256x288xf32> -> vector<256x288xf32>
    %c0_3 = arith.constant 0 : index
    %c0_4 = arith.constant 0 : index
    %3 = vector.load %arg2[%c0_3, %c0_4] : memref<1x288xf32, #tpu.memory_space<vmem>>, vector<1x288xf32>
    %4 = vector.broadcast %3 : vector<1x288xf32> to vector<256x288xf32>
    %5 = arith.addf %2, %4 : vector<256x288xf32>
    %cst_5 = arith.constant 0.000000e+00 : f32
    %6 = vector.broadcast %cst_5 : f32 to vector<256x288xf32>
    %7 = arith.maximumf %5, %6 : vector<256x288xf32>
    %c0_6 = arith.constant 0 : index
    %c0_7 = arith.constant 0 : index
    %8 = vector.load %arg3[%c0_6, %c0_7] : memref<256x288xf32, #tpu.memory_space<vmem>>, vector<256x288xf32>
    %9 = arith.mulf %7, %8 : vector<256x288xf32>
    %10 = arith.truncf %9 : vector<256x288xf32> to vector<256x288xbf16>
    %c0_8 = arith.constant 0 : index
    %c0_9 = arith.constant 0 : index
    %11 = vector.load %arg4[%c0_8, %c0_9] : memref<288x64xbf16, #tpu.memory_space<vmem>>, vector<288x64xbf16>
    %cst_10 = arith.constant dense<0.000000e+00> : vector<256x64xf32>
    %12 = tpu.matmul %10, %11, %cst_10 {dimension_numbers = #tpu.dot_dimension_numbers<[1], [0], [0], [1], [0, 0, 1, 1], [], []>} : vector<256x288xbf16>, vector<288x64xbf16>, vector<256x64xf32> -> vector<256x64xf32>
    %c0_11 = arith.constant 0 : index
    %c0_12 = arith.constant 0 : index
    %13 = vector.load %arg5[%c0_11, %c0_12] : memref<1x64xf32, #tpu.memory_space<vmem>>, vector<1x64xf32>
    %14 = vector.broadcast %13 : vector<1x64xf32> to vector<256x64xf32>
    %15 = arith.addf %12, %14 : vector<256x64xf32>
    %cst_13 = arith.constant 0.000000e+00 : f32
    %16 = vector.broadcast %cst_13 : f32 to vector<256x64xf32>
    %17 = arith.maximumf %15, %16 : vector<256x64xf32>
    %18 = arith.truncf %17 : vector<256x64xf32> to vector<256x64xbf16>
    %c0_14 = arith.constant 0 : index
    %c0_15 = arith.constant 0 : index
    %19 = vector.load %arg6[%c0_14, %c0_15] : memref<256x64xbf16, #tpu.memory_space<vmem>>, vector<256x64xbf16>
    tpu.vector_store %arg6[%c0_14, %c0_15], %18 {strides = array<i32>} : memref<256x64xbf16, #tpu.memory_space<vmem>>, vector<256x64xbf16>,
    return
  }
}

module attributes {stable_mosaic.version = 11 : i64} {
  func.func @_fc_kernel(%arg0: memref<4x4096xbf16, #tpu.memory_space<vmem>>, %arg1: memref<4096x512xbf16, #tpu.memory_space<vmem>>, %arg2: memref<1x512xf32, #tpu.memory_space<vmem>>, %arg3: memref<512x1024xbf16, #tpu.memory_space<vmem>>, %arg4: memref<1x1024xf32, #tpu.memory_space<vmem>>, %arg5: memref<1024x128xbf16, #tpu.memory_space<vmem>>, %arg6: memref<1x128xf32, #tpu.memory_space<vmem>>, %arg7: memref<4x128xf32, #tpu.memory_space<vmem>>) attributes {dimension_semantics = [], scalar_prefetch = 0 : i64, scratch_operands = 0 : i64, tpu.core_type = #tpu.core_type<tc>} {
    %c0 = arith.constant 0 : index
    %c0_0 = arith.constant 0 : index
    %0 = vector.load %arg0[%c0, %c0_0] : memref<4x4096xbf16, #tpu.memory_space<vmem>>, vector<4x4096xbf16>
    %c0_1 = arith.constant 0 : index
    %c0_2 = arith.constant 0 : index
    %1 = vector.load %arg1[%c0_1, %c0_2] : memref<4096x512xbf16, #tpu.memory_space<vmem>>, vector<4096x512xbf16>
    %cst = arith.constant dense<0.000000e+00> : vector<4x512xf32>
    %2 = tpu.matmul %0, %1, %cst {dimension_numbers = #tpu.dot_dimension_numbers<[1], [0], [0], [1], [0, 0, 1, 1], [], []>} : vector<4x4096xbf16>, vector<4096x512xbf16>, vector<4x512xf32> -> vector<4x512xf32>
    %c0_3 = arith.constant 0 : index
    %c0_4 = arith.constant 0 : index
    %3 = vector.load %arg2[%c0_3, %c0_4] : memref<1x512xf32, #tpu.memory_space<vmem>>, vector<1x512xf32>
    %4 = vector.broadcast %3 : vector<1x512xf32> to vector<4x512xf32>
    %5 = arith.addf %2, %4 : vector<4x512xf32>
    %cst_5 = arith.constant 0.000000e+00 : f32
    %6 = vector.broadcast %cst_5 : f32 to vector<4x512xf32>
    %7 = arith.maximumf %5, %6 : vector<4x512xf32>
    %8 = arith.truncf %7 : vector<4x512xf32> to vector<4x512xbf16>
    %c0_6 = arith.constant 0 : index
    %c0_7 = arith.constant 0 : index
    %9 = vector.load %arg3[%c0_6, %c0_7] : memref<512x1024xbf16, #tpu.memory_space<vmem>>, vector<512x1024xbf16>
    %cst_8 = arith.constant dense<0.000000e+00> : vector<4x1024xf32>
    %10 = tpu.matmul %8, %9, %cst_8 {dimension_numbers = #tpu.dot_dimension_numbers<[1], [0], [0], [1], [0, 0, 1, 1], [], []>} : vector<4x512xbf16>, vector<512x1024xbf16>, vector<4x1024xf32> -> vector<4x1024xf32>
    %c0_9 = arith.constant 0 : index
    %c0_10 = arith.constant 0 : index
    %11 = vector.load %arg4[%c0_9, %c0_10] : memref<1x1024xf32, #tpu.memory_space<vmem>>, vector<1x1024xf32>
    %12 = vector.broadcast %11 : vector<1x1024xf32> to vector<4x1024xf32>
    %13 = arith.addf %10, %12 : vector<4x1024xf32>
    %cst_11 = arith.constant 0.000000e+00 : f32
    %14 = vector.broadcast %cst_11 : f32 to vector<4x1024xf32>
    %15 = arith.maximumf %13, %14 : vector<4x1024xf32>
    %16 = arith.truncf %15 : vector<4x1024xf32> to vector<4x1024xbf16>
    %c0_12 = arith.constant 0 : index
    %c0_13 = arith.constant 0 : index
    %17 = vector.load %arg5[%c0_12, %c0_13] : memref<1024x128xbf16, #tpu.memory_space<vmem>>, vector<1024x128xbf16>
    %cst_14 = arith.constant dense<0.000000e+00> : vector<4x128xf32>
    %18 = tpu.matmul %16, %17, %cst_14 {dimension_numbers = #tpu.dot_dimension_numbers<[1], [0], [0], [1], [0, 0, 1, 1], [], []>} : vector<4x1024xbf16>, vector<1024x128xbf16>, vector<4x128xf32> -> vector<4x128xf32>
    %c0_15 = arith.constant 0 : index
    %c0_16 = arith.constant 0 : index
    %19 = vector.load %arg6[%c0_15, %c0_16] : memref<1x128xf32, #tpu.memory_space<vmem>>, vector<1x128xf32>
    %20 = vector.broadcast %19 : vector<1x128xf32> to vector<4x128xf32>
    %21 = arith.addf %18, %20 : vector<4x128xf32>
    %c0_17 = arith.constant 0 : index
    %c0_18 = arith.constant 0 : index
    %22 = vector.load %arg7[%c0_17, %c0_18] : memref<4x128xf32, #tpu.memory_space<vmem>>, vector<4x128xf32>
    tpu.vector_store %arg7[%c0_17, %c0_18], %21 {strides = array<i32>} : memref<4x128xf32, #tpu.memory_space<vmem>>, vector<4x128xf32>,
    return
  }
}

</mosaic_0001>

<llo_original>
// kernel: dqn_forward.2
$region0: #{dqn_forward.2}
  #allocation0 [shape = 'u32[]', space=smem, size = 0x4, offset = 0x4, fixed_abs, tag = 'smem constant byte address 0x4 - core index']
  #allocation1 [shape = 'u32[72,128]{1,0:T(1,128)}', space=vmem, size = 0x9000, scoped, tag = 'internal scratch']
  %s0 = inlined_call_operand.vmem [shape: bf16[256,32], index: 0, kind: input, shape index: {}]
  %s1 = inlined_call_operand.hbm [shape: bf16[32,288], index: 1, kind: input, shape index: {}]
  %s2 = inlined_call_operand.hbm [shape: f32[1,288], index: 2, kind: input, shape index: {}]
  %s3 = inlined_call_operand.vmem [shape: f32[256,288], index: 3, kind: input, shape index: {}]
  %s4 = inlined_call_operand.vmem [shape: bf16[288,64], index: 4, kind: input, shape index: {}]
  %s5 = inlined_call_operand.hbm [shape: f32[1,64], index: 5, kind: input, shape index: {}]
  %s6 = inlined_call_operand.vmem [shape: bf16[256,64], index: 6, kind: output, shape index: {}]
  %s7 = sld [smem:[#allocation0]]
  $region46: #{dqn_forward.2} parent=0
    _
  %s9 = ssub.s32 1, %s7
  %s10 = scalar_select 0, %s9, %s7
  $region1: #{dqn_forward.2} parent=0
    #allocation2 [shape = 'u8[24576]{0}', space=vmem, size = 0x6000, scoped, tag = 'input window, operand 1, single buffered']
    #allocation3 [shape = 's32[1]{0}', space=sflag, size = 0x4, scoped, tag = 'scoped memory for dqn_forward.2']
    #allocation4 [shape = 'u8[1536]{0}', space=vmem, size = 0x800, scoped, tag = 'input window, operand 2, single buffered']
    #allocation5 [shape = 's32[1]{0}', space=sflag, size = 0x4, scoped, tag = 'scoped memory for dqn_forward.2']
    #allocation6 [shape = 'u8[512]{0}', space=vmem, size = 0x400, scoped, tag = 'input window, operand 5, single buffered']
    %11 = vsyncpa [#allocation3], 0
    %12 = vsyncpa [#allocation5], 0
    // Predicated region
    $region2: #{dqn_forward.2} parent=1 // pred_check
      _
    $region3: #{dqn_forward.2} parent=1 // pred_check_branch
      %14 = sbr.rel (0) target = $region5
    $region4: #{dqn_forward.2} parent=1 // pred_region
      _
    $region5: #{dqn_forward.2} parent=1 // pred_fallthru
      _
    // Predicated region
    $region6: #{dqn_forward.2} parent=1 // pred_check
      _
    $region7: #{dqn_forward.2} parent=1 // pred_check_branch
      %16 = sbr.rel (0) target = $region9
    $region8: #{dqn_forward.2} parent=1 // pred_region
      %18 = vsyncadd [#allocation3], 0
      %s19 = sshll.u32 %s1, 4
      %s20 = int_to_ptr.hbm [resolvable:$true] %s19
      %s21 = sshll.u32 [#allocation2], 4
      %s22 = int_to_ptr.vmem [resolvable:$true] %s21
      %27 = dma.hbm_to_vmem [thread:$0]  %s20, 768, %s22, [#allocation3], 192, 192, 12
    $region9: #{dqn_forward.2} parent=1 // pred_fallthru
      _
    // Predicated region
    $region10: #{dqn_forward.2} parent=1 // pred_check
      _
    $region11: #{dqn_forward.2} parent=1 // pred_check_branch
      %29 = sbr.rel (0) target = $region13
    $region12: #{dqn_forward.2} parent=1 // pred_region
      %31 = vsyncadd [#allocation5], 0
      %s33 = sshll.u32 %s2, 4
      %s34 = int_to_ptr.hbm [resolvable:$true] %s33
      %s35 = sshll.u32 [#allocation4], 4
      %s36 = int_to_ptr.vmem [resolvable:$true] %s35
      %38 = dma.hbm_to_vmem [thread:$0]  %s34, 48, %s36, [#allocation5]
    $region13: #{dqn_forward.2} parent=1 // pred_fallthru
      _
    // Predicated region
    $region14: #{dqn_forward.2} parent=1 // pred_check
      _
    $region15: #{dqn_forward.2} parent=1 // pred_check_branch
      %40 = sbr.rel (0) target = $region17
    $region16: #{dqn_forward.2} parent=1 // pred_region
      _
    $region17: #{dqn_forward.2} parent=1 // pred_fallthru
      _
    // Predicated region
    $region18: #{dqn_forward.2} parent=1 // pred_check
      _
    $region19: #{dqn_forward.2} parent=1 // pred_check_branch
      %42 = sbr.rel (0) target = $region21
    $region20: #{dqn_forward.2} parent=1 // pred_region
      _
    $region21: #{dqn_forward.2} parent=1 // pred_fallthru
      _
    // Predicated region
    $region22: #{dqn_forward.2} parent=1 // pred_check
      _
    $region23: #{dqn_forward.2} parent=1 // pred_check_branch
      %44 = sbr.rel (0) target = $region25
    $region24: #{dqn_forward.2} parent=1 // pred_region
      %46 = vsyncadd [#allocation5], 0
      %s48 = sshll.u32 %s5, 4
      %s49 = int_to_ptr.hbm [resolvable:$true] %s48
      %s50 = sshll.u32 [#allocation6], 4
      %s51 = int_to_ptr.vmem [resolvable:$true] %s50
      %53 = dma.hbm_to_vmem [thread:$0]  %s49, 16, %s51, [#allocation5]
    $region25: #{dqn_forward.2} parent=1 // pred_fallthru
      _
    // Predicated region
    $region26: #{dqn_forward.2} parent=1 // pred_check
      _
    $region27: #{dqn_forward.2} parent=1 // pred_check_branch
      %55 = sbr.rel (0) target = $region29
    $region28: #{dqn_forward.2} parent=1 // pred_region
      %57 = dma.done [#allocation3], 768
    $region29: #{dqn_forward.2} parent=1 // pred_fallthru
      _
    // Predicated region
    $region30: #{dqn_forward.2} parent=1 // pred_check
      _
    $region31: #{dqn_forward.2} parent=1 // pred_check_branch
      %59 = sbr.rel (0) target = $region33
    $region32: #{dqn_forward.2} parent=1 // pred_region
      %61 = dma.done [#allocation5], 48
    $region33: #{dqn_forward.2} parent=1 // pred_fallthru
      _
    // Predicated region
    $region34: #{dqn_forward.2} parent=1 // pred_check
      _
    $region35: #{dqn_forward.2} parent=1 // pred_check_branch
      %63 = sbr.rel (0) target = $region37
    $region36: #{dqn_forward.2} parent=1 // pred_region
      %65 = dma.done [#allocation5], 16
    $region37: #{dqn_forward.2} parent=1 // pred_fallthru
      _
    %v67 = vld [vmem:[%s0] sm:$0xf]
    %v68 = vld [vmem:[%s0 + $0x4] sm:$0xf]
    %v69 = vld [vmem:[%s0 + $0x8] sm:$0xf]
    %v70 = vld [vmem:[%s0 + $0xc] sm:$0xf]
    %v71 = vld [vmem:[%s0 + $0x10] sm:$0xf]
    %v72 = vld [vmem:[%s0 + $0x14] sm:$0xf]
    %v73 = vld [vmem:[%s0 + $0x18] sm:$0xf]
    %v74 = vld [vmem:[%s0 + $0x1c] sm:$0xf]
    %v75 = vld [vmem:[%s0 + $0x20] sm:$0xf]
    %v76 = vld [vmem:[%s0 + $0x24] sm:$0xf]
    %v77 = vld [vmem:[%s0 + $0x28] sm:$0xf]
    %v78 = vld [vmem:[%s0 + $0x2c] sm:$0xf]
    %v79 = vld [vmem:[%s0 + $0x30] sm:$0xf]
    %v80 = vld [vmem:[%s0 + $0x34] sm:$0xf]
    %v81 = vld [vmem:[%s0 + $0x38] sm:$0xf]
    %v82 = vld [vmem:[%s0 + $0x3c] sm:$0xf]
    %v83 = vld [vmem:[%s0 + $0x40] sm:$0xf]
    %v84 = vld [vmem:[%s0 + $0x44] sm:$0xf]
    %v85 = vld [vmem:[%s0 + $0x48] sm:$0xf]
    %v86 = vld [vmem:[%s0 + $0x4c] sm:$0xf]
    %v87 = vld [vmem:[%s0 + $0x50] sm:$0xf]
    %v88 = vld [vmem:[%s0 + $0x54] sm:$0xf]
    %v89 = vld [vmem:[%s0 + $0x58] sm:$0xf]
    %v90 = vld [vmem:[%s0 + $0x5c] sm:$0xf]
    %v91 = vld [vmem:[%s0 + $0x60] sm:$0xf]
    %v92 = vld [vmem:[%s0 + $0x64] sm:$0xf]
    %v93 = vld [vmem:[%s0 + $0x68] sm:$0xf]
    %v94 = vld [vmem:[%s0 + $0x6c] sm:$0xf]
    %v95 = vld [vmem:[%s0 + $0x70] sm:$0xf]
    %v96 = vld [vmem:[%s0 + $0x74] sm:$0xf]
    %v97 = vld [vmem:[%s0 + $0x78] sm:$0xf]
    %v98 = vld [vmem:[%s0 + $0x7c] sm:$0xf]
    %v99 = vld [vmem:[#allocation2] sm:$0xff]
    %v100 = vld [vmem:[#allocation2 + $0x8] sm:$0xf]
    %v101 = vld [vmem:[#allocation2 + $0xc] sm:$0xff]
    %v102 = vld [vmem:[#allocation2 + $0x14] sm:$0xf]
    %v103 = vld [vmem:[#allocation2 + $0x18] sm:$0xff]
    %v104 = vld [vmem:[#allocation2 + $0x20] sm:$0xf]
    %v105 = vld [vmem:[#allocation2 + $0x24] sm:$0xff]
    %v106 = vld [vmem:[#allocation2 + $0x2c] sm:$0xf]
    %v107 = vld [vmem:[#allocation4] sm:$0x7]
    %v109 = vperm.slane %v107, 0
    %v110 = vperm.slane %v107, 1
    %v111 = vperm.slane %v107, 2
    %v147 = vunpack.c.l.b16 %v67
    %v148 = vunpack.c.l.b16 %v68
    %v149 = vunpack.c.l.b16 %v69
    %v150 = vunpack.c.l.b16 %v70
    %v151 = vunpack.c.l.b16 %v71
    %v152 = vunpack.c.l.b16 %v72
    %v153 = vunpack.c.l.b16 %v73
    %v154 = vunpack.c.l.b16 %v74
    %v155 = vunpack.c.l.b16 %v75
    %v156 = vunpack.c.l.b16 %v76
    %v157 = vunpack.c.l.b16 %v77
    %v158 = vunpack.c.l.b16 %v78
    %v159 = vunpack.c.l.b16 %v79
    %v160 = vunpack.c.l.b16 %v80
    %v161 = vunpack.c.l.b16 %v81
    %v162 = vunpack.c.l.b16 %v82
    %v163 = vunpack.c.l.b16 %v83
    %v164 = vunpack.c.l.b16 %v84
    %v165 = vunpack.c.l.b16 %v85
    %v166 = vunpack.c.l.b16 %v86
    %v167 = vunpack.c.l.b16 %v87
    %v168 = vunpack.c.l.b16 %v88
    %v169 = vunpack.c.l.b16 %v89
    %v170 = vunpack.c.l.b16 %v90
    %v171 = vunpack.c.l.b16 %v91
    %v172 = vunpack.c.l.b16 %v92
    %v173 = vunpack.c.l.b16 %v93
    %v174 = vunpack.c.l.b16 %v94
    %v175 = vunpack.c.l.b16 %v95
    %v176 = vunpack.c.l.b16 %v96
    %v177 = vunpack.c.l.b16 %v97
    %v178 = vunpack.c.l.b16 %v98
    %v179 = vpack.c.b16 %v148, %v147
    %v180 = vpack.c.b16 %v150, %v149
    %v181 = vpack.c.b16 %v152, %v151
    %v182 = vpack.c.b16 %v154, %v153
    %v183 = vpack.c.b16 %v156, %v155
    %v184 = vpack.c.b16 %v158, %v157
    %v185 = vpack.c.b16 %v160, %v159
    %v186 = vpack.c.b16 %v162, %v161
    %v187 = vpack.c.b16 %v164, %v163
    %v188 = vpack.c.b16 %v166, %v165
    %v189 = vpack.c.b16 %v168, %v167
    %v190 = vpack.c.b16 %v170, %v169
    %v191 = vpack.c.b16 %v172, %v171
    %v192 = vpack.c.b16 %v174, %v173
    %v193 = vpack.c.b16 %v176, %v175
    %v194 = vpack.c.b16 %v178, %v177
    %v203 = vunpack.c.l.b16 %v99
    %v204 = vunpack.c.h.b16 %v99
    %v205 = vunpack.c.l.b16 %v100
    %v206 = vunpack.c.l.b16 %v101
    %v207 = vunpack.c.h.b16 %v101
    %v208 = vunpack.c.l.b16 %v102
    %v209 = vunpack.c.l.b16 %v103
    %v210 = vunpack.c.h.b16 %v103
    %v211 = vunpack.c.l.b16 %v104
    %v212 = vunpack.c.l.b16 %v105
    %v213 = vunpack.c.h.b16 %v105
    %v214 = vunpack.c.l.b16 %v106
    %v215 = vpack.c.b16 %v206, %v203
    %v216 = vpack.c.b16 %v207, %v204
    %v217 = vpack.c.b16 %v208, %v205
    %v218 = vpack.c.b16 %v212, %v209
    %v219 = vpack.c.b16 %v213, %v210
    %v220 = vpack.c.b16 %v214, %v211
    %vm227 = vcmask 261120
    %v229 = vsel %vm227, %v179, 0
    %v232 = vsel %vm227, %v180, 0
    %v235 = vsel %vm227, %v181, 0
    %v238 = vsel %vm227, %v182, 0
    %v241 = vsel %vm227, %v183, 0
    %v244 = vsel %vm227, %v184, 0
    %v247 = vsel %vm227, %v185, 0
    %v250 = vsel %vm227, %v186, 0
    %v253 = vsel %vm227, %v187, 0
    %v256 = vsel %vm227, %v188, 0
    %v259 = vsel %vm227, %v189, 0
    %v262 = vsel %vm227, %v190, 0
    %v265 = vsel %vm227, %v191, 0
    %v268 = vsel %vm227, %v192, 0
    %v271 = vsel %vm227, %v193, 0
    %v274 = vsel %vm227, %v194, 0
    %276 = vmatpush.bf16.msra.mxu0 0
    %277 = vmatpush.bf16.msra.mxu0 0
    %278 = vmatpush.bf16.msra.mxu0 0
    %279 = vmatpush.bf16.msra.mxu0 0
    %280 = vmatpush.bf16.msra.mxu0 0
    %281 = vmatpush.bf16.msra.mxu0 0
    %282 = vmatpush.bf16.msra.mxu0 %v218
    %283 = vmatpush.bf16.msra.mxu0 %v215
    %284 = vmatmul.bf16.gmra.mxu0 %v229
    %v285 = vpop.f32.mrf.mxu0
    %v286 = vadd.f32 %v109, %v285
    %v287 = vpop.f32.mrf.mxu0
    %v288 = vadd.f32 %v109, %v287
    %289 = vmatmul.bf16.gmra.mxu0 %v232
    %v290 = vpop.f32.mrf.mxu0
    %v291 = vadd.f32 %v109, %v290
    %v292 = vpop.f32.mrf.mxu0
    %v293 = vadd.f32 %v109, %v292
    %294 = vmatmul.bf16.gmra.mxu0 %v235
    %v295 = vpop.f32.mrf.mxu0
    %v296 = vadd.f32 %v109, %v295
    %v297 = vpop.f32.mrf.mxu0
    %v298 = vadd.f32 %v109, %v297
    %299 = vmatmul.bf16.gmra.mxu0 %v238
    %v300 = vpop.f32.mrf.mxu0
    %v301 = vadd.f32 %v109, %v300
    %v302 = vpop.f32.mrf.mxu0
    %v303 = vadd.f32 %v109, %v302
    %304 = vmatmul.bf16.gmra.mxu0 %v241
    %v305 = vpop.f32.mrf.mxu0
    %v306 = vadd.f32 %v109, %v305
    %v307 = vpop.f32.mrf.mxu0
    %v308 = vadd.f32 %v109, %v307
    %309 = vmatmul.bf16.gmra.mxu0 %v244
    %v310 = vpop.f32.mrf.mxu0
    %v311 = vadd.f32 %v109, %v310
    %v312 = vpop.f32.mrf.mxu0
    %v313 = vadd.f32 %v109, %v312
    %314 = vmatmul.bf16.gmra.mxu0 %v247
    %v315 = vpop.f32.mrf.mxu0
    %v316 = vadd.f32 %v109, %v315
    %v317 = vpop.f32.mrf.mxu0
    %v318 = vadd.f32 %v109, %v317
    %319 = vmatmul.bf16.gmra.mxu0 %v250
    %v320 = vpop.f32.mrf.mxu0
    %v321 = vadd.f32 %v109, %v320
    %v322 = vpop.f32.mrf.mxu0
    %v323 = vadd.f32 %v109, %v322
    %324 = vmatmul.bf16.gmra.mxu0 %v253
    %v325 = vpop.f32.mrf.mxu0
    %v326 = vadd.f32 %v109, %v325
    %v327 = vpop.f32.mrf.mxu0
    %v328 = vadd.f32 %v109, %v327
    %329 = vmatmul.bf16.gmra.mxu0 %v256
    %v330 = vpop.f32.mrf.mxu0
    %v331 = vadd.f32 %v109, %v330
    %v332 = vpop.f32.mrf.mxu0
    %v333 = vadd.f32 %v109, %v332
    %334 = vmatmul.bf16.gmra.mxu0 %v259
    %v335 = vpop.f32.mrf.mxu0
    %v336 = vadd.f32 %v109, %v335
    %v337 = vpop.f32.mrf.mxu0
    %v338 = vadd.f32 %v109, %v337
    %339 = vmatmul.bf16.gmra.mxu0 %v262
    %v340 = vpop.f32.mrf.mxu0
    %v341 = vadd.f32 %v109, %v340
    %v342 = vpop.f32.mrf.mxu0
    %v343 = vadd.f32 %v109, %v342
    %344 = vmatmul.bf16.gmra.mxu0 %v265
    %v345 = vpop.f32.mrf.mxu0
    %v346 = vadd.f32 %v109, %v345
    %v347 = vpop.f32.mrf.mxu0
    %v348 = vadd.f32 %v109, %v347
    %349 = vmatmul.bf16.gmra.mxu0 %v268
    %v350 = vpop.f32.mrf.mxu0
    %v351 = vadd.f32 %v109, %v350
    %v352 = vpop.f32.mrf.mxu0
    %v353 = vadd.f32 %v109, %v352
    %354 = vmatmul.bf16.gmra.mxu0 %v271
    %v355 = vpop.f32.mrf.mxu0
    %v356 = vadd.f32 %v109, %v355
    %v357 = vpop.f32.mrf.mxu0
    %v358 = vadd.f32 %v109, %v357
    %359 = vmatmul.bf16.gmra.mxu0 %v274
    %v360 = vpop.f32.mrf.mxu0
    %v361 = vadd.f32 %v109, %v360
    %v362 = vpop.f32.mrf.mxu0
    %v363 = vadd.f32 %v109, %v362
    %364 = vdwg.mxu0
    %365 = vmatpush.bf16.msra.mxu0 0
    %366 = vmatpush.bf16.msra.mxu0 0
    %367 = vmatpush.bf16.msra.mxu0 0
    %368 = vmatpush.bf16.msra.mxu0 0
    %369 = vmatpush.bf16.msra.mxu0 0
    %370 = vmatpush.bf16.msra.mxu0 0
    %371 = vmatpush.bf16.msra.mxu0 %v219
    %372 = vmatpush.bf16.msra.mxu0 %v216
    %373 = vmatmul.bf16.gmra.mxu0 %v229
    %v374 = vpop.f32.mrf.mxu0
    %v375 = vadd.f32 %v110, %v374
    %v376 = vpop.f32.mrf.mxu0
    %v377 = vadd.f32 %v110, %v376
    %378 = vmatmul.bf16.gmra.mxu0 %v232
    %v379 = vpop.f32.mrf.mxu0
    %v380 = vadd.f32 %v110, %v379
    %v381 = vpop.f32.mrf.mxu0
    %v382 = vadd.f32 %v110, %v381
    %383 = vmatmul.bf16.gmra.mxu0 %v235
    %v384 = vpop.f32.mrf.mxu0
    %v385 = vadd.f32 %v110, %v384
    %v386 = vpop.f32.mrf.mxu0
    %v387 = vadd.f32 %v110, %v386
    %388 = vmatmul.bf16.gmra.mxu0 %v238
    %v389 = vpop.f32.mrf.mxu0
    %v390 = vadd.f32 %v110, %v389
    %v391 = vpop.f32.mrf.mxu0
    %v392 = vadd.f32 %v110, %v391
    %393 = vmatmul.bf16.gmra.mxu0 %v241
    %v394 = vpop.f32.mrf.mxu0
    %v395 = vadd.f32 %v110, %v394
    %v396 = vpop.f32.mrf.mxu0
    %v397 = vadd.f32 %v110, %v396
    %398 = vmatmul.bf16.gmra.mxu0 %v244
    %v399 = vpop.f32.mrf.mxu0
    %v400 = vadd.f32 %v110, %v399
    %v401 = vpop.f32.mrf.mxu0
    %v402 = vadd.f32 %v110, %v401
    %403 = vmatmul.bf16.gmra.mxu0 %v247
    %v404 = vpop.f32.mrf.mxu0
    %v405 = vadd.f32 %v110, %v404
    %v406 = vpop.f32.mrf.mxu0
    %v407 = vadd.f32 %v110, %v406
    %408 = vmatmul.bf16.gmra.mxu0 %v250
    %v409 = vpop.f32.mrf.mxu0
    %v410 = vadd.f32 %v110, %v409
    %v411 = vpop.f32.mrf.mxu0
    %v412 = vadd.f32 %v110, %v411
    %413 = vmatmul.bf16.gmra.mxu0 %v253
    %v414 = vpop.f32.mrf.mxu0
    %v415 = vadd.f32 %v110, %v414
    %v416 = vpop.f32.mrf.mxu0
    %v417 = vadd.f32 %v110, %v416
    %418 = vmatmul.bf16.gmra.mxu0 %v256
    %v419 = vpop.f32.mrf.mxu0
    %v420 = vadd.f32 %v110, %v419
    %v421 = vpop.f32.mrf.mxu0
    %v422 = vadd.f32 %v110, %v421
    %423 = vmatmul.bf16.gmra.mxu0 %v259
    %v424 = vpop.f32.mrf.mxu0
    %v425 = vadd.f32 %v110, %v424
    %v426 = vpop.f32.mrf.mxu0
    %v427 = vadd.f32 %v110, %v426
    %428 = vmatmul.bf16.gmra.mxu0 %v262
    %v429 = vpop.f32.mrf.mxu0
    %v430 = vadd.f32 %v110, %v429
    %v431 = vpop.f32.mrf.mxu0
    %v432 = vadd.f32 %v110, %v431
    %433 = vmatmul.bf16.gmra.mxu0 %v265
    %v434 = vpop.f32.mrf.mxu0
    %v435 = vadd.f32 %v110, %v434
    %v436 = vpop.f32.mrf.mxu0
    %v437 = vadd.f32 %v110, %v436
    %438 = vmatmul.bf16.gmra.mxu0 %v268
    %v439 = vpop.f32.mrf.mxu0
    %v440 = vadd.f32 %v110, %v439
    %v441 = vpop.f32.mrf.mxu0
    %v442 = vadd.f32 %v110, %v441
    %443 = vmatmul.bf16.gmra.mxu0 %v271
    %v444 = vpop.f32.mrf.mxu0
    %v445 = vadd.f32 %v110, %v444
    %v446 = vpop.f32.mrf.mxu0
    %v447 = vadd.f32 %v110, %v446
    %448 = vmatmul.bf16.gmra.mxu0 %v274
    %v449 = vpop.f32.mrf.mxu0
    %v450 = vadd.f32 %v110, %v449
    %v451 = vpop.f32.mrf.mxu0
    %v452 = vadd.f32 %v110, %v451
    %453 = vdwg.mxu0
    %454 = vmatpush.bf16.msra.mxu0 0
    %455 = vmatpush.bf16.msra.mxu0 0
    %456 = vmatpush.bf16.msra.mxu0 0
    %457 = vmatpush.bf16.msra.mxu0 0
    %458 = vmatpush.bf16.msra.mxu0 0
    %459 = vmatpush.bf16.msra.mxu0 0
    %460 = vmatpush.bf16.msra.mxu0 %v220
    %461 = vmatpush.bf16.msra.mxu0 %v217
    %462 = vmatmul.bf16.gmra.mxu0 %v229
    %v463 = vpop.f32.mrf.mxu0
    %v464 = vadd.f32 %v111, %v463
    %v465 = vpop.f32.mrf.mxu0
    %v466 = vadd.f32 %v111, %v465
    %467 = vmatmul.bf16.gmra.mxu0 %v232
    %v468 = vpop.f32.mrf.mxu0
    %v469 = vadd.f32 %v111, %v468
    %v470 = vpop.f32.mrf.mxu0
    %v471 = vadd.f32 %v111, %v470
    %472 = vmatmul.bf16.gmra.mxu0 %v235
    %v473 = vpop.f32.mrf.mxu0
    %v474 = vadd.f32 %v111, %v473
    %v475 = vpop.f32.mrf.mxu0
    %v476 = vadd.f32 %v111, %v475
    %477 = vmatmul.bf16.gmra.mxu0 %v238
    %v478 = vpop.f32.mrf.mxu0
    %v479 = vadd.f32 %v111, %v478
    %v480 = vpop.f32.mrf.mxu0
    %v481 = vadd.f32 %v111, %v480
    %482 = vmatmul.bf16.gmra.mxu0 %v241
    %v483 = vpop.f32.mrf.mxu0
    %v484 = vadd.f32 %v111, %v483
    %v485 = vpop.f32.mrf.mxu0
    %v486 = vadd.f32 %v111, %v485
    %487 = vmatmul.bf16.gmra.mxu0 %v244
    %v488 = vpop.f32.mrf.mxu0
    %v489 = vadd.f32 %v111, %v488
    %v490 = vpop.f32.mrf.mxu0
    %v491 = vadd.f32 %v111, %v490
    %492 = vmatmul.bf16.gmra.mxu0 %v247
    %v493 = vpop.f32.mrf.mxu0
    %v494 = vadd.f32 %v111, %v493
    %v495 = vpop.f32.mrf.mxu0
    %v496 = vadd.f32 %v111, %v495
    %497 = vmatmul.bf16.gmra.mxu0 %v250
    %v498 = vpop.f32.mrf.mxu0
    %v499 = vadd.f32 %v111, %v498
    %v500 = vpop.f32.mrf.mxu0
    %v501 = vadd.f32 %v111, %v500
    %502 = vmatmul.bf16.gmra.mxu0 %v253
    %v503 = vpop.f32.mrf.mxu0
    %v504 = vadd.f32 %v111, %v503
    %v505 = vpop.f32.mrf.mxu0
    %v506 = vadd.f32 %v111, %v505
    %507 = vmatmul.bf16.gmra.mxu0 %v256
    %v508 = vpop.f32.mrf.mxu0
    %v509 = vadd.f32 %v111, %v508
    %v510 = vpop.f32.mrf.mxu0
    %v511 = vadd.f32 %v111, %v510
    %512 = vmatmul.bf16.gmra.mxu0 %v259
    %v513 = vpop.f32.mrf.mxu0
    %v514 = vadd.f32 %v111, %v513
    %v515 = vpop.f32.mrf.mxu0
    %v516 = vadd.f32 %v111, %v515
    %517 = vmatmul.bf16.gmra.mxu0 %v262
    %v518 = vpop.f32.mrf.mxu0
    %v519 = vadd.f32 %v111, %v518
    %v520 = vpop.f32.mrf.mxu0
    %v521 = vadd.f32 %v111, %v520
    %522 = vmatmul.bf16.gmra.mxu0 %v265
    %v523 = vpop.f32.mrf.mxu0
    %v524 = vadd.f32 %v111, %v523
    %v525 = vpop.f32.mrf.mxu0
    %v526 = vadd.f32 %v111, %v525
    %527 = vmatmul.bf16.gmra.mxu0 %v268
    %v528 = vpop.f32.mrf.mxu0
    %v529 = vadd.f32 %v111, %v528
    %v530 = vpop.f32.mrf.mxu0
    %v531 = vadd.f32 %v111, %v530
    %532 = vmatmul.bf16.gmra.mxu0 %v271
    %v533 = vpop.f32.mrf.mxu0
    %v534 = vadd.f32 %v111, %v533
    %v535 = vpop.f32.mrf.mxu0
    %v536 = vadd.f32 %v111, %v535
    %537 = vmatmul.bf16.gmra.mxu0 %v274
    %v538 = vpop.f32.mrf.mxu0
    %v539 = vadd.f32 %v111, %v538
    %v540 = vpop.f32.mrf.mxu0
    %v541 = vadd.f32 %v111, %v540
    %542 = vdwg.mxu0
    %v543 = vmax.f32 %v286, 0.0
    %v544 = vmax.f32 %v375, 0.0
    %v545 = vmax.f32 %v464, 0.0
    %v546 = vmax.f32 %v288, 0.0
    %v547 = vmax.f32 %v377, 0.0
    %v548 = vmax.f32 %v466, 0.0
    %v549 = vmax.f32 %v291, 0.0
    %v550 = vmax.f32 %v380, 0.0
    %v551 = vmax.f32 %v469, 0.0
    %v552 = vmax.f32 %v293, 0.0
    %v553 = vmax.f32 %v382, 0.0
    %v554 = vmax.f32 %v471, 0.0
    %v555 = vmax.f32 %v296, 0.0
    %v556 = vmax.f32 %v385, 0.0
    %v557 = vmax.f32 %v474, 0.0
    %v558 = vmax.f32 %v298, 0.0
    %v559 = vmax.f32 %v387, 0.0
    %v560 = vmax.f32 %v476, 0.0
    %v561 = vmax.f32 %v301, 0.0
    %v562 = vmax.f32 %v390, 0.0
    %v563 = vmax.f32 %v479, 0.0
    %v564 = vmax.f32 %v303, 0.0
    %v565 = vmax.f32 %v392, 0.0
    %v566 = vmax.f32 %v481, 0.0
    %v567 = vmax.f32 %v306, 0.0
    %v568 = vmax.f32 %v395, 0.0
    %v569 = vmax.f32 %v484, 0.0
    %v570 = vmax.f32 %v308, 0.0
    %v571 = vmax.f32 %v397, 0.0
    %v572 = vmax.f32 %v486, 0.0
    %v573 = vmax.f32 %v311, 0.0
    %v574 = vmax.f32 %v400, 0.0
    %v575 = vmax.f32 %v489, 0.0
    %v576 = vmax.f32 %v313, 0.0
    %v577 = vmax.f32 %v402, 0.0
    %v578 = vmax.f32 %v491, 0.0
    %v579 = vmax.f32 %v316, 0.0
    %v580 = vmax.f32 %v405, 0.0
    %v581 = vmax.f32 %v494, 0.0
    %v582 = vmax.f32 %v318, 0.0
    %v583 = vmax.f32 %v407, 0.0
    %v584 = vmax.f32 %v496, 0.0
    %v585 = vmax.f32 %v321, 0.0
    %v586 = vmax.f32 %v410, 0.0
    %v587 = vmax.f32 %v499, 0.0
    %v588 = vmax.f32 %v323, 0.0
    %v589 = vmax.f32 %v412, 0.0
    %v590 = vmax.f32 %v501, 0.0
    %v591 = vmax.f32 %v326, 0.0
    %v592 = vmax.f32 %v415, 0.0
    %v593 = vmax.f32 %v504, 0.0
    %v594 = vmax.f32 %v328, 0.0
    %v595 = vmax.f32 %v417, 0.0
    %v596 = vmax.f32 %v506, 0.0
    %v597 = vmax.f32 %v331, 0.0
    %v598 = vmax.f32 %v420, 0.0
    %v599 = vmax.f32 %v509, 0.0
    %v600 = vmax.f32 %v333, 0.0
    %v601 = vmax.f32 %v422, 0.0
    %v602 = vmax.f32 %v511, 0.0
    %v603 = vmax.f32 %v336, 0.0
    %v604 = vmax.f32 %v425, 0.0
    %v605 = vmax.f32 %v514, 0.0
    %v606 = vmax.f32 %v338, 0.0
    %v607 = vmax.f32 %v427, 0.0
    %v608 = vmax.f32 %v516, 0.0
    %v609 = vmax.f32 %v341, 0.0
    %v610 = vmax.f32 %v430, 0.0
    %v611 = vmax.f32 %v519, 0.0
    %v612 = vmax.f32 %v343, 0.0
    %v613 = vmax.f32 %v432, 0.0
    %v614 = vmax.f32 %v521, 0.0
    %v615 = vmax.f32 %v346, 0.0
    %v616 = vmax.f32 %v435, 0.0
    %v617 = vmax.f32 %v524, 0.0
    %v618 = vmax.f32 %v348, 0.0
    %v619 = vmax.f32 %v437, 0.0
    %v620 = vmax.f32 %v526, 0.0
    %v621 = vmax.f32 %v351, 0.0
    %v622 = vmax.f32 %v440, 0.0
    %v623 = vmax.f32 %v529, 0.0
    %v624 = vmax.f32 %v353, 0.0
    %v625 = vmax.f32 %v442, 0.0
    %v626 = vmax.f32 %v531, 0.0
    %v627 = vmax.f32 %v356, 0.0
    %v628 = vmax.f32 %v445, 0.0
    %v629 = vmax.f32 %v534, 0.0
    %v630 = vmax.f32 %v358, 0.0
    %v631 = vmax.f32 %v447, 0.0
    %v632 = vmax.f32 %v536, 0.0
    %v633 = vmax.f32 %v361, 0.0
    %v634 = vmax.f32 %v450, 0.0
    %v635 = vmax.f32 %v539, 0.0
    %v636 = vmax.f32 %v363, 0.0
    %v637 = vmax.f32 %v452, 0.0
    %v638 = vmax.f32 %v541, 0.0
    %v639 = vld [vmem:[%s3] sm:$0xff]
    %v640 = vld [vmem:[%s3 + $0x8] sm:$0xff]
    %v641 = vld [vmem:[%s3 + $0x10] sm:$0xff]
    %v642 = vld [vmem:[%s3 + $0x18] sm:$0xff]
    %v643 = vld [vmem:[%s3 + $0x20] sm:$0xff]
    %v644 = vld [vmem:[%s3 + $0x28] sm:$0xff]
    %v645 = vld [vmem:[%s3 + $0x30] sm:$0xff]
    %v646 = vld [vmem:[%s3 + $0x38] sm:$0xff]
    %v647 = vld [vmem:[%s3 + $0x40] sm:$0xff]
    %v648 = vld [vmem:[%s3 + $0x48] sm:$0xff]
    %v649 = vld [vmem:[%s3 + $0x50] sm:$0xff]
    %v650 = vld [vmem:[%s3 + $0x58] sm:$0xff]
    %v651 = vld [vmem:[%s3 + $0x60] sm:$0xff]
    %v652 = vld [vmem:[%s3 + $0x68] sm:$0xff]
    %v653 = vld [vmem:[%s3 + $0x70] sm:$0xff]
    %v654 = vld [vmem:[%s3 + $0x78] sm:$0xff]
    %v655 = vld [vmem:[%s3 + $0x80] sm:$0xff]
    %v656 = vld [vmem:[%s3 + $0x88] sm:$0xff]
    %v657 = vld [vmem:[%s3 + $0x90] sm:$0xff]
    %v658 = vld [vmem:[%s3 + $0x98] sm:$0xff]
    %v659 = vld [vmem:[%s3 + $0xa0] sm:$0xff]
    %v660 = vld [vmem:[%s3 + $0xa8] sm:$0xff]
    %v661 = vld [vmem:[%s3 + $0xb0] sm:$0xff]
    %v662 = vld [vmem:[%s3 + $0xb8] sm:$0xff]
    %v663 = vld [vmem:[%s3 + $0xc0] sm:$0xff]
    %v664 = vld [vmem:[%s3 + $0xc8] sm:$0xff]
    %v665 = vld [vmem:[%s3 + $0xd0] sm:$0xff]
    %v666 = vld [vmem:[%s3 + $0xd8] sm:$0xff]
    %v667 = vld [vmem:[%s3 + $0xe0] sm:$0xff]
    %v668 = vld [vmem:[%s3 + $0xe8] sm:$0xff]
    %v669 = vld [vmem:[%s3 + $0xf0] sm:$0xff]
    %v670 = vld [vmem:[%s3 + $0xf8] sm:$0xff]
    %v671 = vld [vmem:[%s3 + $0x100] sm:$0xff]
    %v672 = vld [vmem:[%s3 + $0x108] sm:$0xff]
    %v673 = vld [vmem:[%s3 + $0x110] sm:$0xff]
    %v674 = vld [vmem:[%s3 + $0x118] sm:$0xff]
    %v675 = vld [vmem:[%s3 + $0x120] sm:$0xff]
    %v676 = vld [vmem:[%s3 + $0x128] sm:$0xff]
    %v677 = vld [vmem:[%s3 + $0x130] sm:$0xff]
    %v678 = vld [vmem:[%s3 + $0x138] sm:$0xff]
    %v679 = vld [vmem:[%s3 + $0x140] sm:$0xff]
    %v680 = vld [vmem:[%s3 + $0x148] sm:$0xff]
    %v681 = vld [vmem:[%s3 + $0x150] sm:$0xff]
    %v682 = vld [vmem:[%s3 + $0x158] sm:$0xff]
    %v683 = vld [vmem:[%s3 + $0x160] sm:$0xff]
    %v684 = vld [vmem:[%s3 + $0x168] sm:$0xff]
    %v685 = vld [vmem:[%s3 + $0x170] sm:$0xff]
    %v686 = vld [vmem:[%s3 + $0x178] sm:$0xff]
    %v687 = vld [vmem:[%s3 + $0x180] sm:$0xff]
    %v688 = vld [vmem:[%s3 + $0x188] sm:$0xff]
    %v689 = vld [vmem:[%s3 + $0x190] sm:$0xff]
    %v690 = vld [vmem:[%s3 + $0x198] sm:$0xff]
    %v691 = vld [vmem:[%s3 + $0x1a0] sm:$0xff]
    %v692 = vld [vmem:[%s3 + $0x1a8] sm:$0xff]
    %v693 = vld [vmem:[%s3 + $0x1b0] sm:$0xff]
    %v694 = vld [vmem:[%s3 + $0x1b8] sm:$0xff]
    %v695 = vld [vmem:[%s3 + $0x1c0] sm:$0xff]
    %v696 = vld [vmem:[%s3 + $0x1c8] sm:$0xff]
    %v697 = vld [vmem:[%s3 + $0x1d0] sm:$0xff]
    %v698 = vld [vmem:[%s3 + $0x1d8] sm:$0xff]
    %v699 = vld [vmem:[%s3 + $0x1e0] sm:$0xff]
    %v700 = vld [vmem:[%s3 + $0x1e8] sm:$0xff]
    %v701 = vld [vmem:[%s3 + $0x1f0] sm:$0xff]
    %v702 = vld [vmem:[%s3 + $0x1f8] sm:$0xff]
    %v703 = vld [vmem:[%s3 + $0x200] sm:$0xff]
    %v704 = vld [vmem:[%s3 + $0x208] sm:$0xff]
    %v705 = vld [vmem:[%s3 + $0x210] sm:$0xff]
    %v706 = vld [vmem:[%s3 + $0x218] sm:$0xff]
    %v707 = vld [vmem:[%s3 + $0x220] sm:$0xff]
    %v708 = vld [vmem:[%s3 + $0x228] sm:$0xff]
    %v709 = vld [vmem:[%s3 + $0x230] sm:$0xff]
    %v710 = vld [vmem:[%s3 + $0x238] sm:$0xff]
    %v711 = vld [vmem:[%s3 + $0x240] sm:$0xff]
    %v712 = vld [vmem:[%s3 + $0x248] sm:$0xff]
    %v713 = vld [vmem:[%s3 + $0x250] sm:$0xff]
    %v714 = vld [vmem:[%s3 + $0x258] sm:$0xff]
    %v715 = vld [vmem:[%s3 + $0x260] sm:$0xff]
    %v716 = vld [vmem:[%s3 + $0x268] sm:$0xff]
    %v717 = vld [vmem:[%s3 + $0x270] sm:$0xff]
    %v718 = vld [vmem:[%s3 + $0x278] sm:$0xff]
    %v719 = vld [vmem:[%s3 + $0x280] sm:$0xff]
    %v720 = vld [vmem:[%s3 + $0x288] sm:$0xff]
    %v721 = vld [vmem:[%s3 + $0x290] sm:$0xff]
    %v722 = vld [vmem:[%s3 + $0x298] sm:$0xff]
    %v723 = vld [vmem:[%s3 + $0x2a0] sm:$0xff]
    %v724 = vld [vmem:[%s3 + $0x2a8] sm:$0xff]
    %v725 = vld [vmem:[%s3 + $0x2b0] sm:$0xff]
    %v726 = vld [vmem:[%s3 + $0x2b8] sm:$0xff]
    %v727 = vld [vmem:[%s3 + $0x2c0] sm:$0xff]
    %v728 = vld [vmem:[%s3 + $0x2c8] sm:$0xff]
    %v729 = vld [vmem:[%s3 + $0x2d0] sm:$0xff]
    %v730 = vld [vmem:[%s3 + $0x2d8] sm:$0xff]
    %v731 = vld [vmem:[%s3 + $0x2e0] sm:$0xff]
    %v732 = vld [vmem:[%s3 + $0x2e8] sm:$0xff]
    %v733 = vld [vmem:[%s3 + $0x2f0] sm:$0xff]
    %v734 = vld [vmem:[%s3 + $0x2f8] sm:$0xff]
    %v735 = vmul.f32 %v543, %v639
    %v736 = vmul.f32 %v544, %v640
    %v737 = vmul.f32 %v545, %v641
    %v738 = vmul.f32 %v546, %v642
    %v739 = vmul.f32 %v547, %v643
    %v740 = vmul.f32 %v548, %v644
    %v741 = vmul.f32 %v549, %v645
    %v742 = vmul.f32 %v550, %v646
    %v743 = vmul.f32 %v551, %v647
    %v744 = vmul.f32 %v552, %v648
    %v745 = vmul.f32 %v553, %v649
    %v746 = vmul.f32 %v554, %v650
    %v747 = vmul.f32 %v555, %v651
    %v748 = vmul.f32 %v556, %v652
    %v749 = vmul.f32 %v557, %v653
    %v750 = vmul.f32 %v558, %v654
    %v751 = vmul.f32 %v559, %v655
    %v752 = vmul.f32 %v560, %v656
    %v753 = vmul.f32 %v561, %v657
    %v754 = vmul.f32 %v562, %v658
    %v755 = vmul.f32 %v563, %v659
    %v756 = vmul.f32 %v564, %v660
    %v757 = vmul.f32 %v565, %v661
    %v758 = vmul.f32 %v566, %v662
    %v759 = vmul.f32 %v567, %v663
    %v760 = vmul.f32 %v568, %v664
    %v761 = vmul.f32 %v569, %v665
    %v762 = vmul.f32 %v570, %v666
    %v763 = vmul.f32 %v571, %v667
    %v764 = vmul.f32 %v572, %v668
    %v765 = vmul.f32 %v573, %v669
    %v766 = vmul.f32 %v574, %v670
    %v767 = vmul.f32 %v575, %v671
    %v768 = vmul.f32 %v576, %v672
    %v769 = vmul.f32 %v577, %v673
    %v770 = vmul.f32 %v578, %v674
    %v771 = vmul.f32 %v579, %v675
    %v772 = vmul.f32 %v580, %v676
    %v773 = vmul.f32 %v581, %v677
    %v774 = vmul.f32 %v582, %v678
    %v775 = vmul.f32 %v583, %v679
    %v776 = vmul.f32 %v584, %v680
    %v777 = vmul.f32 %v585, %v681
    %v778 = vmul.f32 %v586, %v682
    %v779 = vmul.f32 %v587, %v683
    %v780 = vmul.f32 %v588, %v684
    %v781 = vmul.f32 %v589, %v685
    %v782 = vmul.f32 %v590, %v686
    %v783 = vmul.f32 %v591, %v687
    %v784 = vmul.f32 %v592, %v688
    %v785 = vmul.f32 %v593, %v689
    %v786 = vmul.f32 %v594, %v690
    %v787 = vmul.f32 %v595, %v691
    %v788 = vmul.f32 %v596, %v692
    %v789 = vmul.f32 %v597, %v693
    %v790 = vmul.f32 %v598, %v694
    %v791 = vmul.f32 %v599, %v695
    %v792 = vmul.f32 %v600, %v696
    %v793 = vmul.f32 %v601, %v697
    %v794 = vmul.f32 %v602, %v698
    %v795 = vmul.f32 %v603, %v699
    %v796 = vmul.f32 %v604, %v700
    %v797 = vmul.f32 %v605, %v701
    %v798 = vmul.f32 %v606, %v702
    %v799 = vmul.f32 %v607, %v703
    %v800 = vmul.f32 %v608, %v704
    %v801 = vmul.f32 %v609, %v705
    %v802 = vmul.f32 %v610, %v706
    %v803 = vmul.f32 %v611, %v707
    %v804 = vmul.f32 %v612, %v708
    %v805 = vmul.f32 %v613, %v709
    %v806 = vmul.f32 %v614, %v710
    %v807 = vmul.f32 %v615, %v711
    %v808 = vmul.f32 %v616, %v712
    %v809 = vmul.f32 %v617, %v713
    %v810 = vmul.f32 %v618, %v714
    %v811 = vmul.f32 %v619, %v715
    %v812 = vmul.f32 %v620, %v716
    %v813 = vmul.f32 %v621, %v717
    %v814 = vmul.f32 %v622, %v718
    %v815 = vmul.f32 %v623, %v719
    %v816 = vmul.f32 %v624, %v720
    %v817 = vmul.f32 %v625, %v721
    %v818 = vmul.f32 %v626, %v722
    %v819 = vmul.f32 %v627, %v723
    %v820 = vmul.f32 %v628, %v724
    %v821 = vmul.f32 %v629, %v725
    %v822 = vmul.f32 %v630, %v726
    %v823 = vmul.f32 %v631, %v727
    %v824 = vmul.f32 %v632, %v728
    %v825 = vmul.f32 %v633, %v729
    %v826 = vmul.f32 %v634, %v730
    %v827 = vmul.f32 %v635, %v731
    %v828 = vmul.f32 %v636, %v732
    %v829 = vmul.f32 %v637, %v733
    %v830 = vmul.f32 %v638, %v734
    %v831 = vpack.c.bf16 %v738, %v735
    %v832 = vpack.c.bf16 %v739, %v736
    %v833 = vpack.c.bf16 %v740, %v737
    %v834 = vpack.c.bf16 %v744, %v741
    %v835 = vpack.c.bf16 %v745, %v742
    %v836 = vpack.c.bf16 %v746, %v743
    %v837 = vpack.c.bf16 %v750, %v747
    %v838 = vpack.c.bf16 %v751, %v748
    %v839 = vpack.c.bf16 %v752, %v749
    %v840 = vpack.c.bf16 %v756, %v753
    %v841 = vpack.c.bf16 %v757, %v754
    %v842 = vpack.c.bf16 %v758, %v755
    %v843 = vpack.c.bf16 %v762, %v759
    %v844 = vpack.c.bf16 %v763, %v760
    %v845 = vpack.c.bf16 %v764, %v761
    %v846 = vpack.c.bf16 %v768, %v765
    %v847 = vpack.c.bf16 %v769, %v766
    %v848 = vpack.c.bf16 %v770, %v767
    %v849 = vpack.c.bf16 %v774, %v771
    %v850 = vpack.c.bf16 %v775, %v772
    %v851 = vpack.c.bf16 %v776, %v773
    %v852 = vpack.c.bf16 %v780, %v777
    %v853 = vpack.c.bf16 %v781, %v778
    %v854 = vpack.c.bf16 %v782, %v779
    %v855 = vpack.c.bf16 %v786, %v783
    %v856 = vpack.c.bf16 %v787, %v784
    %v857 = vpack.c.bf16 %v788, %v785
    %v858 = vpack.c.bf16 %v792, %v789
    %v859 = vpack.c.bf16 %v793, %v790
    %v860 = vpack.c.bf16 %v794, %v791
    %v861 = vpack.c.bf16 %v798, %v795
    %v862 = vpack.c.bf16 %v799, %v796
    %v863 = vpack.c.bf16 %v800, %v797
    %v864 = vpack.c.bf16 %v804, %v801
    %v865 = vpack.c.bf16 %v805, %v802
    %v866 = vpack.c.bf16 %v806, %v803
    %v867 = vpack.c.bf16 %v810, %v807
    %v868 = vpack.c.bf16 %v811, %v808
    %v869 = vpack.c.bf16 %v812, %v809
    %v870 = vpack.c.bf16 %v816, %v813
    %v871 = vpack.c.bf16 %v817, %v814
    %v872 = vpack.c.bf16 %v818, %v815
    %v873 = vpack.c.bf16 %v822, %v819
    %v874 = vpack.c.bf16 %v823, %v820
    %v875 = vpack.c.bf16 %v824, %v821
    %v876 = vpack.c.bf16 %v828, %v825
    %v877 = vpack.c.bf16 %v829, %v826
    %v878 = vpack.c.bf16 %v830, %v827
    %v879 = vld [vmem:[%s4] sm:$0xf]
    %v880 = vld [vmem:[%s4 + $0x4] sm:$0xf]
    %v881 = vld [vmem:[%s4 + $0x8] sm:$0xf]
    %v882 = vld [vmem:[%s4 + $0xc] sm:$0xf]
    %v883 = vld [vmem:[%s4 + $0x10] sm:$0xf]
    %v884 = vld [vmem:[%s4 + $0x14] sm:$0xf]
    %v885 = vld [vmem:[%s4 + $0x18] sm:$0xf]
    %v886 = vld [vmem:[%s4 + $0x1c] sm:$0xf]
    %v887 = vld [vmem:[%s4 + $0x20] sm:$0xf]
    %v888 = vld [vmem:[%s4 + $0x24] sm:$0xf]
    %v889 = vld [vmem:[%s4 + $0x28] sm:$0xf]
    %v890 = vld [vmem:[%s4 + $0x2c] sm:$0xf]
    %v891 = vld [vmem:[%s4 + $0x30] sm:$0xf]
    %v892 = vld [vmem:[%s4 + $0x34] sm:$0xf]
    %v893 = vld [vmem:[%s4 + $0x38] sm:$0xf]
    %v894 = vld [vmem:[%s4 + $0x3c] sm:$0xf]
    %v895 = vld [vmem:[%s4 + $0x40] sm:$0xf]
    %v896 = vld [vmem:[%s4 + $0x44] sm:$0xf]
    %v897 = vld [vmem:[%s4 + $0x48] sm:$0xf]
    %v898 = vld [vmem:[%s4 + $0x4c] sm:$0xf]
    %v899 = vld [vmem:[%s4 + $0x50] sm:$0xf]
    %v900 = vld [vmem:[%s4 + $0x54] sm:$0xf]
    %v901 = vld [vmem:[%s4 + $0x58] sm:$0xf]
    %v902 = vld [vmem:[%s4 + $0x5c] sm:$0xf]
    %v903 = vld [vmem:[%s4 + $0x60] sm:$0xf]
    %v904 = vld [vmem:[%s4 + $0x64] sm:$0xf]
    %v905 = vld [vmem:[%s4 + $0x68] sm:$0xf]
    %v906 = vld [vmem:[%s4 + $0x6c] sm:$0xf]
    %v907 = vld [vmem:[%s4 + $0x70] sm:$0xf]
    %v908 = vld [vmem:[%s4 + $0x74] sm:$0xf]
    %v909 = vld [vmem:[%s4 + $0x78] sm:$0xf]
    %v910 = vld [vmem:[%s4 + $0x7c] sm:$0xf]
    %v911 = vld [vmem:[%s4 + $0x80] sm:$0xf]
    %v912 = vld [vmem:[%s4 + $0x84] sm:$0xf]
    %v913 = vld [vmem:[%s4 + $0x88] sm:$0xf]
    %v914 = vld [vmem:[%s4 + $0x8c] sm:$0xf]
    %v915 = vld [vmem:[#allocation6] sm:$0x1]
    %v917 = vperm.slane %v915, 0
    %v955 = vunpack.c.l.b16 %v879
    %v956 = vunpack.c.l.b16 %v880
    %v957 = vunpack.c.l.b16 %v881
    %v958 = vunpack.c.l.b16 %v882
    %v959 = vunpack.c.l.b16 %v883
    %v960 = vunpack.c.l.b16 %v884
    %v961 = vunpack.c.l.b16 %v885
    %v962 = vunpack.c.l.b16 %v886
    %v963 = vunpack.c.l.b16 %v887
    %v964 = vunpack.c.l.b16 %v888
    %v965 = vunpack.c.l.b16 %v889
    %v966 = vunpack.c.l.b16 %v890
    %v967 = vunpack.c.l.b16 %v891
    %v968 = vunpack.c.l.b16 %v892
    %v969 = vunpack.c.l.b16 %v893
    %v970 = vunpack.c.l.b16 %v894
    %v971 = vunpack.c.l.b16 %v895
    %v972 = vunpack.c.l.b16 %v896
    %v973 = vunpack.c.l.b16 %v897
    %v974 = vunpack.c.l.b16 %v898
    %v975 = vunpack.c.l.b16 %v899
    %v976 = vunpack.c.l.b16 %v900
    %v977 = vunpack.c.l.b16 %v901
    %v978 = vunpack.c.l.b16 %v902
    %v979 = vunpack.c.l.b16 %v903
    %v980 = vunpack.c.l.b16 %v904
    %v981 = vunpack.c.l.b16 %v905
    %v982 = vunpack.c.l.b16 %v906
    %v983 = vunpack.c.l.b16 %v907
    %v984 = vunpack.c.l.b16 %v908
    %v985 = vunpack.c.l.b16 %v909
    %v986 = vunpack.c.l.b16 %v910
    %v987 = vunpack.c.l.b16 %v911
    %v988 = vunpack.c.l.b16 %v912
    %v989 = vunpack.c.l.b16 %v913
    %v990 = vunpack.c.l.b16 %v914
    %v991 = vpack.c.b16 %v956, %v955
    %v992 = vpack.c.b16 %v958, %v957
    %v993 = vpack.c.b16 %v960, %v959
    %v994 = vpack.c.b16 %v962, %v961
    %v995 = vpack.c.b16 %v964, %v963
    %v996 = vpack.c.b16 %v966, %v965
    %v997 = vpack.c.b16 %v968, %v967
    %v998 = vpack.c.b16 %v970, %v969
    %v999 = vpack.c.b16 %v972, %v971
    %v1000 = vpack.c.b16 %v974, %v973
    %v1001 = vpack.c.b16 %v976, %v975
    %v1002 = vpack.c.b16 %v978, %v977
    %v1003 = vpack.c.b16 %v980, %v979
    %v1004 = vpack.c.b16 %v982, %v981
    %v1005 = vpack.c.b16 %v984, %v983
    %v1006 = vpack.c.b16 %v986, %v985
    %v1007 = vpack.c.b16 %v988, %v987
    %v1008 = vpack.c.b16 %v990, %v989
    %v1028 = vsel %vm227, %v833, 0
    %v1031 = vsel %vm227, %v836, 0
    %v1034 = vsel %vm227, %v839, 0
    %v1037 = vsel %vm227, %v842, 0
    %v1040 = vsel %vm227, %v845, 0
    %v1043 = vsel %vm227, %v848, 0
    %v1046 = vsel %vm227, %v851, 0
    %v1049 = vsel %vm227, %v854, 0
    %v1052 = vsel %vm227, %v857, 0
    %v1055 = vsel %vm227, %v860, 0
    %v1058 = vsel %vm227, %v863, 0
    %v1061 = vsel %vm227, %v866, 0
    %v1064 = vsel %vm227, %v869, 0
    %v1067 = vsel %vm227, %v872, 0
    %v1070 = vsel %vm227, %v875, 0
    %v1073 = vsel %vm227, %v878, 0
    %1075 = vmatpush.bf16.msra.mxu0 %v998
    %1076 = vmatpush.bf16.msra.mxu0 %v997
    %1077 = vmatpush.bf16.msra.mxu0 %v996
    %1078 = vmatpush.bf16.msra.mxu0 %v995
    %1079 = vmatpush.bf16.msra.mxu0 %v994
    %1080 = vmatpush.bf16.msra.mxu0 %v993
    %1081 = vmatpush.bf16.msra.mxu0 %v992
    %1082 = vmatpush.bf16.msra.mxu0 %v991
    %1083 = vmatmul.bf16.gmra.mxu0 %v831
    %v1084 = vpop.f32.mrf.mxu0
    %v1085 = vadd.f32 %v917, %v1084
    %v1086 = vpop.f32.mrf.mxu0
    %v1087 = vadd.f32 %v917, %v1086
    %1088 = vmatmul.bf16.gmra.mxu0 %v834
    %v1089 = vpop.f32.mrf.mxu0
    %v1090 = vadd.f32 %v917, %v1089
    %v1091 = vpop.f32.mrf.mxu0
    %v1092 = vadd.f32 %v917, %v1091
    %1093 = vmatmul.bf16.gmra.mxu0 %v837
    %v1094 = vpop.f32.mrf.mxu0
    %v1095 = vadd.f32 %v917, %v1094
    %v1096 = vpop.f32.mrf.mxu0
    %v1097 = vadd.f32 %v917, %v1096
    %1098 = vmatmul.bf16.gmra.mxu0 %v840
    %v1099 = vpop.f32.mrf.mxu0
    %v1100 = vadd.f32 %v917, %v1099
    %v1101 = vpop.f32.mrf.mxu0
    %v1102 = vadd.f32 %v917, %v1101
    %1103 = vmatmul.bf16.gmra.mxu0 %v843
    %v1104 = vpop.f32.mrf.mxu0
    %v1105 = vadd.f32 %v917, %v1104
    %v1106 = vpop.f32.mrf.mxu0
    %v1107 = vadd.f32 %v917, %v1106
    %1108 = vmatmul.bf16.gmra.mxu0 %v846
    %v1109 = vpop.f32.mrf.mxu0
    %v1110 = vadd.f32 %v917, %v1109
    %v1111 = vpop.f32.mrf.mxu0
    %v1112 = vadd.f32 %v917, %v1111
    %1113 = vmatmul.bf16.gmra.mxu0 %v849
    %v1114 = vpop.f32.mrf.mxu0
    %v1115 = vadd.f32 %v917, %v1114
    %v1116 = vpop.f32.mrf.mxu0
    %v1117 = vadd.f32 %v917, %v1116
    %1118 = vmatmul.bf16.gmra.mxu0 %v852
    %v1119 = vpop.f32.mrf.mxu0
    %v1120 = vadd.f32 %v917, %v1119
    %v1121 = vpop.f32.mrf.mxu0
    %v1122 = vadd.f32 %v917, %v1121
    %1123 = vmatmul.bf16.gmra.mxu0 %v855
    %v1124 = vpop.f32.mrf.mxu0
    %v1125 = vadd.f32 %v917, %v1124
    %v1126 = vpop.f32.mrf.mxu0
    %v1127 = vadd.f32 %v917, %v1126
    %1128 = vmatmul.bf16.gmra.mxu0 %v858
    %v1129 = vpop.f32.mrf.mxu0
    %v1130 = vadd.f32 %v917, %v1129
    %v1131 = vpop.f32.mrf.mxu0
    %v1132 = vadd.f32 %v917, %v1131
    %1133 = vmatmul.bf16.gmra.mxu0 %v861
    %v1134 = vpop.f32.mrf.mxu0
    %v1135 = vadd.f32 %v917, %v1134
    %v1136 = vpop.f32.mrf.mxu0
    %v1137 = vadd.f32 %v917, %v1136
    %1138 = vmatmul.bf16.gmra.mxu0 %v864
    %v1139 = vpop.f32.mrf.mxu0
    %v1140 = vadd.f32 %v917, %v1139
    %v1141 = vpop.f32.mrf.mxu0
    %v1142 = vadd.f32 %v917, %v1141
    %1143 = vmatmul.bf16.gmra.mxu0 %v867
    %v1144 = vpop.f32.mrf.mxu0
    %v1145 = vadd.f32 %v917, %v1144
    %v1146 = vpop.f32.mrf.mxu0
    %v1147 = vadd.f32 %v917, %v1146
    %1148 = vmatmul.bf16.gmra.mxu0 %v870
    %v1149 = vpop.f32.mrf.mxu0
    %v1150 = vadd.f32 %v917, %v1149
    %v1151 = vpop.f32.mrf.mxu0
    %v1152 = vadd.f32 %v917, %v1151
    %1153 = vmatmul.bf16.gmra.mxu0 %v873
    %v1154 = vpop.f32.mrf.mxu0
    %v1155 = vadd.f32 %v917, %v1154
    %v1156 = vpop.f32.mrf.mxu0
    %v1157 = vadd.f32 %v917, %v1156
    %1158 = vmatmul.bf16.gmra.mxu0 %v876
    %v1159 = vpop.f32.mrf.mxu0
    %v1160 = vadd.f32 %v917, %v1159
    %v1161 = vpop.f32.mrf.mxu0
    %v1162 = vadd.f32 %v917, %v1161
    %1163 = vdwg.mxu0
    %1164 = vmatpush.bf16.msra.mxu0 %v1006
    %1165 = vmatpush.bf16.msra.mxu0 %v1005
    %1166 = vmatpush.bf16.msra.mxu0 %v1004
    %1167 = vmatpush.bf16.msra.mxu0 %v1003
    %1168 = vmatpush.bf16.msra.mxu0 %v1002
    %1169 = vmatpush.bf16.msra.mxu0 %v1001
    %1170 = vmatpush.bf16.msra.mxu0 %v1000
    %1171 = vmatpush.bf16.msra.mxu0 %v999
    %1172 = vmatmul.bf16.gmra.mxu0 %v832
    %v1173 = vpop.f32.mrf.mxu0
    %v1174 = vadd.f32 %v1085, %v1173
    %v1175 = vpop.f32.mrf.mxu0
    %v1176 = vadd.f32 %v1087, %v1175
    %1177 = vmatmul.bf16.gmra.mxu0 %v835
    %v1178 = vpop.f32.mrf.mxu0
    %v1179 = vadd.f32 %v1090, %v1178
    %v1180 = vpop.f32.mrf.mxu0
    %v1181 = vadd.f32 %v1092, %v1180
    %1182 = vmatmul.bf16.gmra.mxu0 %v838
    %v1183 = vpop.f32.mrf.mxu0
    %v1184 = vadd.f32 %v1095, %v1183
    %v1185 = vpop.f32.mrf.mxu0
    %v1186 = vadd.f32 %v1097, %v1185
    %1187 = vmatmul.bf16.gmra.mxu0 %v841
    %v1188 = vpop.f32.mrf.mxu0
    %v1189 = vadd.f32 %v1100, %v1188
    %v1190 = vpop.f32.mrf.mxu0
    %v1191 = vadd.f32 %v1102, %v1190
    %1192 = vmatmul.bf16.gmra.mxu0 %v844
    %v1193 = vpop.f32.mrf.mxu0
    %v1194 = vadd.f32 %v1105, %v1193
    %v1195 = vpop.f32.mrf.mxu0
    %v1196 = vadd.f32 %v1107, %v1195
    %1197 = vmatmul.bf16.gmra.mxu0 %v847
    %v1198 = vpop.f32.mrf.mxu0
    %v1199 = vadd.f32 %v1110, %v1198
    %v1200 = vpop.f32.mrf.mxu0
    %v1201 = vadd.f32 %v1112, %v1200
    %1202 = vmatmul.bf16.gmra.mxu0 %v850
    %v1203 = vpop.f32.mrf.mxu0
    %v1204 = vadd.f32 %v1115, %v1203
    %v1205 = vpop.f32.mrf.mxu0
    %v1206 = vadd.f32 %v1117, %v1205
    %1207 = vmatmul.bf16.gmra.mxu0 %v853
    %v1208 = vpop.f32.mrf.mxu0
    %v1209 = vadd.f32 %v1120, %v1208
    %v1210 = vpop.f32.mrf.mxu0
    %v1211 = vadd.f32 %v1122, %v1210
    %1212 = vmatmul.bf16.gmra.mxu0 %v856
    %v1213 = vpop.f32.mrf.mxu0
    %v1214 = vadd.f32 %v1125, %v1213
    %v1215 = vpop.f32.mrf.mxu0
    %v1216 = vadd.f32 %v1127, %v1215
    %1217 = vmatmul.bf16.gmra.mxu0 %v859
    %v1218 = vpop.f32.mrf.mxu0
    %v1219 = vadd.f32 %v1130, %v1218
    %v1220 = vpop.f32.mrf.mxu0
    %v1221 = vadd.f32 %v1132, %v1220
    %1222 = vmatmul.bf16.gmra.mxu0 %v862
    %v1223 = vpop.f32.mrf.mxu0
    %v1224 = vadd.f32 %v1135, %v1223
    %v1225 = vpop.f32.mrf.mxu0
    %v1226 = vadd.f32 %v1137, %v1225
    %1227 = vmatmul.bf16.gmra.mxu0 %v865
    %v1228 = vpop.f32.mrf.mxu0
    %v1229 = vadd.f32 %v1140, %v1228
    %v1230 = vpop.f32.mrf.mxu0
    %v1231 = vadd.f32 %v1142, %v1230
    %1232 = vmatmul.bf16.gmra.mxu0 %v868
    %v1233 = vpop.f32.mrf.mxu0
    %v1234 = vadd.f32 %v1145, %v1233
    %v1235 = vpop.f32.mrf.mxu0
    %v1236 = vadd.f32 %v1147, %v1235
    %1237 = vmatmul.bf16.gmra.mxu0 %v871
    %v1238 = vpop.f32.mrf.mxu0
    %v1239 = vadd.f32 %v1150, %v1238
    %v1240 = vpop.f32.mrf.mxu0
    %v1241 = vadd.f32 %v1152, %v1240
    %1242 = vmatmul.bf16.gmra.mxu0 %v874
    %v1243 = vpop.f32.mrf.mxu0
    %v1244 = vadd.f32 %v1155, %v1243
    %v1245 = vpop.f32.mrf.mxu0
    %v1246 = vadd.f32 %v1157, %v1245
    %1247 = vmatmul.bf16.gmra.mxu0 %v877
    %v1248 = vpop.f32.mrf.mxu0
    %v1249 = vadd.f32 %v1160, %v1248
    %v1250 = vpop.f32.mrf.mxu0
    %v1251 = vadd.f32 %v1162, %v1250
    %1252 = vdwg.mxu0
    %1253 = vmatpush.bf16.msra.mxu0 0
    %1254 = vmatpush.bf16.msra.mxu0 0
    %1255 = vmatpush.bf16.msra.mxu0 0
    %1256 = vmatpush.bf16.msra.mxu0 0
    %1257 = vmatpush.bf16.msra.mxu0 0
    %1258 = vmatpush.bf16.msra.mxu0 0
    %1259 = vmatpush.bf16.msra.mxu0 %v1008
    %1260 = vmatpush.bf16.msra.mxu0 %v1007
    %1261 = vmatmul.bf16.gmra.mxu0 %v1028
    %v1262 = vpop.f32.mrf.mxu0
    %v1263 = vadd.f32 %v1174, %v1262
    %v1264 = vpop.f32.mrf.mxu0
    %v1265 = vadd.f32 %v1176, %v1264
    %1266 = vmatmul.bf16.gmra.mxu0 %v1031
    %v1267 = vpop.f32.mrf.mxu0
    %v1268 = vadd.f32 %v1179, %v1267
    %v1269 = vpop.f32.mrf.mxu0
    %v1270 = vadd.f32 %v1181, %v1269
    %1271 = vmatmul.bf16.gmra.mxu0 %v1034
    %v1272 = vpop.f32.mrf.mxu0
    %v1273 = vadd.f32 %v1184, %v1272
    %v1274 = vpop.f32.mrf.mxu0
    %v1275 = vadd.f32 %v1186, %v1274
    %1276 = vmatmul.bf16.gmra.mxu0 %v1037
    %v1277 = vpop.f32.mrf.mxu0
    %v1278 = vadd.f32 %v1189, %v1277
    %v1279 = vpop.f32.mrf.mxu0
    %v1280 = vadd.f32 %v1191, %v1279
    %1281 = vmatmul.bf16.gmra.mxu0 %v1040
    %v1282 = vpop.f32.mrf.mxu0
    %v1283 = vadd.f32 %v1194, %v1282
    %v1284 = vpop.f32.mrf.mxu0
    %v1285 = vadd.f32 %v1196, %v1284
    %1286 = vmatmul.bf16.gmra.mxu0 %v1043
    %v1287 = vpop.f32.mrf.mxu0
    %v1288 = vadd.f32 %v1199, %v1287
    %v1289 = vpop.f32.mrf.mxu0
    %v1290 = vadd.f32 %v1201, %v1289
    %1291 = vmatmul.bf16.gmra.mxu0 %v1046
    %v1292 = vpop.f32.mrf.mxu0
    %v1293 = vadd.f32 %v1204, %v1292
    %v1294 = vpop.f32.mrf.mxu0
    %v1295 = vadd.f32 %v1206, %v1294
    %1296 = vmatmul.bf16.gmra.mxu0 %v1049
    %v1297 = vpop.f32.mrf.mxu0
    %v1298 = vadd.f32 %v1209, %v1297
    %v1299 = vpop.f32.mrf.mxu0
    %v1300 = vadd.f32 %v1211, %v1299
    %1301 = vmatmul.bf16.gmra.mxu0 %v1052
    %v1302 = vpop.f32.mrf.mxu0
    %v1303 = vadd.f32 %v1214, %v1302
    %v1304 = vpop.f32.mrf.mxu0
    %v1305 = vadd.f32 %v1216, %v1304
    %1306 = vmatmul.bf16.gmra.mxu0 %v1055
    %v1307 = vpop.f32.mrf.mxu0
    %v1308 = vadd.f32 %v1219, %v1307
    %v1309 = vpop.f32.mrf.mxu0
    %v1310 = vadd.f32 %v1221, %v1309
    %1311 = vmatmul.bf16.gmra.mxu0 %v1058
    %v1312 = vpop.f32.mrf.mxu0
    %v1313 = vadd.f32 %v1224, %v1312
    %v1314 = vpop.f32.mrf.mxu0
    %v1315 = vadd.f32 %v1226, %v1314
    %1316 = vmatmul.bf16.gmra.mxu0 %v1061
    %v1317 = vpop.f32.mrf.mxu0
    %v1318 = vadd.f32 %v1229, %v1317
    %v1319 = vpop.f32.mrf.mxu0
    %v1320 = vadd.f32 %v1231, %v1319
    %1321 = vmatmul.bf16.gmra.mxu0 %v1064
    %v1322 = vpop.f32.mrf.mxu0
    %v1323 = vadd.f32 %v1234, %v1322
    %v1324 = vpop.f32.mrf.mxu0
    %v1325 = vadd.f32 %v1236, %v1324
    %1326 = vmatmul.bf16.gmra.mxu0 %v1067
    %v1327 = vpop.f32.mrf.mxu0
    %v1328 = vadd.f32 %v1239, %v1327
    %v1329 = vpop.f32.mrf.mxu0
    %v1330 = vadd.f32 %v1241, %v1329
    %1331 = vmatmul.bf16.gmra.mxu0 %v1070
    %v1332 = vpop.f32.mrf.mxu0
    %v1333 = vadd.f32 %v1244, %v1332
    %v1334 = vpop.f32.mrf.mxu0
    %v1335 = vadd.f32 %v1246, %v1334
    %1336 = vmatmul.bf16.gmra.mxu0 %v1073
    %v1337 = vpop.f32.mrf.mxu0
    %v1338 = vadd.f32 %v1249, %v1337
    %v1339 = vpop.f32.mrf.mxu0
    %v1340 = vadd.f32 %v1251, %v1339
    %1341 = vdwg.mxu0
    %v1342 = vmax.f32 %v1263, 0.0
    %v1343 = vmax.f32 %v1265, 0.0
    %v1344 = vmax.f32 %v1268, 0.0
    %v1345 = vmax.f32 %v1270, 0.0
    %v1346 = vmax.f32 %v1273, 0.0
    %v1347 = vmax.f32 %v1275, 0.0
    %v1348 = vmax.f32 %v1278, 0.0
    %v1349 = vmax.f32 %v1280, 0.0
    %v1350 = vmax.f32 %v1283, 0.0
    %v1351 = vmax.f32 %v1285, 0.0
    %v1352 = vmax.f32 %v1288, 0.0
    %v1353 = vmax.f32 %v1290, 0.0
    %v1354 = vmax.f32 %v1293, 0.0
    %v1355 = vmax.f32 %v1295, 0.0
    %v1356 = vmax.f32 %v1298, 0.0
    %v1357 = vmax.f32 %v1300, 0.0
    %v1358 = vmax.f32 %v1303, 0.0
    %v1359 = vmax.f32 %v1305, 0.0
    %v1360 = vmax.f32 %v1308, 0.0
    %v1361 = vmax.f32 %v1310, 0.0
    %v1362 = vmax.f32 %v1313, 0.0
    %v1363 = vmax.f32 %v1315, 0.0
    %v1364 = vmax.f32 %v1318, 0.0
    %v1365 = vmax.f32 %v1320, 0.0
    %v1366 = vmax.f32 %v1323, 0.0
    %v1367 = vmax.f32 %v1325, 0.0
    %v1368 = vmax.f32 %v1328, 0.0
    %v1369 = vmax.f32 %v1330, 0.0
    %v1370 = vmax.f32 %v1333, 0.0
    %v1371 = vmax.f32 %v1335, 0.0
    %v1372 = vmax.f32 %v1338, 0.0
    %v1373 = vmax.f32 %v1340, 0.0
    %v1374 = vpack.c.bf16 %v1342, %v1342
    %v1375 = vpack.c.bf16 %v1343, %v1343
    %v1376 = vpack.c.bf16 %v1344, %v1344
    %v1377 = vpack.c.bf16 %v1345, %v1345
    %v1378 = vpack.c.bf16 %v1346, %v1346
    %v1379 = vpack.c.bf16 %v1347, %v1347
    %v1380 = vpack.c.bf16 %v1348, %v1348
    %v1381 = vpack.c.bf16 %v1349, %v1349
    %v1382 = vpack.c.bf16 %v1350, %v1350
    %v1383 = vpack.c.bf16 %v1351, %v1351
    %v1384 = vpack.c.bf16 %v1352, %v1352
    %v1385 = vpack.c.bf16 %v1353, %v1353
    %v1386 = vpack.c.bf16 %v1354, %v1354
    %v1387 = vpack.c.bf16 %v1355, %v1355
    %v1388 = vpack.c.bf16 %v1356, %v1356
    %v1389 = vpack.c.bf16 %v1357, %v1357
    %v1390 = vpack.c.bf16 %v1358, %v1358
    %v1391 = vpack.c.bf16 %v1359, %v1359
    %v1392 = vpack.c.bf16 %v1360, %v1360
    %v1393 = vpack.c.bf16 %v1361, %v1361
    %v1394 = vpack.c.bf16 %v1362, %v1362
    %v1395 = vpack.c.bf16 %v1363, %v1363
    %v1396 = vpack.c.bf16 %v1364, %v1364
    %v1397 = vpack.c.bf16 %v1365, %v1365
    %v1398 = vpack.c.bf16 %v1366, %v1366
    %v1399 = vpack.c.bf16 %v1367, %v1367
    %v1400 = vpack.c.bf16 %v1368, %v1368
    %v1401 = vpack.c.bf16 %v1369, %v1369
    %v1402 = vpack.c.bf16 %v1370, %v1370
    %v1403 = vpack.c.bf16 %v1371, %v1371
    %v1404 = vpack.c.bf16 %v1372, %v1372
    %v1405 = vpack.c.bf16 %v1373, %v1373
    %vm1406 = vcmask 519168
    %1407 = vst.msk [vmem:[%s6] sm:$0xf] %vm1406, %v1374
    %1408 = vst.msk [vmem:[%s6 + $0x4] sm:$0xf] %vm1406, %v1375
    %1409 = vst.msk [vmem:[%s6 + $0x8] sm:$0xf] %vm1406, %v1376
    %1410 = vst.msk [vmem:[%s6 + $0xc] sm:$0xf] %vm1406, %v1377
    %1411 = vst.msk [vmem:[%s6 + $0x10] sm:$0xf] %vm1406, %v1378
    %1412 = vst.msk [vmem:[%s6 + $0x14] sm:$0xf] %vm1406, %v1379
    %1413 = vst.msk [vmem:[%s6 + $0x18] sm:$0xf] %vm1406, %v1380
    %1414 = vst.msk [vmem:[%s6 + $0x1c] sm:$0xf] %vm1406, %v1381
    %1415 = vst.msk [vmem:[%s6 + $0x20] sm:$0xf] %vm1406, %v1382
    %1416 = vst.msk [vmem:[%s6 + $0x24] sm:$0xf] %vm1406, %v1383
    %1417 = vst.msk [vmem:[%s6 + $0x28] sm:$0xf] %vm1406, %v1384
    %1418 = vst.msk [vmem:[%s6 + $0x2c] sm:$0xf] %vm1406, %v1385
    %1419 = vst.msk [vmem:[%s6 + $0x30] sm:$0xf] %vm1406, %v1386
    %1420 = vst.msk [vmem:[%s6 + $0x34] sm:$0xf] %vm1406, %v1387
    %1421 = vst.msk [vmem:[%s6 + $0x38] sm:$0xf] %vm1406, %v1388
    %1422 = vst.msk [vmem:[%s6 + $0x3c] sm:$0xf] %vm1406, %v1389
    %1423 = vst.msk [vmem:[%s6 + $0x40] sm:$0xf] %vm1406, %v1390
    %1424 = vst.msk [vmem:[%s6 + $0x44] sm:$0xf] %vm1406, %v1391
    %1425 = vst.msk [vmem:[%s6 + $0x48] sm:$0xf] %vm1406, %v1392
    %1426 = vst.msk [vmem:[%s6 + $0x4c] sm:$0xf] %vm1406, %v1393
    %1427 = vst.msk [vmem:[%s6 + $0x50] sm:$0xf] %vm1406, %v1394
    %1428 = vst.msk [vmem:[%s6 + $0x54] sm:$0xf] %vm1406, %v1395
    %1429 = vst.msk [vmem:[%s6 + $0x58] sm:$0xf] %vm1406, %v1396
    %1430 = vst.msk [vmem:[%s6 + $0x5c] sm:$0xf] %vm1406, %v1397
    %1431 = vst.msk [vmem:[%s6 + $0x60] sm:$0xf] %vm1406, %v1398
    %1432 = vst.msk [vmem:[%s6 + $0x64] sm:$0xf] %vm1406, %v1399
    %1433 = vst.msk [vmem:[%s6 + $0x68] sm:$0xf] %vm1406, %v1400
    %1434 = vst.msk [vmem:[%s6 + $0x6c] sm:$0xf] %vm1406, %v1401
    %1435 = vst.msk [vmem:[%s6 + $0x70] sm:$0xf] %vm1406, %v1402
    %1436 = vst.msk [vmem:[%s6 + $0x74] sm:$0xf] %vm1406, %v1403
    %1437 = vst.msk [vmem:[%s6 + $0x78] sm:$0xf] %vm1406, %v1404
    %1438 = vst.msk [vmem:[%s6 + $0x7c] sm:$0xf] %vm1406, %v1405
    // Predicated region
    $region38: #{dqn_forward.2} parent=1 // pred_check
      _
    $region39: #{dqn_forward.2} parent=1 // pred_check_branch
      %1440 = sbr.rel (0) target = $region41
    $region40: #{dqn_forward.2} parent=1 // pred_region
      _
    $region41: #{dqn_forward.2} parent=1 // pred_fallthru
      _
    // Predicated region
    $region42: #{dqn_forward.2} parent=1 // pred_check
      _
    $region43: #{dqn_forward.2} parent=1 // pred_check_branch
      %1442 = sbr.rel (0) target = $region45
    $region44: #{dqn_forward.2} parent=1 // pred_region
      _
    $region45: #{dqn_forward.2} parent=1 // pred_fallthru
      _
    %1443 = vsyncpa [#allocation3], 1
    %1444 = vsyncpa [#allocation5], 1

// kernel: dqn_forward.3
$region0: #{dqn_forward.3}
  #allocation0 [shape = 'u32[]', space=smem, size = 0x4, offset = 0x4, fixed_abs, tag = 'smem constant byte address 0x4 - core index']
  #allocation1 [shape = 'u32[72,128]{1,0:T(1,128)}', space=vmem, size = 0x9000, scoped, tag = 'internal scratch']
  %s0 = inlined_call_operand.vmem [shape: bf16[4,4096], index: 0, kind: input, shape index: {}]
  %s1 = inlined_call_operand.hbm [shape: bf16[4096,512], index: 1, kind: input, shape index: {}]
  %s2 = inlined_call_operand.hbm [shape: f32[1,512], index: 2, kind: input, shape index: {}]
  %s3 = inlined_call_operand.hbm [shape: bf16[512,1024], index: 3, kind: input, shape index: {}]
  %s4 = inlined_call_operand.hbm [shape: f32[1,1024], index: 4, kind: input, shape index: {}]
  %s5 = inlined_call_operand.hbm [shape: bf16[1024,128], index: 5, kind: input, shape index: {}]
  %s6 = inlined_call_operand.hbm [shape: f32[1,128], index: 6, kind: input, shape index: {}]
  %s7 = inlined_call_operand.hbm [shape: f32[4,128], index: 7, kind: output, shape index: {}]
  %s8 = sld [smem:[#allocation0]]
  $region62: #{dqn_forward.3} parent=0
    _
  %s10 = ssub.s32 1, %s8
  %s11 = scalar_select 0, %s10, %s8
  $region1: #{dqn_forward.3} parent=0
    #allocation2 [shape = 'u8[4194304]{0}', space=vmem, size = 0x400000, scoped, tag = 'input window, operand 1, single buffered']
    #allocation3 [shape = 's32[1]{0}', space=sflag, size = 0x4, scoped, tag = 'scoped memory for dqn_forward.3']
    #allocation4 [shape = 's32[1]{0}', space=sflag, size = 0x4, scoped, tag = 'scoped memory for dqn_forward.3']
    #allocation5 [shape = 'u8[2048]{0}', space=vmem, size = 0x800, scoped, tag = 'input window, operand 2, single buffered']
    #allocation6 [shape = 's32[1]{0}', space=sflag, size = 0x4, scoped, tag = 'scoped memory for dqn_forward.3']
    #allocation7 [shape = 'u8[1048576]{0}', space=vmem, size = 0x100000, scoped, tag = 'input window, operand 3, single buffered']
    #allocation8 [shape = 'u8[4096]{0}', space=vmem, size = 0x1000, scoped, tag = 'input window, operand 4, single buffered']
    #allocation9 [shape = 's32[1]{0}', space=sflag, size = 0x4, scoped, tag = 'scoped memory for dqn_forward.3']
    #allocation10 [shape = 'u8[262144]{0}', space=vmem, size = 0x40000, scoped, tag = 'input window, operand 5, single buffered']
    #allocation11 [shape = 'u8[512]{0}', space=vmem, size = 0x400, scoped, tag = 'input window, operand 6, single buffered']
    #allocation12 [shape = 's32[1]{0}', space=sflag, size = 0x4, scoped, tag = 'scoped memory for dqn_forward.3']
    #allocation13 [shape = 'u8[2048]{0}', space=vmem, size = 0x800, scoped, tag = 'output window, operand 0, single buffered']
    %12 = vsyncpa [#allocation3], 0
    %13 = vsyncpa [#allocation6], 0
    %14 = vsyncpa [#allocation9], 0
    %15 = vsyncpa [#allocation12], 0
    %16 = vsyncpa [#allocation4], 0
    // Predicated region
    $region2: #{dqn_forward.3} parent=1 // pred_check
      _
    $region3: #{dqn_forward.3} parent=1 // pred_check_branch
      %18 = sbr.rel (0) target = $region5
    $region4: #{dqn_forward.3} parent=1 // pred_region
      _
    $region5: #{dqn_forward.3} parent=1 // pred_fallthru
      _
    // Predicated region
    $region6: #{dqn_forward.3} parent=1 // pred_check
      _
    $region7: #{dqn_forward.3} parent=1 // pred_check_branch
      %20 = sbr.rel (0) target = $region9
    $region8: #{dqn_forward.3} parent=1 // pred_region
      %22 = vsyncadd [#allocation3], 0
      %s23 = sshll.u32 %s1, 4
      %s24 = int_to_ptr.hbm [resolvable:$true] %s23
      %s25 = sshll.u32 [#allocation2], 4
      %s26 = int_to_ptr.vmem [resolvable:$true] %s25
      %31 = dma.hbm_to_vmem [thread:$0]  %s24, 131072, %s26, [#allocation3], 256, 256, 16
    $region9: #{dqn_forward.3} parent=1 // pred_fallthru
      _
    // Predicated region
    $region10: #{dqn_forward.3} parent=1 // pred_check
      _
    $region11: #{dqn_forward.3} parent=1 // pred_check_branch
      %33 = sbr.rel (0) target = $region13
    $region12: #{dqn_forward.3} parent=1 // pred_region
      %35 = vsyncadd [#allocation6], 0
      %s37 = sshll.u32 %s2, 4
      %s38 = int_to_ptr.hbm [resolvable:$true] %s37
      %s39 = sshll.u32 [#allocation5], 4
      %s40 = int_to_ptr.vmem [resolvable:$true] %s39
      %42 = dma.hbm_to_vmem [thread:$0]  %s38, 64, %s40, [#allocation6]
    $region13: #{dqn_forward.3} parent=1 // pred_fallthru
      _
    // Predicated region
    $region14: #{dqn_forward.3} parent=1 // pred_check
      _
    $region15: #{dqn_forward.3} parent=1 // pred_check_branch
      %44 = sbr.rel (0) target = $region17
    $region16: #{dqn_forward.3} parent=1 // pred_region
      %46 = vsyncadd [#allocation6], 0
      %s47 = sshll.u32 %s3, 4
      %s48 = int_to_ptr.hbm [resolvable:$true] %s47
      %s49 = sshll.u32 [#allocation7], 4
      %s50 = int_to_ptr.vmem [resolvable:$true] %s49
      %55 = dma.hbm_to_vmem [thread:$0]  %s48, 32768, %s50, [#allocation6], 512, 512, 32
    $region17: #{dqn_forward.3} parent=1 // pred_fallthru
      _
    // Predicated region
    $region18: #{dqn_forward.3} parent=1 // pred_check
      _
    $region19: #{dqn_forward.3} parent=1 // pred_check_branch
      %57 = sbr.rel (0) target = $region21
    $region20: #{dqn_forward.3} parent=1 // pred_region
      %59 = vsyncadd [#allocation9], 0
      %s61 = sshll.u32 %s4, 4
      %s62 = int_to_ptr.hbm [resolvable:$true] %s61
      %s63 = sshll.u32 [#allocation8], 4
      %s64 = int_to_ptr.vmem [resolvable:$true] %s63
      %66 = dma.hbm_to_vmem [thread:$0]  %s62, 128, %s64, [#allocation9]
    $region21: #{dqn_forward.3} parent=1 // pred_fallthru
      _
    // Predicated region
    $region22: #{dqn_forward.3} parent=1 // pred_check
      _
    $region23: #{dqn_forward.3} parent=1 // pred_check_branch
      %68 = sbr.rel (0) target = $region25
    $region24: #{dqn_forward.3} parent=1 // pred_region
      %70 = vsyncadd [#allocation9], 0
      %s71 = sshll.u32 %s5, 4
      %s72 = int_to_ptr.hbm [resolvable:$true] %s71
      %s73 = sshll.u32 [#allocation10], 4
      %s74 = int_to_ptr.vmem [resolvable:$true] %s73
      %79 = dma.hbm_to_vmem [thread:$0]  %s72, 8192, %s74, [#allocation9], 64, 64, 4
    $region25: #{dqn_forward.3} parent=1 // pred_fallthru
      _
    // Predicated region
    $region26: #{dqn_forward.3} parent=1 // pred_check
      _
    $region27: #{dqn_forward.3} parent=1 // pred_check_branch
      %81 = sbr.rel (0) target = $region29
    $region28: #{dqn_forward.3} parent=1 // pred_region
      %83 = vsyncadd [#allocation12], 0
      %s85 = sshll.u32 %s6, 4
      %s86 = int_to_ptr.hbm [resolvable:$true] %s85
      %s87 = sshll.u32 [#allocation11], 4
      %s88 = int_to_ptr.vmem [resolvable:$true] %s87
      %90 = dma.hbm_to_vmem [thread:$0]  %s86, 16, %s88, [#allocation12]
    $region29: #{dqn_forward.3} parent=1 // pred_fallthru
      _
    // Predicated region
    $region30: #{dqn_forward.3} parent=1 // pred_check
      _
    $region31: #{dqn_forward.3} parent=1 // pred_check_branch
      %92 = sbr.rel (0) target = $region33
    $region32: #{dqn_forward.3} parent=1 // pred_region
      %94 = dma.done [#allocation3], 131072
    $region33: #{dqn_forward.3} parent=1 // pred_fallthru
      _
    // Predicated region
    $region34: #{dqn_forward.3} parent=1 // pred_check
      _
    $region35: #{dqn_forward.3} parent=1 // pred_check_branch
      %96 = sbr.rel (0) target = $region37
    $region36: #{dqn_forward.3} parent=1 // pred_region
      %98 = dma.done [#allocation6], 64
    $region37: #{dqn_forward.3} parent=1 // pred_fallthru
      _
    // Predicated region
    $region38: #{dqn_forward.3} parent=1 // pred_check
      _
    $region39: #{dqn_forward.3} parent=1 // pred_check_branch
      %100 = sbr.rel (0) target = $region41
    $region40: #{dqn_forward.3} parent=1 // pred_region
      %102 = dma.done [#allocation6], 32768
    $region41: #{dqn_forward.3} parent=1 // pred_fallthru
      _
    // Predicated region
    $region42: #{dqn_forward.3} parent=1 // pred_check
      _
    $region43: #{dqn_forward.3} parent=1 // pred_check_branch
      %104 = sbr.rel (0) target = $region45
    $region44: #{dqn_forward.3} parent=1 // pred_region
      %106 = dma.done [#allocation9], 128
    $region45: #{dqn_forward.3} parent=1 // pred_fallthru
      _
    // Predicated region
    $region46: #{dqn_forward.3} parent=1 // pred_check
      _
    $region47: #{dqn_forward.3} parent=1 // pred_check_branch
      %108 = sbr.rel (0) target = $region49
    $region48: #{dqn_forward.3} parent=1 // pred_region
      %110 = dma.done [#allocation9], 8192
    $region49: #{dqn_forward.3} parent=1 // pred_fallthru
      _
    // Predicated region
    $region50: #{dqn_forward.3} parent=1 // pred_check
      _
    $region51: #{dqn_forward.3} parent=1 // pred_check_branch
      %112 = sbr.rel (0) target = $region53
    $region52: #{dqn_forward.3} parent=1 // pred_region
      %114 = dma.done [#allocation12], 16
    $region53: #{dqn_forward.3} parent=1 // pred_fallthru
      _
    %v115 = vld [vmem:[%s0] sm:$0xff]
    %v116 = vld [vmem:[%s0 + $0x8] sm:$0xff]
    %v117 = vld [vmem:[%s0 + $0x10] sm:$0xff]
    %v118 = vld [vmem:[%s0 + $0x18] sm:$0xff]
    %v119 = vld [vmem:[%s0 + $0x20] sm:$0xff]
    %v120 = vld [vmem:[%s0 + $0x28] sm:$0xff]
    %v121 = vld [vmem:[%s0 + $0x30] sm:$0xff]
    %v122 = vld [vmem:[%s0 + $0x38] sm:$0xff]
    %v123 = vld [vmem:[#allocation2] sm:$0xff]
    %v124 = vld [vmem:[#allocation2 + $0x8] sm:$0xff]
    %v125 = vld [vmem:[#allocation2 + $0x10] sm:$0xff]
    %v126 = vld [vmem:[#allocation2 + $0x18] sm:$0xff]
    %v127 = vld [vmem:[#allocation2 + $0x20] sm:$0xff]
    %v128 = vld [vmem:[#allocation2 + $0x28] sm:$0xff]
    %v129 = vld [vmem:[#allocation2 + $0x30] sm:$0xff]
    %v130 = vld [vmem:[#allocation2 + $0x38] sm:$0xff]
    %v131 = vld [vmem:[#allocation2 + $0x40] sm:$0xff]
    %v132 = vld [vmem:[#allocation2 + $0x48] sm:$0xff]
    %v133 = vld [vmem:[#allocation2 + $0x50] sm:$0xff]
    %v134 = vld [vmem:[#allocation2 + $0x58] sm:$0xff]
    %v135 = vld [vmem:[#allocation2 + $0x60] sm:$0xff]
    %v136 = vld [vmem:[#allocation2 + $0x68] sm:$0xff]
    %v137 = vld [vmem:[#allocation2 + $0x70] sm:$0xff]
    %v138 = vld [vmem:[#allocation2 + $0x78] sm:$0xff]
    %v139 = vld [vmem:[#allocation2 + $0x80] sm:$0xff]
    %v140 = vld [vmem:[#allocation2 + $0x88] sm:$0xff]
    %v141 = vld [vmem:[#allocation2 + $0x90] sm:$0xff]
    %v142 = vld [vmem:[#allocation2 + $0x98] sm:$0xff]
    %v143 = vld [vmem:[#allocation2 + $0xa0] sm:$0xff]
    %v144 = vld [vmem:[#allocation2 + $0xa8] sm:$0xff]
    %v145 = vld [vmem:[#allocation2 + $0xb0] sm:$0xff]
    %v146 = vld [vmem:[#allocation2 + $0xb8] sm:$0xff]
    %v147 = vld [vmem:[#allocation2 + $0xc0] sm:$0xff]
    %v148 = vld [vmem:[#allocation2 + $0xc8] sm:$0xff]
    %v149 = vld [vmem:[#allocation2 + $0xd0] sm:$0xff]
    %v150 = vld [vmem:[#allocation2 + $0xd8] sm:$0xff]
    %v151 = vld [vmem:[#allocation2 + $0xe0] sm:$0xff]
    %v152 = vld [vmem:[#allocation2 + $0xe8] sm:$0xff]
    %v153 = vld [vmem:[#allocation2 + $0xf0] sm:$0xff]
    %v154 = vld [vmem:[#allocation2 + $0xf8] sm:$0xff]
    %v155 = vld [vmem:[#allocation2 + $0x100] sm:$0xff]
    %v156 = vld [vmem:[#allocation2 + $0x108] sm:$0xff]
    %v157 = vld [vmem:[#allocation2 + $0x110] sm:$0xff]
    %v158 = vld [vmem:[#allocation2 + $0x118] sm:$0xff]
    %v159 = vld [vmem:[#allocation2 + $0x120] sm:$0xff]
    %v160 = vld [vmem:[#allocation2 + $0x128] sm:$0xff]
    %v161 = vld [vmem:[#allocation2 + $0x130] sm:$0xff]
    %v162 = vld [vmem:[#allocation2 + $0x138] sm:$0xff]
    %v163 = vld [vmem:[#allocation2 + $0x140] sm:$0xff]
    %v164 = vld [vmem:[#allocation2 + $0x148] sm:$0xff]
    %v165 = vld [vmem:[#allocation2 + $0x150] sm:$0xff]
    %v166 = vld [vmem:[#allocation2 + $0x158] sm:$0xff]
    %v167 = vld [vmem:[#allocation2 + $0x160] sm:$0xff]
    %v168 = vld [vmem:[#allocation2 + $0x168] sm:$0xff]
    %v169 = vld [vmem:[#allocation2 + $0x170] sm:$0xff]
    %v170 = vld [vmem:[#allocation2 + $0x178] sm:$0xff]
    %v171 = vld [vmem:[#allocation2 + $0x180] sm:$0xff]
    %v172 = vld [vmem:[#allocation2 + $0x188] sm:$0xff]
    %v173 = vld [vmem:[#allocation2 + $0x190] sm:$0xff]
    %v174 = vld [vmem:[#allocation2 + $0x198] sm:$0xff]
    %v175 = vld [vmem:[#allocation2 + $0x1a0] sm:$0xff]
    %v176 = vld [vmem:[#allocation2 + $0x1a8] sm:$0xff]
    %v177 = vld [vmem:[#allocation2 + $0x1b0] sm:$0xff]
    %v178 = vld [vmem:[#allocation2 + $0x1b8] sm:$0xff]
    %v179 = vld [vmem:[#allocation2 + $0x1c0] sm:$0xff]
    %v180 = vld [vmem:[#allocation2 + $0x1c8] sm:$0xff]
    %v181 = vld [vmem:[#allocation2 + $0x1d0] sm:$0xff]
    %v182 = vld [vmem:[#allocation2 + $0x1d8] sm:$0xff]
    %v183 = vld [vmem:[#allocation2 + $0x1e0] sm:$0xff]
    %v184 = vld [vmem:[#allocation2 + $0x1e8] sm:$0xff]
    %v185 = vld [vmem:[#allocation2 + $0x1f0] sm:$0xff]
    %v186 = vld [vmem:[#allocation2 + $0x1f8] sm:$0xff]
    %v187 = vld [vmem:[#allocation2 + $0x200] sm:$0xff]
    %v188 = vld [vmem:[#allocation2 + $0x208] sm:$0xff]
    %v189 = vld [vmem:[#allocation2 + $0x210] sm:$0xff]
    %v190 = vld [vmem:[#allocation2 + $0x218] sm:$0xff]
    %v191 = vld [vmem:[#allocation2 + $0x220] sm:$0xff]
    %v192 = vld [vmem:[#allocation2 + $0x228] sm:$0xff]
    %v193 = vld [vmem:[#allocation2 + $0x230] sm:$0xff]
    %v194 = vld [vmem:[#allocation2 + $0x238] sm:$0xff]
    %v195 = vld [vmem:[#allocation2 + $0x240] sm:$0xff]
    %v196 = vld [vmem:[#allocation2 + $0x248] sm:$0xff]
    %v197 = vld [vmem:[#allocation2 + $0x250] sm:$0xff]
    %v198 = vld [vmem:[#allocation2 + $0x258] sm:$0xff]
    %v199 = vld [vmem:[#allocation2 + $0x260] sm:$0xff]
    %v200 = vld [vmem:[#allocation2 + $0x268] sm:$0xff]
    %v201 = vld [vmem:[#allocation2 + $0x270] sm:$0xff]
    %v202 = vld [vmem:[#allocation2 + $0x278] sm:$0xff]
    %v203 = vld [vmem:[#allocation2 + $0x280] sm:$0xff]
    %v204 = vld [vmem:[#allocation2 + $0x288] sm:$0xff]
    %v205 = vld [vmem:[#allocation2 + $0x290] sm:$0xff]
    %v206 = vld [vmem:[#allocation2 + $0x298] sm:$0xff]
    %v207 = vld [vmem:[#allocation2 + $0x2a0] sm:$0xff]
    %v208 = vld [vmem:[#allocation2 + $0x2a8] sm:$0xff]
    %v209 = vld [vmem:[#allocation2 + $0x2b0] sm:$0xff]
    %v210 = vld [vmem:[#allocation2 + $0x2b8] sm:$0xff]
    %v211 = vld [vmem:[#allocation2 + $0x2c0] sm:$0xff]
    %v212 = vld [vmem:[#allocation2 + $0x2c8] sm:$0xff]
    %v213 = vld [vmem:[#allocation2 + $0x2d0] sm:$0xff]
    %v214 = vld [vmem:[#allocation2 + $0x2d8] sm:$0xff]
    %v215 = vld [vmem:[#allocation2 + $0x2e0] sm:$0xff]
    %v216 = vld [vmem:[#allocation2 + $0x2e8] sm:$0xff]
    %v217 = vld [vmem:[#allocation2 + $0x2f0] sm:$0xff]
    %v218 = vld [vmem:[#allocation2 + $0x2f8] sm:$0xff]
    %v219 = vld [vmem:[#allocation2 + $0x300] sm:$0xff]
    %v220 = vld [vmem:[#allocation2 + $0x308] sm:$0xff]
    %v221 = vld [vmem:[#allocation2 + $0x310] sm:$0xff]
    %v222 = vld [vmem:[#allocation2 + $0x318] sm:$0xff]
    %v223 = vld [vmem:[#allocation2 + $0x320] sm:$0xff]
    %v224 = vld [vmem:[#allocation2 + $0x328] sm:$0xff]
    %v225 = vld [vmem:[#allocation2 + $0x330] sm:$0xff]
    %v226 = vld [vmem:[#allocation2 + $0x338] sm:$0xff]
    %v227 = vld [vmem:[#allocation2 + $0x340] sm:$0xff]
    %v228 = vld [vmem:[#allocation2 + $0x348] sm:$0xff]
    %v229 = vld [vmem:[#allocation2 + $0x350] sm:$0xff]
    %v230 = vld [vmem:[#allocation2 + $0x358] sm:$0xff]
    %v231 = vld [vmem:[#allocation2 + $0x360] sm:$0xff]
    %v232 = vld [vmem:[#allocation2 + $0x368] sm:$0xff]
    %v233 = vld [vmem:[#allocation2 + $0x370] sm:$0xff]
    %v234 = vld [vmem:[#allocation2 + $0x378] sm:$0xff]
    %v235 = vld [vmem:[#allocation2 + $0x380] sm:$0xff]
    %v236 = vld [vmem:[#allocation2 + $0x388] sm:$0xff]
    %v237 = vld [vmem:[#allocation2 + $0x390] sm:$0xff]
    %v238 = vld [vmem:[#allocation2 + $0x398] sm:$0xff]
    %v239 = vld [vmem:[#allocation2 + $0x3a0] sm:$0xff]
    %v240 = vld [vmem:[#allocation2 + $0x3a8] sm:$0xff]
    %v241 = vld [vmem:[#allocation2 + $0x3b0] sm:$0xff]
    %v242 = vld [vmem:[#allocation2 + $0x3b8] sm:$0xff]
    %v243 = vld [vmem:[#allocation2 + $0x3c0] sm:$0xff]
    %v244 = vld [vmem:[#allocation2 + $0x3c8] sm:$0xff]
    %v245 = vld [vmem:[#allocation2 + $0x3d0] sm:$0xff]
    %v246 = vld [vmem:[#allocation2 + $0x3d8] sm:$0xff]
    %v247 = vld [vmem:[#allocation2 + $0x3e0] sm:$0xff]
    %v248 = vld [vmem:[#allocation2 + $0x3e8] sm:$0xff]
    %v249 = vld [vmem:[#allocation2 + $0x3f0] sm:$0xff]
    %v250 = vld [vmem:[#allocation2 + $0x3f8] sm:$0xff]
    %v251 = vld [vmem:[#allocation2 + $0x400] sm:$0xff]
    %v252 = vld [vmem:[#allocation2 + $0x408] sm:$0xff]
    %v253 = vld [vmem:[#allocation2 + $0x410] sm:$0xff]
    %v254 = vld [vmem:[#allocation2 + $0x418] sm:$0xff]
    %v255 = vld [vmem:[#allocation2 + $0x420] sm:$0xff]
    %v256 = vld [vmem:[#allocation2 + $0x428] sm:$0xff]
    %v257 = vld [vmem:[#allocation2 + $0x430] sm:$0xff]
    %v258 = vld [vmem:[#allocation2 + $0x438] sm:$0xff]
    %v259 = vld [vmem:[#allocation2 + $0x440] sm:$0xff]
    %v260 = vld [vmem:[#allocation2 + $0x448] sm:$0xff]
    %v261 = vld [vmem:[#allocation2 + $0x450] sm:$0xff]
    %v262 = vld [vmem:[#allocation2 + $0x458] sm:$0xff]
    %v263 = vld [vmem:[#allocation2 + $0x460] sm:$0xff]
    %v264 = vld [vmem:[#allocation2 + $0x468] sm:$0xff]
    %v265 = vld [vmem:[#allocation2 + $0x470] sm:$0xff]
    %v266 = vld [vmem:[#allocation2 + $0x478] sm:$0xff]
    %v267 = vld [vmem:[#allocation2 + $0x480] sm:$0xff]
    %v268 = vld [vmem:[#allocation2 + $0x488] sm:$0xff]
    %v269 = vld [vmem:[#allocation2 + $0x490] sm:$0xff]
    %v270 = vld [vmem:[#allocation2 + $0x498] sm:$0xff]
    %v271 = vld [vmem:[#allocation2 + $0x4a0] sm:$0xff]
    %v272 = vld [vmem:[#allocation2 + $0x4a8] sm:$0xff]
    %v273 = vld [vmem:[#allocation2 + $0x4b0] sm:$0xff]
    %v274 = vld [vmem:[#allocation2 + $0x4b8] sm:$0xff]
    %v275 = vld [vmem:[#allocation2 + $0x4c0] sm:$0xff]
    %v276 = vld [vmem:[#allocation2 + $0x4c8] sm:$0xff]
    %v277 = vld [vmem:[#allocation2 + $0x4d0] sm:$0xff]
    %v278 = vld [vmem:[#allocation2 + $0x4d8] sm:$0xff]
    %v279 = vld [vmem:[#allocation2 + $0x4e0] sm:$0xff]
    %v280 = vld [vmem:[#allocation2 + $0x4e8] sm:$0xff]
    %v281 = vld [vmem:[#allocation2 + $0x4f0] sm:$0xff]
    %v282 = vld [vmem:[#allocation2 + $0x4f8] sm:$0xff]
    %v283 = vld [vmem:[#allocation2 + $0x500] sm:$0xff]
    %v284 = vld [vmem:[#allocation2 + $0x508] sm:$0xff]
    %v285 = vld [vmem:[#allocation2 + $0x510] sm:$0xff]
    %v286 = vld [vmem:[#allocation2 + $0x518] sm:$0xff]
    %v287 = vld [vmem:[#allocation2 + $0x520] sm:$0xff]
    %v288 = vld [vmem:[#allocation2 + $0x528] sm:$0xff]
    %v289 = vld [vmem:[#allocation2 + $0x530] sm:$0xff]
    %v290 = vld [vmem:[#allocation2 + $0x538] sm:$0xff]
    %v291 = vld [vmem:[#allocation2 + $0x540] sm:$0xff]
    %v292 = vld [vmem:[#allocation2 + $0x548] sm:$0xff]
    %v293 = vld [vmem:[#allocation2 + $0x550] sm:$0xff]
    %v294 = vld [vmem:[#allocation2 + $0x558] sm:$0xff]
    %v295 = vld [vmem:[#allocation2 + $0x560] sm:$0xff]
    %v296 = vld [vmem:[#allocation2 + $0x568] sm:$0xff]
    %v297 = vld [vmem:[#allocation2 + $0x570] sm:$0xff]
    %v298 = vld [vmem:[#allocation2 + $0x578] sm:$0xff]
    %v299 = vld [vmem:[#allocation2 + $0x580] sm:$0xff]
    %v300 = vld [vmem:[#allocation2 + $0x588] sm:$0xff]
    %v301 = vld [vmem:[#allocation2 + $0x590] sm:$0xff]
    %v302 = vld [vmem:[#allocation2 + $0x598] sm:$0xff]
    %v303 = vld [vmem:[#allocation2 + $0x5a0] sm:$0xff]
    %v304 = vld [vmem:[#allocation2 + $0x5a8] sm:$0xff]
    %v305 = vld [vmem:[#allocation2 + $0x5b0] sm:$0xff]
    %v306 = vld [vmem:[#allocation2 + $0x5b8] sm:$0xff]
    %v307 = vld [vmem:[#allocation2 + $0x5c0] sm:$0xff]
    %v308 = vld [vmem:[#allocation2 + $0x5c8] sm:$0xff]
    %v309 = vld [vmem:[#allocation2 + $0x5d0] sm:$0xff]
    %v310 = vld [vmem:[#allocation2 + $0x5d8] sm:$0xff]
    %v311 = vld [vmem:[#allocation2 + $0x5e0] sm:$0xff]
    %v312 = vld [vmem:[#allocation2 + $0x5e8] sm:$0xff]
    %v313 = vld [vmem:[#allocation2 + $0x5f0] sm:$0xff]
    %v314 = vld [vmem:[#allocation2 + $0x5f8] sm:$0xff]
    %v315 = vld [vmem:[#allocation2 + $0x600] sm:$0xff]
    %v316 = vld [vmem:[#allocation2 + $0x608] sm:$0xff]
    %v317 = vld [vmem:[#allocation2 + $0x610] sm:$0xff]
    %v318 = vld [vmem:[#allocation2 + $0x618] sm:$0xff]
    %v319 = vld [vmem:[#allocation2 + $0x620] sm:$0xff]
    %v320 = vld [vmem:[#allocation2 + $0x628] sm:$0xff]
    %v321 = vld [vmem:[#allocation2 + $0x630] sm:$0xff]
    %v322 = vld [vmem:[#allocation2 + $0x638] sm:$0xff]
    %v323 = vld [vmem:[#allocation2 + $0x640] sm:$0xff]
    %v324 = vld [vmem:[#allocation2 + $0x648] sm:$0xff]
    %v325 = vld [vmem:[#allocation2 + $0x650] sm:$0xff]
    %v326 = vld [vmem:[#allocation2 + $0x658] sm:$0xff]
    %v327 = vld [vmem:[#allocation2 + $0x660] sm:$0xff]
    %v328 = vld [vmem:[#allocation2 + $0x668] sm:$0xff]
    %v329 = vld [vmem:[#allocation2 + $0x670] sm:$0xff]
    %v330 = vld [vmem:[#allocation2 + $0x678] sm:$0xff]
    %v331 = vld [vmem:[#allocation2 + $0x680] sm:$0xff]
    %v332 = vld [vmem:[#allocation2 + $0x688] sm:$0xff]
    %v333 = vld [vmem:[#allocation2 + $0x690] sm:$0xff]
    %v334 = vld [vmem:[#allocation2 + $0x698] sm:$0xff]
    %v335 = vld [vmem:[#allocation2 + $0x6a0] sm:$0xff]
    %v336 = vld [vmem:[#allocation2 + $0x6a8] sm:$0xff]
    %v337 = vld [vmem:[#allocation2 + $0x6b0] sm:$0xff]
    %v338 = vld [vmem:[#allocation2 + $0x6b8] sm:$0xff]
    %v339 = vld [vmem:[#allocation2 + $0x6c0] sm:$0xff]
    %v340 = vld [vmem:[#allocation2 + $0x6c8] sm:$0xff]
    %v341 = vld [vmem:[#allocation2 + $0x6d0] sm:$0xff]
    %v342 = vld [vmem:[#allocation2 + $0x6d8] sm:$0xff]
    %v343 = vld [vmem:[#allocation2 + $0x6e0] sm:$0xff]
    %v344 = vld [vmem:[#allocation2 + $0x6e8] sm:$0xff]
    %v345 = vld [vmem:[#allocation2 + $0x6f0] sm:$0xff]
    %v346 = vld [vmem:[#allocation2 + $0x6f8] sm:$0xff]
    %v347 = vld [vmem:[#allocation2 + $0x700] sm:$0xff]
    %v348 = vld [vmem:[#allocation2 + $0x708] sm:$0xff]
    %v349 = vld [vmem:[#allocation2 + $0x710] sm:$0xff]
    %v350 = vld [vmem:[#allocation2 + $0x718] sm:$0xff]
    %v351 = vld [vmem:[#allocation2 + $0x720] sm:$0xff]
    %v352 = vld [vmem:[#allocation2 + $0x728] sm:$0xff]
    %v353 = vld [vmem:[#allocation2 + $0x730] sm:$0xff]
    %v354 = vld [vmem:[#allocation2 + $0x738] sm:$0xff]
    %v355 = vld [vmem:[#allocation2 + $0x740] sm:$0xff]
    %v356 = vld [vmem:[#allocation2 + $0x748] sm:$0xff]
    %v357 = vld [vmem:[#allocation2 + $0x750] sm:$0xff]
    %v358 = vld [vmem:[#allocation2 + $0x758] sm:$0xff]
    %v359 = vld [vmem:[#allocation2 + $0x760] sm:$0xff]
    %v360 = vld [vmem:[#allocation2 + $0x768] sm:$0xff]
    %v361 = vld [vmem:[#allocation2 + $0x770] sm:$0xff]
    %v362 = vld [vmem:[#allocation2 + $0x778] sm:$0xff]
    %v363 = vld [vmem:[#allocation2 + $0x780] sm:$0xff]
    %v364 = vld [vmem:[#allocation2 + $0x788] sm:$0xff]
    %v365 = vld [vmem:[#allocation2 + $0x790] sm:$0xff]
    %v366 = vld [vmem:[#allocation2 + $0x798] sm:$0xff]
    %v367 = vld [vmem:[#allocation2 + $0x7a0] sm:$0xff]
    %v368 = vld [vmem:[#allocation2 + $0x7a8] sm:$0xff]
    %v369 = vld [vmem:[#allocation2 + $0x7b0] sm:$0xff]
    %v370 = vld [vmem:[#allocation2 + $0x7b8] sm:$0xff]
    %v371 = vld [vmem:[#allocation2 + $0x7c0] sm:$0xff]
    %v372 = vld [vmem:[#allocation2 + $0x7c8] sm:$0xff]
    %v373 = vld [vmem:[#allocation2 + $0x7d0] sm:$0xff]
    %v374 = vld [vmem:[#allocation2 + $0x7d8] sm:$0xff]
    %v375 = vld [vmem:[#allocation2 + $0x7e0] sm:$0xff]
    %v376 = vld [vmem:[#allocation2 + $0x7e8] sm:$0xff]
    %v377 = vld [vmem:[#allocation2 + $0x7f0] sm:$0xff]
    %v378 = vld [vmem:[#allocation2 + $0x7f8] sm:$0xff]
    %v379 = vld [vmem:[#allocation2 + $0x800] sm:$0xff]
    %v380 = vld [vmem:[#allocation2 + $0x808] sm:$0xff]
    %v381 = vld [vmem:[#allocation2 + $0x810] sm:$0xff]
    %v382 = vld [vmem:[#allocation2 + $0x818] sm:$0xff]
    %v383 = vld [vmem:[#allocation2 + $0x820] sm:$0xff]
    %v384 = vld [vmem:[#allocation2 + $0x828] sm:$0xff]
    %v385 = vld [vmem:[#allocation2 + $0x830] sm:$0xff]
    %v386 = vld [vmem:[#allocation2 + $0x838] sm:$0xff]
    %v387 = vld [vmem:[#allocation2 + $0x840] sm:$0xff]
    %v388 = vld [vmem:[#allocation2 + $0x848] sm:$0xff]
    %v389 = vld [vmem:[#allocation2 + $0x850] sm:$0xff]
    %v390 = vld [vmem:[#allocation2 + $0x858] sm:$0xff]
    %v391 = vld [vmem:[#allocation2 + $0x860] sm:$0xff]
    %v392 = vld [vmem:[#allocation2 + $0x868] sm:$0xff]
    %v393 = vld [vmem:[#allocation2 + $0x870] sm:$0xff]
    %v394 = vld [vmem:[#allocation2 + $0x878] sm:$0xff]
    %v395 = vld [vmem:[#allocation2 + $0x880] sm:$0xff]
    %v396 = vld [vmem:[#allocation2 + $0x888] sm:$0xff]
    %v397 = vld [vmem:[#allocation2 + $0x890] sm:$0xff]
    %v398 = vld [vmem:[#allocation2 + $0x898] sm:$0xff]
    %v399 = vld [vmem:[#allocation2 + $0x8a0] sm:$0xff]
    %v400 = vld [vmem:[#allocation2 + $0x8a8] sm:$0xff]
    %v401 = vld [vmem:[#allocation2 + $0x8b0] sm:$0xff]
    %v402 = vld [vmem:[#allocation2 + $0x8b8] sm:$0xff]
    %v403 = vld [vmem:[#allocation2 + $0x8c0] sm:$0xff]
    %v404 = vld [vmem:[#allocation2 + $0x8c8] sm:$0xff]
    %v405 = vld [vmem:[#allocation2 + $0x8d0] sm:$0xff]
    %v406 = vld [vmem:[#allocation2 + $0x8d8] sm:$0xff]
    %v407 = vld [vmem:[#allocation2 + $0x8e0] sm:$0xff]
    %v408 = vld [vmem:[#allocation2 + $0x8e8] sm:$0xff]
    %v409 = vld [vmem:[#allocation2 + $0x8f0] sm:$0xff]
    %v410 = vld [vmem:[#allocation2 + $0x8f8] sm:$0xff]
    %v411 = vld [vmem:[#allocation2 + $0x900] sm:$0xff]
    %v412 = vld [vmem:[#allocation2 + $0x908] sm:$0xff]
    %v413 = vld [vmem:[#allocation2 + $0x910] sm:$0xff]
    %v414 = vld [vmem:[#allocation2 + $0x918] sm:$0xff]
    %v415 = vld [vmem:[#allocation2 + $0x920] sm:$0xff]
    %v416 = vld [vmem:[#allocation2 + $0x928] sm:$0xff]
    %v417 = vld [vmem:[#allocation2 + $0x930] sm:$0xff]
    %v418 = vld [vmem:[#allocation2 + $0x938] sm:$0xff]
    %v419 = vld [vmem:[#allocation2 + $0x940] sm:$0xff]
    %v420 = vld [vmem:[#allocation2 + $0x948] sm:$0xff]
    %v421 = vld [vmem:[#allocation2 + $0x950] sm:$0xff]
    %v422 = vld [vmem:[#allocation2 + $0x958] sm:$0xff]
    %v423 = vld [vmem:[#allocation2 + $0x960] sm:$0xff]
    %v424 = vld [vmem:[#allocation2 + $0x968] sm:$0xff]
    %v425 = vld [vmem:[#allocation2 + $0x970] sm:$0xff]
    %v426 = vld [vmem:[#allocation2 + $0x978] sm:$0xff]
    %v427 = vld [vmem:[#allocation2 + $0x980] sm:$0xff]
    %v428 = vld [vmem:[#allocation2 + $0x988] sm:$0xff]
    %v429 = vld [vmem:[#allocation2 + $0x990] sm:$0xff]
    %v430 = vld [vmem:[#allocation2 + $0x998] sm:$0xff]
    %v431 = vld [vmem:[#allocation2 + $0x9a0] sm:$0xff]
    %v432 = vld [vmem:[#allocation2 + $0x9a8] sm:$0xff]
    %v433 = vld [vmem:[#allocation2 + $0x9b0] sm:$0xff]
    %v434 = vld [vmem:[#allocation2 + $0x9b8] sm:$0xff]
    %v435 = vld [vmem:[#allocation2 + $0x9c0] sm:$0xff]
    %v436 = vld [vmem:[#allocation2 + $0x9c8] sm:$0xff]
    %v437 = vld [vmem:[#allocation2 + $0x9d0] sm:$0xff]
    %v438 = vld [vmem:[#allocation2 + $0x9d8] sm:$0xff]
    %v439 = vld [vmem:[#allocation2 + $0x9e0] sm:$0xff]
    %v440 = vld [vmem:[#allocation2 + $0x9e8] sm:$0xff]
    %v441 = vld [vmem:[#allocation2 + $0x9f0] sm:$0xff]
    %v442 = vld [vmem:[#allocation2 + $0x9f8] sm:$0xff]
    %v443 = vld [vmem:[#allocation2 + $0xa00] sm:$0xff]
    %v444 = vld [vmem:[#allocation2 + $0xa08] sm:$0xff]
    %v445 = vld [vmem:[#allocation2 + $0xa10] sm:$0xff]
    %v446 = vld [vmem:[#allocation2 + $0xa18] sm:$0xff]
    %v447 = vld [vmem:[#allocation2 + $0xa20] sm:$0xff]
    %v448 = vld [vmem:[#allocation2 + $0xa28] sm:$0xff]
    %v449 = vld [vmem:[#allocation2 + $0xa30] sm:$0xff]
    %v450 = vld [vmem:[#allocation2 + $0xa38] sm:$0xff]
    %v451 = vld [vmem:[#allocation2 + $0xa40] sm:$0xff]
    %v452 = vld [vmem:[#allocation2 + $0xa48] sm:$0xff]
    %v453 = vld [vmem:[#allocation2 + $0xa50] sm:$0xff]
    %v454 = vld [vmem:[#allocation2 + $0xa58] sm:$0xff]
    %v455 = vld [vmem:[#allocation2 + $0xa60] sm:$0xff]
    %v456 = vld [vmem:[#allocation2 + $0xa68] sm:$0xff]
    %v457 = vld [vmem:[#allocation2 + $0xa70] sm:$0xff]
    %v458 = vld [vmem:[#allocation2 + $0xa78] sm:$0xff]
    %v459 = vld [vmem:[#allocation2 + $0xa80] sm:$0xff]
    %v460 = vld [vmem:[#allocation2 + $0xa88] sm:$0xff]
    %v461 = vld [vmem:[#allocation2 + $0xa90] sm:$0xff]
    %v462 = vld [vmem:[#allocation2 + $0xa98] sm:$0xff]
    %v463 = vld [vmem:[#allocation2 + $0xaa0] sm:$0xff]
    %v464 = vld [vmem:[#allocation2 + $0xaa8] sm:$0xff]
    %v465 = vld [vmem:[#allocation2 + $0xab0] sm:$0xff]
    %v466 = vld [vmem:[#allocation2 + $0xab8] sm:$0xff]
    %v467 = vld [vmem:[#allocation2 + $0xac0] sm:$0xff]
    %v468 = vld [vmem:[#allocation2 + $0xac8] sm:$0xff]
    %v469 = vld [vmem:[#allocation2 + $0xad0] sm:$0xff]
    %v470 = vld [vmem:[#allocation2 + $0xad8] sm:$0xff]
    %v471 = vld [vmem:[#allocation2 + $0xae0] sm:$0xff]
    %v472 = vld [vmem:[#allocation2 + $0xae8] sm:$0xff]
    %v473 = vld [vmem:[#allocation2 + $0xaf0] sm:$0xff]
    %v474 = vld [vmem:[#allocation2 + $0xaf8] sm:$0xff]
    %v475 = vld [vmem:[#allocation2 + $0xb00] sm:$0xff]
    %v476 = vld [vmem:[#allocation2 + $0xb08] sm:$0xff]
    %v477 = vld [vmem:[#allocation2 + $0xb10] sm:$0xff]
    %v478 = vld [vmem:[#allocation2 + $0xb18] sm:$0xff]
    %v479 = vld [vmem:[#allocation2 + $0xb20] sm:$0xff]
    %v480 = vld [vmem:[#allocation2 + $0xb28] sm:$0xff]
    %v481 = vld [vmem:[#allocation2 + $0xb30] sm:$0xff]
    %v482 = vld [vmem:[#allocation2 + $0xb38] sm:$0xff]
    %v483 = vld [vmem:[#allocation2 + $0xb40] sm:$0xff]
    %v484 = vld [vmem:[#allocation2 + $0xb48] sm:$0xff]
    %v485 = vld [vmem:[#allocation2 + $0xb50] sm:$0xff]
    %v486 = vld [vmem:[#allocation2 + $0xb58] sm:$0xff]
    %v487 = vld [vmem:[#allocation2 + $0xb60] sm:$0xff]
    %v488 = vld [vmem:[#allocation2 + $0xb68] sm:$0xff]
    %v489 = vld [vmem:[#allocation2 + $0xb70] sm:$0xff]
    %v490 = vld [vmem:[#allocation2 + $0xb78] sm:$0xff]
    %v491 = vld [vmem:[#allocation2 + $0xb80] sm:$0xff]
    %v492 = vld [vmem:[#allocation2 + $0xb88] sm:$0xff]
    %v493 = vld [vmem:[#allocation2 + $0xb90] sm:$0xff]
    %v494 = vld [vmem:[#allocation2 + $0xb98] sm:$0xff]
    %v495 = vld [vmem:[#allocation2 + $0xba0] sm:$0xff]
    %v496 = vld [vmem:[#allocation2 + $0xba8] sm:$0xff]
    %v497 = vld [vmem:[#allocation2 + $0xbb0] sm:$0xff]
    %v498 = vld [vmem:[#allocation2 + $0xbb8] sm:$0xff]
    %v499 = vld [vmem:[#allocation2 + $0xbc0] sm:$0xff]
    %v500 = vld [vmem:[#allocation2 + $0xbc8] sm:$0xff]
    %v501 = vld [vmem:[#allocation2 + $0xbd0] sm:$0xff]
    %v502 = vld [vmem:[#allocation2 + $0xbd8] sm:$0xff]
    %v503 = vld [vmem:[#allocation2 + $0xbe0] sm:$0xff]
    %v504 = vld [vmem:[#allocation2 + $0xbe8] sm:$0xff]
    %v505 = vld [vmem:[#allocation2 + $0xbf0] sm:$0xff]
    %v506 = vld [vmem:[#allocation2 + $0xbf8] sm:$0xff]
    %v507 = vld [vmem:[#allocation2 + $0xc00] sm:$0xff]
    %v508 = vld [vmem:[#allocation2 + $0xc08] sm:$0xff]
    %v509 = vld [vmem:[#allocation2 + $0xc10] sm:$0xff]
    %v510 = vld [vmem:[#allocation2 + $0xc18] sm:$0xff]
    %v511 = vld [vmem:[#allocation2 + $0xc20] sm:$0xff]
    %v512 = vld [vmem:[#allocation2 + $0xc28] sm:$0xff]
    %v513 = vld [vmem:[#allocation2 + $0xc30] sm:$0xff]
    %v514 = vld [vmem:[#allocation2 + $0xc38] sm:$0xff]
    %v515 = vld [vmem:[#allocation2 + $0xc40] sm:$0xff]
    %v516 = vld [vmem:[#allocation2 + $0xc48] sm:$0xff]
    %v517 = vld [vmem:[#allocation2 + $0xc50] sm:$0xff]
    %v518 = vld [vmem:[#allocation2 + $0xc58] sm:$0xff]
    %v519 = vld [vmem:[#allocation2 + $0xc60] sm:$0xff]
    %v520 = vld [vmem:[#allocation2 + $0xc68] sm:$0xff]
    %v521 = vld [vmem:[#allocation2 + $0xc70] sm:$0xff]
    %v522 = vld [vmem:[#allocation2 + $0xc78] sm:$0xff]
    %v523 = vld [vmem:[#allocation2 + $0xc80] sm:$0xff]
    %v524 = vld [vmem:[#allocation2 + $0xc88] sm:$0xff]
    %v525 = vld [vmem:[#allocation2 + $0xc90] sm:$0xff]
    %v526 = vld [vmem:[#allocation2 + $0xc98] sm:$0xff]
    %v527 = vld [vmem:[#allocation2 + $0xca0] sm:$0xff]
    %v528 = vld [vmem:[#allocation2 + $0xca8] sm:$0xff]
    %v529 = vld [vmem:[#allocation2 + $0xcb0] sm:$0xff]
    %v530 = vld [vmem:[#allocation2 + $0xcb8] sm:$0xff]
    %v531 = vld [vmem:[#allocation2 + $0xcc0] sm:$0xff]
    %v532 = vld [vmem:[#allocation2 + $0xcc8] sm:$0xff]
    %v533 = vld [vmem:[#allocation2 + $0xcd0] sm:$0xff]
    %v534 = vld [vmem:[#allocation2 + $0xcd8] sm:$0xff]
    %v535 = vld [vmem:[#allocation2 + $0xce0] sm:$0xff]
    %v536 = vld [vmem:[#allocation2 + $0xce8] sm:$0xff]
    %v537 = vld [vmem:[#allocation2 + $0xcf0] sm:$0xff]
    %v538 = vld [vmem:[#allocation2 + $0xcf8] sm:$0xff]
    %v539 = vld [vmem:[#allocation2 + $0xd00] sm:$0xff]
    %v540 = vld [vmem:[#allocation2 + $0xd08] sm:$0xff]
    %v541 = vld [vmem:[#allocation2 + $0xd10] sm:$0xff]
    %v542 = vld [vmem:[#allocation2 + $0xd18] sm:$0xff]
    %v543 = vld [vmem:[#allocation2 + $0xd20] sm:$0xff]
    %v544 = vld [vmem:[#allocation2 + $0xd28] sm:$0xff]
    %v545 = vld [vmem:[#allocation2 + $0xd30] sm:$0xff]
    %v546 = vld [vmem:[#allocation2 + $0xd38] sm:$0xff]
    %v547 = vld [vmem:[#allocation2 + $0xd40] sm:$0xff]
    %v548 = vld [vmem:[#allocation2 + $0xd48] sm:$0xff]
    %v549 = vld [vmem:[#allocation2 + $0xd50] sm:$0xff]
    %v550 = vld [vmem:[#allocation2 + $0xd58] sm:$0xff]
    %v551 = vld [vmem:[#allocation2 + $0xd60] sm:$0xff]
    %v552 = vld [vmem:[#allocation2 + $0xd68] sm:$0xff]
    %v553 = vld [vmem:[#allocation2 + $0xd70] sm:$0xff]
    %v554 = vld [vmem:[#allocation2 + $0xd78] sm:$0xff]
    %v555 = vld [vmem:[#allocation2 + $0xd80] sm:$0xff]
    %v556 = vld [vmem:[#allocation2 + $0xd88] sm:$0xff]
    %v557 = vld [vmem:[#allocation2 + $0xd90] sm:$0xff]
    %v558 = vld [vmem:[#allocation2 + $0xd98] sm:$0xff]
    %v559 = vld [vmem:[#allocation2 + $0xda0] sm:$0xff]
    %v560 = vld [vmem:[#allocation2 + $0xda8] sm:$0xff]
    %v561 = vld [vmem:[#allocation2 + $0xdb0] sm:$0xff]
    %v562 = vld [vmem:[#allocation2 + $0xdb8] sm:$0xff]
    %v563 = vld [vmem:[#allocation2 + $0xdc0] sm:$0xff]
    %v564 = vld [vmem:[#allocation2 + $0xdc8] sm:$0xff]
    %v565 = vld [vmem:[#allocation2 + $0xdd0] sm:$0xff]
    %v566 = vld [vmem:[#allocation2 + $0xdd8] sm:$0xff]
    %v567 = vld [vmem:[#allocation2 + $0xde0] sm:$0xff]
    %v568 = vld [vmem:[#allocation2 + $0xde8] sm:$0xff]
    %v569 = vld [vmem:[#allocation2 + $0xdf0] sm:$0xff]
    %v570 = vld [vmem:[#allocation2 + $0xdf8] sm:$0xff]
    %v571 = vld [vmem:[#allocation2 + $0xe00] sm:$0xff]
    %v572 = vld [vmem:[#allocation2 + $0xe08] sm:$0xff]
    %v573 = vld [vmem:[#allocation2 + $0xe10] sm:$0xff]
    %v574 = vld [vmem:[#allocation2 + $0xe18] sm:$0xff]
    %v575 = vld [vmem:[#allocation2 + $0xe20] sm:$0xff]
    %v576 = vld [vmem:[#allocation2 + $0xe28] sm:$0xff]
    %v577 = vld [vmem:[#allocation2 + $0xe30] sm:$0xff]
    %v578 = vld [vmem:[#allocation2 + $0xe38] sm:$0xff]
    %v579 = vld [vmem:[#allocation2 + $0xe40] sm:$0xff]
    %v580 = vld [vmem:[#allocation2 + $0xe48] sm:$0xff]
    %v581 = vld [vmem:[#allocation2 + $0xe50] sm:$0xff]
    %v582 = vld [vmem:[#allocation2 + $0xe58] sm:$0xff]
    %v583 = vld [vmem:[#allocation2 + $0xe60] sm:$0xff]
    %v584 = vld [vmem:[#allocation2 + $0xe68] sm:$0xff]
    %v585 = vld [vmem:[#allocation2 + $0xe70] sm:$0xff]
    %v586 = vld [vmem:[#allocation2 + $0xe78] sm:$0xff]
    %v587 = vld [vmem:[#allocation2 + $0xe80] sm:$0xff]
    %v588 = vld [vmem:[#allocation2 + $0xe88] sm:$0xff]
    %v589 = vld [vmem:[#allocation2 + $0xe90] sm:$0xff]
    %v590 = vld [vmem:[#allocation2 + $0xe98] sm:$0xff]
    %v591 = vld [vmem:[#allocation2 + $0xea0] sm:$0xff]
    %v592 = vld [vmem:[#allocation2 + $0xea8] sm:$0xff]
    %v593 = vld [vmem:[#allocation2 + $0xeb0] sm:$0xff]
    %v594 = vld [vmem:[#allocation2 + $0xeb8] sm:$0xff]
    %v595 = vld [vmem:[#allocation2 + $0xec0] sm:$0xff]
    %v596 = vld [vmem:[#allocation2 + $0xec8] sm:$0xff]
    %v597 = vld [vmem:[#allocation2 + $0xed0] sm:$0xff]
    %v598 = vld [vmem:[#allocation2 + $0xed8] sm:$0xff]
    %v599 = vld [vmem:[#allocation2 + $0xee0] sm:$0xff]
    %v600 = vld [vmem:[#allocation2 + $0xee8] sm:$0xff]
    %v601 = vld [vmem:[#allocation2 + $0xef0] sm:$0xff]
    %v602 = vld [vmem:[#allocation2 + $0xef8] sm:$0xff]
    %v603 = vld [vmem:[#allocation2 + $0xf00] sm:$0xff]
    %v604 = vld [vmem:[#allocation2 + $0xf08] sm:$0xff]
    %v605 = vld [vmem:[#allocation2 + $0xf10] sm:$0xff]
    %v606 = vld [vmem:[#allocation2 + $0xf18] sm:$0xff]
    %v607 = vld [vmem:[#allocation2 + $0xf20] sm:$0xff]
    %v608 = vld [vmem:[#allocation2 + $0xf28] sm:$0xff]
    %v609 = vld [vmem:[#allocation2 + $0xf30] sm:$0xff]
    %v610 = vld [vmem:[#allocation2 + $0xf38] sm:$0xff]
    %v611 = vld [vmem:[#allocation2 + $0xf40] sm:$0xff]
    %v612 = vld [vmem:[#allocation2 + $0xf48] sm:$0xff]
    %v613 = vld [vmem:[#allocation2 + $0xf50] sm:$0xff]
    %v614 = vld [vmem:[#allocation2 + $0xf58] sm:$0xff]
    %v615 = vld [vmem:[#allocation2 + $0xf60] sm:$0xff]
    %v616 = vld [vmem:[#allocation2 + $0xf68] sm:$0xff]
    %v617 = vld [vmem:[#allocation2 + $0xf70] sm:$0xff]
    %v618 = vld [vmem:[#allocation2 + $0xf78] sm:$0xff]
    %v619 = vld [vmem:[#allocation2 + $0xf80] sm:$0xff]
    %v620 = vld [vmem:[#allocation2 + $0xf88] sm:$0xff]
    %v621 = vld [vmem:[#allocation2 + $0xf90] sm:$0xff]
    %v622 = vld [vmem:[#allocation2 + $0xf98] sm:$0xff]
    %v623 = vld [vmem:[#allocation2 + $0xfa0] sm:$0xff]
    %v624 = vld [vmem:[#allocation2 + $0xfa8] sm:$0xff]
    %v625 = vld [vmem:[#allocation2 + $0xfb0] sm:$0xff]
    %v626 = vld [vmem:[#allocation2 + $0xfb8] sm:$0xff]
    %v627 = vld [vmem:[#allocation2 + $0xfc0] sm:$0xff]
    %v628 = vld [vmem:[#allocation2 + $0xfc8] sm:$0xff]
    %v629 = vld [vmem:[#allocation2 + $0xfd0] sm:$0xff]
    %v630 = vld [vmem:[#allocation2 + $0xfd8] sm:$0xff]
    %v631 = vld [vmem:[#allocation2 + $0xfe0] sm:$0xff]
    %v632 = vld [vmem:[#allocation2 + $0xfe8] sm:$0xff]
    %v633 = vld [vmem:[#allocation2 + $0xff0] sm:$0xff]
    %v634 = vld [vmem:[#allocation2 + $0xff8] sm:$0xff]
    %v635 = vld [vmem:[#allocation2 + $0x1000] sm:$0xff]
    %v636 = vld [vmem:[#allocation2 + $0x1008] sm:$0xff]
    %v637 = vld [vmem:[#allocation2 + $0x1010] sm:$0xff]
    %v638 = vld [vmem:[#allocation2 + $0x1018] sm:$0xff]
    %v639 = vld [vmem:[#allocation2 + $0x1020] sm:$0xff]
    %v640 = vld [vmem:[#allocation2 + $0x1028] sm:$0xff]
    %v641 = vld [vmem:[#allocation2 + $0x1030] sm:$0xff]
    %v642 = vld [vmem:[#allocation2 + $0x1038] sm:$0xff]
    %v643 = vld [vmem:[#allocation2 + $0x1040] sm:$0xff]
    %v644 = vld [vmem:[#allocation2 + $0x1048] sm:$0xff]
    %v645 = vld [vmem:[#allocation2 + $0x1050] sm:$0xff]
    %v646 = vld [vmem:[#allocation2 + $0x1058] sm:$0xff]
    %v647 = vld [vmem:[#allocation2 + $0x1060] sm:$0xff]
    %v648 = vld [vmem:[#allocation2 + $0x1068] sm:$0xff]
    %v649 = vld [vmem:[#allocation2 + $0x1070] sm:$0xff]
    %v650 = vld [vmem:[#allocation2 + $0x1078] sm:$0xff]
    %v651 = vld [vmem:[#allocation2 + $0x1080] sm:$0xff]
    %v652 = vld [vmem:[#allocation2 + $0x1088] sm:$0xff]
    %v653 = vld [vmem:[#allocation2 + $0x1090] sm:$0xff]
    %v654 = vld [vmem:[#allocation2 + $0x1098] sm:$0xff]
    %v655 = vld [vmem:[#allocation2 + $0x10a0] sm:$0xff]
    %v656 = vld [vmem:[#allocation2 + $0x10a8] sm:$0xff]
    %v657 = vld [vmem:[#allocation2 + $0x10b0] sm:$0xff]
    %v658 = vld [vmem:[#allocation2 + $0x10b8] sm:$0xff]
    %v659 = vld [vmem:[#allocation2 + $0x10c0] sm:$0xff]
    %v660 = vld [vmem:[#allocation2 + $0x10c8] sm:$0xff]
    %v661 = vld [vmem:[#allocation2 + $0x10d0] sm:$0xff]
    %v662 = vld [vmem:[#allocation2 + $0x10d8] sm:$0xff]
    %v663 = vld [vmem:[#allocation2 + $0x10e0] sm:$0xff]
    %v664 = vld [vmem:[#allocation2 + $0x10e8] sm:$0xff]
    %v665 = vld [vmem:[#allocation2 + $0x10f0] sm:$0xff]
    %v666 = vld [vmem:[#allocation2 + $0x10f8] sm:$0xff]
    %v667 = vld [vmem:[#allocation2 + $0x1100] sm:$0xff]
    %v668 = vld [vmem:[#allocation2 + $0x1108] sm:$0xff]
    %v669 = vld [vmem:[#allocation2 + $0x1110] sm:$0xff]
    %v670 = vld [vmem:[#allocation2 + $0x1118] sm:$0xff]
    %v671 = vld [vmem:[#allocation2 + $0x1120] sm:$0xff]
    %v672 = vld [vmem:[#allocation2 + $0x1128] sm:$0xff]
    %v673 = vld [vmem:[#allocation2 + $0x1130] sm:$0xff]
    %v674 = vld [vmem:[#allocation2 + $0x1138] sm:$0xff]
    %v675 = vld [vmem:[#allocation2 + $0x1140] sm:$0xff]
    %v676 = vld [vmem:[#allocation2 + $0x1148] sm:$0xff]
    %v677 = vld [vmem:[#allocation2 + $0x1150] sm:$0xff]
    %v678 = vld [vmem:[#allocation2 + $0x1158] sm:$0xff]
    %v679 = vld [vmem:[#allocation2 + $0x1160] sm:$0xff]
    %v680 = vld [vmem:[#allocation2 + $0x1168] sm:$0xff]
    %v681 = vld [vmem:[#allocation2 + $0x1170] sm:$0xff]
    %v682 = vld [vmem:[#allocation2 + $0x1178] sm:$0xff]
    %v683 = vld [vmem:[#allocation2 + $0x1180] sm:$0xff]
    %v684 = vld [vmem:[#allocation2 + $0x1188] sm:$0xff]
    %v685 = vld [vmem:[#allocation2 + $0x1190] sm:$0xff]
    %v686 = vld [vmem:[#allocation2 + $0x1198] sm:$0xff]
    %v687 = vld [vmem:[#allocation2 + $0x11a0] sm:$0xff]
    %v688 = vld [vmem:[#allocation2 + $0x11a8] sm:$0xff]
    %v689 = vld [vmem:[#allocation2 + $0x11b0] sm:$0xff]
    %v690 = vld [vmem:[#allocation2 + $0x11b8] sm:$0xff]
    %v691 = vld [vmem:[#allocation2 + $0x11c0] sm:$0xff]
    %v692 = vld [vmem:[#allocation2 + $0x11c8] sm:$0xff]
    %v693 = vld [vmem:[#allocation2 + $0x11d0] sm:$0xff]
    %v694 = vld [vmem:[#allocation2 + $0x11d8] sm:$0xff]
    %v695 = vld [vmem:[#allocation2 + $0x11e0] sm:$0xff]
    %v696 = vld [vmem:[#allocation2 + $0x11e8] sm:$0xff]
    %v697 = vld [vmem:[#allocation2 + $0x11f0] sm:$0xff]
    %v698 = vld [vmem:[#allocation2 + $0x11f8] sm:$0xff]
    %v699 = vld [vmem:[#allocation2 + $0x1200] sm:$0xff]
    %v700 = vld [vmem:[#allocation2 + $0x1208] sm:$0xff]
    %v701 = vld [vmem:[#allocation2 + $0x1210] sm:$0xff]
    %v702 = vld [vmem:[#allocation2 + $0x1218] sm:$0xff]
    %v703 = vld [vmem:[#allocation2 + $0x1220] sm:$0xff]
    %v704 = vld [vmem:[#allocation2 + $0x1228] sm:$0xff]
    %v705 = vld [vmem:[#allocation2 + $0x1230] sm:$0xff]
    %v706 = vld [vmem:[#allocation2 + $0x1238] sm:$0xff]
    %v707 = vld [vmem:[#allocation2 + $0x1240] sm:$0xff]
    %v708 = vld [vmem:[#allocation2 + $0x1248] sm:$0xff]
    %v709 = vld [vmem:[#allocation2 + $0x1250] sm:$0xff]
    %v710 = vld [vmem:[#allocation2 + $0x1258] sm:$0xff]
    %v711 = vld [vmem:[#allocation2 + $0x1260] sm:$0xff]
    %v712 = vld [vmem:[#allocation2 + $0x1268] sm:$0xff]
    %v713 = vld [vmem:[#allocation2 + $0x1270] sm:$0xff]
    %v714 = vld [vmem:[#allocation2 + $0x1278] sm:$0xff]
    %v715 = vld [vmem:[#allocation2 + $0x1280] sm:$0xff]
    %v716 = vld [vmem:[#allocation2 + $0x1288] sm:$0xff]
    %v717 = vld [vmem:[#allocation2 + $0x1290] sm:$0xff]
    %v718 = vld [vmem:[#allocation2 + $0x1298] sm:$0xff]
    %v719 = vld [vmem:[#allocation2 + $0x12a0] sm:$0xff]
    %v720 = vld [vmem:[#allocation2 + $0x12a8] sm:$0xff]
    %v721 = vld [vmem:[#allocation2 + $0x12b0] sm:$0xff]
    %v722 = vld [vmem:[#allocation2 + $0x12b8] sm:$0xff]
    %v723 = vld [vmem:[#allocation2 + $0x12c0] sm:$0xff]
    %v724 = vld [vmem:[#allocation2 + $0x12c8] sm:$0xff]
    %v725 = vld [vmem:[#allocation2 + $0x12d0] sm:$0xff]
    %v726 = vld [vmem:[#allocation2 + $0x12d8] sm:$0xff]
    %v727 = vld [vmem:[#allocation2 + $0x12e0] sm:$0xff]
    %v728 = vld [vmem:[#allocation2 + $0x12e8] sm:$0xff]
    %v729 = vld [vmem:[#allocation2 + $0x12f0] sm:$0xff]
    %v730 = vld [vmem:[#allocation2 + $0x12f8] sm:$0xff]
    %v731 = vld [vmem:[#allocation2 + $0x1300] sm:$0xff]
    %v732 = vld [vmem:[#allocation2 + $0x1308] sm:$0xff]
    %v733 = vld [vmem:[#allocation2 + $0x1310] sm:$0xff]
    %v734 = vld [vmem:[#allocation2 + $0x1318] sm:$0xff]
    %v735 = vld [vmem:[#allocation2 + $0x1320] sm:$0xff]
    %v736 = vld [vmem:[#allocation2 + $0x1328] sm:$0xff]
    %v737 = vld [vmem:[#allocation2 + $0x1330] sm:$0xff]
    %v738 = vld [vmem:[#allocation2 + $0x1338] sm:$0xff]
    %v739 = vld [vmem:[#allocation2 + $0x1340] sm:$0xff]
    %v740 = vld [vmem:[#allocation2 + $0x1348] sm:$0xff]
    %v741 = vld [vmem:[#allocation2 + $0x1350] sm:$0xff]
    %v742 = vld [vmem:[#allocation2 + $0x1358] sm:$0xff]
    %v743 = vld [vmem:[#allocation2 + $0x1360] sm:$0xff]
    %v744 = vld [vmem:[#allocation2 + $0x1368] sm:$0xff]
    %v745 = vld [vmem:[#allocation2 + $0x1370] sm:$0xff]
    %v746 = vld [vmem:[#allocation2 + $0x1378] sm:$0xff]
    %v747 = vld [vmem:[#allocation2 + $0x1380] sm:$0xff]
    %v748 = vld [vmem:[#allocation2 + $0x1388] sm:$0xff]
    %v749 = vld [vmem:[#allocation2 + $0x1390] sm:$0xff]
    %v750 = vld [vmem:[#allocation2 + $0x1398] sm:$0xff]
    %v751 = vld [vmem:[#allocation2 + $0x13a0] sm:$0xff]
    %v752 = vld [vmem:[#allocation2 + $0x13a8] sm:$0xff]
    %v753 = vld [vmem:[#allocation2 + $0x13b0] sm:$0xff]
    %v754 = vld [vmem:[#allocation2 + $0x13b8] sm:$0xff]
    %v755 = vld [vmem:[#allocation2 + $0x13c0] sm:$0xff]
    %v756 = vld [vmem:[#allocation2 + $0x13c8] sm:$0xff]
    %v757 = vld [vmem:[#allocation2 + $0x13d0] sm:$0xff]
    %v758 = vld [vmem:[#allocation2 + $0x13d8] sm:$0xff]
    %v759 = vld [vmem:[#allocation2 + $0x13e0] sm:$0xff]
    %v760 = vld [vmem:[#allocation2 + $0x13e8] sm:$0xff]
    %v761 = vld [vmem:[#allocation2 + $0x13f0] sm:$0xff]
    %v762 = vld [vmem:[#allocation2 + $0x13f8] sm:$0xff]
    %v763 = vld [vmem:[#allocation2 + $0x1400] sm:$0xff]
    %v764 = vld [vmem:[#allocation2 + $0x1408] sm:$0xff]
    %v765 = vld [vmem:[#allocation2 + $0x1410] sm:$0xff]
    %v766 = vld [vmem:[#allocation2 + $0x1418] sm:$0xff]
    %v767 = vld [vmem:[#allocation2 + $0x1420] sm:$0xff]
    %v768 = vld [vmem:[#allocation2 + $0x1428] sm:$0xff]
    %v769 = vld [vmem:[#allocation2 + $0x1430] sm:$0xff]
    %v770 = vld [vmem:[#allocation2 + $0x1438] sm:$0xff]
    %v771 = vld [vmem:[#allocation2 + $0x1440] sm:$0xff]
    %v772 = vld [vmem:[#allocation2 + $0x1448] sm:$0xff]
    %v773 = vld [vmem:[#allocation2 + $0x1450] sm:$0xff]
    %v774 = vld [vmem:[#allocation2 + $0x1458] sm:$0xff]
    %v775 = vld [vmem:[#allocation2 + $0x1460] sm:$0xff]
    %v776 = vld [vmem:[#allocation2 + $0x1468] sm:$0xff]
    %v777 = vld [vmem:[#allocation2 + $0x1470] sm:$0xff]
    %v778 = vld [vmem:[#allocation2 + $0x1478] sm:$0xff]
    %v779 = vld [vmem:[#allocation2 + $0x1480] sm:$0xff]
    %v780 = vld [vmem:[#allocation2 + $0x1488] sm:$0xff]
    %v781 = vld [vmem:[#allocation2 + $0x1490] sm:$0xff]
    %v782 = vld [vmem:[#allocation2 + $0x1498] sm:$0xff]
    %v783 = vld [vmem:[#allocation2 + $0x14a0] sm:$0xff]
    %v784 = vld [vmem:[#allocation2 + $0x14a8] sm:$0xff]
    %v785 = vld [vmem:[#allocation2 + $0x14b0] sm:$0xff]
    %v786 = vld [vmem:[#allocation2 + $0x14b8] sm:$0xff]
    %v787 = vld [vmem:[#allocation2 + $0x14c0] sm:$0xff]
    %v788 = vld [vmem:[#allocation2 + $0x14c8] sm:$0xff]
    %v789 = vld [vmem:[#allocation2 + $0x14d0] sm:$0xff]
    %v790 = vld [vmem:[#allocation2 + $0x14d8] sm:$0xff]
    %v791 = vld [vmem:[#allocation2 + $0x14e0] sm:$0xff]
    %v792 = vld [vmem:[#allocation2 + $0x14e8] sm:$0xff]
    %v793 = vld [vmem:[#allocation2 + $0x14f0] sm:$0xff]
    %v794 = vld [vmem:[#allocation2 + $0x14f8] sm:$0xff]
    %v795 = vld [vmem:[#allocation2 + $0x1500] sm:$0xff]
    %v796 = vld [vmem:[#allocation2 + $0x1508] sm:$0xff]
    %v797 = vld [vmem:[#allocation2 + $0x1510] sm:$0xff]
    %v798 = vld [vmem:[#allocation2 + $0x1518] sm:$0xff]
    %v799 = vld [vmem:[#allocation2 + $0x1520] sm:$0xff]
    %v800 = vld [vmem:[#allocation2 + $0x1528] sm:$0xff]
    %v801 = vld [vmem:[#allocation2 + $0x1530] sm:$0xff]
    %v802 = vld [vmem:[#allocation2 + $0x1538] sm:$0xff]
    %v803 = vld [vmem:[#allocation2 + $0x1540] sm:$0xff]
    %v804 = vld [vmem:[#allocation2 + $0x1548] sm:$0xff]
    %v805 = vld [vmem:[#allocation2 + $0x1550] sm:$0xff]
    %v806 = vld [vmem:[#allocation2 + $0x1558] sm:$0xff]
    %v807 = vld [vmem:[#allocation2 + $0x1560] sm:$0xff]
    %v808 = vld [vmem:[#allocation2 + $0x1568] sm:$0xff]
    %v809 = vld [vmem:[#allocation2 + $0x1570] sm:$0xff]
    %v810 = vld [vmem:[#allocation2 + $0x1578] sm:$0xff]
    %v811 = vld [vmem:[#allocation2 + $0x1580] sm:$0xff]
    %v812 = vld [vmem:[#allocation2 + $0x1588] sm:$0xff]
    %v813 = vld [vmem:[#allocation2 + $0x1590] sm:$0xff]
    %v814 = vld [vmem:[#allocation2 + $0x1598] sm:$0xff]
    %v815 = vld [vmem:[#allocation2 + $0x15a0] sm:$0xff]
    %v816 = vld [vmem:[#allocation2 + $0x15a8] sm:$0xff]
    %v817 = vld [vmem:[#allocation2 + $0x15b0] sm:$0xff]
    %v818 = vld [vmem:[#allocation2 + $0x15b8] sm:$0xff]
    %v819 = vld [vmem:[#allocation2 + $0x15c0] sm:$0xff]
    %v820 = vld [vmem:[#allocation2 + $0x15c8] sm:$0xff]
    %v821 = vld [vmem:[#allocation2 + $0x15d0] sm:$0xff]
    %v822 = vld [vmem:[#allocation2 + $0x15d8] sm:$0xff]
    %v823 = vld [vmem:[#allocation2 + $0x15e0] sm:$0xff]
    %v824 = vld [vmem:[#allocation2 + $0x15e8] sm:$0xff]
    %v825 = vld [vmem:[#allocation2 + $0x15f0] sm:$0xff]
    %v826 = vld [vmem:[#allocation2 + $0x15f8] sm:$0xff]
    %v827 = vld [vmem:[#allocation2 + $0x1600] sm:$0xff]
    %v828 = vld [vmem:[#allocation2 + $0x1608] sm:$0xff]
    %v829 = vld [vmem:[#allocation2 + $0x1610] sm:$0xff]
    %v830 = vld [vmem:[#allocation2 + $0x1618] sm:$0xff]
    %v831 = vld [vmem:[#allocation2 + $0x1620] sm:$0xff]
    %v832 = vld [vmem:[#allocation2 + $0x1628] sm:$0xff]
    %v833 = vld [vmem:[#allocation2 + $0x1630] sm:$0xff]
    %v834 = vld [vmem:[#allocation2 + $0x1638] sm:$0xff]
    %v835 = vld [vmem:[#allocation2 + $0x1640] sm:$0xff]
    %v836 = vld [vmem:[#allocation2 + $0x1648] sm:$0xff]
    %v837 = vld [vmem:[#allocation2 + $0x1650] sm:$0xff]
    %v838 = vld [vmem:[#allocation2 + $0x1658] sm:$0xff]
    %v839 = vld [vmem:[#allocation2 + $0x1660] sm:$0xff]
    %v840 = vld [vmem:[#allocation2 + $0x1668] sm:$0xff]
    %v841 = vld [vmem:[#allocation2 + $0x1670] sm:$0xff]
    %v842 = vld [vmem:[#allocation2 + $0x1678] sm:$0xff]
    %v843 = vld [vmem:[#allocation2 + $0x1680] sm:$0xff]
    %v844 = vld [vmem:[#allocation2 + $0x1688] sm:$0xff]
    %v845 = vld [vmem:[#allocation2 + $0x1690] sm:$0xff]
    %v846 = vld [vmem:[#allocation2 + $0x1698] sm:$0xff]
    %v847 = vld [vmem:[#allocation2 + $0x16a0] sm:$0xff]
    %v848 = vld [vmem:[#allocation2 + $0x16a8] sm:$0xff]
    %v849 = vld [vmem:[#allocation2 + $0x16b0] sm:$0xff]
    %v850 = vld [vmem:[#allocation2 + $0x16b8] sm:$0xff]
    %v851 = vld [vmem:[#allocation2 + $0x16c0] sm:$0xff]
    %v852 = vld [vmem:[#allocation2 + $0x16c8] sm:$0xff]
    %v853 = vld [vmem:[#allocation2 + $0x16d0] sm:$0xff]
    %v854 = vld [vmem:[#allocation2 + $0x16d8] sm:$0xff]
    %v855 = vld [vmem:[#allocation2 + $0x16e0] sm:$0xff]
    %v856 = vld [vmem:[#allocation2 + $0x16e8] sm:$0xff]
    %v857 = vld [vmem:[#allocation2 + $0x16f0] sm:$0xff]
    %v858 = vld [vmem:[#allocation2 + $0x16f8] sm:$0xff]
    %v859 = vld [vmem:[#allocation2 + $0x1700] sm:$0xff]
    %v860 = vld [vmem:[#allocation2 + $0x1708] sm:$0xff]
    %v861 = vld [vmem:[#allocation2 + $0x1710] sm:$0xff]
    %v862 = vld [vmem:[#allocation2 + $0x1718] sm:$0xff]
    %v863 = vld [vmem:[#allocation2 + $0x1720] sm:$0xff]
    %v864 = vld [vmem:[#allocation2 + $0x1728] sm:$0xff]
    %v865 = vld [vmem:[#allocation2 + $0x1730] sm:$0xff]
    %v866 = vld [vmem:[#allocation2 + $0x1738] sm:$0xff]
    %v867 = vld [vmem:[#allocation2 + $0x1740] sm:$0xff]
    %v868 = vld [vmem:[#allocation2 + $0x1748] sm:$0xff]
    %v869 = vld [vmem:[#allocation2 + $0x1750] sm:$0xff]
    %v870 = vld [vmem:[#allocation2 + $0x1758] sm:$0xff]
    %v871 = vld [vmem:[#allocation2 + $0x1760] sm:$0xff]
    %v872 = vld [vmem:[#allocation2 + $0x1768] sm:$0xff]
    %v873 = vld [vmem:[#allocation2 + $0x1770] sm:$0xff]
    %v874 = vld [vmem:[#allocation2 + $0x1778] sm:$0xff]
    %v875 = vld [vmem:[#allocation2 + $0x1780] sm:$0xff]
    %v876 = vld [vmem:[#allocation2 + $0x1788] sm:$0xff]
    %v877 = vld [vmem:[#allocation2 + $0x1790] sm:$0xff]
    %v878 = vld [vmem:[#allocation2 + $0x1798] sm:$0xff]
    %v879 = vld [vmem:[#allocation2 + $0x17a0] sm:$0xff]
    %v880 = vld [vmem:[#allocation2 + $0x17a8] sm:$0xff]
    %v881 = vld [vmem:[#allocation2 + $0x17b0] sm:$0xff]
    %v882 = vld [vmem:[#allocation2 + $0x17b8] sm:$0xff]
    %v883 = vld [vmem:[#allocation2 + $0x17c0] sm:$0xff]
    %v884 = vld [vmem:[#allocation2 + $0x17c8] sm:$0xff]
    %v885 = vld [vmem:[#allocation2 + $0x17d0] sm:$0xff]
    %v886 = vld [vmem:[#allocation2 + $0x17d8] sm:$0xff]
    %v887 = vld [vmem:[#allocation2 + $0x17e0] sm:$0xff]
    %v888 = vld [vmem:[#allocation2 + $0x17e8] sm:$0xff]
    %v889 = vld [vmem:[#allocation2 + $0x17f0] sm:$0xff]
    %v890 = vld [vmem:[#allocation2 + $0x17f8] sm:$0xff]
    %v891 = vld [vmem:[#allocation2 + $0x1800] sm:$0xff]
    %v892 = vld [vmem:[#allocation2 + $0x1808] sm:$0xff]
    %v893 = vld [vmem:[#allocation2 + $0x1810] sm:$0xff]
    %v894 = vld [vmem:[#allocation2 + $0x1818] sm:$0xff]
    %v895 = vld [vmem:[#allocation2 + $0x1820] sm:$0xff]
    %v896 = vld [vmem:[#allocation2 + $0x1828] sm:$0xff]
    %v897 = vld [vmem:[#allocation2 + $0x1830] sm:$0xff]
    %v898 = vld [vmem:[#allocation2 + $0x1838] sm:$0xff]
    %v899 = vld [vmem:[#allocation2 + $0x1840] sm:$0xff]
    %v900 = vld [vmem:[#allocation2 + $0x1848] sm:$0xff]
    %v901 = vld [vmem:[#allocation2 + $0x1850] sm:$0xff]
    %v902 = vld [vmem:[#allocation2 + $0x1858] sm:$0xff]
    %v903 = vld [vmem:[#allocation2 + $0x1860] sm:$0xff]
    %v904 = vld [vmem:[#allocation2 + $0x1868] sm:$0xff]
    %v905 = vld [vmem:[#allocation2 + $0x1870] sm:$0xff]
    %v906 = vld [vmem:[#allocation2 + $0x1878] sm:$0xff]
    %v907 = vld [vmem:[#allocation2 + $0x1880] sm:$0xff]
    %v908 = vld [vmem:[#allocation2 + $0x1888] sm:$0xff]
    %v909 = vld [vmem:[#allocation2 + $0x1890] sm:$0xff]
    %v910 = vld [vmem:[#allocation2 + $0x1898] sm:$0xff]
    %v911 = vld [vmem:[#allocation2 + $0x18a0] sm:$0xff]
    %v912 = vld [vmem:[#allocation2 + $0x18a8] sm:$0xff]
    %v913 = vld [vmem:[#allocation2 + $0x18b0] sm:$0xff]
    %v914 = vld [vmem:[#allocation2 + $0x18b8] sm:$0xff]
    %v915 = vld [vmem:[#allocation2 + $0x18c0] sm:$0xff]
    %v916 = vld [vmem:[#allocation2 + $0x18c8] sm:$0xff]
    %v917 = vld [vmem:[#allocation2 + $0x18d0] sm:$0xff]
    %v918 = vld [vmem:[#allocation2 + $0x18d8] sm:$0xff]
    %v919 = vld [vmem:[#allocation2 + $0x18e0] sm:$0xff]
    %v920 = vld [vmem:[#allocation2 + $0x18e8] sm:$0xff]
    %v921 = vld [vmem:[#allocation2 + $0x18f0] sm:$0xff]
    %v922 = vld [vmem:[#allocation2 + $0x18f8] sm:$0xff]
    %v923 = vld [vmem:[#allocation2 + $0x1900] sm:$0xff]
    %v924 = vld [vmem:[#allocation2 + $0x1908] sm:$0xff]
    %v925 = vld [vmem:[#allocation2 + $0x1910] sm:$0xff]
    %v926 = vld [vmem:[#allocation2 + $0x1918] sm:$0xff]
    %v927 = vld [vmem:[#allocation2 + $0x1920] sm:$0xff]
    %v928 = vld [vmem:[#allocation2 + $0x1928] sm:$0xff]
    %v929 = vld [vmem:[#allocation2 + $0x1930] sm:$0xff]
    %v930 = vld [vmem:[#allocation2 + $0x1938] sm:$0xff]
    %v931 = vld [vmem:[#allocation2 + $0x1940] sm:$0xff]
    %v932 = vld [vmem:[#allocation2 + $0x1948] sm:$0xff]
    %v933 = vld [vmem:[#allocation2 + $0x1950] sm:$0xff]
    %v934 = vld [vmem:[#allocation2 + $0x1958] sm:$0xff]
    %v935 = vld [vmem:[#allocation2 + $0x1960] sm:$0xff]
    %v936 = vld [vmem:[#allocation2 + $0x1968] sm:$0xff]
    %v937 = vld [vmem:[#allocation2 + $0x1970] sm:$0xff]
    %v938 = vld [vmem:[#allocation2 + $0x1978] sm:$0xff]
    %v939 = vld [vmem:[#allocation2 + $0x1980] sm:$0xff]
    %v940 = vld [vmem:[#allocation2 + $0x1988] sm:$0xff]
    %v941 = vld [vmem:[#allocation2 + $0x1990] sm:$0xff]
    %v942 = vld [vmem:[#allocation2 + $0x1998] sm:$0xff]
    %v943 = vld [vmem:[#allocation2 + $0x19a0] sm:$0xff]
    %v944 = vld [vmem:[#allocation2 + $0x19a8] sm:$0xff]
    %v945 = vld [vmem:[#allocation2 + $0x19b0] sm:$0xff]
    %v946 = vld [vmem:[#allocation2 + $0x19b8] sm:$0xff]
    %v947 = vld [vmem:[#allocation2 + $0x19c0] sm:$0xff]
    %v948 = vld [vmem:[#allocation2 + $0x19c8] sm:$0xff]
    %v949 = vld [vmem:[#allocation2 + $0x19d0] sm:$0xff]
    %v950 = vld [vmem:[#allocation2 + $0x19d8] sm:$0xff]
    %v951 = vld [vmem:[#allocation2 + $0x19e0] sm:$0xff]
    %v952 = vld [vmem:[#allocation2 + $0x19e8] sm:$0xff]
    %v953 = vld [vmem:[#allocation2 + $0x19f0] sm:$0xff]
    %v954 = vld [vmem:[#allocation2 + $0x19f8] sm:$0xff]
    %v955 = vld [vmem:[#allocation2 + $0x1a00] sm:$0xff]
    %v956 = vld [vmem:[#allocation2 + $0x1a08] sm:$0xff]
    %v957 = vld [vmem:[#allocation2 + $0x1a10] sm:$0xff]
    %v958 = vld [vmem:[#allocation2 + $0x1a18] sm:$0xff]
    %v959 = vld [vmem:[#allocation2 + $0x1a20] sm:$0xff]
    %v960 = vld [vmem:[#allocation2 + $0x1a28] sm:$0xff]
    %v961 = vld [vmem:[#allocation2 + $0x1a30] sm:$0xff]
    %v962 = vld [vmem:[#allocation2 + $0x1a38] sm:$0xff]
    %v963 = vld [vmem:[#allocation2 + $0x1a40] sm:$0xff]
    %v964 = vld [vmem:[#allocation2 + $0x1a48] sm:$0xff]
    %v965 = vld [vmem:[#allocation2 + $0x1a50] sm:$0xff]
    %v966 = vld [vmem:[#allocation2 + $0x1a58] sm:$0xff]
    %v967 = vld [vmem:[#allocation2 + $0x1a60] sm:$0xff]
    %v968 = vld [vmem:[#allocation2 + $0x1a68] sm:$0xff]
    %v969 = vld [vmem:[#allocation2 + $0x1a70] sm:$0xff]
    %v970 = vld [vmem:[#allocation2 + $0x1a78] sm:$0xff]
    %v971 = vld [vmem:[#allocation2 + $0x1a80] sm:$0xff]
    %v972 = vld [vmem:[#allocation2 + $0x1a88] sm:$0xff]
    %v973 = vld [vmem:[#allocation2 + $0x1a90] sm:$0xff]
    %v974 = vld [vmem:[#allocation2 + $0x1a98] sm:$0xff]
    %v975 = vld [vmem:[#allocation2 + $0x1aa0] sm:$0xff]
    %v976 = vld [vmem:[#allocation2 + $0x1aa8] sm:$0xff]
    %v977 = vld [vmem:[#allocation2 + $0x1ab0] sm:$0xff]
    %v978 = vld [vmem:[#allocation2 + $0x1ab8] sm:$0xff]
    %v979 = vld [vmem:[#allocation2 + $0x1ac0] sm:$0xff]
    %v980 = vld [vmem:[#allocation2 + $0x1ac8] sm:$0xff]
    %v981 = vld [vmem:[#allocation2 + $0x1ad0] sm:$0xff]
    %v982 = vld [vmem:[#allocation2 + $0x1ad8] sm:$0xff]
    %v983 = vld [vmem:[#allocation2 + $0x1ae0] sm:$0xff]
    %v984 = vld [vmem:[#allocation2 + $0x1ae8] sm:$0xff]
    %v985 = vld [vmem:[#allocation2 + $0x1af0] sm:$0xff]
    %v986 = vld [vmem:[#allocation2 + $0x1af8] sm:$0xff]
    %v987 = vld [vmem:[#allocation2 + $0x1b00] sm:$0xff]
    %v988 = vld [vmem:[#allocation2 + $0x1b08] sm:$0xff]
    %v989 = vld [vmem:[#allocation2 + $0x1b10] sm:$0xff]
    %v990 = vld [vmem:[#allocation2 + $0x1b18] sm:$0xff]
    %v991 = vld [vmem:[#allocation2 + $0x1b20] sm:$0xff]
    %v992 = vld [vmem:[#allocation2 + $0x1b28] sm:$0xff]
    %v993 = vld [vmem:[#allocation2 + $0x1b30] sm:$0xff]
    %v994 = vld [vmem:[#allocation2 + $0x1b38] sm:$0xff]
    %v995 = vld [vmem:[#allocation2 + $0x1b40] sm:$0xff]
    %v996 = vld [vmem:[#allocation2 + $0x1b48] sm:$0xff]
    %v997 = vld [vmem:[#allocation2 + $0x1b50] sm:$0xff]
    %v998 = vld [vmem:[#allocation2 + $0x1b58] sm:$0xff]
    %v999 = vld [vmem:[#allocation2 + $0x1b60] sm:$0xff]
    %v1000 = vld [vmem:[#allocation2 + $0x1b68] sm:$0xff]
    %v1001 = vld [vmem:[#allocation2 + $0x1b70] sm:$0xff]
    %v1002 = vld [vmem:[#allocation2 + $0x1b78] sm:$0xff]
    %v1003 = vld [vmem:[#allocation2 + $0x1b80] sm:$0xff]
    %v1004 = vld [vmem:[#allocation2 + $0x1b88] sm:$0xff]
    %v1005 = vld [vmem:[#allocation2 + $0x1b90] sm:$0xff]
    %v1006 = vld [vmem:[#allocation2 + $0x1b98] sm:$0xff]
    %v1007 = vld [vmem:[#allocation2 + $0x1ba0] sm:$0xff]
    %v1008 = vld [vmem:[#allocation2 + $0x1ba8] sm:$0xff]
    %v1009 = vld [vmem:[#allocation2 + $0x1bb0] sm:$0xff]
    %v1010 = vld [vmem:[#allocation2 + $0x1bb8] sm:$0xff]
    %v1011 = vld [vmem:[#allocation2 + $0x1bc0] sm:$0xff]
    %v1012 = vld [vmem:[#allocation2 + $0x1bc8] sm:$0xff]
    %v1013 = vld [vmem:[#allocation2 + $0x1bd0] sm:$0xff]
    %v1014 = vld [vmem:[#allocation2 + $0x1bd8] sm:$0xff]
    %v1015 = vld [vmem:[#allocation2 + $0x1be0] sm:$0xff]
    %v1016 = vld [vmem:[#allocation2 + $0x1be8] sm:$0xff]
    %v1017 = vld [vmem:[#allocation2 + $0x1bf0] sm:$0xff]
    %v1018 = vld [vmem:[#allocation2 + $0x1bf8] sm:$0xff]
    %v1019 = vld [vmem:[#allocation2 + $0x1c00] sm:$0xff]
    %v1020 = vld [vmem:[#allocation2 + $0x1c08] sm:$0xff]
    %v1021 = vld [vmem:[#allocation2 + $0x1c10] sm:$0xff]
    %v1022 = vld [vmem:[#allocation2 + $0x1c18] sm:$0xff]
    %v1023 = vld [vmem:[#allocation2 + $0x1c20] sm:$0xff]
    %v1024 = vld [vmem:[#allocation2 + $0x1c28] sm:$0xff]
    %v1025 = vld [vmem:[#allocation2 + $0x1c30] sm:$0xff]
    %v1026 = vld [vmem:[#allocation2 + $0x1c38] sm:$0xff]
    %v1027 = vld [vmem:[#allocation2 + $0x1c40] sm:$0xff]
    %v1028 = vld [vmem:[#allocation2 + $0x1c48] sm:$0xff]
    %v1029 = vld [vmem:[#allocation2 + $0x1c50] sm:$0xff]
    %v1030 = vld [vmem:[#allocation2 + $0x1c58] sm:$0xff]
    %v1031 = vld [vmem:[#allocation2 + $0x1c60] sm:$0xff]
    %v1032 = vld [vmem:[#allocation2 + $0x1c68] sm:$0xff]
    %v1033 = vld [vmem:[#allocation2 + $0x1c70] sm:$0xff]
    %v1034 = vld [vmem:[#allocation2 + $0x1c78] sm:$0xff]
    %v1035 = vld [vmem:[#allocation2 + $0x1c80] sm:$0xff]
    %v1036 = vld [vmem:[#allocation2 + $0x1c88] sm:$0xff]
    %v1037 = vld [vmem:[#allocation2 + $0x1c90] sm:$0xff]
    %v1038 = vld [vmem:[#allocation2 + $0x1c98] sm:$0xff]
    %v1039 = vld [vmem:[#allocation2 + $0x1ca0] sm:$0xff]
    %v1040 = vld [vmem:[#allocation2 + $0x1ca8] sm:$0xff]
    %v1041 = vld [vmem:[#allocation2 + $0x1cb0] sm:$0xff]
    %v1042 = vld [vmem:[#allocation2 + $0x1cb8] sm:$0xff]
    %v1043 = vld [vmem:[#allocation2 + $0x1cc0] sm:$0xff]
    %v1044 = vld [vmem:[#allocation2 + $0x1cc8] sm:$0xff]
    %v1045 = vld [vmem:[#allocation2 + $0x1cd0] sm:$0xff]
    %v1046 = vld [vmem:[#allocation2 + $0x1cd8] sm:$0xff]
    %v1047 = vld [vmem:[#allocation2 + $0x1ce0] sm:$0xff]
    %v1048 = vld [vmem:[#allocation2 + $0x1ce8] sm:$0xff]
    %v1049 = vld [vmem:[#allocation2 + $0x1cf0] sm:$0xff]
    %v1050 = vld [vmem:[#allocation2 + $0x1cf8] sm:$0xff]
    %v1051 = vld [vmem:[#allocation2 + $0x1d00] sm:$0xff]
    %v1052 = vld [vmem:[#allocation2 + $0x1d08] sm:$0xff]
    %v1053 = vld [vmem:[#allocation2 + $0x1d10] sm:$0xff]
    %v1054 = vld [vmem:[#allocation2 + $0x1d18] sm:$0xff]
    %v1055 = vld [vmem:[#allocation2 + $0x1d20] sm:$0xff]
    %v1056 = vld [vmem:[#allocation2 + $0x1d28] sm:$0xff]
    %v1057 = vld [vmem:[#allocation2 + $0x1d30] sm:$0xff]
    %v1058 = vld [vmem:[#allocation2 + $0x1d38] sm:$0xff]
    %v1059 = vld [vmem:[#allocation2 + $0x1d40] sm:$0xff]
    %v1060 = vld [vmem:[#allocation2 + $0x1d48] sm:$0xff]
    %v1061 = vld [vmem:[#allocation2 + $0x1d50] sm:$0xff]
    %v1062 = vld [vmem:[#allocation2 + $0x1d58] sm:$0xff]
    %v1063 = vld [vmem:[#allocation2 + $0x1d60] sm:$0xff]
    %v1064 = vld [vmem:[#allocation2 + $0x1d68] sm:$0xff]
    %v1065 = vld [vmem:[#allocation2 + $0x1d70] sm:$0xff]
    %v1066 = vld [vmem:[#allocation2 + $0x1d78] sm:$0xff]
    %v1067 = vld [vmem:[#allocation2 + $0x1d80] sm:$0xff]
    %v1068 = vld [vmem:[#allocation2 + $0x1d88] sm:$0xff]
    %v1069 = vld [vmem:[#allocation2 + $0x1d90] sm:$0xff]
    %v1070 = vld [vmem:[#allocation2 + $0x1d98] sm:$0xff]
    %v1071 = vld [vmem:[#allocation2 + $0x1da0] sm:$0xff]
    %v1072 = vld [vmem:[#allocation2 + $0x1da8] sm:$0xff]
    %v1073 = vld [vmem:[#allocation2 + $0x1db0] sm:$0xff]
    %v1074 = vld [vmem:[#allocation2 + $0x1db8] sm:$0xff]
    %v1075 = vld [vmem:[#allocation2 + $0x1dc0] sm:$0xff]
    %v1076 = vld [vmem:[#allocation2 + $0x1dc8] sm:$0xff]
    %v1077 = vld [vmem:[#allocation2 + $0x1dd0] sm:$0xff]
    %v1078 = vld [vmem:[#allocation2 + $0x1dd8] sm:$0xff]
    %v1079 = vld [vmem:[#allocation2 + $0x1de0] sm:$0xff]
    %v1080 = vld [vmem:[#allocation2 + $0x1de8] sm:$0xff]
    %v1081 = vld [vmem:[#allocation2 + $0x1df0] sm:$0xff]
    %v1082 = vld [vmem:[#allocation2 + $0x1df8] sm:$0xff]
    %v1083 = vld [vmem:[#allocation2 + $0x1e00] sm:$0xff]
    %v1084 = vld [vmem:[#allocation2 + $0x1e08] sm:$0xff]
    %v1085 = vld [vmem:[#allocation2 + $0x1e10] sm:$0xff]
    %v1086 = vld [vmem:[#allocation2 + $0x1e18] sm:$0xff]
    %v1087 = vld [vmem:[#allocation2 + $0x1e20] sm:$0xff]
    %v1088 = vld [vmem:[#allocation2 + $0x1e28] sm:$0xff]
    %v1089 = vld [vmem:[#allocation2 + $0x1e30] sm:$0xff]
    %v1090 = vld [vmem:[#allocation2 + $0x1e38] sm:$0xff]
    %v1091 = vld [vmem:[#allocation2 + $0x1e40] sm:$0xff]
    %v1092 = vld [vmem:[#allocation2 + $0x1e48] sm:$0xff]
    %v1093 = vld [vmem:[#allocation2 + $0x1e50] sm:$0xff]
    %v1094 = vld [vmem:[#allocation2 + $0x1e58] sm:$0xff]
    %v1095 = vld [vmem:[#allocation2 + $0x1e60] sm:$0xff]
    %v1096 = vld [vmem:[#allocation2 + $0x1e68] sm:$0xff]
    %v1097 = vld [vmem:[#allocation2 + $0x1e70] sm:$0xff]
    %v1098 = vld [vmem:[#allocation2 + $0x1e78] sm:$0xff]
    %v1099 = vld [vmem:[#allocation2 + $0x1e80] sm:$0xff]
    %v1100 = vld [vmem:[#allocation2 + $0x1e88] sm:$0xff]
    %v1101 = vld [vmem:[#allocation2 + $0x1e90] sm:$0xff]
    %v1102 = vld [vmem:[#allocation2 + $0x1e98] sm:$0xff]
    %v1103 = vld [vmem:[#allocation2 + $0x1ea0] sm:$0xff]
    %v1104 = vld [vmem:[#allocation2 + $0x1ea8] sm:$0xff]
    %v1105 = vld [vmem:[#allocation2 + $0x1eb0] sm:$0xff]
    %v1106 = vld [vmem:[#allocation2 + $0x1eb8] sm:$0xff]
    %v1107 = vld [vmem:[#allocation2 + $0x1ec0] sm:$0xff]
    %v1108 = vld [vmem:[#allocation2 + $0x1ec8] sm:$0xff]
    %v1109 = vld [vmem:[#allocation2 + $0x1ed0] sm:$0xff]
    %v1110 = vld [vmem:[#allocation2 + $0x1ed8] sm:$0xff]
    %v1111 = vld [vmem:[#allocation2 + $0x1ee0] sm:$0xff]
    %v1112 = vld [vmem:[#allocation2 + $0x1ee8] sm:$0xff]
    %v1113 = vld [vmem:[#allocation2 + $0x1ef0] sm:$0xff]
    %v1114 = vld [vmem:[#allocation2 + $0x1ef8] sm:$0xff]
    %v1115 = vld [vmem:[#allocation2 + $0x1f00] sm:$0xff]
    %v1116 = vld [vmem:[#allocation2 + $0x1f08] sm:$0xff]
    %v1117 = vld [vmem:[#allocation2 + $0x1f10] sm:$0xff]
    %v1118 = vld [vmem:[#allocation2 + $0x1f18] sm:$0xff]
    %v1119 = vld [vmem:[#allocation2 + $0x1f20] sm:$0xff]
    %v1120 = vld [vmem:[#allocation2 + $0x1f28] sm:$0xff]
    %v1121 = vld [vmem:[#allocation2 + $0x1f30] sm:$0xff]
    %v1122 = vld [vmem:[#allocation2 + $0x1f38] sm:$0xff]
    %v1123 = vld [vmem:[#allocation2 + $0x1f40] sm:$0xff]
    %v1124 = vld [vmem:[#allocation2 + $0x1f48] sm:$0xff]
    %v1125 = vld [vmem:[#allocation2 + $0x1f50] sm:$0xff]
    %v1126 = vld [vmem:[#allocation2 + $0x1f58] sm:$0xff]
    %v1127 = vld [vmem:[#allocation2 + $0x1f60] sm:$0xff]
    %v1128 = vld [vmem:[#allocation2 + $0x1f68] sm:$0xff]
    %v1129 = vld [vmem:[#allocation2 + $0x1f70] sm:$0xff]
    %v1130 = vld [vmem:[#allocation2 + $0x1f78] sm:$0xff]
    %v1131 = vld [vmem:[#allocation2 + $0x1f80] sm:$0xff]
    %v1132 = vld [vmem:[#allocation2 + $0x1f88] sm:$0xff]
    %v1133 = vld [vmem:[#allocation2 + $0x1f90] sm:$0xff]
    %v1134 = vld [vmem:[#allocation2 + $0x1f98] sm:$0xff]
    %v1135 = vld [vmem:[#allocation2 + $0x1fa0] sm:$0xff]
    %v1136 = vld [vmem:[#allocation2 + $0x1fa8] sm:$0xff]
    %v1137 = vld [vmem:[#allocation2 + $0x1fb0] sm:$0xff]
    %v1138 = vld [vmem:[#allocation2 + $0x1fb8] sm:$0xff]
    %v1139 = vld [vmem:[#allocation2 + $0x1fc0] sm:$0xff]
    %v1140 = vld [vmem:[#allocation2 + $0x1fc8] sm:$0xff]
    %v1141 = vld [vmem:[#allocation2 + $0x1fd0] sm:$0xff]
    %v1142 = vld [vmem:[#allocation2 + $0x1fd8] sm:$0xff]
    %v1143 = vld [vmem:[#allocation2 + $0x1fe0] sm:$0xff]
    %v1144 = vld [vmem:[#allocation2 + $0x1fe8] sm:$0xff]
    %v1145 = vld [vmem:[#allocation2 + $0x1ff0] sm:$0xff]
    %v1146 = vld [vmem:[#allocation2 + $0x1ff8] sm:$0xff]
    %v1147 = vld [vmem:[#allocation5] sm:$0xf]
    %v1149 = vperm.slane %v1147, 0
    %v1150 = vperm.slane %v1147, 1
    %v1151 = vperm.slane %v1147, 2
    %v1152 = vperm.slane %v1147, 3
    %1158 = vst [vmem:[#allocation1] ss:$4 sm:$0xff] %v115
    %s1160 = scalar_lea.vmem [#allocation1], 32
    %1161 = vst [vmem:[%s1160] ss:$4 sm:$0xff] %v116
    %v1162 = vld.sshfl [vmem:[#allocation1] sm:$0xff pattern:$0x73625140]
    %v1163 = vld.sshfl [vmem:[#allocation1 + $0x8] sm:$0xff pattern:$0x73625140]
    %v1164 = vld.sshfl [vmem:[#allocation1 + $0x10] sm:$0xff pattern:$0x73625140]
    %v1165 = vld.sshfl [vmem:[#allocation1 + $0x18] sm:$0xff pattern:$0x73625140]
    %v1166 = vld.sshfl [vmem:[#allocation1 + $0x20] sm:$0xff pattern:$0x73625140]
    %v1167 = vld.sshfl [vmem:[#allocation1 + $0x28] sm:$0xff pattern:$0x73625140]
    %v1168 = vld.sshfl [vmem:[#allocation1 + $0x30] sm:$0xff pattern:$0x73625140]
    %v1169 = vld.sshfl [vmem:[#allocation1 + $0x38] sm:$0xff pattern:$0x73625140]
    %1171 = vst [vmem:[#allocation1] ss:$4 sm:$0xff] %v117
    %1173 = vst [vmem:[%s1160] ss:$4 sm:$0xff] %v118
    %v1174 = vld.sshfl [vmem:[#allocation1] sm:$0xff pattern:$0x73625140]
    %v1175 = vld.sshfl [vmem:[#allocation1 + $0x8] sm:$0xff pattern:$0x73625140]
    %v1176 = vld.sshfl [vmem:[#allocation1 + $0x10] sm:$0xff pattern:$0x73625140]
    %v1177 = vld.sshfl [vmem:[#allocation1 + $0x18] sm:$0xff pattern:$0x73625140]
    %v1178 = vld.sshfl [vmem:[#allocation1 + $0x20] sm:$0xff pattern:$0x73625140]
    %v1179 = vld.sshfl [vmem:[#allocation1 + $0x28] sm:$0xff pattern:$0x73625140]
    %v1180 = vld.sshfl [vmem:[#allocation1 + $0x30] sm:$0xff pattern:$0x73625140]
    %v1181 = vld.sshfl [vmem:[#allocation1 + $0x38] sm:$0xff pattern:$0x73625140]
    %1183 = vst [vmem:[#allocation1] ss:$4 sm:$0xff] %v119
    %1185 = vst [vmem:[%s1160] ss:$4 sm:$0xff] %v120
    %v1186 = vld.sshfl [vmem:[#allocation1] sm:$0xff pattern:$0x73625140]
    %v1187 = vld.sshfl [vmem:[#allocation1 + $0x8] sm:$0xff pattern:$0x73625140]
    %v1188 = vld.sshfl [vmem:[#allocation1 + $0x10] sm:$0xff pattern:$0x73625140]
    %v1189 = vld.sshfl [vmem:[#allocation1 + $0x18] sm:$0xff pattern:$0x73625140]
    %v1190 = vld.sshfl [vmem:[#allocation1 + $0x20] sm:$0xff pattern:$0x73625140]
    %v1191 = vld.sshfl [vmem:[#allocation1 + $0x28] sm:$0xff pattern:$0x73625140]
    %v1192 = vld.sshfl [vmem:[#allocation1 + $0x30] sm:$0xff pattern:$0x73625140]
    %v1193 = vld.sshfl [vmem:[#allocation1 + $0x38] sm:$0xff pattern:$0x73625140]
    %1195 = vst [vmem:[#allocation1] ss:$4 sm:$0xff] %v121
    %1197 = vst [vmem:[%s1160] ss:$4 sm:$0xff] %v122
    %v1198 = vld.sshfl [vmem:[#allocation1] sm:$0xff pattern:$0x73625140]
    %v1199 = vld.sshfl [vmem:[#allocation1 + $0x8] sm:$0xff pattern:$0x73625140]
    %v1200 = vld.sshfl [vmem:[#allocation1 + $0x10] sm:$0xff pattern:$0x73625140]
    %v1201 = vld.sshfl [vmem:[#allocation1 + $0x18] sm:$0xff pattern:$0x73625140]
    %v1202 = vld.sshfl [vmem:[#allocation1 + $0x20] sm:$0xff pattern:$0x73625140]
    %v1203 = vld.sshfl [vmem:[#allocation1 + $0x28] sm:$0xff pattern:$0x73625140]
    %v1204 = vld.sshfl [vmem:[#allocation1 + $0x30] sm:$0xff pattern:$0x73625140]
    %v1205 = vld.sshfl [vmem:[#allocation1 + $0x38] sm:$0xff pattern:$0x73625140]
    %v2262 = vunpack.c.l.b16 %v123
    %v2263 = vunpack.c.h.b16 %v123
    %v2264 = vunpack.c.l.b16 %v124
    %v2265 = vunpack.c.h.b16 %v124
    %v2266 = vunpack.c.l.b16 %v125
    %v2267 = vunpack.c.h.b16 %v125
    %v2268 = vunpack.c.l.b16 %v126
    %v2269 = vunpack.c.h.b16 %v126
    %v2270 = vunpack.c.l.b16 %v127
    %v2271 = vunpack.c.h.b16 %v127
    %v2272 = vunpack.c.l.b16 %v128
    %v2273 = vunpack.c.h.b16 %v128
    %v2274 = vunpack.c.l.b16 %v129
    %v2275 = vunpack.c.h.b16 %v129
    %v2276 = vunpack.c.l.b16 %v130
    %v2277 = vunpack.c.h.b16 %v130
    %v2278 = vunpack.c.l.b16 %v131
    %v2279 = vunpack.c.h.b16 %v131
    %v2280 = vunpack.c.l.b16 %v132
    %v2281 = vunpack.c.h.b16 %v132
    %v2282 = vunpack.c.l.b16 %v133
    %v2283 = vunpack.c.h.b16 %v133
    %v2284 = vunpack.c.l.b16 %v134
    %v2285 = vunpack.c.h.b16 %v134
    %v2286 = vunpack.c.l.b16 %v135
    %v2287 = vunpack.c.h.b16 %v135
    %v2288 = vunpack.c.l.b16 %v136
    %v2289 = vunpack.c.h.b16 %v136
    %v2290 = vunpack.c.l.b16 %v137
    %v2291 = vunpack.c.h.b16 %v137
    %v2292 = vunpack.c.l.b16 %v138
    %v2293 = vunpack.c.h.b16 %v138
    %v2294 = vunpack.c.l.b16 %v139
    %v2295 = vunpack.c.h.b16 %v139
    %v2296 = vunpack.c.l.b16 %v140
    %v2297 = vunpack.c.h.b16 %v140
    %v2298 = vunpack.c.l.b16 %v141
    %v2299 = vunpack.c.h.b16 %v141
    %v2300 = vunpack.c.l.b16 %v142
    %v2301 = vunpack.c.h.b16 %v142
    %v2302 = vunpack.c.l.b16 %v143
    %v2303 = vunpack.c.h.b16 %v143
    %v2304 = vunpack.c.l.b16 %v144
    %v2305 = vunpack.c.h.b16 %v144
    %v2306 = vunpack.c.l.b16 %v145
    %v2307 = vunpack.c.h.b16 %v145
    %v2308 = vunpack.c.l.b16 %v146
    %v2309 = vunpack.c.h.b16 %v146
    %v2310 = vunpack.c.l.b16 %v147
    %v2311 = vunpack.c.h.b16 %v147
    %v2312 = vunpack.c.l.b16 %v148
    %v2313 = vunpack.c.h.b16 %v148
    %v2314 = vunpack.c.l.b16 %v149
    %v2315 = vunpack.c.h.b16 %v149
    %v2316 = vunpack.c.l.b16 %v150
    %v2317 = vunpack.c.h.b16 %v150
    %v2318 = vunpack.c.l.b16 %v151
    %v2319 = vunpack.c.h.b16 %v151
    %v2320 = vunpack.c.l.b16 %v152
    %v2321 = vunpack.c.h.b16 %v152
    %v2322 = vunpack.c.l.b16 %v153
    %v2323 = vunpack.c.h.b16 %v153
    %v2324 = vunpack.c.l.b16 %v154
    %v2325 = vunpack.c.h.b16 %v154
    %v2326 = vunpack.c.l.b16 %v155
    %v2327 = vunpack.c.h.b16 %v155
    %v2328 = vunpack.c.l.b16 %v156
    %v2329 = vunpack.c.h.b16 %v156
    %v2330 = vunpack.c.l.b16 %v157
    %v2331 = vunpack.c.h.b16 %v157
    %v2332 = vunpack.c.l.b16 %v158
    %v2333 = vunpack.c.h.b16 %v158
    %v2334 = vunpack.c.l.b16 %v159
    %v2335 = vunpack.c.h.b16 %v159
    %v2336 = vunpack.c.l.b16 %v160
    %v2337 = vunpack.c.h.b16 %v160
    %v2338 = vunpack.c.l.b16 %v161
    %v2339 = vunpack.c.h.b16 %v161
    %v2340 = vunpack.c.l.b16 %v162
    %v2341 = vunpack.c.h.b16 %v162
    %v2342 = vunpack.c.l.b16 %v163
    %v2343 = vunpack.c.h.b16 %v163
    %v2344 = vunpack.c.l.b16 %v164
    %v2345 = vunpack.c.h.b16 %v164
    %v2346 = vunpack.c.l.b16 %v165
    %v2347 = vunpack.c.h.b16 %v165
    %v2348 = vunpack.c.l.b16 %v166
    %v2349 = vunpack.c.h.b16 %v166
    %v2350 = vunpack.c.l.b16 %v167
    %v2351 = vunpack.c.h.b16 %v167
    %v2352 = vunpack.c.l.b16 %v168
    %v2353 = vunpack.c.h.b16 %v168
    %v2354 = vunpack.c.l.b16 %v169
    %v2355 = vunpack.c.h.b16 %v169
    %v2356 = vunpack.c.l.b16 %v170
    %v2357 = vunpack.c.h.b16 %v170
    %v2358 = vunpack.c.l.b16 %v171
    %v2359 = vunpack.c.h.b16 %v171
    %v2360 = vunpack.c.l.b16 %v172
    %v2361 = vunpack.c.h.b16 %v172
    %v2362 = vunpack.c.l.b16 %v173
    %v2363 = vunpack.c.h.b16 %v173
    %v2364 = vunpack.c.l.b16 %v174
    %v2365 = vunpack.c.h.b16 %v174
    %v2366 = vunpack.c.l.b16 %v175
    %v2367 = vunpack.c.h.b16 %v175
    %v2368 = vunpack.c.l.b16 %v176
    %v2369 = vunpack.c.h.b16 %v176
    %v2370 = vunpack.c.l.b16 %v177
    %v2371 = vunpack.c.h.b16 %v177
    %v2372 = vunpack.c.l.b16 %v178
    %v2373 = vunpack.c.h.b16 %v178
    %v2374 = vunpack.c.l.b16 %v179
    %v2375 = vunpack.c.h.b16 %v179
    %v2376 = vunpack.c.l.b16 %v180
    %v2377 = vunpack.c.h.b16 %v180
    %v2378 = vunpack.c.l.b16 %v181
    %v2379 = vunpack.c.h.b16 %v181
    %v2380 = vunpack.c.l.b16 %v182
    %v2381 = vunpack.c.h.b16 %v182
    %v2382 = vunpack.c.l.b16 %v183
    %v2383 = vunpack.c.h.b16 %v183
    %v2384 = vunpack.c.l.b16 %v184
    %v2385 = vunpack.c.h.b16 %v184
    %v2386 = vunpack.c.l.b16 %v185
    %v2387 = vunpack.c.h.b16 %v185
    %v2388 = vunpack.c.l.b16 %v186
    %v2389 = vunpack.c.h.b16 %v186
    %v2390 = vunpack.c.l.b16 %v187
    %v2391 = vunpack.c.h.b16 %v187
    %v2392 = vunpack.c.l.b16 %v188
    %v2393 = vunpack.c.h.b16 %v188
    %v2394 = vunpack.c.l.b16 %v189
    %v2395 = vunpack.c.h.b16 %v189
    %v2396 = vunpack.c.l.b16 %v190
    %v2397 = vunpack.c.h.b16 %v190
    %v2398 = vunpack.c.l.b16 %v191
    %v2399 = vunpack.c.h.b16 %v191
    %v2400 = vunpack.c.l.b16 %v192
    %v2401 = vunpack.c.h.b16 %v192
    %v2402 = vunpack.c.l.b16 %v193
    %v2403 = vunpack.c.h.b16 %v193
    %v2404 = vunpack.c.l.b16 %v194
    %v2405 = vunpack.c.h.b16 %v194
    %v2406 = vunpack.c.l.b16 %v195
    %v2407 = vunpack.c.h.b16 %v195
    %v2408 = vunpack.c.l.b16 %v196
    %v2409 = vunpack.c.h.b16 %v196
    %v2410 = vunpack.c.l.b16 %v197
    %v2411 = vunpack.c.h.b16 %v197
    %v2412 = vunpack.c.l.b16 %v198
    %v2413 = vunpack.c.h.b16 %v198
    %v2414 = vunpack.c.l.b16 %v199
    %v2415 = vunpack.c.h.b16 %v199
    %v2416 = vunpack.c.l.b16 %v200
    %v2417 = vunpack.c.h.b16 %v200
    %v2418 = vunpack.c.l.b16 %v201
    %v2419 = vunpack.c.h.b16 %v201
    %v2420 = vunpack.c.l.b16 %v202
    %v2421 = vunpack.c.h.b16 %v202
    %v2422 = vunpack.c.l.b16 %v203
    %v2423 = vunpack.c.h.b16 %v203
    %v2424 = vunpack.c.l.b16 %v204
    %v2425 = vunpack.c.h.b16 %v204
    %v2426 = vunpack.c.l.b16 %v205
    %v2427 = vunpack.c.h.b16 %v205
    %v2428 = vunpack.c.l.b16 %v206
    %v2429 = vunpack.c.h.b16 %v206
    %v2430 = vunpack.c.l.b16 %v207
    %v2431 = vunpack.c.h.b16 %v207
    %v2432 = vunpack.c.l.b16 %v208
    %v2433 = vunpack.c.h.b16 %v208
    %v2434 = vunpack.c.l.b16 %v209
    %v2435 = vunpack.c.h.b16 %v209
    %v2436 = vunpack.c.l.b16 %v210
    %v2437 = vunpack.c.h.b16 %v210
    %v2438 = vunpack.c.l.b16 %v211
    %v2439 = vunpack.c.h.b16 %v211
    %v2440 = vunpack.c.l.b16 %v212
    %v2441 = vunpack.c.h.b16 %v212
    %v2442 = vunpack.c.l.b16 %v213
    %v2443 = vunpack.c.h.b16 %v213
    %v2444 = vunpack.c.l.b16 %v214
    %v2445 = vunpack.c.h.b16 %v214
    %v2446 = vunpack.c.l.b16 %v215
    %v2447 = vunpack.c.h.b16 %v215
    %v2448 = vunpack.c.l.b16 %v216
    %v2449 = vunpack.c.h.b16 %v216
    %v2450 = vunpack.c.l.b16 %v217
    %v2451 = vunpack.c.h.b16 %v217
    %v2452 = vunpack.c.l.b16 %v218
    %v2453 = vunpack.c.h.b16 %v218
    %v2454 = vunpack.c.l.b16 %v219
    %v2455 = vunpack.c.h.b16 %v219
    %v2456 = vunpack.c.l.b16 %v220
    %v2457 = vunpack.c.h.b16 %v220
    %v2458 = vunpack.c.l.b16 %v221
    %v2459 = vunpack.c.h.b16 %v221
    %v2460 = vunpack.c.l.b16 %v222
    %v2461 = vunpack.c.h.b16 %v222
    %v2462 = vunpack.c.l.b16 %v223
    %v2463 = vunpack.c.h.b16 %v223
    %v2464 = vunpack.c.l.b16 %v224
    %v2465 = vunpack.c.h.b16 %v224
    %v2466 = vunpack.c.l.b16 %v225
    %v2467 = vunpack.c.h.b16 %v225
    %v2468 = vunpack.c.l.b16 %v226
    %v2469 = vunpack.c.h.b16 %v226
    %v2470 = vunpack.c.l.b16 %v227
    %v2471 = vunpack.c.h.b16 %v227
    %v2472 = vunpack.c.l.b16 %v228
    %v2473 = vunpack.c.h.b16 %v228
    %v2474 = vunpack.c.l.b16 %v229
    %v2475 = vunpack.c.h.b16 %v229
    %v2476 = vunpack.c.l.b16 %v230
    %v2477 = vunpack.c.h.b16 %v230
    %v2478 = vunpack.c.l.b16 %v231
    %v2479 = vunpack.c.h.b16 %v231
    %v2480 = vunpack.c.l.b16 %v232
    %v2481 = vunpack.c.h.b16 %v232
    %v2482 = vunpack.c.l.b16 %v233
    %v2483 = vunpack.c.h.b16 %v233
    %v2484 = vunpack.c.l.b16 %v234
    %v2485 = vunpack.c.h.b16 %v234
    %v2486 = vunpack.c.l.b16 %v235
    %v2487 = vunpack.c.h.b16 %v235
    %v2488 = vunpack.c.l.b16 %v236
    %v2489 = vunpack.c.h.b16 %v236
    %v2490 = vunpack.c.l.b16 %v237
    %v2491 = vunpack.c.h.b16 %v237
    %v2492 = vunpack.c.l.b16 %v238
    %v2493 = vunpack.c.h.b16 %v238
    %v2494 = vunpack.c.l.b16 %v239
    %v2495 = vunpack.c.h.b16 %v239
    %v2496 = vunpack.c.l.b16 %v240
    %v2497 = vunpack.c.h.b16 %v240
    %v2498 = vunpack.c.l.b16 %v241
    %v2499 = vunpack.c.h.b16 %v241
    %v2500 = vunpack.c.l.b16 %v242
    %v2501 = vunpack.c.h.b16 %v242
    %v2502 = vunpack.c.l.b16 %v243
    %v2503 = vunpack.c.h.b16 %v243
    %v2504 = vunpack.c.l.b16 %v244
    %v2505 = vunpack.c.h.b16 %v244
    %v2506 = vunpack.c.l.b16 %v245
    %v2507 = vunpack.c.h.b16 %v245
    %v2508 = vunpack.c.l.b16 %v246
    %v2509 = vunpack.c.h.b16 %v246
    %v2510 = vunpack.c.l.b16 %v247
    %v2511 = vunpack.c.h.b16 %v247
    %v2512 = vunpack.c.l.b16 %v248
    %v2513 = vunpack.c.h.b16 %v248
    %v2514 = vunpack.c.l.b16 %v249
    %v2515 = vunpack.c.h.b16 %v249
    %v2516 = vunpack.c.l.b16 %v250
    %v2517 = vunpack.c.h.b16 %v250
    %v2518 = vunpack.c.l.b16 %v251
    %v2519 = vunpack.c.h.b16 %v251
    %v2520 = vunpack.c.l.b16 %v252
    %v2521 = vunpack.c.h.b16 %v252
    %v2522 = vunpack.c.l.b16 %v253
    %v2523 = vunpack.c.h.b16 %v253
    %v2524 = vunpack.c.l.b16 %v254
    %v2525 = vunpack.c.h.b16 %v254
    %v2526 = vunpack.c.l.b16 %v255
    %v2527 = vunpack.c.h.b16 %v255
    %v2528 = vunpack.c.l.b16 %v256
    %v2529 = vunpack.c.h.b16 %v256
    %v2530 = vunpack.c.l.b16 %v257
    %v2531 = vunpack.c.h.b16 %v257
    %v2532 = vunpack.c.l.b16 %v258
    %v2533 = vunpack.c.h.b16 %v258
    %v2534 = vunpack.c.l.b16 %v259
    %v2535 = vunpack.c.h.b16 %v259
    %v2536 = vunpack.c.l.b16 %v260
    %v2537 = vunpack.c.h.b16 %v260
    %v2538 = vunpack.c.l.b16 %v261
    %v2539 = vunpack.c.h.b16 %v261
    %v2540 = vunpack.c.l.b16 %v262
    %v2541 = vunpack.c.h.b16 %v262
    %v2542 = vunpack.c.l.b16 %v263
    %v2543 = vunpack.c.h.b16 %v263
    %v2544 = vunpack.c.l.b16 %v264
    %v2545 = vunpack.c.h.b16 %v264
    %v2546 = vunpack.c.l.b16 %v265
    %v2547 = vunpack.c.h.b16 %v265
    %v2548 = vunpack.c.l.b16 %v266
    %v2549 = vunpack.c.h.b16 %v266
    %v2550 = vunpack.c.l.b16 %v267
    %v2551 = vunpack.c.h.b16 %v267
    %v2552 = vunpack.c.l.b16 %v268
    %v2553 = vunpack.c.h.b16 %v268
    %v2554 = vunpack.c.l.b16 %v269
    %v2555 = vunpack.c.h.b16 %v269
    %v2556 = vunpack.c.l.b16 %v270
    %v2557 = vunpack.c.h.b16 %v270
    %v2558 = vunpack.c.l.b16 %v271
    %v2559 = vunpack.c.h.b16 %v271
    %v2560 = vunpack.c.l.b16 %v272
    %v2561 = vunpack.c.h.b16 %v272
    %v2562 = vunpack.c.l.b16 %v273
    %v2563 = vunpack.c.h.b16 %v273
    %v2564 = vunpack.c.l.b16 %v274
    %v2565 = vunpack.c.h.b16 %v274
    %v2566 = vunpack.c.l.b16 %v275
    %v2567 = vunpack.c.h.b16 %v275
    %v2568 = vunpack.c.l.b16 %v276
    %v2569 = vunpack.c.h.b16 %v276
    %v2570 = vunpack.c.l.b16 %v277
    %v2571 = vunpack.c.h.b16 %v277
    %v2572 = vunpack.c.l.b16 %v278
    %v2573 = vunpack.c.h.b16 %v278
    %v2574 = vunpack.c.l.b16 %v279
    %v2575 = vunpack.c.h.b16 %v279
    %v2576 = vunpack.c.l.b16 %v280
    %v2577 = vunpack.c.h.b16 %v280
    %v2578 = vunpack.c.l.b16 %v281
    %v2579 = vunpack.c.h.b16 %v281
    %v2580 = vunpack.c.l.b16 %v282
    %v2581 = vunpack.c.h.b16 %v282
    %v2582 = vunpack.c.l.b16 %v283
    %v2583 = vunpack.c.h.b16 %v283
    %v2584 = vunpack.c.l.b16 %v284
    %v2585 = vunpack.c.h.b16 %v284
    %v2586 = vunpack.c.l.b16 %v285
    %v2587 = vunpack.c.h.b16 %v285
    %v2588 = vunpack.c.l.b16 %v286
    %v2589 = vunpack.c.h.b16 %v286
    %v2590 = vunpack.c.l.b16 %v287
    %v2591 = vunpack.c.h.b16 %v287
    %v2592 = vunpack.c.l.b16 %v288
    %v2593 = vunpack.c.h.b16 %v288
    %v2594 = vunpack.c.l.b16 %v289
    %v2595 = vunpack.c.h.b16 %v289
    %v2596 = vunpack.c.l.b16 %v290
    %v2597 = vunpack.c.h.b16 %v290
    %v2598 = vunpack.c.l.b16 %v291
    %v2599 = vunpack.c.h.b16 %v291
    %v2600 = vunpack.c.l.b16 %v292
    %v2601 = vunpack.c.h.b16 %v292
    %v2602 = vunpack.c.l.b16 %v293
    %v2603 = vunpack.c.h.b16 %v293
    %v2604 = vunpack.c.l.b16 %v294
    %v2605 = vunpack.c.h.b16 %v294
    %v2606 = vunpack.c.l.b16 %v295
    %v2607 = vunpack.c.h.b16 %v295
    %v2608 = vunpack.c.l.b16 %v296
    %v2609 = vunpack.c.h.b16 %v296
    %v2610 = vunpack.c.l.b16 %v297
    %v2611 = vunpack.c.h.b16 %v297
    %v2612 = vunpack.c.l.b16 %v298
    %v2613 = vunpack.c.h.b16 %v298
    %v2614 = vunpack.c.l.b16 %v299
    %v2615 = vunpack.c.h.b16 %v299
    %v2616 = vunpack.c.l.b16 %v300
    %v2617 = vunpack.c.h.b16 %v300
    %v2618 = vunpack.c.l.b16 %v301
    %v2619 = vunpack.c.h.b16 %v301
    %v2620 = vunpack.c.l.b16 %v302
    %v2621 = vunpack.c.h.b16 %v302
    %v2622 = vunpack.c.l.b16 %v303
    %v2623 = vunpack.c.h.b16 %v303
    %v2624 = vunpack.c.l.b16 %v304
    %v2625 = vunpack.c.h.b16 %v304
    %v2626 = vunpack.c.l.b16 %v305
    %v2627 = vunpack.c.h.b16 %v305
    %v2628 = vunpack.c.l.b16 %v306
    %v2629 = vunpack.c.h.b16 %v306
    %v2630 = vunpack.c.l.b16 %v307
    %v2631 = vunpack.c.h.b16 %v307
    %v2632 = vunpack.c.l.b16 %v308
    %v2633 = vunpack.c.h.b16 %v308
    %v2634 = vunpack.c.l.b16 %v309
    %v2635 = vunpack.c.h.b16 %v309
    %v2636 = vunpack.c.l.b16 %v310
    %v2637 = vunpack.c.h.b16 %v310
    %v2638 = vunpack.c.l.b16 %v311
    %v2639 = vunpack.c.h.b16 %v311
    %v2640 = vunpack.c.l.b16 %v312
    %v2641 = vunpack.c.h.b16 %v312
    %v2642 = vunpack.c.l.b16 %v313
    %v2643 = vunpack.c.h.b16 %v313
    %v2644 = vunpack.c.l.b16 %v314
    %v2645 = vunpack.c.h.b16 %v314
    %v2646 = vunpack.c.l.b16 %v315
    %v2647 = vunpack.c.h.b16 %v315
    %v2648 = vunpack.c.l.b16 %v316
    %v2649 = vunpack.c.h.b16 %v316
    %v2650 = vunpack.c.l.b16 %v317
    %v2651 = vunpack.c.h.b16 %v317
    %v2652 = vunpack.c.l.b16 %v318
    %v2653 = vunpack.c.h.b16 %v318
    %v2654 = vunpack.c.l.b16 %v319
    %v2655 = vunpack.c.h.b16 %v319
    %v2656 = vunpack.c.l.b16 %v320
    %v2657 = vunpack.c.h.b16 %v320
    %v2658 = vunpack.c.l.b16 %v321
    %v2659 = vunpack.c.h.b16 %v321
    %v2660 = vunpack.c.l.b16 %v322
    %v2661 = vunpack.c.h.b16 %v322
    %v2662 = vunpack.c.l.b16 %v323
    %v2663 = vunpack.c.h.b16 %v323
    %v2664 = vunpack.c.l.b16 %v324
    %v2665 = vunpack.c.h.b16 %v324
    %v2666 = vunpack.c.l.b16 %v325
    %v2667 = vunpack.c.h.b16 %v325
    %v2668 = vunpack.c.l.b16 %v326
    %v2669 = vunpack.c.h.b16 %v326
    %v2670 = vunpack.c.l.b16 %v327
    %v2671 = vunpack.c.h.b16 %v327
    %v2672 = vunpack.c.l.b16 %v328
    %v2673 = vunpack.c.h.b16 %v328
    %v2674 = vunpack.c.l.b16 %v329
    %v2675 = vunpack.c.h.b16 %v329
    %v2676 = vunpack.c.l.b16 %v330
    %v2677 = vunpack.c.h.b16 %v330
    %v2678 = vunpack.c.l.b16 %v331
    %v2679 = vunpack.c.h.b16 %v331
    %v2680 = vunpack.c.l.b16 %v332
    %v2681 = vunpack.c.h.b16 %v332
    %v2682 = vunpack.c.l.b16 %v333
    %v2683 = vunpack.c.h.b16 %v333
    %v2684 = vunpack.c.l.b16 %v334
    %v2685 = vunpack.c.h.b16 %v334
    %v2686 = vunpack.c.l.b16 %v335
    %v2687 = vunpack.c.h.b16 %v335
    %v2688 = vunpack.c.l.b16 %v336
    %v2689 = vunpack.c.h.b16 %v336
    %v2690 = vunpack.c.l.b16 %v337
    %v2691 = vunpack.c.h.b16 %v337
    %v2692 = vunpack.c.l.b16 %v338
    %v2693 = vunpack.c.h.b16 %v338
    %v2694 = vunpack.c.l.b16 %v339
    %v2695 = vunpack.c.h.b16 %v339
    %v2696 = vunpack.c.l.b16 %v340
    %v2697 = vunpack.c.h.b16 %v340
    %v2698 = vunpack.c.l.b16 %v341
    %v2699 = vunpack.c.h.b16 %v341
    %v2700 = vunpack.c.l.b16 %v342
    %v2701 = vunpack.c.h.b16 %v342
    %v2702 = vunpack.c.l.b16 %v343
    %v2703 = vunpack.c.h.b16 %v343
    %v2704 = vunpack.c.l.b16 %v344
    %v2705 = vunpack.c.h.b16 %v344
    %v2706 = vunpack.c.l.b16 %v345
    %v2707 = vunpack.c.h.b16 %v345
    %v2708 = vunpack.c.l.b16 %v346
    %v2709 = vunpack.c.h.b16 %v346
    %v2710 = vunpack.c.l.b16 %v347
    %v2711 = vunpack.c.h.b16 %v347
    %v2712 = vunpack.c.l.b16 %v348
    %v2713 = vunpack.c.h.b16 %v348
    %v2714 = vunpack.c.l.b16 %v349
    %v2715 = vunpack.c.h.b16 %v349
    %v2716 = vunpack.c.l.b16 %v350
    %v2717 = vunpack.c.h.b16 %v350
    %v2718 = vunpack.c.l.b16 %v351
    %v2719 = vunpack.c.h.b16 %v351
    %v2720 = vunpack.c.l.b16 %v352
    %v2721 = vunpack.c.h.b16 %v352
    %v2722 = vunpack.c.l.b16 %v353
    %v2723 = vunpack.c.h.b16 %v353
    %v2724 = vunpack.c.l.b16 %v354
    %v2725 = vunpack.c.h.b16 %v354
    %v2726 = vunpack.c.l.b16 %v355
    %v2727 = vunpack.c.h.b16 %v355
    %v2728 = vunpack.c.l.b16 %v356
    %v2729 = vunpack.c.h.b16 %v356
    %v2730 = vunpack.c.l.b16 %v357
    %v2731 = vunpack.c.h.b16 %v357
    %v2732 = vunpack.c.l.b16 %v358
    %v2733 = vunpack.c.h.b16 %v358
    %v2734 = vunpack.c.l.b16 %v359
    %v2735 = vunpack.c.h.b16 %v359
    %v2736 = vunpack.c.l.b16 %v360
    %v2737 = vunpack.c.h.b16 %v360
    %v2738 = vunpack.c.l.b16 %v361
    %v2739 = vunpack.c.h.b16 %v361
    %v2740 = vunpack.c.l.b16 %v362
    %v2741 = vunpack.c.h.b16 %v362
    %v2742 = vunpack.c.l.b16 %v363
    %v2743 = vunpack.c.h.b16 %v363
    %v2744 = vunpack.c.l.b16 %v364
    %v2745 = vunpack.c.h.b16 %v364
    %v2746 = vunpack.c.l.b16 %v365
    %v2747 = vunpack.c.h.b16 %v365
    %v2748 = vunpack.c.l.b16 %v366
    %v2749 = vunpack.c.h.b16 %v366
    %v2750 = vunpack.c.l.b16 %v367
    %v2751 = vunpack.c.h.b16 %v367
    %v2752 = vunpack.c.l.b16 %v368
    %v2753 = vunpack.c.h.b16 %v368
    %v2754 = vunpack.c.l.b16 %v369
    %v2755 = vunpack.c.h.b16 %v369
    %v2756 = vunpack.c.l.b16 %v370
    %v2757 = vunpack.c.h.b16 %v370
    %v2758 = vunpack.c.l.b16 %v371
    %v2759 = vunpack.c.h.b16 %v371
    %v2760 = vunpack.c.l.b16 %v372
    %v2761 = vunpack.c.h.b16 %v372
    %v2762 = vunpack.c.l.b16 %v373
    %v2763 = vunpack.c.h.b16 %v373
    %v2764 = vunpack.c.l.b16 %v374
    %v2765 = vunpack.c.h.b16 %v374
    %v2766 = vunpack.c.l.b16 %v375
    %v2767 = vunpack.c.h.b16 %v375
    %v2768 = vunpack.c.l.b16 %v376
    %v2769 = vunpack.c.h.b16 %v376
    %v2770 = vunpack.c.l.b16 %v377
    %v2771 = vunpack.c.h.b16 %v377
    %v2772 = vunpack.c.l.b16 %v378
    %v2773 = vunpack.c.h.b16 %v378
    %v2774 = vunpack.c.l.b16 %v379
    %v2775 = vunpack.c.h.b16 %v379
    %v2776 = vunpack.c.l.b16 %v380
    %v2777 = vunpack.c.h.b16 %v380
    %v2778 = vunpack.c.l.b16 %v381
    %v2779 = vunpack.c.h.b16 %v381
    %v2780 = vunpack.c.l.b16 %v382
    %v2781 = vunpack.c.h.b16 %v382
    %v2782 = vunpack.c.l.b16 %v383
    %v2783 = vunpack.c.h.b16 %v383
    %v2784 = vunpack.c.l.b16 %v384
    %v2785 = vunpack.c.h.b16 %v384
    %v2786 = vunpack.c.l.b16 %v385
    %v2787 = vunpack.c.h.b16 %v385
    %v2788 = vunpack.c.l.b16 %v386
    %v2789 = vunpack.c.h.b16 %v386
    %v2790 = vunpack.c.l.b16 %v387
    %v2791 = vunpack.c.h.b16 %v387
    %v2792 = vunpack.c.l.b16 %v388
    %v2793 = vunpack.c.h.b16 %v388
    %v2794 = vunpack.c.l.b16 %v389
    %v2795 = vunpack.c.h.b16 %v389
    %v2796 = vunpack.c.l.b16 %v390
    %v2797 = vunpack.c.h.b16 %v390
    %v2798 = vunpack.c.l.b16 %v391
    %v2799 = vunpack.c.h.b16 %v391
    %v2800 = vunpack.c.l.b16 %v392
    %v2801 = vunpack.c.h.b16 %v392
    %v2802 = vunpack.c.l.b16 %v393
    %v2803 = vunpack.c.h.b16 %v393
    %v2804 = vunpack.c.l.b16 %v394
    %v2805 = vunpack.c.h.b16 %v394
    %v2806 = vunpack.c.l.b16 %v395
    %v2807 = vunpack.c.h.b16 %v395
    %v2808 = vunpack.c.l.b16 %v396
    %v2809 = vunpack.c.h.b16 %v396
    %v2810 = vunpack.c.l.b16 %v397
    %v2811 = vunpack.c.h.b16 %v397
    %v2812 = vunpack.c.l.b16 %v398
    %v2813 = vunpack.c.h.b16 %v398
    %v2814 = vunpack.c.l.b16 %v399
    %v2815 = vunpack.c.h.b16 %v399
    %v2816 = vunpack.c.l.b16 %v400
    %v2817 = vunpack.c.h.b16 %v400
    %v2818 = vunpack.c.l.b16 %v401
    %v2819 = vunpack.c.h.b16 %v401
    %v2820 = vunpack.c.l.b16 %v402
    %v2821 = vunpack.c.h.b16 %v402
    %v2822 = vunpack.c.l.b16 %v403
    %v2823 = vunpack.c.h.b16 %v403
    %v2824 = vunpack.c.l.b16 %v404
    %v2825 = vunpack.c.h.b16 %v404
    %v2826 = vunpack.c.l.b16 %v405
    %v2827 = vunpack.c.h.b16 %v405
    %v2828 = vunpack.c.l.b16 %v406
    %v2829 = vunpack.c.h.b16 %v406
    %v2830 = vunpack.c.l.b16 %v407
    %v2831 = vunpack.c.h.b16 %v407
    %v2832 = vunpack.c.l.b16 %v408
    %v2833 = vunpack.c.h.b16 %v408
    %v2834 = vunpack.c.l.b16 %v409
    %v2835 = vunpack.c.h.b16 %v409
    %v2836 = vunpack.c.l.b16 %v410
    %v2837 = vunpack.c.h.b16 %v410
    %v2838 = vunpack.c.l.b16 %v411
    %v2839 = vunpack.c.h.b16 %v411
    %v2840 = vunpack.c.l.b16 %v412
    %v2841 = vunpack.c.h.b16 %v412
    %v2842 = vunpack.c.l.b16 %v413
    %v2843 = vunpack.c.h.b16 %v413
    %v2844 = vunpack.c.l.b16 %v414
    %v2845 = vunpack.c.h.b16 %v414
    %v2846 = vunpack.c.l.b16 %v415
    %v2847 = vunpack.c.h.b16 %v415
    %v2848 = vunpack.c.l.b16 %v416
    %v2849 = vunpack.c.h.b16 %v416
    %v2850 = vunpack.c.l.b16 %v417
    %v2851 = vunpack.c.h.b16 %v417
    %v2852 = vunpack.c.l.b16 %v418
    %v2853 = vunpack.c.h.b16 %v418
    %v2854 = vunpack.c.l.b16 %v419
    %v2855 = vunpack.c.h.b16 %v419
    %v2856 = vunpack.c.l.b16 %v420
    %v2857 = vunpack.c.h.b16 %v420
    %v2858 = vunpack.c.l.b16 %v421
    %v2859 = vunpack.c.h.b16 %v421
    %v2860 = vunpack.c.l.b16 %v422
    %v2861 = vunpack.c.h.b16 %v422
    %v2862 = vunpack.c.l.b16 %v423
    %v2863 = vunpack.c.h.b16 %v423
    %v2864 = vunpack.c.l.b16 %v424
    %v2865 = vunpack.c.h.b16 %v424
    %v2866 = vunpack.c.l.b16 %v425
    %v2867 = vunpack.c.h.b16 %v425
    %v2868 = vunpack.c.l.b16 %v426
    %v2869 = vunpack.c.h.b16 %v426
    %v2870 = vunpack.c.l.b16 %v427
    %v2871 = vunpack.c.h.b16 %v427
    %v2872 = vunpack.c.l.b16 %v428
    %v2873 = vunpack.c.h.b16 %v428
    %v2874 = vunpack.c.l.b16 %v429
    %v2875 = vunpack.c.h.b16 %v429
    %v2876 = vunpack.c.l.b16 %v430
    %v2877 = vunpack.c.h.b16 %v430
    %v2878 = vunpack.c.l.b16 %v431
    %v2879 = vunpack.c.h.b16 %v431
    %v2880 = vunpack.c.l.b16 %v432
    %v2881 = vunpack.c.h.b16 %v432
    %v2882 = vunpack.c.l.b16 %v433
    %v2883 = vunpack.c.h.b16 %v433
    %v2884 = vunpack.c.l.b16 %v434
    %v2885 = vunpack.c.h.b16 %v434
    %v2886 = vunpack.c.l.b16 %v435
    %v2887 = vunpack.c.h.b16 %v435
    %v2888 = vunpack.c.l.b16 %v436
    %v2889 = vunpack.c.h.b16 %v436
    %v2890 = vunpack.c.l.b16 %v437
    %v2891 = vunpack.c.h.b16 %v437
    %v2892 = vunpack.c.l.b16 %v438
    %v2893 = vunpack.c.h.b16 %v438
    %v2894 = vunpack.c.l.b16 %v439
    %v2895 = vunpack.c.h.b16 %v439
    %v2896 = vunpack.c.l.b16 %v440
    %v2897 = vunpack.c.h.b16 %v440
    %v2898 = vunpack.c.l.b16 %v441
    %v2899 = vunpack.c.h.b16 %v441
    %v2900 = vunpack.c.l.b16 %v442
    %v2901 = vunpack.c.h.b16 %v442
    %v2902 = vunpack.c.l.b16 %v443
    %v2903 = vunpack.c.h.b16 %v443
    %v2904 = vunpack.c.l.b16 %v444
    %v2905 = vunpack.c.h.b16 %v444
    %v2906 = vunpack.c.l.b16 %v445
    %v2907 = vunpack.c.h.b16 %v445
    %v2908 = vunpack.c.l.b16 %v446
    %v2909 = vunpack.c.h.b16 %v446
    %v2910 = vunpack.c.l.b16 %v447
    %v2911 = vunpack.c.h.b16 %v447
    %v2912 = vunpack.c.l.b16 %v448
    %v2913 = vunpack.c.h.b16 %v448
    %v2914 = vunpack.c.l.b16 %v449
    %v2915 = vunpack.c.h.b16 %v449
    %v2916 = vunpack.c.l.b16 %v450
    %v2917 = vunpack.c.h.b16 %v450
    %v2918 = vunpack.c.l.b16 %v451
    %v2919 = vunpack.c.h.b16 %v451
    %v2920 = vunpack.c.l.b16 %v452
    %v2921 = vunpack.c.h.b16 %v452
    %v2922 = vunpack.c.l.b16 %v453
    %v2923 = vunpack.c.h.b16 %v453
    %v2924 = vunpack.c.l.b16 %v454
    %v2925 = vunpack.c.h.b16 %v454
    %v2926 = vunpack.c.l.b16 %v455
    %v2927 = vunpack.c.h.b16 %v455
    %v2928 = vunpack.c.l.b16 %v456
    %v2929 = vunpack.c.h.b16 %v456
    %v2930 = vunpack.c.l.b16 %v457
    %v2931 = vunpack.c.h.b16 %v457
    %v2932 = vunpack.c.l.b16 %v458
    %v2933 = vunpack.c.h.b16 %v458
    %v2934 = vunpack.c.l.b16 %v459
    %v2935 = vunpack.c.h.b16 %v459
    %v2936 = vunpack.c.l.b16 %v460
    %v2937 = vunpack.c.h.b16 %v460
    %v2938 = vunpack.c.l.b16 %v461
    %v2939 = vunpack.c.h.b16 %v461
    %v2940 = vunpack.c.l.b16 %v462
    %v2941 = vunpack.c.h.b16 %v462
    %v2942 = vunpack.c.l.b16 %v463
    %v2943 = vunpack.c.h.b16 %v463
    %v2944 = vunpack.c.l.b16 %v464
    %v2945 = vunpack.c.h.b16 %v464
    %v2946 = vunpack.c.l.b16 %v465
    %v2947 = vunpack.c.h.b16 %v465
    %v2948 = vunpack.c.l.b16 %v466
    %v2949 = vunpack.c.h.b16 %v466
    %v2950 = vunpack.c.l.b16 %v467
    %v2951 = vunpack.c.h.b16 %v467
    %v2952 = vunpack.c.l.b16 %v468
    %v2953 = vunpack.c.h.b16 %v468
    %v2954 = vunpack.c.l.b16 %v469
    %v2955 = vunpack.c.h.b16 %v469
    %v2956 = vunpack.c.l.b16 %v470
    %v2957 = vunpack.c.h.b16 %v470
    %v2958 = vunpack.c.l.b16 %v471
    %v2959 = vunpack.c.h.b16 %v471
    %v2960 = vunpack.c.l.b16 %v472
    %v2961 = vunpack.c.h.b16 %v472
    %v2962 = vunpack.c.l.b16 %v473
    %v2963 = vunpack.c.h.b16 %v473
    %v2964 = vunpack.c.l.b16 %v474
    %v2965 = vunpack.c.h.b16 %v474
    %v2966 = vunpack.c.l.b16 %v475
    %v2967 = vunpack.c.h.b16 %v475
    %v2968 = vunpack.c.l.b16 %v476
    %v2969 = vunpack.c.h.b16 %v476
    %v2970 = vunpack.c.l.b16 %v477
    %v2971 = vunpack.c.h.b16 %v477
    %v2972 = vunpack.c.l.b16 %v478
    %v2973 = vunpack.c.h.b16 %v478
    %v2974 = vunpack.c.l.b16 %v479
    %v2975 = vunpack.c.h.b16 %v479
    %v2976 = vunpack.c.l.b16 %v480
    %v2977 = vunpack.c.h.b16 %v480
    %v2978 = vunpack.c.l.b16 %v481
    %v2979 = vunpack.c.h.b16 %v481
    %v2980 = vunpack.c.l.b16 %v482
    %v2981 = vunpack.c.h.b16 %v482
    %v2982 = vunpack.c.l.b16 %v483
    %v2983 = vunpack.c.h.b16 %v483
    %v2984 = vunpack.c.l.b16 %v484
    %v2985 = vunpack.c.h.b16 %v484
    %v2986 = vunpack.c.l.b16 %v485
    %v2987 = vunpack.c.h.b16 %v485
    %v2988 = vunpack.c.l.b16 %v486
    %v2989 = vunpack.c.h.b16 %v486
    %v2990 = vunpack.c.l.b16 %v487
    %v2991 = vunpack.c.h.b16 %v487
    %v2992 = vunpack.c.l.b16 %v488
    %v2993 = vunpack.c.h.b16 %v488
    %v2994 = vunpack.c.l.b16 %v489
    %v2995 = vunpack.c.h.b16 %v489
    %v2996 = vunpack.c.l.b16 %v490
    %v2997 = vunpack.c.h.b16 %v490
    %v2998 = vunpack.c.l.b16 %v491
    %v2999 = vunpack.c.h.b16 %v491
    %v3000 = vunpack.c.l.b16 %v492
    %v3001 = vunpack.c.h.b16 %v492
    %v3002 = vunpack.c.l.b16 %v493
    %v3003 = vunpack.c.h.b16 %v493
    %v3004 = vunpack.c.l.b16 %v494
    %v3005 = vunpack.c.h.b16 %v494
    %v3006 = vunpack.c.l.b16 %v495
    %v3007 = vunpack.c.h.b16 %v495
    %v3008 = vunpack.c.l.b16 %v496
    %v3009 = vunpack.c.h.b16 %v496
    %v3010 = vunpack.c.l.b16 %v497
    %v3011 = vunpack.c.h.b16 %v497
    %v3012 = vunpack.c.l.b16 %v498
    %v3013 = vunpack.c.h.b16 %v498
    %v3014 = vunpack.c.l.b16 %v499
    %v3015 = vunpack.c.h.b16 %v499
    %v3016 = vunpack.c.l.b16 %v500
    %v3017 = vunpack.c.h.b16 %v500
    %v3018 = vunpack.c.l.b16 %v501
    %v3019 = vunpack.c.h.b16 %v501
    %v3020 = vunpack.c.l.b16 %v502
    %v3021 = vunpack.c.h.b16 %v502
    %v3022 = vunpack.c.l.b16 %v503
    %v3023 = vunpack.c.h.b16 %v503
    %v3024 = vunpack.c.l.b16 %v504
    %v3025 = vunpack.c.h.b16 %v504
    %v3026 = vunpack.c.l.b16 %v505
    %v3027 = vunpack.c.h.b16 %v505
    %v3028 = vunpack.c.l.b16 %v506
    %v3029 = vunpack.c.h.b16 %v506
    %v3030 = vunpack.c.l.b16 %v507
    %v3031 = vunpack.c.h.b16 %v507
    %v3032 = vunpack.c.l.b16 %v508
    %v3033 = vunpack.c.h.b16 %v508
    %v3034 = vunpack.c.l.b16 %v509
    %v3035 = vunpack.c.h.b16 %v509
    %v3036 = vunpack.c.l.b16 %v510
    %v3037 = vunpack.c.h.b16 %v510
    %v3038 = vunpack.c.l.b16 %v511
    %v3039 = vunpack.c.h.b16 %v511
    %v3040 = vunpack.c.l.b16 %v512
    %v3041 = vunpack.c.h.b16 %v512
    %v3042 = vunpack.c.l.b16 %v513
    %v3043 = vunpack.c.h.b16 %v513
    %v3044 = vunpack.c.l.b16 %v514
    %v3045 = vunpack.c.h.b16 %v514
    %v3046 = vunpack.c.l.b16 %v515
    %v3047 = vunpack.c.h.b16 %v515
    %v3048 = vunpack.c.l.b16 %v516
    %v3049 = vunpack.c.h.b16 %v516
    %v3050 = vunpack.c.l.b16 %v517
    %v3051 = vunpack.c.h.b16 %v517
    %v3052 = vunpack.c.l.b16 %v518
    %v3053 = vunpack.c.h.b16 %v518
    %v3054 = vunpack.c.l.b16 %v519
    %v3055 = vunpack.c.h.b16 %v519
    %v3056 = vunpack.c.l.b16 %v520
    %v3057 = vunpack.c.h.b16 %v520
    %v3058 = vunpack.c.l.b16 %v521
    %v3059 = vunpack.c.h.b16 %v521
    %v3060 = vunpack.c.l.b16 %v522
    %v3061 = vunpack.c.h.b16 %v522
    %v3062 = vunpack.c.l.b16 %v523
    %v3063 = vunpack.c.h.b16 %v523
    %v3064 = vunpack.c.l.b16 %v524
    %v3065 = vunpack.c.h.b16 %v524
    %v3066 = vunpack.c.l.b16 %v525
    %v3067 = vunpack.c.h.b16 %v525
    %v3068 = vunpack.c.l.b16 %v526
    %v3069 = vunpack.c.h.b16 %v526
    %v3070 = vunpack.c.l.b16 %v527
    %v3071 = vunpack.c.h.b16 %v527
    %v3072 = vunpack.c.l.b16 %v528
    %v3073 = vunpack.c.h.b16 %v528
    %v3074 = vunpack.c.l.b16 %v529
    %v3075 = vunpack.c.h.b16 %v529
    %v3076 = vunpack.c.l.b16 %v530
    %v3077 = vunpack.c.h.b16 %v530
    %v3078 = vunpack.c.l.b16 %v531
    %v3079 = vunpack.c.h.b16 %v531
    %v3080 = vunpack.c.l.b16 %v532
    %v3081 = vunpack.c.h.b16 %v532
    %v3082 = vunpack.c.l.b16 %v533
    %v3083 = vunpack.c.h.b16 %v533
    %v3084 = vunpack.c.l.b16 %v534
    %v3085 = vunpack.c.h.b16 %v534
    %v3086 = vunpack.c.l.b16 %v535
    %v3087 = vunpack.c.h.b16 %v535
    %v3088 = vunpack.c.l.b16 %v536
    %v3089 = vunpack.c.h.b16 %v536
    %v3090 = vunpack.c.l.b16 %v537
    %v3091 = vunpack.c.h.b16 %v537
    %v3092 = vunpack.c.l.b16 %v538
    %v3093 = vunpack.c.h.b16 %v538
    %v3094 = vunpack.c.l.b16 %v539
    %v3095 = vunpack.c.h.b16 %v539
    %v3096 = vunpack.c.l.b16 %v540
    %v3097 = vunpack.c.h.b16 %v540
    %v3098 = vunpack.c.l.b16 %v541
    %v3099 = vunpack.c.h.b16 %v541
    %v3100 = vunpack.c.l.b16 %v542
    %v3101 = vunpack.c.h.b16 %v542
    %v3102 = vunpack.c.l.b16 %v543
    %v3103 = vunpack.c.h.b16 %v543
    %v3104 = vunpack.c.l.b16 %v544
    %v3105 = vunpack.c.h.b16 %v544
    %v3106 = vunpack.c.l.b16 %v545
    %v3107 = vunpack.c.h.b16 %v545
    %v3108 = vunpack.c.l.b16 %v546
    %v3109 = vunpack.c.h.b16 %v546
    %v3110 = vunpack.c.l.b16 %v547
    %v3111 = vunpack.c.h.b16 %v547
    %v3112 = vunpack.c.l.b16 %v548
    %v3113 = vunpack.c.h.b16 %v548
    %v3114 = vunpack.c.l.b16 %v549
    %v3115 = vunpack.c.h.b16 %v549
    %v3116 = vunpack.c.l.b16 %v550
    %v3117 = vunpack.c.h.b16 %v550
    %v3118 = vunpack.c.l.b16 %v551
    %v3119 = vunpack.c.h.b16 %v551
    %v3120 = vunpack.c.l.b16 %v552
    %v3121 = vunpack.c.h.b16 %v552
    %v3122 = vunpack.c.l.b16 %v553
    %v3123 = vunpack.c.h.b16 %v553
    %v3124 = vunpack.c.l.b16 %v554
    %v3125 = vunpack.c.h.b16 %v554
    %v3126 = vunpack.c.l.b16 %v555
    %v3127 = vunpack.c.h.b16 %v555
    %v3128 = vunpack.c.l.b16 %v556
    %v3129 = vunpack.c.h.b16 %v556
    %v3130 = vunpack.c.l.b16 %v557
    %v3131 = vunpack.c.h.b16 %v557
    %v3132 = vunpack.c.l.b16 %v558
    %v3133 = vunpack.c.h.b16 %v558
    %v3134 = vunpack.c.l.b16 %v559
    %v3135 = vunpack.c.h.b16 %v559
    %v3136 = vunpack.c.l.b16 %v560
    %v3137 = vunpack.c.h.b16 %v560
    %v3138 = vunpack.c.l.b16 %v561
    %v3139 = vunpack.c.h.b16 %v561
    %v3140 = vunpack.c.l.b16 %v562
    %v3141 = vunpack.c.h.b16 %v562
    %v3142 = vunpack.c.l.b16 %v563
    %v3143 = vunpack.c.h.b16 %v563
    %v3144 = vunpack.c.l.b16 %v564
    %v3145 = vunpack.c.h.b16 %v564
    %v3146 = vunpack.c.l.b16 %v565
    %v3147 = vunpack.c.h.b16 %v565
    %v3148 = vunpack.c.l.b16 %v566
    %v3149 = vunpack.c.h.b16 %v566
    %v3150 = vunpack.c.l.b16 %v567
    %v3151 = vunpack.c.h.b16 %v567
    %v3152 = vunpack.c.l.b16 %v568
    %v3153 = vunpack.c.h.b16 %v568
    %v3154 = vunpack.c.l.b16 %v569
    %v3155 = vunpack.c.h.b16 %v569
    %v3156 = vunpack.c.l.b16 %v570
    %v3157 = vunpack.c.h.b16 %v570
    %v3158 = vunpack.c.l.b16 %v571
    %v3159 = vunpack.c.h.b16 %v571
    %v3160 = vunpack.c.l.b16 %v572
    %v3161 = vunpack.c.h.b16 %v572
    %v3162 = vunpack.c.l.b16 %v573
    %v3163 = vunpack.c.h.b16 %v573
    %v3164 = vunpack.c.l.b16 %v574
    %v3165 = vunpack.c.h.b16 %v574
    %v3166 = vunpack.c.l.b16 %v575
    %v3167 = vunpack.c.h.b16 %v575
    %v3168 = vunpack.c.l.b16 %v576
    %v3169 = vunpack.c.h.b16 %v576
    %v3170 = vunpack.c.l.b16 %v577
    %v3171 = vunpack.c.h.b16 %v577
    %v3172 = vunpack.c.l.b16 %v578
    %v3173 = vunpack.c.h.b16 %v578
    %v3174 = vunpack.c.l.b16 %v579
    %v3175 = vunpack.c.h.b16 %v579
    %v3176 = vunpack.c.l.b16 %v580
    %v3177 = vunpack.c.h.b16 %v580
    %v3178 = vunpack.c.l.b16 %v581
    %v3179 = vunpack.c.h.b16 %v581
    %v3180 = vunpack.c.l.b16 %v582
    %v3181 = vunpack.c.h.b16 %v582
    %v3182 = vunpack.c.l.b16 %v583
    %v3183 = vunpack.c.h.b16 %v583
    %v3184 = vunpack.c.l.b16 %v584
    %v3185 = vunpack.c.h.b16 %v584
    %v3186 = vunpack.c.l.b16 %v585
    %v3187 = vunpack.c.h.b16 %v585
    %v3188 = vunpack.c.l.b16 %v586
    %v3189 = vunpack.c.h.b16 %v586
    %v3190 = vunpack.c.l.b16 %v587
    %v3191 = vunpack.c.h.b16 %v587
    %v3192 = vunpack.c.l.b16 %v588
    %v3193 = vunpack.c.h.b16 %v588
    %v3194 = vunpack.c.l.b16 %v589
    %v3195 = vunpack.c.h.b16 %v589
    %v3196 = vunpack.c.l.b16 %v590
    %v3197 = vunpack.c.h.b16 %v590
    %v3198 = vunpack.c.l.b16 %v591
    %v3199 = vunpack.c.h.b16 %v591
    %v3200 = vunpack.c.l.b16 %v592
    %v3201 = vunpack.c.h.b16 %v592
    %v3202 = vunpack.c.l.b16 %v593
    %v3203 = vunpack.c.h.b16 %v593
    %v3204 = vunpack.c.l.b16 %v594
    %v3205 = vunpack.c.h.b16 %v594
    %v3206 = vunpack.c.l.b16 %v595
    %v3207 = vunpack.c.h.b16 %v595
    %v3208 = vunpack.c.l.b16 %v596
    %v3209 = vunpack.c.h.b16 %v596
    %v3210 = vunpack.c.l.b16 %v597
    %v3211 = vunpack.c.h.b16 %v597
    %v3212 = vunpack.c.l.b16 %v598
    %v3213 = vunpack.c.h.b16 %v598
    %v3214 = vunpack.c.l.b16 %v599
    %v3215 = vunpack.c.h.b16 %v599
    %v3216 = vunpack.c.l.b16 %v600
    %v3217 = vunpack.c.h.b16 %v600
    %v3218 = vunpack.c.l.b16 %v601
    %v3219 = vunpack.c.h.b16 %v601
    %v3220 = vunpack.c.l.b16 %v602
    %v3221 = vunpack.c.h.b16 %v602
    %v3222 = vunpack.c.l.b16 %v603
    %v3223 = vunpack.c.h.b16 %v603
    %v3224 = vunpack.c.l.b16 %v604
    %v3225 = vunpack.c.h.b16 %v604
    %v3226 = vunpack.c.l.b16 %v605
    %v3227 = vunpack.c.h.b16 %v605
    %v3228 = vunpack.c.l.b16 %v606
    %v3229 = vunpack.c.h.b16 %v606
    %v3230 = vunpack.c.l.b16 %v607
    %v3231 = vunpack.c.h.b16 %v607
    %v3232 = vunpack.c.l.b16 %v608
    %v3233 = vunpack.c.h.b16 %v608
    %v3234 = vunpack.c.l.b16 %v609
    %v3235 = vunpack.c.h.b16 %v609
    %v3236 = vunpack.c.l.b16 %v610
    %v3237 = vunpack.c.h.b16 %v610
    %v3238 = vunpack.c.l.b16 %v611
    %v3239 = vunpack.c.h.b16 %v611
    %v3240 = vunpack.c.l.b16 %v612
    %v3241 = vunpack.c.h.b16 %v612
    %v3242 = vunpack.c.l.b16 %v613
    %v3243 = vunpack.c.h.b16 %v613
    %v3244 = vunpack.c.l.b16 %v614
    %v3245 = vunpack.c.h.b16 %v614
    %v3246 = vunpack.c.l.b16 %v615
    %v3247 = vunpack.c.h.b16 %v615
    %v3248 = vunpack.c.l.b16 %v616
    %v3249 = vunpack.c.h.b16 %v616
    %v3250 = vunpack.c.l.b16 %v617
    %v3251 = vunpack.c.h.b16 %v617
    %v3252 = vunpack.c.l.b16 %v618
    %v3253 = vunpack.c.h.b16 %v618
    %v3254 = vunpack.c.l.b16 %v619
    %v3255 = vunpack.c.h.b16 %v619
    %v3256 = vunpack.c.l.b16 %v620
    %v3257 = vunpack.c.h.b16 %v620
    %v3258 = vunpack.c.l.b16 %v621
    %v3259 = vunpack.c.h.b16 %v621
    %v3260 = vunpack.c.l.b16 %v622
    %v3261 = vunpack.c.h.b16 %v622
    %v3262 = vunpack.c.l.b16 %v623
    %v3263 = vunpack.c.h.b16 %v623
    %v3264 = vunpack.c.l.b16 %v624
    %v3265 = vunpack.c.h.b16 %v624
    %v3266 = vunpack.c.l.b16 %v625
    %v3267 = vunpack.c.h.b16 %v625
    %v3268 = vunpack.c.l.b16 %v626
    %v3269 = vunpack.c.h.b16 %v626
    %v3270 = vunpack.c.l.b16 %v627
    %v3271 = vunpack.c.h.b16 %v627
    %v3272 = vunpack.c.l.b16 %v628
    %v3273 = vunpack.c.h.b16 %v628
    %v3274 = vunpack.c.l.b16 %v629
    %v3275 = vunpack.c.h.b16 %v629
    %v3276 = vunpack.c.l.b16 %v630
    %v3277 = vunpack.c.h.b16 %v630
    %v3278 = vunpack.c.l.b16 %v631
    %v3279 = vunpack.c.h.b16 %v631
    %v3280 = vunpack.c.l.b16 %v632
    %v3281 = vunpack.c.h.b16 %v632
    %v3282 = vunpack.c.l.b16 %v633
    %v3283 = vunpack.c.h.b16 %v633
    %v3284 = vunpack.c.l.b16 %v634
    %v3285 = vunpack.c.h.b16 %v634
    %v3286 = vunpack.c.l.b16 %v635
    %v3287 = vunpack.c.h.b16 %v635
    %v3288 = vunpack.c.l.b16 %v636
    %v3289 = vunpack.c.h.b16 %v636
    %v3290 = vunpack.c.l.b16 %v637
    %v3291 = vunpack.c.h.b16 %v637
    %v3292 = vunpack.c.l.b16 %v638
    %v3293 = vunpack.c.h.b16 %v638
    %v3294 = vunpack.c.l.b16 %v639
    %v3295 = vunpack.c.h.b16 %v639
    %v3296 = vunpack.c.l.b16 %v640
    %v3297 = vunpack.c.h.b16 %v640
    %v3298 = vunpack.c.l.b16 %v641
    %v3299 = vunpack.c.h.b16 %v641
    %v3300 = vunpack.c.l.b16 %v642
    %v3301 = vunpack.c.h.b16 %v642
    %v3302 = vunpack.c.l.b16 %v643
    %v3303 = vunpack.c.h.b16 %v643
    %v3304 = vunpack.c.l.b16 %v644
    %v3305 = vunpack.c.h.b16 %v644
    %v3306 = vunpack.c.l.b16 %v645
    %v3307 = vunpack.c.h.b16 %v645
    %v3308 = vunpack.c.l.b16 %v646
    %v3309 = vunpack.c.h.b16 %v646
    %v3310 = vunpack.c.l.b16 %v647
    %v3311 = vunpack.c.h.b16 %v647
    %v3312 = vunpack.c.l.b16 %v648
    %v3313 = vunpack.c.h.b16 %v648
    %v3314 = vunpack.c.l.b16 %v649
    %v3315 = vunpack.c.h.b16 %v649
    %v3316 = vunpack.c.l.b16 %v650
    %v3317 = vunpack.c.h.b16 %v650
    %v3318 = vunpack.c.l.b16 %v651
    %v3319 = vunpack.c.h.b16 %v651
    %v3320 = vunpack.c.l.b16 %v652
    %v3321 = vunpack.c.h.b16 %v652
    %v3322 = vunpack.c.l.b16 %v653
    %v3323 = vunpack.c.h.b16 %v653
    %v3324 = vunpack.c.l.b16 %v654
    %v3325 = vunpack.c.h.b16 %v654
    %v3326 = vunpack.c.l.b16 %v655
    %v3327 = vunpack.c.h.b16 %v655
    %v3328 = vunpack.c.l.b16 %v656
    %v3329 = vunpack.c.h.b16 %v656
    %v3330 = vunpack.c.l.b16 %v657
    %v3331 = vunpack.c.h.b16 %v657
    %v3332 = vunpack.c.l.b16 %v658
    %v3333 = vunpack.c.h.b16 %v658
    %v3334 = vunpack.c.l.b16 %v659
    %v3335 = vunpack.c.h.b16 %v659
    %v3336 = vunpack.c.l.b16 %v660
    %v3337 = vunpack.c.h.b16 %v660
    %v3338 = vunpack.c.l.b16 %v661
    %v3339 = vunpack.c.h.b16 %v661
    %v3340 = vunpack.c.l.b16 %v662
    %v3341 = vunpack.c.h.b16 %v662
    %v3342 = vunpack.c.l.b16 %v663
    %v3343 = vunpack.c.h.b16 %v663
    %v3344 = vunpack.c.l.b16 %v664
    %v3345 = vunpack.c.h.b16 %v664
    %v3346 = vunpack.c.l.b16 %v665
    %v3347 = vunpack.c.h.b16 %v665
    %v3348 = vunpack.c.l.b16 %v666
    %v3349 = vunpack.c.h.b16 %v666
    %v3350 = vunpack.c.l.b16 %v667
    %v3351 = vunpack.c.h.b16 %v667
    %v3352 = vunpack.c.l.b16 %v668
    %v3353 = vunpack.c.h.b16 %v668
    %v3354 = vunpack.c.l.b16 %v669
    %v3355 = vunpack.c.h.b16 %v669
    %v3356 = vunpack.c.l.b16 %v670
    %v3357 = vunpack.c.h.b16 %v670
    %v3358 = vunpack.c.l.b16 %v671
    %v3359 = vunpack.c.h.b16 %v671
    %v3360 = vunpack.c.l.b16 %v672
    %v3361 = vunpack.c.h.b16 %v672
    %v3362 = vunpack.c.l.b16 %v673
    %v3363 = vunpack.c.h.b16 %v673
    %v3364 = vunpack.c.l.b16 %v674
    %v3365 = vunpack.c.h.b16 %v674
    %v3366 = vunpack.c.l.b16 %v675
    %v3367 = vunpack.c.h.b16 %v675
    %v3368 = vunpack.c.l.b16 %v676
    %v3369 = vunpack.c.h.b16 %v676
    %v3370 = vunpack.c.l.b16 %v677
    %v3371 = vunpack.c.h.b16 %v677
    %v3372 = vunpack.c.l.b16 %v678
    %v3373 = vunpack.c.h.b16 %v678
    %v3374 = vunpack.c.l.b16 %v679
    %v3375 = vunpack.c.h.b16 %v679
    %v3376 = vunpack.c.l.b16 %v680
    %v3377 = vunpack.c.h.b16 %v680
    %v3378 = vunpack.c.l.b16 %v681
    %v3379 = vunpack.c.h.b16 %v681
    %v3380 = vunpack.c.l.b16 %v682
    %v3381 = vunpack.c.h.b16 %v682
    %v3382 = vunpack.c.l.b16 %v683
    %v3383 = vunpack.c.h.b16 %v683
    %v3384 = vunpack.c.l.b16 %v684
    %v3385 = vunpack.c.h.b16 %v684
    %v3386 = vunpack.c.l.b16 %v685
    %v3387 = vunpack.c.h.b16 %v685
    %v3388 = vunpack.c.l.b16 %v686
    %v3389 = vunpack.c.h.b16 %v686
    %v3390 = vunpack.c.l.b16 %v687
    %v3391 = vunpack.c.h.b16 %v687
    %v3392 = vunpack.c.l.b16 %v688
    %v3393 = vunpack.c.h.b16 %v688
    %v3394 = vunpack.c.l.b16 %v689
    %v3395 = vunpack.c.h.b16 %v689
    %v3396 = vunpack.c.l.b16 %v690
    %v3397 = vunpack.c.h.b16 %v690
    %v3398 = vunpack.c.l.b16 %v691
    %v3399 = vunpack.c.h.b16 %v691
    %v3400 = vunpack.c.l.b16 %v692
    %v3401 = vunpack.c.h.b16 %v692
    %v3402 = vunpack.c.l.b16 %v693
    %v3403 = vunpack.c.h.b16 %v693
    %v3404 = vunpack.c.l.b16 %v694
    %v3405 = vunpack.c.h.b16 %v694
    %v3406 = vunpack.c.l.b16 %v695
    %v3407 = vunpack.c.h.b16 %v695
    %v3408 = vunpack.c.l.b16 %v696
    %v3409 = vunpack.c.h.b16 %v696
    %v3410 = vunpack.c.l.b16 %v697
    %v3411 = vunpack.c.h.b16 %v697
    %v3412 = vunpack.c.l.b16 %v698
    %v3413 = vunpack.c.h.b16 %v698
    %v3414 = vunpack.c.l.b16 %v699
    %v3415 = vunpack.c.h.b16 %v699
    %v3416 = vunpack.c.l.b16 %v700
    %v3417 = vunpack.c.h.b16 %v700
    %v3418 = vunpack.c.l.b16 %v701
    %v3419 = vunpack.c.h.b16 %v701
    %v3420 = vunpack.c.l.b16 %v702
    %v3421 = vunpack.c.h.b16 %v702
    %v3422 = vunpack.c.l.b16 %v703
    %v3423 = vunpack.c.h.b16 %v703
    %v3424 = vunpack.c.l.b16 %v704
    %v3425 = vunpack.c.h.b16 %v704
    %v3426 = vunpack.c.l.b16 %v705
    %v3427 = vunpack.c.h.b16 %v705
    %v3428 = vunpack.c.l.b16 %v706
    %v3429 = vunpack.c.h.b16 %v706
    %v3430 = vunpack.c.l.b16 %v707
    %v3431 = vunpack.c.h.b16 %v707
    %v3432 = vunpack.c.l.b16 %v708
    %v3433 = vunpack.c.h.b16 %v708
    %v3434 = vunpack.c.l.b16 %v709
    %v3435 = vunpack.c.h.b16 %v709
    %v3436 = vunpack.c.l.b16 %v710
    %v3437 = vunpack.c.h.b16 %v710
    %v3438 = vunpack.c.l.b16 %v711
    %v3439 = vunpack.c.h.b16 %v711
    %v3440 = vunpack.c.l.b16 %v712
    %v3441 = vunpack.c.h.b16 %v712
    %v3442 = vunpack.c.l.b16 %v713
    %v3443 = vunpack.c.h.b16 %v713
    %v3444 = vunpack.c.l.b16 %v714
    %v3445 = vunpack.c.h.b16 %v714
    %v3446 = vunpack.c.l.b16 %v715
    %v3447 = vunpack.c.h.b16 %v715
    %v3448 = vunpack.c.l.b16 %v716
    %v3449 = vunpack.c.h.b16 %v716
    %v3450 = vunpack.c.l.b16 %v717
    %v3451 = vunpack.c.h.b16 %v717
    %v3452 = vunpack.c.l.b16 %v718
    %v3453 = vunpack.c.h.b16 %v718
    %v3454 = vunpack.c.l.b16 %v719
    %v3455 = vunpack.c.h.b16 %v719
    %v3456 = vunpack.c.l.b16 %v720
    %v3457 = vunpack.c.h.b16 %v720
    %v3458 = vunpack.c.l.b16 %v721
    %v3459 = vunpack.c.h.b16 %v721
    %v3460 = vunpack.c.l.b16 %v722
    %v3461 = vunpack.c.h.b16 %v722
    %v3462 = vunpack.c.l.b16 %v723
    %v3463 = vunpack.c.h.b16 %v723
    %v3464 = vunpack.c.l.b16 %v724
    %v3465 = vunpack.c.h.b16 %v724
    %v3466 = vunpack.c.l.b16 %v725
    %v3467 = vunpack.c.h.b16 %v725
    %v3468 = vunpack.c.l.b16 %v726
    %v3469 = vunpack.c.h.b16 %v726
    %v3470 = vunpack.c.l.b16 %v727
    %v3471 = vunpack.c.h.b16 %v727
    %v3472 = vunpack.c.l.b16 %v728
    %v3473 = vunpack.c.h.b16 %v728
    %v3474 = vunpack.c.l.b16 %v729
    %v3475 = vunpack.c.h.b16 %v729
    %v3476 = vunpack.c.l.b16 %v730
    %v3477 = vunpack.c.h.b16 %v730
    %v3478 = vunpack.c.l.b16 %v731
    %v3479 = vunpack.c.h.b16 %v731
    %v3480 = vunpack.c.l.b16 %v732
    %v3481 = vunpack.c.h.b16 %v732
    %v3482 = vunpack.c.l.b16 %v733
    %v3483 = vunpack.c.h.b16 %v733
    %v3484 = vunpack.c.l.b16 %v734
    %v3485 = vunpack.c.h.b16 %v734
    %v3486 = vunpack.c.l.b16 %v735
    %v3487 = vunpack.c.h.b16 %v735
    %v3488 = vunpack.c.l.b16 %v736
    %v3489 = vunpack.c.h.b16 %v736
    %v3490 = vunpack.c.l.b16 %v737
    %v3491 = vunpack.c.h.b16 %v737
    %v3492 = vunpack.c.l.b16 %v738
    %v3493 = vunpack.c.h.b16 %v738
    %v3494 = vunpack.c.l.b16 %v739
    %v3495 = vunpack.c.h.b16 %v739
    %v3496 = vunpack.c.l.b16 %v740
    %v3497 = vunpack.c.h.b16 %v740
    %v3498 = vunpack.c.l.b16 %v741
    %v3499 = vunpack.c.h.b16 %v741
    %v3500 = vunpack.c.l.b16 %v742
    %v3501 = vunpack.c.h.b16 %v742
    %v3502 = vunpack.c.l.b16 %v743
    %v3503 = vunpack.c.h.b16 %v743
    %v3504 = vunpack.c.l.b16 %v744
    %v3505 = vunpack.c.h.b16 %v744
    %v3506 = vunpack.c.l.b16 %v745
    %v3507 = vunpack.c.h.b16 %v745
    %v3508 = vunpack.c.l.b16 %v746
    %v3509 = vunpack.c.h.b16 %v746
    %v3510 = vunpack.c.l.b16 %v747
    %v3511 = vunpack.c.h.b16 %v747
    %v3512 = vunpack.c.l.b16 %v748
    %v3513 = vunpack.c.h.b16 %v748
    %v3514 = vunpack.c.l.b16 %v749
    %v3515 = vunpack.c.h.b16 %v749
    %v3516 = vunpack.c.l.b16 %v750
    %v3517 = vunpack.c.h.b16 %v750
    %v3518 = vunpack.c.l.b16 %v751
    %v3519 = vunpack.c.h.b16 %v751
    %v3520 = vunpack.c.l.b16 %v752
    %v3521 = vunpack.c.h.b16 %v752
    %v3522 = vunpack.c.l.b16 %v753
    %v3523 = vunpack.c.h.b16 %v753
    %v3524 = vunpack.c.l.b16 %v754
    %v3525 = vunpack.c.h.b16 %v754
    %v3526 = vunpack.c.l.b16 %v755
    %v3527 = vunpack.c.h.b16 %v755
    %v3528 = vunpack.c.l.b16 %v756
    %v3529 = vunpack.c.h.b16 %v756
    %v3530 = vunpack.c.l.b16 %v757
    %v3531 = vunpack.c.h.b16 %v757
    %v3532 = vunpack.c.l.b16 %v758
    %v3533 = vunpack.c.h.b16 %v758
    %v3534 = vunpack.c.l.b16 %v759
    %v3535 = vunpack.c.h.b16 %v759
    %v3536 = vunpack.c.l.b16 %v760
    %v3537 = vunpack.c.h.b16 %v760
    %v3538 = vunpack.c.l.b16 %v761
    %v3539 = vunpack.c.h.b16 %v761
    %v3540 = vunpack.c.l.b16 %v762
    %v3541 = vunpack.c.h.b16 %v762
    %v3542 = vunpack.c.l.b16 %v763
    %v3543 = vunpack.c.h.b16 %v763
    %v3544 = vunpack.c.l.b16 %v764
    %v3545 = vunpack.c.h.b16 %v764
    %v3546 = vunpack.c.l.b16 %v765
    %v3547 = vunpack.c.h.b16 %v765
    %v3548 = vunpack.c.l.b16 %v766
    %v3549 = vunpack.c.h.b16 %v766
    %v3550 = vunpack.c.l.b16 %v767
    %v3551 = vunpack.c.h.b16 %v767
    %v3552 = vunpack.c.l.b16 %v768
    %v3553 = vunpack.c.h.b16 %v768
    %v3554 = vunpack.c.l.b16 %v769
    %v3555 = vunpack.c.h.b16 %v769
    %v3556 = vunpack.c.l.b16 %v770
    %v3557 = vunpack.c.h.b16 %v770
    %v3558 = vunpack.c.l.b16 %v771
    %v3559 = vunpack.c.h.b16 %v771
    %v3560 = vunpack.c.l.b16 %v772
    %v3561 = vunpack.c.h.b16 %v772
    %v3562 = vunpack.c.l.b16 %v773
    %v3563 = vunpack.c.h.b16 %v773
    %v3564 = vunpack.c.l.b16 %v774
    %v3565 = vunpack.c.h.b16 %v774
    %v3566 = vunpack.c.l.b16 %v775
    %v3567 = vunpack.c.h.b16 %v775
    %v3568 = vunpack.c.l.b16 %v776
    %v3569 = vunpack.c.h.b16 %v776
    %v3570 = vunpack.c.l.b16 %v777
    %v3571 = vunpack.c.h.b16 %v777
    %v3572 = vunpack.c.l.b16 %v778
    %v3573 = vunpack.c.h.b16 %v778
    %v3574 = vunpack.c.l.b16 %v779
    %v3575 = vunpack.c.h.b16 %v779
    %v3576 = vunpack.c.l.b16 %v780
    %v3577 = vunpack.c.h.b16 %v780
    %v3578 = vunpack.c.l.b16 %v781
    %v3579 = vunpack.c.h.b16 %v781
    %v3580 = vunpack.c.l.b16 %v782
    %v3581 = vunpack.c.h.b16 %v782
    %v3582 = vunpack.c.l.b16 %v783
    %v3583 = vunpack.c.h.b16 %v783
    %v3584 = vunpack.c.l.b16 %v784
    %v3585 = vunpack.c.h.b16 %v784
    %v3586 = vunpack.c.l.b16 %v785
    %v3587 = vunpack.c.h.b16 %v785
    %v3588 = vunpack.c.l.b16 %v786
    %v3589 = vunpack.c.h.b16 %v786
    %v3590 = vunpack.c.l.b16 %v787
    %v3591 = vunpack.c.h.b16 %v787
    %v3592 = vunpack.c.l.b16 %v788
    %v3593 = vunpack.c.h.b16 %v788
    %v3594 = vunpack.c.l.b16 %v789
    %v3595 = vunpack.c.h.b16 %v789
    %v3596 = vunpack.c.l.b16 %v790
    %v3597 = vunpack.c.h.b16 %v790
    %v3598 = vunpack.c.l.b16 %v791
    %v3599 = vunpack.c.h.b16 %v791
    %v3600 = vunpack.c.l.b16 %v792
    %v3601 = vunpack.c.h.b16 %v792
    %v3602 = vunpack.c.l.b16 %v793
    %v3603 = vunpack.c.h.b16 %v793
    %v3604 = vunpack.c.l.b16 %v794
    %v3605 = vunpack.c.h.b16 %v794
    %v3606 = vunpack.c.l.b16 %v795
    %v3607 = vunpack.c.h.b16 %v795
    %v3608 = vunpack.c.l.b16 %v796
    %v3609 = vunpack.c.h.b16 %v796
    %v3610 = vunpack.c.l.b16 %v797
    %v3611 = vunpack.c.h.b16 %v797
    %v3612 = vunpack.c.l.b16 %v798
    %v3613 = vunpack.c.h.b16 %v798
    %v3614 = vunpack.c.l.b16 %v799
    %v3615 = vunpack.c.h.b16 %v799
    %v3616 = vunpack.c.l.b16 %v800
    %v3617 = vunpack.c.h.b16 %v800
    %v3618 = vunpack.c.l.b16 %v801
    %v3619 = vunpack.c.h.b16 %v801
    %v3620 = vunpack.c.l.b16 %v802
    %v3621 = vunpack.c.h.b16 %v802
    %v3622 = vunpack.c.l.b16 %v803
    %v3623 = vunpack.c.h.b16 %v803
    %v3624 = vunpack.c.l.b16 %v804
    %v3625 = vunpack.c.h.b16 %v804
    %v3626 = vunpack.c.l.b16 %v805
    %v3627 = vunpack.c.h.b16 %v805
    %v3628 = vunpack.c.l.b16 %v806
    %v3629 = vunpack.c.h.b16 %v806
    %v3630 = vunpack.c.l.b16 %v807
    %v3631 = vunpack.c.h.b16 %v807
    %v3632 = vunpack.c.l.b16 %v808
    %v3633 = vunpack.c.h.b16 %v808
    %v3634 = vunpack.c.l.b16 %v809
    %v3635 = vunpack.c.h.b16 %v809
    %v3636 = vunpack.c.l.b16 %v810
    %v3637 = vunpack.c.h.b16 %v810
    %v3638 = vunpack.c.l.b16 %v811
    %v3639 = vunpack.c.h.b16 %v811
    %v3640 = vunpack.c.l.b16 %v812
    %v3641 = vunpack.c.h.b16 %v812
    %v3642 = vunpack.c.l.b16 %v813
    %v3643 = vunpack.c.h.b16 %v813
    %v3644 = vunpack.c.l.b16 %v814
    %v3645 = vunpack.c.h.b16 %v814
    %v3646 = vunpack.c.l.b16 %v815
    %v3647 = vunpack.c.h.b16 %v815
    %v3648 = vunpack.c.l.b16 %v816
    %v3649 = vunpack.c.h.b16 %v816
    %v3650 = vunpack.c.l.b16 %v817
    %v3651 = vunpack.c.h.b16 %v817
    %v3652 = vunpack.c.l.b16 %v818
    %v3653 = vunpack.c.h.b16 %v818
    %v3654 = vunpack.c.l.b16 %v819
    %v3655 = vunpack.c.h.b16 %v819
    %v3656 = vunpack.c.l.b16 %v820
    %v3657 = vunpack.c.h.b16 %v820
    %v3658 = vunpack.c.l.b16 %v821
    %v3659 = vunpack.c.h.b16 %v821
    %v3660 = vunpack.c.l.b16 %v822
    %v3661 = vunpack.c.h.b16 %v822
    %v3662 = vunpack.c.l.b16 %v823
    %v3663 = vunpack.c.h.b16 %v823
    %v3664 = vunpack.c.l.b16 %v824
    %v3665 = vunpack.c.h.b16 %v824
    %v3666 = vunpack.c.l.b16 %v825
    %v3667 = vunpack.c.h.b16 %v825
    %v3668 = vunpack.c.l.b16 %v826
    %v3669 = vunpack.c.h.b16 %v826
    %v3670 = vunpack.c.l.b16 %v827
    %v3671 = vunpack.c.h.b16 %v827
    %v3672 = vunpack.c.l.b16 %v828
    %v3673 = vunpack.c.h.b16 %v828
    %v3674 = vunpack.c.l.b16 %v829
    %v3675 = vunpack.c.h.b16 %v829
    %v3676 = vunpack.c.l.b16 %v830
    %v3677 = vunpack.c.h.b16 %v830
    %v3678 = vunpack.c.l.b16 %v831
    %v3679 = vunpack.c.h.b16 %v831
    %v3680 = vunpack.c.l.b16 %v832
    %v3681 = vunpack.c.h.b16 %v832
    %v3682 = vunpack.c.l.b16 %v833
    %v3683 = vunpack.c.h.b16 %v833
    %v3684 = vunpack.c.l.b16 %v834
    %v3685 = vunpack.c.h.b16 %v834
    %v3686 = vunpack.c.l.b16 %v835
    %v3687 = vunpack.c.h.b16 %v835
    %v3688 = vunpack.c.l.b16 %v836
    %v3689 = vunpack.c.h.b16 %v836
    %v3690 = vunpack.c.l.b16 %v837
    %v3691 = vunpack.c.h.b16 %v837
    %v3692 = vunpack.c.l.b16 %v838
    %v3693 = vunpack.c.h.b16 %v838
    %v3694 = vunpack.c.l.b16 %v839
    %v3695 = vunpack.c.h.b16 %v839
    %v3696 = vunpack.c.l.b16 %v840
    %v3697 = vunpack.c.h.b16 %v840
    %v3698 = vunpack.c.l.b16 %v841
    %v3699 = vunpack.c.h.b16 %v841
    %v3700 = vunpack.c.l.b16 %v842
    %v3701 = vunpack.c.h.b16 %v842
    %v3702 = vunpack.c.l.b16 %v843
    %v3703 = vunpack.c.h.b16 %v843
    %v3704 = vunpack.c.l.b16 %v844
    %v3705 = vunpack.c.h.b16 %v844
    %v3706 = vunpack.c.l.b16 %v845
    %v3707 = vunpack.c.h.b16 %v845
    %v3708 = vunpack.c.l.b16 %v846
    %v3709 = vunpack.c.h.b16 %v846
    %v3710 = vunpack.c.l.b16 %v847
    %v3711 = vunpack.c.h.b16 %v847
    %v3712 = vunpack.c.l.b16 %v848
    %v3713 = vunpack.c.h.b16 %v848
    %v3714 = vunpack.c.l.b16 %v849
    %v3715 = vunpack.c.h.b16 %v849
    %v3716 = vunpack.c.l.b16 %v850
    %v3717 = vunpack.c.h.b16 %v850
    %v3718 = vunpack.c.l.b16 %v851
    %v3719 = vunpack.c.h.b16 %v851
    %v3720 = vunpack.c.l.b16 %v852
    %v3721 = vunpack.c.h.b16 %v852
    %v3722 = vunpack.c.l.b16 %v853
    %v3723 = vunpack.c.h.b16 %v853
    %v3724 = vunpack.c.l.b16 %v854
    %v3725 = vunpack.c.h.b16 %v854
    %v3726 = vunpack.c.l.b16 %v855
    %v3727 = vunpack.c.h.b16 %v855
    %v3728 = vunpack.c.l.b16 %v856
    %v3729 = vunpack.c.h.b16 %v856
    %v3730 = vunpack.c.l.b16 %v857
    %v3731 = vunpack.c.h.b16 %v857
    %v3732 = vunpack.c.l.b16 %v858
    %v3733 = vunpack.c.h.b16 %v858
    %v3734 = vunpack.c.l.b16 %v859
    %v3735 = vunpack.c.h.b16 %v859
    %v3736 = vunpack.c.l.b16 %v860
    %v3737 = vunpack.c.h.b16 %v860
    %v3738 = vunpack.c.l.b16 %v861
    %v3739 = vunpack.c.h.b16 %v861
    %v3740 = vunpack.c.l.b16 %v862
    %v3741 = vunpack.c.h.b16 %v862
    %v3742 = vunpack.c.l.b16 %v863
    %v3743 = vunpack.c.h.b16 %v863
    %v3744 = vunpack.c.l.b16 %v864
    %v3745 = vunpack.c.h.b16 %v864
    %v3746 = vunpack.c.l.b16 %v865
    %v3747 = vunpack.c.h.b16 %v865
    %v3748 = vunpack.c.l.b16 %v866
    %v3749 = vunpack.c.h.b16 %v866
    %v3750 = vunpack.c.l.b16 %v867
    %v3751 = vunpack.c.h.b16 %v867
    %v3752 = vunpack.c.l.b16 %v868
    %v3753 = vunpack.c.h.b16 %v868
    %v3754 = vunpack.c.l.b16 %v869
    %v3755 = vunpack.c.h.b16 %v869
    %v3756 = vunpack.c.l.b16 %v870
    %v3757 = vunpack.c.h.b16 %v870
    %v3758 = vunpack.c.l.b16 %v871
    %v3759 = vunpack.c.h.b16 %v871
    %v3760 = vunpack.c.l.b16 %v872
    %v3761 = vunpack.c.h.b16 %v872
    %v3762 = vunpack.c.l.b16 %v873
    %v3763 = vunpack.c.h.b16 %v873
    %v3764 = vunpack.c.l.b16 %v874
    %v3765 = vunpack.c.h.b16 %v874
    %v3766 = vunpack.c.l.b16 %v875
    %v3767 = vunpack.c.h.b16 %v875
    %v3768 = vunpack.c.l.b16 %v876
    %v3769 = vunpack.c.h.b16 %v876
    %v3770 = vunpack.c.l.b16 %v877
    %v3771 = vunpack.c.h.b16 %v877
    %v3772 = vunpack.c.l.b16 %v878
    %v3773 = vunpack.c.h.b16 %v878
    %v3774 = vunpack.c.l.b16 %v879
    %v3775 = vunpack.c.h.b16 %v879
    %v3776 = vunpack.c.l.b16 %v880
    %v3777 = vunpack.c.h.b16 %v880
    %v3778 = vunpack.c.l.b16 %v881
    %v3779 = vunpack.c.h.b16 %v881
    %v3780 = vunpack.c.l.b16 %v882
    %v3781 = vunpack.c.h.b16 %v882
    %v3782 = vunpack.c.l.b16 %v883
    %v3783 = vunpack.c.h.b16 %v883
    %v3784 = vunpack.c.l.b16 %v884
    %v3785 = vunpack.c.h.b16 %v884
    %v3786 = vunpack.c.l.b16 %v885
    %v3787 = vunpack.c.h.b16 %v885
    %v3788 = vunpack.c.l.b16 %v886
    %v3789 = vunpack.c.h.b16 %v886
    %v3790 = vunpack.c.l.b16 %v887
    %v3791 = vunpack.c.h.b16 %v887
    %v3792 = vunpack.c.l.b16 %v888
    %v3793 = vunpack.c.h.b16 %v888
    %v3794 = vunpack.c.l.b16 %v889
    %v3795 = vunpack.c.h.b16 %v889
    %v3796 = vunpack.c.l.b16 %v890
    %v3797 = vunpack.c.h.b16 %v890
    %v3798 = vunpack.c.l.b16 %v891
    %v3799 = vunpack.c.h.b16 %v891
    %v3800 = vunpack.c.l.b16 %v892
    %v3801 = vunpack.c.h.b16 %v892
    %v3802 = vunpack.c.l.b16 %v893
    %v3803 = vunpack.c.h.b16 %v893
    %v3804 = vunpack.c.l.b16 %v894
    %v3805 = vunpack.c.h.b16 %v894
    %v3806 = vunpack.c.l.b16 %v895
    %v3807 = vunpack.c.h.b16 %v895
    %v3808 = vunpack.c.l.b16 %v896
    %v3809 = vunpack.c.h.b16 %v896
    %v3810 = vunpack.c.l.b16 %v897
    %v3811 = vunpack.c.h.b16 %v897
    %v3812 = vunpack.c.l.b16 %v898
    %v3813 = vunpack.c.h.b16 %v898
    %v3814 = vunpack.c.l.b16 %v899
    %v3815 = vunpack.c.h.b16 %v899
    %v3816 = vunpack.c.l.b16 %v900
    %v3817 = vunpack.c.h.b16 %v900
    %v3818 = vunpack.c.l.b16 %v901
    %v3819 = vunpack.c.h.b16 %v901
    %v3820 = vunpack.c.l.b16 %v902
    %v3821 = vunpack.c.h.b16 %v902
    %v3822 = vunpack.c.l.b16 %v903
    %v3823 = vunpack.c.h.b16 %v903
    %v3824 = vunpack.c.l.b16 %v904
    %v3825 = vunpack.c.h.b16 %v904
    %v3826 = vunpack.c.l.b16 %v905
    %v3827 = vunpack.c.h.b16 %v905
    %v3828 = vunpack.c.l.b16 %v906
    %v3829 = vunpack.c.h.b16 %v906
    %v3830 = vunpack.c.l.b16 %v907
    %v3831 = vunpack.c.h.b16 %v907
    %v3832 = vunpack.c.l.b16 %v908
    %v3833 = vunpack.c.h.b16 %v908
    %v3834 = vunpack.c.l.b16 %v909
    %v3835 = vunpack.c.h.b16 %v909
    %v3836 = vunpack.c.l.b16 %v910
    %v3837 = vunpack.c.h.b16 %v910
    %v3838 = vunpack.c.l.b16 %v911
    %v3839 = vunpack.c.h.b16 %v911
    %v3840 = vunpack.c.l.b16 %v912
    %v3841 = vunpack.c.h.b16 %v912
    %v3842 = vunpack.c.l.b16 %v913
    %v3843 = vunpack.c.h.b16 %v913
    %v3844 = vunpack.c.l.b16 %v914
    %v3845 = vunpack.c.h.b16 %v914
    %v3846 = vunpack.c.l.b16 %v915
    %v3847 = vunpack.c.h.b16 %v915
    %v3848 = vunpack.c.l.b16 %v916
    %v3849 = vunpack.c.h.b16 %v916
    %v3850 = vunpack.c.l.b16 %v917
    %v3851 = vunpack.c.h.b16 %v917
    %v3852 = vunpack.c.l.b16 %v918
    %v3853 = vunpack.c.h.b16 %v918
    %v3854 = vunpack.c.l.b16 %v919
    %v3855 = vunpack.c.h.b16 %v919
    %v3856 = vunpack.c.l.b16 %v920
    %v3857 = vunpack.c.h.b16 %v920
    %v3858 = vunpack.c.l.b16 %v921
    %v3859 = vunpack.c.h.b16 %v921
    %v3860 = vunpack.c.l.b16 %v922
    %v3861 = vunpack.c.h.b16 %v922
    %v3862 = vunpack.c.l.b16 %v923
    %v3863 = vunpack.c.h.b16 %v923
    %v3864 = vunpack.c.l.b16 %v924
    %v3865 = vunpack.c.h.b16 %v924
    %v3866 = vunpack.c.l.b16 %v925
    %v3867 = vunpack.c.h.b16 %v925
    %v3868 = vunpack.c.l.b16 %v926
    %v3869 = vunpack.c.h.b16 %v926
    %v3870 = vunpack.c.l.b16 %v927
    %v3871 = vunpack.c.h.b16 %v927
    %v3872 = vunpack.c.l.b16 %v928
    %v3873 = vunpack.c.h.b16 %v928
    %v3874 = vunpack.c.l.b16 %v929
    %v3875 = vunpack.c.h.b16 %v929
    %v3876 = vunpack.c.l.b16 %v930
    %v3877 = vunpack.c.h.b16 %v930
    %v3878 = vunpack.c.l.b16 %v931
    %v3879 = vunpack.c.h.b16 %v931
    %v3880 = vunpack.c.l.b16 %v932
    %v3881 = vunpack.c.h.b16 %v932
    %v3882 = vunpack.c.l.b16 %v933
    %v3883 = vunpack.c.h.b16 %v933
    %v3884 = vunpack.c.l.b16 %v934
    %v3885 = vunpack.c.h.b16 %v934
    %v3886 = vunpack.c.l.b16 %v935
    %v3887 = vunpack.c.h.b16 %v935
    %v3888 = vunpack.c.l.b16 %v936
    %v3889 = vunpack.c.h.b16 %v936
    %v3890 = vunpack.c.l.b16 %v937
    %v3891 = vunpack.c.h.b16 %v937
    %v3892 = vunpack.c.l.b16 %v938
    %v3893 = vunpack.c.h.b16 %v938
    %v3894 = vunpack.c.l.b16 %v939
    %v3895 = vunpack.c.h.b16 %v939
    %v3896 = vunpack.c.l.b16 %v940
    %v3897 = vunpack.c.h.b16 %v940
    %v3898 = vunpack.c.l.b16 %v941
    %v3899 = vunpack.c.h.b16 %v941
    %v3900 = vunpack.c.l.b16 %v942
    %v3901 = vunpack.c.h.b16 %v942
    %v3902 = vunpack.c.l.b16 %v943
    %v3903 = vunpack.c.h.b16 %v943
    %v3904 = vunpack.c.l.b16 %v944
    %v3905 = vunpack.c.h.b16 %v944
    %v3906 = vunpack.c.l.b16 %v945
    %v3907 = vunpack.c.h.b16 %v945
    %v3908 = vunpack.c.l.b16 %v946
    %v3909 = vunpack.c.h.b16 %v946
    %v3910 = vunpack.c.l.b16 %v947
    %v3911 = vunpack.c.h.b16 %v947
    %v3912 = vunpack.c.l.b16 %v948
    %v3913 = vunpack.c.h.b16 %v948
    %v3914 = vunpack.c.l.b16 %v949
    %v3915 = vunpack.c.h.b16 %v949
    %v3916 = vunpack.c.l.b16 %v950
    %v3917 = vunpack.c.h.b16 %v950
    %v3918 = vunpack.c.l.b16 %v951
    %v3919 = vunpack.c.h.b16 %v951
    %v3920 = vunpack.c.l.b16 %v952
    %v3921 = vunpack.c.h.b16 %v952
    %v3922 = vunpack.c.l.b16 %v953
    %v3923 = vunpack.c.h.b16 %v953
    %v3924 = vunpack.c.l.b16 %v954
    %v3925 = vunpack.c.h.b16 %v954
    %v3926 = vunpack.c.l.b16 %v955
    %v3927 = vunpack.c.h.b16 %v955
    %v3928 = vunpack.c.l.b16 %v956
    %v3929 = vunpack.c.h.b16 %v956
    %v3930 = vunpack.c.l.b16 %v957
    %v3931 = vunpack.c.h.b16 %v957
    %v3932 = vunpack.c.l.b16 %v958
    %v3933 = vunpack.c.h.b16 %v958
    %v3934 = vunpack.c.l.b16 %v959
    %v3935 = vunpack.c.h.b16 %v959
    %v3936 = vunpack.c.l.b16 %v960
    %v3937 = vunpack.c.h.b16 %v960
    %v3938 = vunpack.c.l.b16 %v961
    %v3939 = vunpack.c.h.b16 %v961
    %v3940 = vunpack.c.l.b16 %v962
    %v3941 = vunpack.c.h.b16 %v962
    %v3942 = vunpack.c.l.b16 %v963
    %v3943 = vunpack.c.h.b16 %v963
    %v3944 = vunpack.c.l.b16 %v964
    %v3945 = vunpack.c.h.b16 %v964
    %v3946 = vunpack.c.l.b16 %v965
    %v3947 = vunpack.c.h.b16 %v965
    %v3948 = vunpack.c.l.b16 %v966
    %v3949 = vunpack.c.h.b16 %v966
    %v3950 = vunpack.c.l.b16 %v967
    %v3951 = vunpack.c.h.b16 %v967
    %v3952 = vunpack.c.l.b16 %v968
    %v3953 = vunpack.c.h.b16 %v968
    %v3954 = vunpack.c.l.b16 %v969
    %v3955 = vunpack.c.h.b16 %v969
    %v3956 = vunpack.c.l.b16 %v970
    %v3957 = vunpack.c.h.b16 %v970
    %v3958 = vunpack.c.l.b16 %v971
    %v3959 = vunpack.c.h.b16 %v971
    %v3960 = vunpack.c.l.b16 %v972
    %v3961 = vunpack.c.h.b16 %v972
    %v3962 = vunpack.c.l.b16 %v973
    %v3963 = vunpack.c.h.b16 %v973
    %v3964 = vunpack.c.l.b16 %v974
    %v3965 = vunpack.c.h.b16 %v974
    %v3966 = vunpack.c.l.b16 %v975
    %v3967 = vunpack.c.h.b16 %v975
    %v3968 = vunpack.c.l.b16 %v976
    %v3969 = vunpack.c.h.b16 %v976
    %v3970 = vunpack.c.l.b16 %v977
    %v3971 = vunpack.c.h.b16 %v977
    %v3972 = vunpack.c.l.b16 %v978
    %v3973 = vunpack.c.h.b16 %v978
    %v3974 = vunpack.c.l.b16 %v979
    %v3975 = vunpack.c.h.b16 %v979
    %v3976 = vunpack.c.l.b16 %v980
    %v3977 = vunpack.c.h.b16 %v980
    %v3978 = vunpack.c.l.b16 %v981
    %v3979 = vunpack.c.h.b16 %v981
    %v3980 = vunpack.c.l.b16 %v982
    %v3981 = vunpack.c.h.b16 %v982
    %v3982 = vunpack.c.l.b16 %v983
    %v3983 = vunpack.c.h.b16 %v983
    %v3984 = vunpack.c.l.b16 %v984
    %v3985 = vunpack.c.h.b16 %v984
    %v3986 = vunpack.c.l.b16 %v985
    %v3987 = vunpack.c.h.b16 %v985
    %v3988 = vunpack.c.l.b16 %v986
    %v3989 = vunpack.c.h.b16 %v986
    %v3990 = vunpack.c.l.b16 %v987
    %v3991 = vunpack.c.h.b16 %v987
    %v3992 = vunpack.c.l.b16 %v988
    %v3993 = vunpack.c.h.b16 %v988
    %v3994 = vunpack.c.l.b16 %v989
    %v3995 = vunpack.c.h.b16 %v989
    %v3996 = vunpack.c.l.b16 %v990
    %v3997 = vunpack.c.h.b16 %v990
    %v3998 = vunpack.c.l.b16 %v991
    %v3999 = vunpack.c.h.b16 %v991
    %v4000 = vunpack.c.l.b16 %v992
    %v4001 = vunpack.c.h.b16 %v992
    %v4002 = vunpack.c.l.b16 %v993
    %v4003 = vunpack.c.h.b16 %v993
    %v4004 = vunpack.c.l.b16 %v994
    %v4005 = vunpack.c.h.b16 %v994
    %v4006 = vunpack.c.l.b16 %v995
    %v4007 = vunpack.c.h.b16 %v995
    %v4008 = vunpack.c.l.b16 %v996
    %v4009 = vunpack.c.h.b16 %v996
    %v4010 = vunpack.c.l.b16 %v997
    %v4011 = vunpack.c.h.b16 %v997
    %v4012 = vunpack.c.l.b16 %v998
    %v4013 = vunpack.c.h.b16 %v998
    %v4014 = vunpack.c.l.b16 %v999
    %v4015 = vunpack.c.h.b16 %v999
    %v4016 = vunpack.c.l.b16 %v1000
    %v4017 = vunpack.c.h.b16 %v1000
    %v4018 = vunpack.c.l.b16 %v1001
    %v4019 = vunpack.c.h.b16 %v1001
    %v4020 = vunpack.c.l.b16 %v1002
    %v4021 = vunpack.c.h.b16 %v1002
    %v4022 = vunpack.c.l.b16 %v1003
    %v4023 = vunpack.c.h.b16 %v1003
    %v4024 = vunpack.c.l.b16 %v1004
    %v4025 = vunpack.c.h.b16 %v1004
    %v4026 = vunpack.c.l.b16 %v1005
    %v4027 = vunpack.c.h.b16 %v1005
    %v4028 = vunpack.c.l.b16 %v1006
    %v4029 = vunpack.c.h.b16 %v1006
    %v4030 = vunpack.c.l.b16 %v1007
    %v4031 = vunpack.c.h.b16 %v1007
    %v4032 = vunpack.c.l.b16 %v1008
    %v4033 = vunpack.c.h.b16 %v1008
    %v4034 = vunpack.c.l.b16 %v1009
    %v4035 = vunpack.c.h.b16 %v1009
    %v4036 = vunpack.c.l.b16 %v1010
    %v4037 = vunpack.c.h.b16 %v1010
    %v4038 = vunpack.c.l.b16 %v1011
    %v4039 = vunpack.c.h.b16 %v1011
    %v4040 = vunpack.c.l.b16 %v1012
    %v4041 = vunpack.c.h.b16 %v1012
    %v4042 = vunpack.c.l.b16 %v1013
    %v4043 = vunpack.c.h.b16 %v1013
    %v4044 = vunpack.c.l.b16 %v1014
    %v4045 = vunpack.c.h.b16 %v1014
    %v4046 = vunpack.c.l.b16 %v1015
    %v4047 = vunpack.c.h.b16 %v1015
    %v4048 = vunpack.c.l.b16 %v1016
    %v4049 = vunpack.c.h.b16 %v1016
    %v4050 = vunpack.c.l.b16 %v1017
    %v4051 = vunpack.c.h.b16 %v1017
    %v4052 = vunpack.c.l.b16 %v1018
    %v4053 = vunpack.c.h.b16 %v1018
    %v4054 = vunpack.c.l.b16 %v1019
    %v4055 = vunpack.c.h.b16 %v1019
    %v4056 = vunpack.c.l.b16 %v1020
    %v4057 = vunpack.c.h.b16 %v1020
    %v4058 = vunpack.c.l.b16 %v1021
    %v4059 = vunpack.c.h.b16 %v1021
    %v4060 = vunpack.c.l.b16 %v1022
    %v4061 = vunpack.c.h.b16 %v1022
    %v4062 = vunpack.c.l.b16 %v1023
    %v4063 = vunpack.c.h.b16 %v1023
    %v4064 = vunpack.c.l.b16 %v1024
    %v4065 = vunpack.c.h.b16 %v1024
    %v4066 = vunpack.c.l.b16 %v1025
    %v4067 = vunpack.c.h.b16 %v1025
    %v4068 = vunpack.c.l.b16 %v1026
    %v4069 = vunpack.c.h.b16 %v1026
    %v4070 = vunpack.c.l.b16 %v1027
    %v4071 = vunpack.c.h.b16 %v1027
    %v4072 = vunpack.c.l.b16 %v1028
    %v4073 = vunpack.c.h.b16 %v1028
    %v4074 = vunpack.c.l.b16 %v1029
    %v4075 = vunpack.c.h.b16 %v1029
    %v4076 = vunpack.c.l.b16 %v1030
    %v4077 = vunpack.c.h.b16 %v1030
    %v4078 = vunpack.c.l.b16 %v1031
    %v4079 = vunpack.c.h.b16 %v1031
    %v4080 = vunpack.c.l.b16 %v1032
    %v4081 = vunpack.c.h.b16 %v1032
    %v4082 = vunpack.c.l.b16 %v1033
    %v4083 = vunpack.c.h.b16 %v1033
    %v4084 = vunpack.c.l.b16 %v1034
    %v4085 = vunpack.c.h.b16 %v1034
    %v4086 = vunpack.c.l.b16 %v1035
    %v4087 = vunpack.c.h.b16 %v1035
    %v4088 = vunpack.c.l.b16 %v1036
    %v4089 = vunpack.c.h.b16 %v1036
    %v4090 = vunpack.c.l.b16 %v1037
    %v4091 = vunpack.c.h.b16 %v1037
    %v4092 = vunpack.c.l.b16 %v1038
    %v4093 = vunpack.c.h.b16 %v1038
    %v4094 = vunpack.c.l.b16 %v1039
    %v4095 = vunpack.c.h.b16 %v1039
    %v4096 = vunpack.c.l.b16 %v1040
    %v4097 = vunpack.c.h.b16 %v1040
    %v4098 = vunpack.c.l.b16 %v1041
    %v4099 = vunpack.c.h.b16 %v1041
    %v4100 = vunpack.c.l.b16 %v1042
    %v4101 = vunpack.c.h.b16 %v1042
    %v4102 = vunpack.c.l.b16 %v1043
    %v4103 = vunpack.c.h.b16 %v1043
    %v4104 = vunpack.c.l.b16 %v1044
    %v4105 = vunpack.c.h.b16 %v1044
    %v4106 = vunpack.c.l.b16 %v1045
    %v4107 = vunpack.c.h.b16 %v1045
    %v4108 = vunpack.c.l.b16 %v1046
    %v4109 = vunpack.c.h.b16 %v1046
    %v4110 = vunpack.c.l.b16 %v1047
    %v4111 = vunpack.c.h.b16 %v1047
    %v4112 = vunpack.c.l.b16 %v1048
    %v4113 = vunpack.c.h.b16 %v1048
    %v4114 = vunpack.c.l.b16 %v1049
    %v4115 = vunpack.c.h.b16 %v1049
    %v4116 = vunpack.c.l.b16 %v1050
    %v4117 = vunpack.c.h.b16 %v1050
    %v4118 = vunpack.c.l.b16 %v1051
    %v4119 = vunpack.c.h.b16 %v1051
    %v4120 = vunpack.c.l.b16 %v1052
    %v4121 = vunpack.c.h.b16 %v1052
    %v4122 = vunpack.c.l.b16 %v1053
    %v4123 = vunpack.c.h.b16 %v1053
    %v4124 = vunpack.c.l.b16 %v1054
    %v4125 = vunpack.c.h.b16 %v1054
    %v4126 = vunpack.c.l.b16 %v1055
    %v4127 = vunpack.c.h.b16 %v1055
    %v4128 = vunpack.c.l.b16 %v1056
    %v4129 = vunpack.c.h.b16 %v1056
    %v4130 = vunpack.c.l.b16 %v1057
    %v4131 = vunpack.c.h.b16 %v1057
    %v4132 = vunpack.c.l.b16 %v1058
    %v4133 = vunpack.c.h.b16 %v1058
    %v4134 = vunpack.c.l.b16 %v1059
    %v4135 = vunpack.c.h.b16 %v1059
    %v4136 = vunpack.c.l.b16 %v1060
    %v4137 = vunpack.c.h.b16 %v1060
    %v4138 = vunpack.c.l.b16 %v1061
    %v4139 = vunpack.c.h.b16 %v1061
    %v4140 = vunpack.c.l.b16 %v1062
    %v4141 = vunpack.c.h.b16 %v1062
    %v4142 = vunpack.c.l.b16 %v1063
    %v4143 = vunpack.c.h.b16 %v1063
    %v4144 = vunpack.c.l.b16 %v1064
    %v4145 = vunpack.c.h.b16 %v1064
    %v4146 = vunpack.c.l.b16 %v1065
    %v4147 = vunpack.c.h.b16 %v1065
    %v4148 = vunpack.c.l.b16 %v1066
    %v4149 = vunpack.c.h.b16 %v1066
    %v4150 = vunpack.c.l.b16 %v1067
    %v4151 = vunpack.c.h.b16 %v1067
    %v4152 = vunpack.c.l.b16 %v1068
    %v4153 = vunpack.c.h.b16 %v1068
    %v4154 = vunpack.c.l.b16 %v1069
    %v4155 = vunpack.c.h.b16 %v1069
    %v4156 = vunpack.c.l.b16 %v1070
    %v4157 = vunpack.c.h.b16 %v1070
    %v4158 = vunpack.c.l.b16 %v1071
    %v4159 = vunpack.c.h.b16 %v1071
    %v4160 = vunpack.c.l.b16 %v1072
    %v4161 = vunpack.c.h.b16 %v1072
    %v4162 = vunpack.c.l.b16 %v1073
    %v4163 = vunpack.c.h.b16 %v1073
    %v4164 = vunpack.c.l.b16 %v1074
    %v4165 = vunpack.c.h.b16 %v1074
    %v4166 = vunpack.c.l.b16 %v1075
    %v4167 = vunpack.c.h.b16 %v1075
    %v4168 = vunpack.c.l.b16 %v1076
    %v4169 = vunpack.c.h.b16 %v1076
    %v4170 = vunpack.c.l.b16 %v1077
    %v4171 = vunpack.c.h.b16 %v1077
    %v4172 = vunpack.c.l.b16 %v1078
    %v4173 = vunpack.c.h.b16 %v1078
    %v4174 = vunpack.c.l.b16 %v1079
    %v4175 = vunpack.c.h.b16 %v1079
    %v4176 = vunpack.c.l.b16 %v1080
    %v4177 = vunpack.c.h.b16 %v1080
    %v4178 = vunpack.c.l.b16 %v1081
    %v4179 = vunpack.c.h.b16 %v1081
    %v4180 = vunpack.c.l.b16 %v1082
    %v4181 = vunpack.c.h.b16 %v1082
    %v4182 = vunpack.c.l.b16 %v1083
    %v4183 = vunpack.c.h.b16 %v1083
    %v4184 = vunpack.c.l.b16 %v1084
    %v4185 = vunpack.c.h.b16 %v1084
    %v4186 = vunpack.c.l.b16 %v1085
    %v4187 = vunpack.c.h.b16 %v1085
    %v4188 = vunpack.c.l.b16 %v1086
    %v4189 = vunpack.c.h.b16 %v1086
    %v4190 = vunpack.c.l.b16 %v1087
    %v4191 = vunpack.c.h.b16 %v1087
    %v4192 = vunpack.c.l.b16 %v1088
    %v4193 = vunpack.c.h.b16 %v1088
    %v4194 = vunpack.c.l.b16 %v1089
    %v4195 = vunpack.c.h.b16 %v1089
    %v4196 = vunpack.c.l.b16 %v1090
    %v4197 = vunpack.c.h.b16 %v1090
    %v4198 = vunpack.c.l.b16 %v1091
    %v4199 = vunpack.c.h.b16 %v1091
    %v4200 = vunpack.c.l.b16 %v1092
    %v4201 = vunpack.c.h.b16 %v1092
    %v4202 = vunpack.c.l.b16 %v1093
    %v4203 = vunpack.c.h.b16 %v1093
    %v4204 = vunpack.c.l.b16 %v1094
    %v4205 = vunpack.c.h.b16 %v1094
    %v4206 = vunpack.c.l.b16 %v1095
    %v4207 = vunpack.c.h.b16 %v1095
    %v4208 = vunpack.c.l.b16 %v1096
    %v4209 = vunpack.c.h.b16 %v1096
    %v4210 = vunpack.c.l.b16 %v1097
    %v4211 = vunpack.c.h.b16 %v1097
    %v4212 = vunpack.c.l.b16 %v1098
    %v4213 = vunpack.c.h.b16 %v1098
    %v4214 = vunpack.c.l.b16 %v1099
    %v4215 = vunpack.c.h.b16 %v1099
    %v4216 = vunpack.c.l.b16 %v1100
    %v4217 = vunpack.c.h.b16 %v1100
    %v4218 = vunpack.c.l.b16 %v1101
    %v4219 = vunpack.c.h.b16 %v1101
    %v4220 = vunpack.c.l.b16 %v1102
    %v4221 = vunpack.c.h.b16 %v1102
    %v4222 = vunpack.c.l.b16 %v1103
    %v4223 = vunpack.c.h.b16 %v1103
    %v4224 = vunpack.c.l.b16 %v1104
    %v4225 = vunpack.c.h.b16 %v1104
    %v4226 = vunpack.c.l.b16 %v1105
    %v4227 = vunpack.c.h.b16 %v1105
    %v4228 = vunpack.c.l.b16 %v1106
    %v4229 = vunpack.c.h.b16 %v1106
    %v4230 = vunpack.c.l.b16 %v1107
    %v4231 = vunpack.c.h.b16 %v1107
    %v4232 = vunpack.c.l.b16 %v1108
    %v4233 = vunpack.c.h.b16 %v1108
    %v4234 = vunpack.c.l.b16 %v1109
    %v4235 = vunpack.c.h.b16 %v1109
    %v4236 = vunpack.c.l.b16 %v1110
    %v4237 = vunpack.c.h.b16 %v1110
    %v4238 = vunpack.c.l.b16 %v1111
    %v4239 = vunpack.c.h.b16 %v1111
    %v4240 = vunpack.c.l.b16 %v1112
    %v4241 = vunpack.c.h.b16 %v1112
    %v4242 = vunpack.c.l.b16 %v1113
    %v4243 = vunpack.c.h.b16 %v1113
    %v4244 = vunpack.c.l.b16 %v1114
    %v4245 = vunpack.c.h.b16 %v1114
    %v4246 = vunpack.c.l.b16 %v1115
    %v4247 = vunpack.c.h.b16 %v1115
    %v4248 = vunpack.c.l.b16 %v1116
    %v4249 = vunpack.c.h.b16 %v1116
    %v4250 = vunpack.c.l.b16 %v1117
    %v4251 = vunpack.c.h.b16 %v1117
    %v4252 = vunpack.c.l.b16 %v1118
    %v4253 = vunpack.c.h.b16 %v1118
    %v4254 = vunpack.c.l.b16 %v1119
    %v4255 = vunpack.c.h.b16 %v1119
    %v4256 = vunpack.c.l.b16 %v1120
    %v4257 = vunpack.c.h.b16 %v1120
    %v4258 = vunpack.c.l.b16 %v1121
    %v4259 = vunpack.c.h.b16 %v1121
    %v4260 = vunpack.c.l.b16 %v1122
    %v4261 = vunpack.c.h.b16 %v1122
    %v4262 = vunpack.c.l.b16 %v1123
    %v4263 = vunpack.c.h.b16 %v1123
    %v4264 = vunpack.c.l.b16 %v1124
    %v4265 = vunpack.c.h.b16 %v1124
    %v4266 = vunpack.c.l.b16 %v1125
    %v4267 = vunpack.c.h.b16 %v1125
    %v4268 = vunpack.c.l.b16 %v1126
    %v4269 = vunpack.c.h.b16 %v1126
    %v4270 = vunpack.c.l.b16 %v1127
    %v4271 = vunpack.c.h.b16 %v1127
    %v4272 = vunpack.c.l.b16 %v1128
    %v4273 = vunpack.c.h.b16 %v1128
    %v4274 = vunpack.c.l.b16 %v1129
    %v4275 = vunpack.c.h.b16 %v1129
    %v4276 = vunpack.c.l.b16 %v1130
    %v4277 = vunpack.c.h.b16 %v1130
    %v4278 = vunpack.c.l.b16 %v1131
    %v4279 = vunpack.c.h.b16 %v1131
    %v4280 = vunpack.c.l.b16 %v1132
    %v4281 = vunpack.c.h.b16 %v1132
    %v4282 = vunpack.c.l.b16 %v1133
    %v4283 = vunpack.c.h.b16 %v1133
    %v4284 = vunpack.c.l.b16 %v1134
    %v4285 = vunpack.c.h.b16 %v1134
    %v4286 = vunpack.c.l.b16 %v1135
    %v4287 = vunpack.c.h.b16 %v1135
    %v4288 = vunpack.c.l.b16 %v1136
    %v4289 = vunpack.c.h.b16 %v1136
    %v4290 = vunpack.c.l.b16 %v1137
    %v4291 = vunpack.c.h.b16 %v1137
    %v4292 = vunpack.c.l.b16 %v1138
    %v4293 = vunpack.c.h.b16 %v1138
    %v4294 = vunpack.c.l.b16 %v1139
    %v4295 = vunpack.c.h.b16 %v1139
    %v4296 = vunpack.c.l.b16 %v1140
    %v4297 = vunpack.c.h.b16 %v1140
    %v4298 = vunpack.c.l.b16 %v1141
    %v4299 = vunpack.c.h.b16 %v1141
    %v4300 = vunpack.c.l.b16 %v1142
    %v4301 = vunpack.c.h.b16 %v1142
    %v4302 = vunpack.c.l.b16 %v1143
    %v4303 = vunpack.c.h.b16 %v1143
    %v4304 = vunpack.c.l.b16 %v1144
    %v4305 = vunpack.c.h.b16 %v1144
    %v4306 = vunpack.c.l.b16 %v1145
    %v4307 = vunpack.c.h.b16 %v1145
    %v4308 = vunpack.c.l.b16 %v1146
    %v4309 = vunpack.c.h.b16 %v1146
    %v4310 = vpack.c.b16 %v2266, %v2262
    %v4311 = vpack.c.b16 %v2267, %v2263
    %v4312 = vpack.c.b16 %v2268, %v2264
    %v4313 = vpack.c.b16 %v2269, %v2265
    %v4314 = vpack.c.b16 %v2274, %v2270
    %v4315 = vpack.c.b16 %v2275, %v2271
    %v4316 = vpack.c.b16 %v2276, %v2272
    %v4317 = vpack.c.b16 %v2277, %v2273
    %v4318 = vpack.c.b16 %v2282, %v2278
    %v4319 = vpack.c.b16 %v2283, %v2279
    %v4320 = vpack.c.b16 %v2284, %v2280
    %v4321 = vpack.c.b16 %v2285, %v2281
    %v4322 = vpack.c.b16 %v2290, %v2286
    %v4323 = vpack.c.b16 %v2291, %v2287
    %v4324 = vpack.c.b16 %v2292, %v2288
    %v4325 = vpack.c.b16 %v2293, %v2289
    %v4326 = vpack.c.b16 %v2298, %v2294
    %v4327 = vpack.c.b16 %v2299, %v2295
    %v4328 = vpack.c.b16 %v2300, %v2296
    %v4329 = vpack.c.b16 %v2301, %v2297
    %v4330 = vpack.c.b16 %v2306, %v2302
    %v4331 = vpack.c.b16 %v2307, %v2303
    %v4332 = vpack.c.b16 %v2308, %v2304
    %v4333 = vpack.c.b16 %v2309, %v2305
    %v4334 = vpack.c.b16 %v2314, %v2310
    %v4335 = vpack.c.b16 %v2315, %v2311
    %v4336 = vpack.c.b16 %v2316, %v2312
    %v4337 = vpack.c.b16 %v2317, %v2313
    %v4338 = vpack.c.b16 %v2322, %v2318
    %v4339 = vpack.c.b16 %v2323, %v2319
    %v4340 = vpack.c.b16 %v2324, %v2320
    %v4341 = vpack.c.b16 %v2325, %v2321
    %v4342 = vpack.c.b16 %v2330, %v2326
    %v4343 = vpack.c.b16 %v2331, %v2327
    %v4344 = vpack.c.b16 %v2332, %v2328
    %v4345 = vpack.c.b16 %v2333, %v2329
    %v4346 = vpack.c.b16 %v2338, %v2334
    %v4347 = vpack.c.b16 %v2339, %v2335
    %v4348 = vpack.c.b16 %v2340, %v2336
    %v4349 = vpack.c.b16 %v2341, %v2337
    %v4350 = vpack.c.b16 %v2346, %v2342
    %v4351 = vpack.c.b16 %v2347, %v2343
    %v4352 = vpack.c.b16 %v2348, %v2344
    %v4353 = vpack.c.b16 %v2349, %v2345
    %v4354 = vpack.c.b16 %v2354, %v2350
    %v4355 = vpack.c.b16 %v2355, %v2351
    %v4356 = vpack.c.b16 %v2356, %v2352
    %v4357 = vpack.c.b16 %v2357, %v2353
    %v4358 = vpack.c.b16 %v2362, %v2358
    %v4359 = vpack.c.b16 %v2363, %v2359
    %v4360 = vpack.c.b16 %v2364, %v2360
    %v4361 = vpack.c.b16 %v2365, %v2361
    %v4362 = vpack.c.b16 %v2370, %v2366
    %v4363 = vpack.c.b16 %v2371, %v2367
    %v4364 = vpack.c.b16 %v2372, %v2368
    %v4365 = vpack.c.b16 %v2373, %v2369
    %v4366 = vpack.c.b16 %v2378, %v2374
    %v4367 = vpack.c.b16 %v2379, %v2375
    %v4368 = vpack.c.b16 %v2380, %v2376
    %v4369 = vpack.c.b16 %v2381, %v2377
    %v4370 = vpack.c.b16 %v2386, %v2382
    %v4371 = vpack.c.b16 %v2387, %v2383
    %v4372 = vpack.c.b16 %v2388, %v2384
    %v4373 = vpack.c.b16 %v2389, %v2385
    %v4374 = vpack.c.b16 %v2394, %v2390
    %v4375 = vpack.c.b16 %v2395, %v2391
    %v4376 = vpack.c.b16 %v2396, %v2392
    %v4377 = vpack.c.b16 %v2397, %v2393
    %v4378 = vpack.c.b16 %v2402, %v2398
    %v4379 = vpack.c.b16 %v2403, %v2399
    %v4380 = vpack.c.b16 %v2404, %v2400
    %v4381 = vpack.c.b16 %v2405, %v2401
    %v4382 = vpack.c.b16 %v2410, %v2406
    %v4383 = vpack.c.b16 %v2411, %v2407
    %v4384 = vpack.c.b16 %v2412, %v2408
    %v4385 = vpack.c.b16 %v2413, %v2409
    %v4386 = vpack.c.b16 %v2418, %v2414
    %v4387 = vpack.c.b16 %v2419, %v2415
    %v4388 = vpack.c.b16 %v2420, %v2416
    %v4389 = vpack.c.b16 %v2421, %v2417
    %v4390 = vpack.c.b16 %v2426, %v2422
    %v4391 = vpack.c.b16 %v2427, %v2423
    %v4392 = vpack.c.b16 %v2428, %v2424
    %v4393 = vpack.c.b16 %v2429, %v2425
    %v4394 = vpack.c.b16 %v2434, %v2430
    %v4395 = vpack.c.b16 %v2435, %v2431
    %v4396 = vpack.c.b16 %v2436, %v2432
    %v4397 = vpack.c.b16 %v2437, %v2433
    %v4398 = vpack.c.b16 %v2442, %v2438
    %v4399 = vpack.c.b16 %v2443, %v2439
    %v4400 = vpack.c.b16 %v2444, %v2440
    %v4401 = vpack.c.b16 %v2445, %v2441
    %v4402 = vpack.c.b16 %v2450, %v2446
    %v4403 = vpack.c.b16 %v2451, %v2447
    %v4404 = vpack.c.b16 %v2452, %v2448
    %v4405 = vpack.c.b16 %v2453, %v2449
    %v4406 = vpack.c.b16 %v2458, %v2454
    %v4407 = vpack.c.b16 %v2459, %v2455
    %v4408 = vpack.c.b16 %v2460, %v2456
    %v4409 = vpack.c.b16 %v2461, %v2457
    %v4410 = vpack.c.b16 %v2466, %v2462
    %v4411 = vpack.c.b16 %v2467, %v2463
    %v4412 = vpack.c.b16 %v2468, %v2464
    %v4413 = vpack.c.b16 %v2469, %v2465
    %v4414 = vpack.c.b16 %v2474, %v2470
    %v4415 = vpack.c.b16 %v2475, %v2471
    %v4416 = vpack.c.b16 %v2476, %v2472
    %v4417 = vpack.c.b16 %v2477, %v2473
    %v4418 = vpack.c.b16 %v2482, %v2478
    %v4419 = vpack.c.b16 %v2483, %v2479
    %v4420 = vpack.c.b16 %v2484, %v2480
    %v4421 = vpack.c.b16 %v2485, %v2481
    %v4422 = vpack.c.b16 %v2490, %v2486
    %v4423 = vpack.c.b16 %v2491, %v2487
    %v4424 = vpack.c.b16 %v2492, %v2488
    %v4425 = vpack.c.b16 %v2493, %v2489
    %v4426 = vpack.c.b16 %v2498, %v2494
    %v4427 = vpack.c.b16 %v2499, %v2495
    %v4428 = vpack.c.b16 %v2500, %v2496
    %v4429 = vpack.c.b16 %v2501, %v2497
    %v4430 = vpack.c.b16 %v2506, %v2502
    %v4431 = vpack.c.b16 %v2507, %v2503
    %v4432 = vpack.c.b16 %v2508, %v2504
    %v4433 = vpack.c.b16 %v2509, %v2505
    %v4434 = vpack.c.b16 %v2514, %v2510
    %v4435 = vpack.c.b16 %v2515, %v2511
    %v4436 = vpack.c.b16 %v2516, %v2512
    %v4437 = vpack.c.b16 %v2517, %v2513
    %v4438 = vpack.c.b16 %v2522, %v2518
    %v4439 = vpack.c.b16 %v2523, %v2519
    %v4440 = vpack.c.b16 %v2524, %v2520
    %v4441 = vpack.c.b16 %v2525, %v2521
    %v4442 = vpack.c.b16 %v2530, %v2526
    %v4443 = vpack.c.b16 %v2531, %v2527
    %v4444 = vpack.c.b16 %v2532, %v2528
    %v4445 = vpack.c.b16 %v2533, %v2529
    %v4446 = vpack.c.b16 %v2538, %v2534
    %v4447 = vpack.c.b16 %v2539, %v2535
    %v4448 = vpack.c.b16 %v2540, %v2536
    %v4449 = vpack.c.b16 %v2541, %v2537
    %v4450 = vpack.c.b16 %v2546, %v2542
    %v4451 = vpack.c.b16 %v2547, %v2543
    %v4452 = vpack.c.b16 %v2548, %v2544
    %v4453 = vpack.c.b16 %v2549, %v2545
    %v4454 = vpack.c.b16 %v2554, %v2550
    %v4455 = vpack.c.b16 %v2555, %v2551
    %v4456 = vpack.c.b16 %v2556, %v2552
    %v4457 = vpack.c.b16 %v2557, %v2553
    %v4458 = vpack.c.b16 %v2562, %v2558
    %v4459 = vpack.c.b16 %v2563, %v2559
    %v4460 = vpack.c.b16 %v2564, %v2560
    %v4461 = vpack.c.b16 %v2565, %v2561
    %v4462 = vpack.c.b16 %v2570, %v2566
    %v4463 = vpack.c.b16 %v2571, %v2567
    %v4464 = vpack.c.b16 %v2572, %v2568
    %v4465 = vpack.c.b16 %v2573, %v2569
    %v4466 = vpack.c.b16 %v2578, %v2574
    %v4467 = vpack.c.b16 %v2579, %v2575
    %v4468 = vpack.c.b16 %v2580, %v2576
    %v4469 = vpack.c.b16 %v2581, %v2577
    %v4470 = vpack.c.b16 %v2586, %v2582
    %v4471 = vpack.c.b16 %v2587, %v2583
    %v4472 = vpack.c.b16 %v2588, %v2584
    %v4473 = vpack.c.b16 %v2589, %v2585
    %v4474 = vpack.c.b16 %v2594, %v2590
    %v4475 = vpack.c.b16 %v2595, %v2591
    %v4476 = vpack.c.b16 %v2596, %v2592
    %v4477 = vpack.c.b16 %v2597, %v2593
    %v4478 = vpack.c.b16 %v2602, %v2598
    %v4479 = vpack.c.b16 %v2603, %v2599
    %v4480 = vpack.c.b16 %v2604, %v2600
    %v4481 = vpack.c.b16 %v2605, %v2601
    %v4482 = vpack.c.b16 %v2610, %v2606
    %v4483 = vpack.c.b16 %v2611, %v2607
    %v4484 = vpack.c.b16 %v2612, %v2608
    %v4485 = vpack.c.b16 %v2613, %v2609
    %v4486 = vpack.c.b16 %v2618, %v2614
    %v4487 = vpack.c.b16 %v2619, %v2615
    %v4488 = vpack.c.b16 %v2620, %v2616
    %v4489 = vpack.c.b16 %v2621, %v2617
    %v4490 = vpack.c.b16 %v2626, %v2622
    %v4491 = vpack.c.b16 %v2627, %v2623
    %v4492 = vpack.c.b16 %v2628, %v2624
    %v4493 = vpack.c.b16 %v2629, %v2625
    %v4494 = vpack.c.b16 %v2634, %v2630
    %v4495 = vpack.c.b16 %v2635, %v2631
    %v4496 = vpack.c.b16 %v2636, %v2632
    %v4497 = vpack.c.b16 %v2637, %v2633
    %v4498 = vpack.c.b16 %v2642, %v2638
    %v4499 = vpack.c.b16 %v2643, %v2639
    %v4500 = vpack.c.b16 %v2644, %v2640
    %v4501 = vpack.c.b16 %v2645, %v2641
    %v4502 = vpack.c.b16 %v2650, %v2646
    %v4503 = vpack.c.b16 %v2651, %v2647
    %v4504 = vpack.c.b16 %v2652, %v2648
    %v4505 = vpack.c.b16 %v2653, %v2649
    %v4506 = vpack.c.b16 %v2658, %v2654
    %v4507 = vpack.c.b16 %v2659, %v2655
    %v4508 = vpack.c.b16 %v2660, %v2656
    %v4509 = vpack.c.b16 %v2661, %v2657
    %v4510 = vpack.c.b16 %v2666, %v2662
    %v4511 = vpack.c.b16 %v2667, %v2663
    %v4512 = vpack.c.b16 %v2668, %v2664
    %v4513 = vpack.c.b16 %v2669, %v2665
    %v4514 = vpack.c.b16 %v2674, %v2670
    %v4515 = vpack.c.b16 %v2675, %v2671
    %v4516 = vpack.c.b16 %v2676, %v2672
    %v4517 = vpack.c.b16 %v2677, %v2673
    %v4518 = vpack.c.b16 %v2682, %v2678
    %v4519 = vpack.c.b16 %v2683, %v2679
    %v4520 = vpack.c.b16 %v2684, %v2680
    %v4521 = vpack.c.b16 %v2685, %v2681
    %v4522 = vpack.c.b16 %v2690, %v2686
    %v4523 = vpack.c.b16 %v2691, %v2687
    %v4524 = vpack.c.b16 %v2692, %v2688
    %v4525 = vpack.c.b16 %v2693, %v2689
    %v4526 = vpack.c.b16 %v2698, %v2694
    %v4527 = vpack.c.b16 %v2699, %v2695
    %v4528 = vpack.c.b16 %v2700, %v2696
    %v4529 = vpack.c.b16 %v2701, %v2697
    %v4530 = vpack.c.b16 %v2706, %v2702
    %v4531 = vpack.c.b16 %v2707, %v2703
    %v4532 = vpack.c.b16 %v2708, %v2704
    %v4533 = vpack.c.b16 %v2709, %v2705
    %v4534 = vpack.c.b16 %v2714, %v2710
    %v4535 = vpack.c.b16 %v2715, %v2711
    %v4536 = vpack.c.b16 %v2716, %v2712
    %v4537 = vpack.c.b16 %v2717, %v2713
    %v4538 = vpack.c.b16 %v2722, %v2718
    %v4539 = vpack.c.b16 %v2723, %v2719
    %v4540 = vpack.c.b16 %v2724, %v2720
    %v4541 = vpack.c.b16 %v2725, %v2721
    %v4542 = vpack.c.b16 %v2730, %v2726
    %v4543 = vpack.c.b16 %v2731, %v2727
    %v4544 = vpack.c.b16 %v2732, %v2728
    %v4545 = vpack.c.b16 %v2733, %v2729
    %v4546 = vpack.c.b16 %v2738, %v2734
    %v4547 = vpack.c.b16 %v2739, %v2735
    %v4548 = vpack.c.b16 %v2740, %v2736
    %v4549 = vpack.c.b16 %v2741, %v2737
    %v4550 = vpack.c.b16 %v2746, %v2742
    %v4551 = vpack.c.b16 %v2747, %v2743
    %v4552 = vpack.c.b16 %v2748, %v2744
    %v4553 = vpack.c.b16 %v2749, %v2745
    %v4554 = vpack.c.b16 %v2754, %v2750
    %v4555 = vpack.c.b16 %v2755, %v2751
    %v4556 = vpack.c.b16 %v2756, %v2752
    %v4557 = vpack.c.b16 %v2757, %v2753
    %v4558 = vpack.c.b16 %v2762, %v2758
    %v4559 = vpack.c.b16 %v2763, %v2759
    %v4560 = vpack.c.b16 %v2764, %v2760
    %v4561 = vpack.c.b16 %v2765, %v2761
    %v4562 = vpack.c.b16 %v2770, %v2766
    %v4563 = vpack.c.b16 %v2771, %v2767
    %v4564 = vpack.c.b16 %v2772, %v2768
    %v4565 = vpack.c.b16 %v2773, %v2769
    %v4566 = vpack.c.b16 %v2778, %v2774
    %v4567 = vpack.c.b16 %v2779, %v2775
    %v4568 = vpack.c.b16 %v2780, %v2776
    %v4569 = vpack.c.b16 %v2781, %v2777
    %v4570 = vpack.c.b16 %v2786, %v2782
    %v4571 = vpack.c.b16 %v2787, %v2783
    %v4572 = vpack.c.b16 %v2788, %v2784
    %v4573 = vpack.c.b16 %v2789, %v2785
    %v4574 = vpack.c.b16 %v2794, %v2790
    %v4575 = vpack.c.b16 %v2795, %v2791
    %v4576 = vpack.c.b16 %v2796, %v2792
    %v4577 = vpack.c.b16 %v2797, %v2793
    %v4578 = vpack.c.b16 %v2802, %v2798
    %v4579 = vpack.c.b16 %v2803, %v2799
    %v4580 = vpack.c.b16 %v2804, %v2800
    %v4581 = vpack.c.b16 %v2805, %v2801
    %v4582 = vpack.c.b16 %v2810, %v2806
    %v4583 = vpack.c.b16 %v2811, %v2807
    %v4584 = vpack.c.b16 %v2812, %v2808
    %v4585 = vpack.c.b16 %v2813, %v2809
    %v4586 = vpack.c.b16 %v2818, %v2814
    %v4587 = vpack.c.b16 %v2819, %v2815
    %v4588 = vpack.c.b16 %v2820, %v2816
    %v4589 = vpack.c.b16 %v2821, %v2817
    %v4590 = vpack.c.b16 %v2826, %v2822
    %v4591 = vpack.c.b16 %v2827, %v2823
    %v4592 = vpack.c.b16 %v2828, %v2824
    %v4593 = vpack.c.b16 %v2829, %v2825
    %v4594 = vpack.c.b16 %v2834, %v2830
    %v4595 = vpack.c.b16 %v2835, %v2831
    %v4596 = vpack.c.b16 %v2836, %v2832
    %v4597 = vpack.c.b16 %v2837, %v2833
    %v4598 = vpack.c.b16 %v2842, %v2838
    %v4599 = vpack.c.b16 %v2843, %v2839
    %v4600 = vpack.c.b16 %v2844, %v2840
    %v4601 = vpack.c.b16 %v2845, %v2841
    %v4602 = vpack.c.b16 %v2850, %v2846
    %v4603 = vpack.c.b16 %v2851, %v2847
    %v4604 = vpack.c.b16 %v2852, %v2848
    %v4605 = vpack.c.b16 %v2853, %v2849
    %v4606 = vpack.c.b16 %v2858, %v2854
    %v4607 = vpack.c.b16 %v2859, %v2855
    %v4608 = vpack.c.b16 %v2860, %v2856
    %v4609 = vpack.c.b16 %v2861, %v2857
    %v4610 = vpack.c.b16 %v2866, %v2862
    %v4611 = vpack.c.b16 %v2867, %v2863
    %v4612 = vpack.c.b16 %v2868, %v2864
    %v4613 = vpack.c.b16 %v2869, %v2865
    %v4614 = vpack.c.b16 %v2874, %v2870
    %v4615 = vpack.c.b16 %v2875, %v2871
    %v4616 = vpack.c.b16 %v2876, %v2872
    %v4617 = vpack.c.b16 %v2877, %v2873
    %v4618 = vpack.c.b16 %v2882, %v2878
    %v4619 = vpack.c.b16 %v2883, %v2879
    %v4620 = vpack.c.b16 %v2884, %v2880
    %v4621 = vpack.c.b16 %v2885, %v2881
    %v4622 = vpack.c.b16 %v2890, %v2886
    %v4623 = vpack.c.b16 %v2891, %v2887
    %v4624 = vpack.c.b16 %v2892, %v2888
    %v4625 = vpack.c.b16 %v2893, %v2889
    %v4626 = vpack.c.b16 %v2898, %v2894
    %v4627 = vpack.c.b16 %v2899, %v2895
    %v4628 = vpack.c.b16 %v2900, %v2896
    %v4629 = vpack.c.b16 %v2901, %v2897
    %v4630 = vpack.c.b16 %v2906, %v2902
    %v4631 = vpack.c.b16 %v2907, %v2903
    %v4632 = vpack.c.b16 %v2908, %v2904
    %v4633 = vpack.c.b16 %v2909, %v2905
    %v4634 = vpack.c.b16 %v2914, %v2910
    %v4635 = vpack.c.b16 %v2915, %v2911
    %v4636 = vpack.c.b16 %v2916, %v2912
    %v4637 = vpack.c.b16 %v2917, %v2913
    %v4638 = vpack.c.b16 %v2922, %v2918
    %v4639 = vpack.c.b16 %v2923, %v2919
    %v4640 = vpack.c.b16 %v2924, %v2920
    %v4641 = vpack.c.b16 %v2925, %v2921
    %v4642 = vpack.c.b16 %v2930, %v2926
    %v4643 = vpack.c.b16 %v2931, %v2927
    %v4644 = vpack.c.b16 %v2932, %v2928
    %v4645 = vpack.c.b16 %v2933, %v2929
    %v4646 = vpack.c.b16 %v2938, %v2934
    %v4647 = vpack.c.b16 %v2939, %v2935
    %v4648 = vpack.c.b16 %v2940, %v2936
    %v4649 = vpack.c.b16 %v2941, %v2937
    %v4650 = vpack.c.b16 %v2946, %v2942
    %v4651 = vpack.c.b16 %v2947, %v2943
    %v4652 = vpack.c.b16 %v2948, %v2944
    %v4653 = vpack.c.b16 %v2949, %v2945
    %v4654 = vpack.c.b16 %v2954, %v2950
    %v4655 = vpack.c.b16 %v2955, %v2951
    %v4656 = vpack.c.b16 %v2956, %v2952
    %v4657 = vpack.c.b16 %v2957, %v2953
    %v4658 = vpack.c.b16 %v2962, %v2958
    %v4659 = vpack.c.b16 %v2963, %v2959
    %v4660 = vpack.c.b16 %v2964, %v2960
    %v4661 = vpack.c.b16 %v2965, %v2961
    %v4662 = vpack.c.b16 %v2970, %v2966
    %v4663 = vpack.c.b16 %v2971, %v2967
    %v4664 = vpack.c.b16 %v2972, %v2968
    %v4665 = vpack.c.b16 %v2973, %v2969
    %v4666 = vpack.c.b16 %v2978, %v2974
    %v4667 = vpack.c.b16 %v2979, %v2975
    %v4668 = vpack.c.b16 %v2980, %v2976
    %v4669 = vpack.c.b16 %v2981, %v2977
    %v4670 = vpack.c.b16 %v2986, %v2982
    %v4671 = vpack.c.b16 %v2987, %v2983
    %v4672 = vpack.c.b16 %v2988, %v2984
    %v4673 = vpack.c.b16 %v2989, %v2985
    %v4674 = vpack.c.b16 %v2994, %v2990
    %v4675 = vpack.c.b16 %v2995, %v2991
    %v4676 = vpack.c.b16 %v2996, %v2992
    %v4677 = vpack.c.b16 %v2997, %v2993
    %v4678 = vpack.c.b16 %v3002, %v2998
    %v4679 = vpack.c.b16 %v3003, %v2999
    %v4680 = vpack.c.b16 %v3004, %v3000
    %v4681 = vpack.c.b16 %v3005, %v3001
    %v4682 = vpack.c.b16 %v3010, %v3006
    %v4683 = vpack.c.b16 %v3011, %v3007
    %v4684 = vpack.c.b16 %v3012, %v3008
    %v4685 = vpack.c.b16 %v3013, %v3009
    %v4686 = vpack.c.b16 %v3018, %v3014
    %v4687 = vpack.c.b16 %v3019, %v3015
    %v4688 = vpack.c.b16 %v3020, %v3016
    %v4689 = vpack.c.b16 %v3021, %v3017
    %v4690 = vpack.c.b16 %v3026, %v3022
    %v4691 = vpack.c.b16 %v3027, %v3023
    %v4692 = vpack.c.b16 %v3028, %v3024
    %v4693 = vpack.c.b16 %v3029, %v3025
    %v4694 = vpack.c.b16 %v3034, %v3030
    %v4695 = vpack.c.b16 %v3035, %v3031
    %v4696 = vpack.c.b16 %v3036, %v3032
    %v4697 = vpack.c.b16 %v3037, %v3033
    %v4698 = vpack.c.b16 %v3042, %v3038
    %v4699 = vpack.c.b16 %v3043, %v3039
    %v4700 = vpack.c.b16 %v3044, %v3040
    %v4701 = vpack.c.b16 %v3045, %v3041
    %v4702 = vpack.c.b16 %v3050, %v3046
    %v4703 = vpack.c.b16 %v3051, %v3047
    %v4704 = vpack.c.b16 %v3052, %v3048
    %v4705 = vpack.c.b16 %v3053, %v3049
    %v4706 = vpack.c.b16 %v3058, %v3054
    %v4707 = vpack.c.b16 %v3059, %v3055
    %v4708 = vpack.c.b16 %v3060, %v3056
    %v4709 = vpack.c.b16 %v3061, %v3057
    %v4710 = vpack.c.b16 %v3066, %v3062
    %v4711 = vpack.c.b16 %v3067, %v3063
    %v4712 = vpack.c.b16 %v3068, %v3064
    %v4713 = vpack.c.b16 %v3069, %v3065
    %v4714 = vpack.c.b16 %v3074, %v3070
    %v4715 = vpack.c.b16 %v3075, %v3071
    %v4716 = vpack.c.b16 %v3076, %v3072
    %v4717 = vpack.c.b16 %v3077, %v3073
    %v4718 = vpack.c.b16 %v3082, %v3078
    %v4719 = vpack.c.b16 %v3083, %v3079
    %v4720 = vpack.c.b16 %v3084, %v3080
    %v4721 = vpack.c.b16 %v3085, %v3081
    %v4722 = vpack.c.b16 %v3090, %v3086
    %v4723 = vpack.c.b16 %v3091, %v3087
    %v4724 = vpack.c.b16 %v3092, %v3088
    %v4725 = vpack.c.b16 %v3093, %v3089
    %v4726 = vpack.c.b16 %v3098, %v3094
    %v4727 = vpack.c.b16 %v3099, %v3095
    %v4728 = vpack.c.b16 %v3100, %v3096
    %v4729 = vpack.c.b16 %v3101, %v3097
    %v4730 = vpack.c.b16 %v3106, %v3102
    %v4731 = vpack.c.b16 %v3107, %v3103
    %v4732 = vpack.c.b16 %v3108, %v3104
    %v4733 = vpack.c.b16 %v3109, %v3105
    %v4734 = vpack.c.b16 %v3114, %v3110
    %v4735 = vpack.c.b16 %v3115, %v3111
    %v4736 = vpack.c.b16 %v3116, %v3112
    %v4737 = vpack.c.b16 %v3117, %v3113
    %v4738 = vpack.c.b16 %v3122, %v3118
    %v4739 = vpack.c.b16 %v3123, %v3119
    %v4740 = vpack.c.b16 %v3124, %v3120
    %v4741 = vpack.c.b16 %v3125, %v3121
    %v4742 = vpack.c.b16 %v3130, %v3126
    %v4743 = vpack.c.b16 %v3131, %v3127
    %v4744 = vpack.c.b16 %v3132, %v3128
    %v4745 = vpack.c.b16 %v3133, %v3129
    %v4746 = vpack.c.b16 %v3138, %v3134
    %v4747 = vpack.c.b16 %v3139, %v3135
    %v4748 = vpack.c.b16 %v3140, %v3136
    %v4749 = vpack.c.b16 %v3141, %v3137
    %v4750 = vpack.c.b16 %v3146, %v3142
    %v4751 = vpack.c.b16 %v3147, %v3143
    %v4752 = vpack.c.b16 %v3148, %v3144
    %v4753 = vpack.c.b16 %v3149, %v3145
    %v4754 = vpack.c.b16 %v3154, %v3150
    %v4755 = vpack.c.b16 %v3155, %v3151
    %v4756 = vpack.c.b16 %v3156, %v3152
    %v4757 = vpack.c.b16 %v3157, %v3153
    %v4758 = vpack.c.b16 %v3162, %v3158
    %v4759 = vpack.c.b16 %v3163, %v3159
    %v4760 = vpack.c.b16 %v3164, %v3160
    %v4761 = vpack.c.b16 %v3165, %v3161
    %v4762 = vpack.c.b16 %v3170, %v3166
    %v4763 = vpack.c.b16 %v3171, %v3167
    %v4764 = vpack.c.b16 %v3172, %v3168
    %v4765 = vpack.c.b16 %v3173, %v3169
    %v4766 = vpack.c.b16 %v3178, %v3174
    %v4767 = vpack.c.b16 %v3179, %v3175
    %v4768 = vpack.c.b16 %v3180, %v3176
    %v4769 = vpack.c.b16 %v3181, %v3177
    %v4770 = vpack.c.b16 %v3186, %v3182
    %v4771 = vpack.c.b16 %v3187, %v3183
    %v4772 = vpack.c.b16 %v3188, %v3184
    %v4773 = vpack.c.b16 %v3189, %v3185
    %v4774 = vpack.c.b16 %v3194, %v3190
    %v4775 = vpack.c.b16 %v3195, %v3191
    %v4776 = vpack.c.b16 %v3196, %v3192
    %v4777 = vpack.c.b16 %v3197, %v3193
    %v4778 = vpack.c.b16 %v3202, %v3198
    %v4779 = vpack.c.b16 %v3203, %v3199
    %v4780 = vpack.c.b16 %v3204, %v3200
    %v4781 = vpack.c.b16 %v3205, %v3201
    %v4782 = vpack.c.b16 %v3210, %v3206
    %v4783 = vpack.c.b16 %v3211, %v3207
    %v4784 = vpack.c.b16 %v3212, %v3208
    %v4785 = vpack.c.b16 %v3213, %v3209
    %v4786 = vpack.c.b16 %v3218, %v3214
    %v4787 = vpack.c.b16 %v3219, %v3215
    %v4788 = vpack.c.b16 %v3220, %v3216
    %v4789 = vpack.c.b16 %v3221, %v3217
    %v4790 = vpack.c.b16 %v3226, %v3222
    %v4791 = vpack.c.b16 %v3227, %v3223
    %v4792 = vpack.c.b16 %v3228, %v3224
    %v4793 = vpack.c.b16 %v3229, %v3225
    %v4794 = vpack.c.b16 %v3234, %v3230
    %v4795 = vpack.c.b16 %v3235, %v3231
    %v4796 = vpack.c.b16 %v3236, %v3232
    %v4797 = vpack.c.b16 %v3237, %v3233
    %v4798 = vpack.c.b16 %v3242, %v3238
    %v4799 = vpack.c.b16 %v3243, %v3239
    %v4800 = vpack.c.b16 %v3244, %v3240
    %v4801 = vpack.c.b16 %v3245, %v3241
    %v4802 = vpack.c.b16 %v3250, %v3246
    %v4803 = vpack.c.b16 %v3251, %v3247
    %v4804 = vpack.c.b16 %v3252, %v3248
    %v4805 = vpack.c.b16 %v3253, %v3249
    %v4806 = vpack.c.b16 %v3258, %v3254
    %v4807 = vpack.c.b16 %v3259, %v3255
    %v4808 = vpack.c.b16 %v3260, %v3256
    %v4809 = vpack.c.b16 %v3261, %v3257
    %v4810 = vpack.c.b16 %v3266, %v3262
    %v4811 = vpack.c.b16 %v3267, %v3263
    %v4812 = vpack.c.b16 %v3268, %v3264
    %v4813 = vpack.c.b16 %v3269, %v3265
    %v4814 = vpack.c.b16 %v3274, %v3270
    %v4815 = vpack.c.b16 %v3275, %v3271
    %v4816 = vpack.c.b16 %v3276, %v3272
    %v4817 = vpack.c.b16 %v3277, %v3273
    %v4818 = vpack.c.b16 %v3282, %v3278
    %v4819 = vpack.c.b16 %v3283, %v3279
    %v4820 = vpack.c.b16 %v3284, %v3280
    %v4821 = vpack.c.b16 %v3285, %v3281
    %v4822 = vpack.c.b16 %v3290, %v3286
    %v4823 = vpack.c.b16 %v3291, %v3287
    %v4824 = vpack.c.b16 %v3292, %v3288
    %v4825 = vpack.c.b16 %v3293, %v3289
    %v4826 = vpack.c.b16 %v3298, %v3294
    %v4827 = vpack.c.b16 %v3299, %v3295
    %v4828 = vpack.c.b16 %v3300, %v3296
    %v4829 = vpack.c.b16 %v3301, %v3297
    %v4830 = vpack.c.b16 %v3306, %v3302
    %v4831 = vpack.c.b16 %v3307, %v3303
    %v4832 = vpack.c.b16 %v3308, %v3304
    %v4833 = vpack.c.b16 %v3309, %v3305
    %v4834 = vpack.c.b16 %v3314, %v3310
    %v4835 = vpack.c.b16 %v3315, %v3311
    %v4836 = vpack.c.b16 %v3316, %v3312
    %v4837 = vpack.c.b16 %v3317, %v3313
    %v4838 = vpack.c.b16 %v3322, %v3318
    %v4839 = vpack.c.b16 %v3323, %v3319
    %v4840 = vpack.c.b16 %v3324, %v3320
    %v4841 = vpack.c.b16 %v3325, %v3321
    %v4842 = vpack.c.b16 %v3330, %v3326
    %v4843 = vpack.c.b16 %v3331, %v3327
    %v4844 = vpack.c.b16 %v3332, %v3328
    %v4845 = vpack.c.b16 %v3333, %v3329
    %v4846 = vpack.c.b16 %v3338, %v3334
    %v4847 = vpack.c.b16 %v3339, %v3335
    %v4848 = vpack.c.b16 %v3340, %v3336
    %v4849 = vpack.c.b16 %v3341, %v3337
    %v4850 = vpack.c.b16 %v3346, %v3342
    %v4851 = vpack.c.b16 %v3347, %v3343
    %v4852 = vpack.c.b16 %v3348, %v3344
    %v4853 = vpack.c.b16 %v3349, %v3345
    %v4854 = vpack.c.b16 %v3354, %v3350
    %v4855 = vpack.c.b16 %v3355, %v3351
    %v4856 = vpack.c.b16 %v3356, %v3352
    %v4857 = vpack.c.b16 %v3357, %v3353
    %v4858 = vpack.c.b16 %v3362, %v3358
    %v4859 = vpack.c.b16 %v3363, %v3359
    %v4860 = vpack.c.b16 %v3364, %v3360
    %v4861 = vpack.c.b16 %v3365, %v3361
    %v4862 = vpack.c.b16 %v3370, %v3366
    %v4863 = vpack.c.b16 %v3371, %v3367
    %v4864 = vpack.c.b16 %v3372, %v3368
    %v4865 = vpack.c.b16 %v3373, %v3369
    %v4866 = vpack.c.b16 %v3378, %v3374
    %v4867 = vpack.c.b16 %v3379, %v3375
    %v4868 = vpack.c.b16 %v3380, %v3376
    %v4869 = vpack.c.b16 %v3381, %v3377
    %v4870 = vpack.c.b16 %v3386, %v3382
    %v4871 = vpack.c.b16 %v3387, %v3383
    %v4872 = vpack.c.b16 %v3388, %v3384
    %v4873 = vpack.c.b16 %v3389, %v3385
    %v4874 = vpack.c.b16 %v3394, %v3390
    %v4875 = vpack.c.b16 %v3395, %v3391
    %v4876 = vpack.c.b16 %v3396, %v3392
    %v4877 = vpack.c.b16 %v3397, %v3393
    %v4878 = vpack.c.b16 %v3402, %v3398
    %v4879 = vpack.c.b16 %v3403, %v3399
    %v4880 = vpack.c.b16 %v3404, %v3400
    %v4881 = vpack.c.b16 %v3405, %v3401
    %v4882 = vpack.c.b16 %v3410, %v3406
    %v4883 = vpack.c.b16 %v3411, %v3407
    %v4884 = vpack.c.b16 %v3412, %v3408
    %v4885 = vpack.c.b16 %v3413, %v3409
    %v4886 = vpack.c.b16 %v3418, %v3414
    %v4887 = vpack.c.b16 %v3419, %v3415
    %v4888 = vpack.c.b16 %v3420, %v3416
    %v4889 = vpack.c.b16 %v3421, %v3417
    %v4890 = vpack.c.b16 %v3426, %v3422
    %v4891 = vpack.c.b16 %v3427, %v3423
    %v4892 = vpack.c.b16 %v3428, %v3424
    %v4893 = vpack.c.b16 %v3429, %v3425
    %v4894 = vpack.c.b16 %v3434, %v3430
    %v4895 = vpack.c.b16 %v3435, %v3431
    %v4896 = vpack.c.b16 %v3436, %v3432
    %v4897 = vpack.c.b16 %v3437, %v3433
    %v4898 = vpack.c.b16 %v3442, %v3438
    %v4899 = vpack.c.b16 %v3443, %v3439
    %v4900 = vpack.c.b16 %v3444, %v3440
    %v4901 = vpack.c.b16 %v3445, %v3441
    %v4902 = vpack.c.b16 %v3450, %v3446
    %v4903 = vpack.c.b16 %v3451, %v3447
    %v4904 = vpack.c.b16 %v3452, %v3448
    %v4905 = vpack.c.b16 %v3453, %v3449
    %v4906 = vpack.c.b16 %v3458, %v3454
    %v4907 = vpack.c.b16 %v3459, %v3455
    %v4908 = vpack.c.b16 %v3460, %v3456
    %v4909 = vpack.c.b16 %v3461, %v3457
    %v4910 = vpack.c.b16 %v3466, %v3462
    %v4911 = vpack.c.b16 %v3467, %v3463
    %v4912 = vpack.c.b16 %v3468, %v3464
    %v4913 = vpack.c.b16 %v3469, %v3465
    %v4914 = vpack.c.b16 %v3474, %v3470
    %v4915 = vpack.c.b16 %v3475, %v3471
    %v4916 = vpack.c.b16 %v3476, %v3472
    %v4917 = vpack.c.b16 %v3477, %v3473
    %v4918 = vpack.c.b16 %v3482, %v3478
    %v4919 = vpack.c.b16 %v3483, %v3479
    %v4920 = vpack.c.b16 %v3484, %v3480
    %v4921 = vpack.c.b16 %v3485, %v3481
    %v4922 = vpack.c.b16 %v3490, %v3486
    %v4923 = vpack.c.b16 %v3491, %v3487
    %v4924 = vpack.c.b16 %v3492, %v3488
    %v4925 = vpack.c.b16 %v3493, %v3489
    %v4926 = vpack.c.b16 %v3498, %v3494
    %v4927 = vpack.c.b16 %v3499, %v3495
    %v4928 = vpack.c.b16 %v3500, %v3496
    %v4929 = vpack.c.b16 %v3501, %v3497
    %v4930 = vpack.c.b16 %v3506, %v3502
    %v4931 = vpack.c.b16 %v3507, %v3503
    %v4932 = vpack.c.b16 %v3508, %v3504
    %v4933 = vpack.c.b16 %v3509, %v3505
    %v4934 = vpack.c.b16 %v3514, %v3510
    %v4935 = vpack.c.b16 %v3515, %v3511
    %v4936 = vpack.c.b16 %v3516, %v3512
    %v4937 = vpack.c.b16 %v3517, %v3513
    %v4938 = vpack.c.b16 %v3522, %v3518
    %v4939 = vpack.c.b16 %v3523, %v3519
    %v4940 = vpack.c.b16 %v3524, %v3520
    %v4941 = vpack.c.b16 %v3525, %v3521
    %v4942 = vpack.c.b16 %v3530, %v3526
    %v4943 = vpack.c.b16 %v3531, %v3527
    %v4944 = vpack.c.b16 %v3532, %v3528
    %v4945 = vpack.c.b16 %v3533, %v3529
    %v4946 = vpack.c.b16 %v3538, %v3534
    %v4947 = vpack.c.b16 %v3539, %v3535
    %v4948 = vpack.c.b16 %v3540, %v3536
    %v4949 = vpack.c.b16 %v3541, %v3537
    %v4950 = vpack.c.b16 %v3546, %v3542
    %v4951 = vpack.c.b16 %v3547, %v3543
    %v4952 = vpack.c.b16 %v3548, %v3544
    %v4953 = vpack.c.b16 %v3549, %v3545
    %v4954 = vpack.c.b16 %v3554, %v3550
    %v4955 = vpack.c.b16 %v3555, %v3551
    %v4956 = vpack.c.b16 %v3556, %v3552
    %v4957 = vpack.c.b16 %v3557, %v3553
    %v4958 = vpack.c.b16 %v3562, %v3558
    %v4959 = vpack.c.b16 %v3563, %v3559
    %v4960 = vpack.c.b16 %v3564, %v3560
    %v4961 = vpack.c.b16 %v3565, %v3561
    %v4962 = vpack.c.b16 %v3570, %v3566
    %v4963 = vpack.c.b16 %v3571, %v3567
    %v4964 = vpack.c.b16 %v3572, %v3568
    %v4965 = vpack.c.b16 %v3573, %v3569
    %v4966 = vpack.c.b16 %v3578, %v3574
    %v4967 = vpack.c.b16 %v3579, %v3575
    %v4968 = vpack.c.b16 %v3580, %v3576
    %v4969 = vpack.c.b16 %v3581, %v3577
    %v4970 = vpack.c.b16 %v3586, %v3582
    %v4971 = vpack.c.b16 %v3587, %v3583
    %v4972 = vpack.c.b16 %v3588, %v3584
    %v4973 = vpack.c.b16 %v3589, %v3585
    %v4974 = vpack.c.b16 %v3594, %v3590
    %v4975 = vpack.c.b16 %v3595, %v3591
    %v4976 = vpack.c.b16 %v3596, %v3592
    %v4977 = vpack.c.b16 %v3597, %v3593
    %v4978 = vpack.c.b16 %v3602, %v3598
    %v4979 = vpack.c.b16 %v3603, %v3599
    %v4980 = vpack.c.b16 %v3604, %v3600
    %v4981 = vpack.c.b16 %v3605, %v3601
    %v4982 = vpack.c.b16 %v3610, %v3606
    %v4983 = vpack.c.b16 %v3611, %v3607
    %v4984 = vpack.c.b16 %v3612, %v3608
    %v4985 = vpack.c.b16 %v3613, %v3609
    %v4986 = vpack.c.b16 %v3618, %v3614
    %v4987 = vpack.c.b16 %v3619, %v3615
    %v4988 = vpack.c.b16 %v3620, %v3616
    %v4989 = vpack.c.b16 %v3621, %v3617
    %v4990 = vpack.c.b16 %v3626, %v3622
    %v4991 = vpack.c.b16 %v3627, %v3623
    %v4992 = vpack.c.b16 %v3628, %v3624
    %v4993 = vpack.c.b16 %v3629, %v3625
    %v4994 = vpack.c.b16 %v3634, %v3630
    %v4995 = vpack.c.b16 %v3635, %v3631
    %v4996 = vpack.c.b16 %v3636, %v3632
    %v4997 = vpack.c.b16 %v3637, %v3633
    %v4998 = vpack.c.b16 %v3642, %v3638
    %v4999 = vpack.c.b16 %v3643, %v3639
    %v5000 = vpack.c.b16 %v3644, %v3640
    %v5001 = vpack.c.b16 %v3645, %v3641
    %v5002 = vpack.c.b16 %v3650, %v3646
    %v5003 = vpack.c.b16 %v3651, %v3647
    %v5004 = vpack.c.b16 %v3652, %v3648
    %v5005 = vpack.c.b16 %v3653, %v3649
    %v5006 = vpack.c.b16 %v3658, %v3654
    %v5007 = vpack.c.b16 %v3659, %v3655
    %v5008 = vpack.c.b16 %v3660, %v3656
    %v5009 = vpack.c.b16 %v3661, %v3657
    %v5010 = vpack.c.b16 %v3666, %v3662
    %v5011 = vpack.c.b16 %v3667, %v3663
    %v5012 = vpack.c.b16 %v3668, %v3664
    %v5013 = vpack.c.b16 %v3669, %v3665
    %v5014 = vpack.c.b16 %v3674, %v3670
    %v5015 = vpack.c.b16 %v3675, %v3671
    %v5016 = vpack.c.b16 %v3676, %v3672
    %v5017 = vpack.c.b16 %v3677, %v3673
    %v5018 = vpack.c.b16 %v3682, %v3678
    %v5019 = vpack.c.b16 %v3683, %v3679
    %v5020 = vpack.c.b16 %v3684, %v3680
    %v5021 = vpack.c.b16 %v3685, %v3681
    %v5022 = vpack.c.b16 %v3690, %v3686
    %v5023 = vpack.c.b16 %v3691, %v3687
    %v5024 = vpack.c.b16 %v3692, %v3688
    %v5025 = vpack.c.b16 %v3693, %v3689
    %v5026 = vpack.c.b16 %v3698, %v3694
    %v5027 = vpack.c.b16 %v3699, %v3695
    %v5028 = vpack.c.b16 %v3700, %v3696
    %v5029 = vpack.c.b16 %v3701, %v3697
    %v5030 = vpack.c.b16 %v3706, %v3702
    %v5031 = vpack.c.b16 %v3707, %v3703
    %v5032 = vpack.c.b16 %v3708, %v3704
    %v5033 = vpack.c.b16 %v3709, %v3705
    %v5034 = vpack.c.b16 %v3714, %v3710
    %v5035 = vpack.c.b16 %v3715, %v3711
    %v5036 = vpack.c.b16 %v3716, %v3712
    %v5037 = vpack.c.b16 %v3717, %v3713
    %v5038 = vpack.c.b16 %v3722, %v3718
    %v5039 = vpack.c.b16 %v3723, %v3719
    %v5040 = vpack.c.b16 %v3724, %v3720
    %v5041 = vpack.c.b16 %v3725, %v3721
    %v5042 = vpack.c.b16 %v3730, %v3726
    %v5043 = vpack.c.b16 %v3731, %v3727
    %v5044 = vpack.c.b16 %v3732, %v3728
    %v5045 = vpack.c.b16 %v3733, %v3729
    %v5046 = vpack.c.b16 %v3738, %v3734
    %v5047 = vpack.c.b16 %v3739, %v3735
    %v5048 = vpack.c.b16 %v3740, %v3736
    %v5049 = vpack.c.b16 %v3741, %v3737
    %v5050 = vpack.c.b16 %v3746, %v3742
    %v5051 = vpack.c.b16 %v3747, %v3743
    %v5052 = vpack.c.b16 %v3748, %v3744
    %v5053 = vpack.c.b16 %v3749, %v3745
    %v5054 = vpack.c.b16 %v3754, %v3750
    %v5055 = vpack.c.b16 %v3755, %v3751
    %v5056 = vpack.c.b16 %v3756, %v3752
    %v5057 = vpack.c.b16 %v3757, %v3753
    %v5058 = vpack.c.b16 %v3762, %v3758
    %v5059 = vpack.c.b16 %v3763, %v3759
    %v5060 = vpack.c.b16 %v3764, %v3760
    %v5061 = vpack.c.b16 %v3765, %v3761
    %v5062 = vpack.c.b16 %v3770, %v3766
    %v5063 = vpack.c.b16 %v3771, %v3767
    %v5064 = vpack.c.b16 %v3772, %v3768
    %v5065 = vpack.c.b16 %v3773, %v3769
    %v5066 = vpack.c.b16 %v3778, %v3774
    %v5067 = vpack.c.b16 %v3779, %v3775
    %v5068 = vpack.c.b16 %v3780, %v3776
    %v5069 = vpack.c.b16 %v3781, %v3777
    %v5070 = vpack.c.b16 %v3786, %v3782
    %v5071 = vpack.c.b16 %v3787, %v3783
    %v5072 = vpack.c.b16 %v3788, %v3784
    %v5073 = vpack.c.b16 %v3789, %v3785
    %v5074 = vpack.c.b16 %v3794, %v3790
    %v5075 = vpack.c.b16 %v3795, %v3791
    %v5076 = vpack.c.b16 %v3796, %v3792
    %v5077 = vpack.c.b16 %v3797, %v3793
    %v5078 = vpack.c.b16 %v3802, %v3798
    %v5079 = vpack.c.b16 %v3803, %v3799
    %v5080 = vpack.c.b16 %v3804, %v3800
    %v5081 = vpack.c.b16 %v3805, %v3801
    %v5082 = vpack.c.b16 %v3810, %v3806
    %v5083 = vpack.c.b16 %v3811, %v3807
    %v5084 = vpack.c.b16 %v3812, %v3808
    %v5085 = vpack.c.b16 %v3813, %v3809
    %v5086 = vpack.c.b16 %v3818, %v3814
    %v5087 = vpack.c.b16 %v3819, %v3815
    %v5088 = vpack.c.b16 %v3820, %v3816
    %v5089 = vpack.c.b16 %v3821, %v3817
    %v5090 = vpack.c.b16 %v3826, %v3822
    %v5091 = vpack.c.b16 %v3827, %v3823
    %v5092 = vpack.c.b16 %v3828, %v3824
    %v5093 = vpack.c.b16 %v3829, %v3825
    %v5094 = vpack.c.b16 %v3834, %v3830
    %v5095 = vpack.c.b16 %v3835, %v3831
    %v5096 = vpack.c.b16 %v3836, %v3832
    %v5097 = vpack.c.b16 %v3837, %v3833
    %v5098 = vpack.c.b16 %v3842, %v3838
    %v5099 = vpack.c.b16 %v3843, %v3839
    %v5100 = vpack.c.b16 %v3844, %v3840
    %v5101 = vpack.c.b16 %v3845, %v3841
    %v5102 = vpack.c.b16 %v3850, %v3846
    %v5103 = vpack.c.b16 %v3851, %v3847
    %v5104 = vpack.c.b16 %v3852, %v3848
    %v5105 = vpack.c.b16 %v3853, %v3849
    %v5106 = vpack.c.b16 %v3858, %v3854
    %v5107 = vpack.c.b16 %v3859, %v3855
    %v5108 = vpack.c.b16 %v3860, %v3856
    %v5109 = vpack.c.b16 %v3861, %v3857
    %v5110 = vpack.c.b16 %v3866, %v3862
    %v5111 = vpack.c.b16 %v3867, %v3863
    %v5112 = vpack.c.b16 %v3868, %v3864
    %v5113 = vpack.c.b16 %v3869, %v3865
    %v5114 = vpack.c.b16 %v3874, %v3870
    %v5115 = vpack.c.b16 %v3875, %v3871
    %v5116 = vpack.c.b16 %v3876, %v3872
    %v5117 = vpack.c.b16 %v3877, %v3873
    %v5118 = vpack.c.b16 %v3882, %v3878
    %v5119 = vpack.c.b16 %v3883, %v3879
    %v5120 = vpack.c.b16 %v3884, %v3880
    %v5121 = vpack.c.b16 %v3885, %v3881
    %v5122 = vpack.c.b16 %v3890, %v3886
    %v5123 = vpack.c.b16 %v3891, %v3887
    %v5124 = vpack.c.b16 %v3892, %v3888
    %v5125 = vpack.c.b16 %v3893, %v3889
    %v5126 = vpack.c.b16 %v3898, %v3894
    %v5127 = vpack.c.b16 %v3899, %v3895
    %v5128 = vpack.c.b16 %v3900, %v3896
    %v5129 = vpack.c.b16 %v3901, %v3897
    %v5130 = vpack.c.b16 %v3906, %v3902
    %v5131 = vpack.c.b16 %v3907, %v3903
    %v5132 = vpack.c.b16 %v3908, %v3904
    %v5133 = vpack.c.b16 %v3909, %v3905
    %v5134 = vpack.c.b16 %v3914, %v3910
    %v5135 = vpack.c.b16 %v3915, %v3911
    %v5136 = vpack.c.b16 %v3916, %v3912
    %v5137 = vpack.c.b16 %v3917, %v3913
    %v5138 = vpack.c.b16 %v3922, %v3918
    %v5139 = vpack.c.b16 %v3923, %v3919
    %v5140 = vpack.c.b16 %v3924, %v3920
    %v5141 = vpack.c.b16 %v3925, %v3921
    %v5142 = vpack.c.b16 %v3930, %v3926
    %v5143 = vpack.c.b16 %v3931, %v3927
    %v5144 = vpack.c.b16 %v3932, %v3928
    %v5145 = vpack.c.b16 %v3933, %v3929
    %v5146 = vpack.c.b16 %v3938, %v3934
    %v5147 = vpack.c.b16 %v3939, %v3935
    %v5148 = vpack.c.b16 %v3940, %v3936
    %v5149 = vpack.c.b16 %v3941, %v3937
    %v5150 = vpack.c.b16 %v3946, %v3942
    %v5151 = vpack.c.b16 %v3947, %v3943
    %v5152 = vpack.c.b16 %v3948, %v3944
    %v5153 = vpack.c.b16 %v3949, %v3945
    %v5154 = vpack.c.b16 %v3954, %v3950
    %v5155 = vpack.c.b16 %v3955, %v3951
    %v5156 = vpack.c.b16 %v3956, %v3952
    %v5157 = vpack.c.b16 %v3957, %v3953
    %v5158 = vpack.c.b16 %v3962, %v3958
    %v5159 = vpack.c.b16 %v3963, %v3959
    %v5160 = vpack.c.b16 %v3964, %v3960
    %v5161 = vpack.c.b16 %v3965, %v3961
    %v5162 = vpack.c.b16 %v3970, %v3966
    %v5163 = vpack.c.b16 %v3971, %v3967
    %v5164 = vpack.c.b16 %v3972, %v3968
    %v5165 = vpack.c.b16 %v3973, %v3969
    %v5166 = vpack.c.b16 %v3978, %v3974
    %v5167 = vpack.c.b16 %v3979, %v3975
    %v5168 = vpack.c.b16 %v3980, %v3976
    %v5169 = vpack.c.b16 %v3981, %v3977
    %v5170 = vpack.c.b16 %v3986, %v3982
    %v5171 = vpack.c.b16 %v3987, %v3983
    %v5172 = vpack.c.b16 %v3988, %v3984
    %v5173 = vpack.c.b16 %v3989, %v3985
    %v5174 = vpack.c.b16 %v3994, %v3990
    %v5175 = vpack.c.b16 %v3995, %v3991
    %v5176 = vpack.c.b16 %v3996, %v3992
    %v5177 = vpack.c.b16 %v3997, %v3993
    %v5178 = vpack.c.b16 %v4002, %v3998
    %v5179 = vpack.c.b16 %v4003, %v3999
    %v5180 = vpack.c.b16 %v4004, %v4000
    %v5181 = vpack.c.b16 %v4005, %v4001
    %v5182 = vpack.c.b16 %v4010, %v4006
    %v5183 = vpack.c.b16 %v4011, %v4007
    %v5184 = vpack.c.b16 %v4012, %v4008
    %v5185 = vpack.c.b16 %v4013, %v4009
    %v5186 = vpack.c.b16 %v4018, %v4014
    %v5187 = vpack.c.b16 %v4019, %v4015
    %v5188 = vpack.c.b16 %v4020, %v4016
    %v5189 = vpack.c.b16 %v4021, %v4017
    %v5190 = vpack.c.b16 %v4026, %v4022
    %v5191 = vpack.c.b16 %v4027, %v4023
    %v5192 = vpack.c.b16 %v4028, %v4024
    %v5193 = vpack.c.b16 %v4029, %v4025
    %v5194 = vpack.c.b16 %v4034, %v4030
    %v5195 = vpack.c.b16 %v4035, %v4031
    %v5196 = vpack.c.b16 %v4036, %v4032
    %v5197 = vpack.c.b16 %v4037, %v4033
    %v5198 = vpack.c.b16 %v4042, %v4038
    %v5199 = vpack.c.b16 %v4043, %v4039
    %v5200 = vpack.c.b16 %v4044, %v4040
    %v5201 = vpack.c.b16 %v4045, %v4041
    %v5202 = vpack.c.b16 %v4050, %v4046
    %v5203 = vpack.c.b16 %v4051, %v4047
    %v5204 = vpack.c.b16 %v4052, %v4048
    %v5205 = vpack.c.b16 %v4053, %v4049
    %v5206 = vpack.c.b16 %v4058, %v4054
    %v5207 = vpack.c.b16 %v4059, %v4055
    %v5208 = vpack.c.b16 %v4060, %v4056
    %v5209 = vpack.c.b16 %v4061, %v4057
    %v5210 = vpack.c.b16 %v4066, %v4062
    %v5211 = vpack.c.b16 %v4067, %v4063
    %v5212 = vpack.c.b16 %v4068, %v4064
    %v5213 = vpack.c.b16 %v4069, %v4065
    %v5214 = vpack.c.b16 %v4074, %v4070
    %v5215 = vpack.c.b16 %v4075, %v4071
    %v5216 = vpack.c.b16 %v4076, %v4072
    %v5217 = vpack.c.b16 %v4077, %v4073
    %v5218 = vpack.c.b16 %v4082, %v4078
    %v5219 = vpack.c.b16 %v4083, %v4079
    %v5220 = vpack.c.b16 %v4084, %v4080
    %v5221 = vpack.c.b16 %v4085, %v4081
    %v5222 = vpack.c.b16 %v4090, %v4086
    %v5223 = vpack.c.b16 %v4091, %v4087
    %v5224 = vpack.c.b16 %v4092, %v4088
    %v5225 = vpack.c.b16 %v4093, %v4089
    %v5226 = vpack.c.b16 %v4098, %v4094
    %v5227 = vpack.c.b16 %v4099, %v4095
    %v5228 = vpack.c.b16 %v4100, %v4096
    %v5229 = vpack.c.b16 %v4101, %v4097
    %v5230 = vpack.c.b16 %v4106, %v4102
    %v5231 = vpack.c.b16 %v4107, %v4103
    %v5232 = vpack.c.b16 %v4108, %v4104
    %v5233 = vpack.c.b16 %v4109, %v4105
    %v5234 = vpack.c.b16 %v4114, %v4110
    %v5235 = vpack.c.b16 %v4115, %v4111
    %v5236 = vpack.c.b16 %v4116, %v4112
    %v5237 = vpack.c.b16 %v4117, %v4113
    %v5238 = vpack.c.b16 %v4122, %v4118
    %v5239 = vpack.c.b16 %v4123, %v4119
    %v5240 = vpack.c.b16 %v4124, %v4120
    %v5241 = vpack.c.b16 %v4125, %v4121
    %v5242 = vpack.c.b16 %v4130, %v4126
    %v5243 = vpack.c.b16 %v4131, %v4127
    %v5244 = vpack.c.b16 %v4132, %v4128
    %v5245 = vpack.c.b16 %v4133, %v4129
    %v5246 = vpack.c.b16 %v4138, %v4134
    %v5247 = vpack.c.b16 %v4139, %v4135
    %v5248 = vpack.c.b16 %v4140, %v4136
    %v5249 = vpack.c.b16 %v4141, %v4137
    %v5250 = vpack.c.b16 %v4146, %v4142
    %v5251 = vpack.c.b16 %v4147, %v4143
    %v5252 = vpack.c.b16 %v4148, %v4144
    %v5253 = vpack.c.b16 %v4149, %v4145
    %v5254 = vpack.c.b16 %v4154, %v4150
    %v5255 = vpack.c.b16 %v4155, %v4151
    %v5256 = vpack.c.b16 %v4156, %v4152
    %v5257 = vpack.c.b16 %v4157, %v4153
    %v5258 = vpack.c.b16 %v4162, %v4158
    %v5259 = vpack.c.b16 %v4163, %v4159
    %v5260 = vpack.c.b16 %v4164, %v4160
    %v5261 = vpack.c.b16 %v4165, %v4161
    %v5262 = vpack.c.b16 %v4170, %v4166
    %v5263 = vpack.c.b16 %v4171, %v4167
    %v5264 = vpack.c.b16 %v4172, %v4168
    %v5265 = vpack.c.b16 %v4173, %v4169
    %v5266 = vpack.c.b16 %v4178, %v4174
    %v5267 = vpack.c.b16 %v4179, %v4175
    %v5268 = vpack.c.b16 %v4180, %v4176
    %v5269 = vpack.c.b16 %v4181, %v4177
    %v5270 = vpack.c.b16 %v4186, %v4182
    %v5271 = vpack.c.b16 %v4187, %v4183
    %v5272 = vpack.c.b16 %v4188, %v4184
    %v5273 = vpack.c.b16 %v4189, %v4185
    %v5274 = vpack.c.b16 %v4194, %v4190
    %v5275 = vpack.c.b16 %v4195, %v4191
    %v5276 = vpack.c.b16 %v4196, %v4192
    %v5277 = vpack.c.b16 %v4197, %v4193
    %v5278 = vpack.c.b16 %v4202, %v4198
    %v5279 = vpack.c.b16 %v4203, %v4199
    %v5280 = vpack.c.b16 %v4204, %v4200
    %v5281 = vpack.c.b16 %v4205, %v4201
    %v5282 = vpack.c.b16 %v4210, %v4206
    %v5283 = vpack.c.b16 %v4211, %v4207
    %v5284 = vpack.c.b16 %v4212, %v4208
    %v5285 = vpack.c.b16 %v4213, %v4209
    %v5286 = vpack.c.b16 %v4218, %v4214
    %v5287 = vpack.c.b16 %v4219, %v4215
    %v5288 = vpack.c.b16 %v4220, %v4216
    %v5289 = vpack.c.b16 %v4221, %v4217
    %v5290 = vpack.c.b16 %v4226, %v4222
    %v5291 = vpack.c.b16 %v4227, %v4223
    %v5292 = vpack.c.b16 %v4228, %v4224
    %v5293 = vpack.c.b16 %v4229, %v4225
    %v5294 = vpack.c.b16 %v4234, %v4230
    %v5295 = vpack.c.b16 %v4235, %v4231
    %v5296 = vpack.c.b16 %v4236, %v4232
    %v5297 = vpack.c.b16 %v4237, %v4233
    %v5298 = vpack.c.b16 %v4242, %v4238
    %v5299 = vpack.c.b16 %v4243, %v4239
    %v5300 = vpack.c.b16 %v4244, %v4240
    %v5301 = vpack.c.b16 %v4245, %v4241
    %v5302 = vpack.c.b16 %v4250, %v4246
    %v5303 = vpack.c.b16 %v4251, %v4247
    %v5304 = vpack.c.b16 %v4252, %v4248
    %v5305 = vpack.c.b16 %v4253, %v4249
    %v5306 = vpack.c.b16 %v4258, %v4254
    %v5307 = vpack.c.b16 %v4259, %v4255
    %v5308 = vpack.c.b16 %v4260, %v4256
    %v5309 = vpack.c.b16 %v4261, %v4257
    %v5310 = vpack.c.b16 %v4266, %v4262
    %v5311 = vpack.c.b16 %v4267, %v4263
    %v5312 = vpack.c.b16 %v4268, %v4264
    %v5313 = vpack.c.b16 %v4269, %v4265
    %v5314 = vpack.c.b16 %v4274, %v4270
    %v5315 = vpack.c.b16 %v4275, %v4271
    %v5316 = vpack.c.b16 %v4276, %v4272
    %v5317 = vpack.c.b16 %v4277, %v4273
    %v5318 = vpack.c.b16 %v4282, %v4278
    %v5319 = vpack.c.b16 %v4283, %v4279
    %v5320 = vpack.c.b16 %v4284, %v4280
    %v5321 = vpack.c.b16 %v4285, %v4281
    %v5322 = vpack.c.b16 %v4290, %v4286
    %v5323 = vpack.c.b16 %v4291, %v4287
    %v5324 = vpack.c.b16 %v4292, %v4288
    %v5325 = vpack.c.b16 %v4293, %v4289
    %v5326 = vpack.c.b16 %v4298, %v4294
    %v5327 = vpack.c.b16 %v4299, %v4295
    %v5328 = vpack.c.b16 %v4300, %v4296
    %v5329 = vpack.c.b16 %v4301, %v4297
    %v5330 = vpack.c.b16 %v4306, %v4302
    %v5331 = vpack.c.b16 %v4307, %v4303
    %v5332 = vpack.c.b16 %v4308, %v4304
    %v5333 = vpack.c.b16 %v4309, %v4305
    %6358 = vmatpush.bf16.msra.mxu0 %v4338
    %6359 = vmatpush.bf16.msra.mxu0 %v4334
    %6360 = vmatpush.bf16.msra.mxu0 %v4330
    %6361 = vmatpush.bf16.msra.mxu0 %v4326
    %6362 = vmatpush.bf16.msra.mxu0 %v4322
    %6363 = vmatpush.bf16.msra.mxu0 %v4318
    %6364 = vmatpush.bf16.msra.mxu0 %v4314
    %6365 = vmatpush.bf16.msra.mxu0 %v4310
    %6366 = vmatmul.bf16.gmra.mxu0 %v1162
    %v6367 = vpop.f32.mrf.mxu0
    %v6368 = vadd.f32 %v1149, %v6367
    %v6369 = vpop.f32.mrf.mxu0
    %6370 = vdwg.mxu0
    %6371 = vmatpush.bf16.msra.mxu0 %v4370
    %6372 = vmatpush.bf16.msra.mxu0 %v4366
    %6373 = vmatpush.bf16.msra.mxu0 %v4362
    %6374 = vmatpush.bf16.msra.mxu0 %v4358
    %6375 = vmatpush.bf16.msra.mxu0 %v4354
    %6376 = vmatpush.bf16.msra.mxu0 %v4350
    %6377 = vmatpush.bf16.msra.mxu0 %v4346
    %6378 = vmatpush.bf16.msra.mxu0 %v4342
    %6379 = vmatmul.bf16.gmra.mxu0 %v1163
    %v6380 = vpop.f32.mrf.mxu0
    %v6381 = vadd.f32 %v6368, %v6380
    %v6382 = vpop.f32.mrf.mxu0
    %6383 = vdwg.mxu0
    %6384 = vmatpush.bf16.msra.mxu0 %v4402
    %6385 = vmatpush.bf16.msra.mxu0 %v4398
    %6386 = vmatpush.bf16.msra.mxu0 %v4394
    %6387 = vmatpush.bf16.msra.mxu0 %v4390
    %6388 = vmatpush.bf16.msra.mxu0 %v4386
    %6389 = vmatpush.bf16.msra.mxu0 %v4382
    %6390 = vmatpush.bf16.msra.mxu0 %v4378
    %6391 = vmatpush.bf16.msra.mxu0 %v4374
    %6392 = vmatmul.bf16.gmra.mxu0 %v1164
    %v6393 = vpop.f32.mrf.mxu0
    %v6394 = vadd.f32 %v6381, %v6393
    %v6395 = vpop.f32.mrf.mxu0
    %6396 = vdwg.mxu0
    %6397 = vmatpush.bf16.msra.mxu0 %v4434
    %6398 = vmatpush.bf16.msra.mxu0 %v4430
    %6399 = vmatpush.bf16.msra.mxu0 %v4426
    %6400 = vmatpush.bf16.msra.mxu0 %v4422
    %6401 = vmatpush.bf16.msra.mxu0 %v4418
    %6402 = vmatpush.bf16.msra.mxu0 %v4414
    %6403 = vmatpush.bf16.msra.mxu0 %v4410
    %6404 = vmatpush.bf16.msra.mxu0 %v4406
    %6405 = vmatmul.bf16.gmra.mxu0 %v1165
    %v6406 = vpop.f32.mrf.mxu0
    %v6407 = vadd.f32 %v6394, %v6406
    %v6408 = vpop.f32.mrf.mxu0
    %6409 = vdwg.mxu0
    %6410 = vmatpush.bf16.msra.mxu0 %v4466
    %6411 = vmatpush.bf16.msra.mxu0 %v4462
    %6412 = vmatpush.bf16.msra.mxu0 %v4458
    %6413 = vmatpush.bf16.msra.mxu0 %v4454
    %6414 = vmatpush.bf16.msra.mxu0 %v4450
    %6415 = vmatpush.bf16.msra.mxu0 %v4446
    %6416 = vmatpush.bf16.msra.mxu0 %v4442
    %6417 = vmatpush.bf16.msra.mxu0 %v4438
    %6418 = vmatmul.bf16.gmra.mxu0 %v1166
    %v6419 = vpop.f32.mrf.mxu0
    %v6420 = vadd.f32 %v6407, %v6419
    %v6421 = vpop.f32.mrf.mxu0
    %6422 = vdwg.mxu0
    %6423 = vmatpush.bf16.msra.mxu0 %v4498
    %6424 = vmatpush.bf16.msra.mxu0 %v4494
    %6425 = vmatpush.bf16.msra.mxu0 %v4490
    %6426 = vmatpush.bf16.msra.mxu0 %v4486
    %6427 = vmatpush.bf16.msra.mxu0 %v4482
    %6428 = vmatpush.bf16.msra.mxu0 %v4478
    %6429 = vmatpush.bf16.msra.mxu0 %v4474
    %6430 = vmatpush.bf16.msra.mxu0 %v4470
    %6431 = vmatmul.bf16.gmra.mxu0 %v1167
    %v6432 = vpop.f32.mrf.mxu0
    %v6433 = vadd.f32 %v6420, %v6432
    %v6434 = vpop.f32.mrf.mxu0
    %6435 = vdwg.mxu0
    %6436 = vmatpush.bf16.msra.mxu0 %v4530
    %6437 = vmatpush.bf16.msra.mxu0 %v4526
    %6438 = vmatpush.bf16.msra.mxu0 %v4522
    %6439 = vmatpush.bf16.msra.mxu0 %v4518
    %6440 = vmatpush.bf16.msra.mxu0 %v4514
    %6441 = vmatpush.bf16.msra.mxu0 %v4510
    %6442 = vmatpush.bf16.msra.mxu0 %v4506
    %6443 = vmatpush.bf16.msra.mxu0 %v4502
    %6444 = vmatmul.bf16.gmra.mxu0 %v1168
    %v6445 = vpop.f32.mrf.mxu0
    %v6446 = vadd.f32 %v6433, %v6445
    %v6447 = vpop.f32.mrf.mxu0
    %6448 = vdwg.mxu0
    %6449 = vmatpush.bf16.msra.mxu0 %v4562
    %6450 = vmatpush.bf16.msra.mxu0 %v4558
    %6451 = vmatpush.bf16.msra.mxu0 %v4554
    %6452 = vmatpush.bf16.msra.mxu0 %v4550
    %6453 = vmatpush.bf16.msra.mxu0 %v4546
    %6454 = vmatpush.bf16.msra.mxu0 %v4542
    %6455 = vmatpush.bf16.msra.mxu0 %v4538
    %6456 = vmatpush.bf16.msra.mxu0 %v4534
    %6457 = vmatmul.bf16.gmra.mxu0 %v1169
    %v6458 = vpop.f32.mrf.mxu0
    %v6459 = vadd.f32 %v6446, %v6458
    %v6460 = vpop.f32.mrf.mxu0
    %6461 = vdwg.mxu0
    %6462 = vmatpush.bf16.msra.mxu0 %v4594
    %6463 = vmatpush.bf16.msra.mxu0 %v4590
    %6464 = vmatpush.bf16.msra.mxu0 %v4586
    %6465 = vmatpush.bf16.msra.mxu0 %v4582
    %6466 = vmatpush.bf16.msra.mxu0 %v4578
    %6467 = vmatpush.bf16.msra.mxu0 %v4574
    %6468 = vmatpush.bf16.msra.mxu0 %v4570
    %6469 = vmatpush.bf16.msra.mxu0 %v4566
    %6470 = vmatmul.bf16.gmra.mxu0 %v1174
    %v6471 = vpop.f32.mrf.mxu0
    %v6472 = vadd.f32 %v6459, %v6471
    %v6473 = vpop.f32.mrf.mxu0
    %6474 = vdwg.mxu0
    %6475 = vmatpush.bf16.msra.mxu0 %v4626
    %6476 = vmatpush.bf16.msra.mxu0 %v4622
    %6477 = vmatpush.bf16.msra.mxu0 %v4618
    %6478 = vmatpush.bf16.msra.mxu0 %v4614
    %6479 = vmatpush.bf16.msra.mxu0 %v4610
    %6480 = vmatpush.bf16.msra.mxu0 %v4606
    %6481 = vmatpush.bf16.msra.mxu0 %v4602
    %6482 = vmatpush.bf16.msra.mxu0 %v4598
    %6483 = vmatmul.bf16.gmra.mxu0 %v1175
    %v6484 = vpop.f32.mrf.mxu0
    %v6485 = vadd.f32 %v6472, %v6484
    %v6486 = vpop.f32.mrf.mxu0
    %6487 = vdwg.mxu0
    %6488 = vmatpush.bf16.msra.mxu0 %v4658
    %6489 = vmatpush.bf16.msra.mxu0 %v4654
    %6490 = vmatpush.bf16.msra.mxu0 %v4650
    %6491 = vmatpush.bf16.msra.mxu0 %v4646
    %6492 = vmatpush.bf16.msra.mxu0 %v4642
    %6493 = vmatpush.bf16.msra.mxu0 %v4638
    %6494 = vmatpush.bf16.msra.mxu0 %v4634
    %6495 = vmatpush.bf16.msra.mxu0 %v4630
    %6496 = vmatmul.bf16.gmra.mxu0 %v1176
    %v6497 = vpop.f32.mrf.mxu0
    %v6498 = vadd.f32 %v6485, %v6497
    %v6499 = vpop.f32.mrf.mxu0
    %6500 = vdwg.mxu0
    %6501 = vmatpush.bf16.msra.mxu0 %v4690
    %6502 = vmatpush.bf16.msra.mxu0 %v4686
    %6503 = vmatpush.bf16.msra.mxu0 %v4682
    %6504 = vmatpush.bf16.msra.mxu0 %v4678
    %6505 = vmatpush.bf16.msra.mxu0 %v4674
    %6506 = vmatpush.bf16.msra.mxu0 %v4670
    %6507 = vmatpush.bf16.msra.mxu0 %v4666
    %6508 = vmatpush.bf16.msra.mxu0 %v4662
    %6509 = vmatmul.bf16.gmra.mxu0 %v1177
    %v6510 = vpop.f32.mrf.mxu0
    %v6511 = vadd.f32 %v6498, %v6510
    %v6512 = vpop.f32.mrf.mxu0
    %6513 = vdwg.mxu0
    %6514 = vmatpush.bf16.msra.mxu0 %v4722
    %6515 = vmatpush.bf16.msra.mxu0 %v4718
    %6516 = vmatpush.bf16.msra.mxu0 %v4714
    %6517 = vmatpush.bf16.msra.mxu0 %v4710
    %6518 = vmatpush.bf16.msra.mxu0 %v4706
    %6519 = vmatpush.bf16.msra.mxu0 %v4702
    %6520 = vmatpush.bf16.msra.mxu0 %v4698
    %6521 = vmatpush.bf16.msra.mxu0 %v4694
    %6522 = vmatmul.bf16.gmra.mxu0 %v1178
    %v6523 = vpop.f32.mrf.mxu0
    %v6524 = vadd.f32 %v6511, %v6523
    %v6525 = vpop.f32.mrf.mxu0
    %6526 = vdwg.mxu0
    %6527 = vmatpush.bf16.msra.mxu0 %v4754
    %6528 = vmatpush.bf16.msra.mxu0 %v4750
    %6529 = vmatpush.bf16.msra.mxu0 %v4746
    %6530 = vmatpush.bf16.msra.mxu0 %v4742
    %6531 = vmatpush.bf16.msra.mxu0 %v4738
    %6532 = vmatpush.bf16.msra.mxu0 %v4734
    %6533 = vmatpush.bf16.msra.mxu0 %v4730
    %6534 = vmatpush.bf16.msra.mxu0 %v4726
    %6535 = vmatmul.bf16.gmra.mxu0 %v1179
    %v6536 = vpop.f32.mrf.mxu0
    %v6537 = vadd.f32 %v6524, %v6536
    %v6538 = vpop.f32.mrf.mxu0
    %6539 = vdwg.mxu0
    %6540 = vmatpush.bf16.msra.mxu0 %v4786
    %6541 = vmatpush.bf16.msra.mxu0 %v4782
    %6542 = vmatpush.bf16.msra.mxu0 %v4778
    %6543 = vmatpush.bf16.msra.mxu0 %v4774
    %6544 = vmatpush.bf16.msra.mxu0 %v4770
    %6545 = vmatpush.bf16.msra.mxu0 %v4766
    %6546 = vmatpush.bf16.msra.mxu0 %v4762
    %6547 = vmatpush.bf16.msra.mxu0 %v4758
    %6548 = vmatmul.bf16.gmra.mxu0 %v1180
    %v6549 = vpop.f32.mrf.mxu0
    %v6550 = vadd.f32 %v6537, %v6549
    %v6551 = vpop.f32.mrf.mxu0
    %6552 = vdwg.mxu0
    %6553 = vmatpush.bf16.msra.mxu0 %v4818
    %6554 = vmatpush.bf16.msra.mxu0 %v4814
    %6555 = vmatpush.bf16.msra.mxu0 %v4810
    %6556 = vmatpush.bf16.msra.mxu0 %v4806
    %6557 = vmatpush.bf16.msra.mxu0 %v4802
    %6558 = vmatpush.bf16.msra.mxu0 %v4798
    %6559 = vmatpush.bf16.msra.mxu0 %v4794
    %6560 = vmatpush.bf16.msra.mxu0 %v4790
    %6561 = vmatmul.bf16.gmra.mxu0 %v1181
    %v6562 = vpop.f32.mrf.mxu0
    %v6563 = vadd.f32 %v6550, %v6562
    %v6564 = vpop.f32.mrf.mxu0
    %6565 = vdwg.mxu0
    %6566 = vmatpush.bf16.msra.mxu0 %v4850
    %6567 = vmatpush.bf16.msra.mxu0 %v4846
    %6568 = vmatpush.bf16.msra.mxu0 %v4842
    %6569 = vmatpush.bf16.msra.mxu0 %v4838
    %6570 = vmatpush.bf16.msra.mxu0 %v4834
    %6571 = vmatpush.bf16.msra.mxu0 %v4830
    %6572 = vmatpush.bf16.msra.mxu0 %v4826
    %6573 = vmatpush.bf16.msra.mxu0 %v4822
    %6574 = vmatmul.bf16.gmra.mxu0 %v1186
    %v6575 = vpop.f32.mrf.mxu0
    %v6576 = vadd.f32 %v6563, %v6575
    %v6577 = vpop.f32.mrf.mxu0
    %6578 = vdwg.mxu0
    %6579 = vmatpush.bf16.msra.mxu0 %v4882
    %6580 = vmatpush.bf16.msra.mxu0 %v4878
    %6581 = vmatpush.bf16.msra.mxu0 %v4874
    %6582 = vmatpush.bf16.msra.mxu0 %v4870
    %6583 = vmatpush.bf16.msra.mxu0 %v4866
    %6584 = vmatpush.bf16.msra.mxu0 %v4862
    %6585 = vmatpush.bf16.msra.mxu0 %v4858
    %6586 = vmatpush.bf16.msra.mxu0 %v4854
    %6587 = vmatmul.bf16.gmra.mxu0 %v1187
    %v6588 = vpop.f32.mrf.mxu0
    %v6589 = vadd.f32 %v6576, %v6588
    %v6590 = vpop.f32.mrf.mxu0
    %6591 = vdwg.mxu0
    %6592 = vmatpush.bf16.msra.mxu0 %v4914
    %6593 = vmatpush.bf16.msra.mxu0 %v4910
    %6594 = vmatpush.bf16.msra.mxu0 %v4906
    %6595 = vmatpush.bf16.msra.mxu0 %v4902
    %6596 = vmatpush.bf16.msra.mxu0 %v4898
    %6597 = vmatpush.bf16.msra.mxu0 %v4894
    %6598 = vmatpush.bf16.msra.mxu0 %v4890
    %6599 = vmatpush.bf16.msra.mxu0 %v4886
    %6600 = vmatmul.bf16.gmra.mxu0 %v1188
    %v6601 = vpop.f32.mrf.mxu0
    %v6602 = vadd.f32 %v6589, %v6601
    %v6603 = vpop.f32.mrf.mxu0
    %6604 = vdwg.mxu0
    %6605 = vmatpush.bf16.msra.mxu0 %v4946
    %6606 = vmatpush.bf16.msra.mxu0 %v4942
    %6607 = vmatpush.bf16.msra.mxu0 %v4938
    %6608 = vmatpush.bf16.msra.mxu0 %v4934
    %6609 = vmatpush.bf16.msra.mxu0 %v4930
    %6610 = vmatpush.bf16.msra.mxu0 %v4926
    %6611 = vmatpush.bf16.msra.mxu0 %v4922
    %6612 = vmatpush.bf16.msra.mxu0 %v4918
    %6613 = vmatmul.bf16.gmra.mxu0 %v1189
    %v6614 = vpop.f32.mrf.mxu0
    %v6615 = vadd.f32 %v6602, %v6614
    %v6616 = vpop.f32.mrf.mxu0
    %6617 = vdwg.mxu0
    %6618 = vmatpush.bf16.msra.mxu0 %v4978
    %6619 = vmatpush.bf16.msra.mxu0 %v4974
    %6620 = vmatpush.bf16.msra.mxu0 %v4970
    %6621 = vmatpush.bf16.msra.mxu0 %v4966
    %6622 = vmatpush.bf16.msra.mxu0 %v4962
    %6623 = vmatpush.bf16.msra.mxu0 %v4958
    %6624 = vmatpush.bf16.msra.mxu0 %v4954
    %6625 = vmatpush.bf16.msra.mxu0 %v4950
    %6626 = vmatmul.bf16.gmra.mxu0 %v1190
    %v6627 = vpop.f32.mrf.mxu0
    %v6628 = vadd.f32 %v6615, %v6627
    %v6629 = vpop.f32.mrf.mxu0
    %6630 = vdwg.mxu0
    %6631 = vmatpush.bf16.msra.mxu0 %v5010
    %6632 = vmatpush.bf16.msra.mxu0 %v5006
    %6633 = vmatpush.bf16.msra.mxu0 %v5002
    %6634 = vmatpush.bf16.msra.mxu0 %v4998
    %6635 = vmatpush.bf16.msra.mxu0 %v4994
    %6636 = vmatpush.bf16.msra.mxu0 %v4990
    %6637 = vmatpush.bf16.msra.mxu0 %v4986
    %6638 = vmatpush.bf16.msra.mxu0 %v4982
    %6639 = vmatmul.bf16.gmra.mxu0 %v1191
    %v6640 = vpop.f32.mrf.mxu0
    %v6641 = vadd.f32 %v6628, %v6640
    %v6642 = vpop.f32.mrf.mxu0
    %6643 = vdwg.mxu0
    %6644 = vmatpush.bf16.msra.mxu0 %v5042
    %6645 = vmatpush.bf16.msra.mxu0 %v5038
    %6646 = vmatpush.bf16.msra.mxu0 %v5034
    %6647 = vmatpush.bf16.msra.mxu0 %v5030
    %6648 = vmatpush.bf16.msra.mxu0 %v5026
    %6649 = vmatpush.bf16.msra.mxu0 %v5022
    %6650 = vmatpush.bf16.msra.mxu0 %v5018
    %6651 = vmatpush.bf16.msra.mxu0 %v5014
    %6652 = vmatmul.bf16.gmra.mxu0 %v1192
    %v6653 = vpop.f32.mrf.mxu0
    %v6654 = vadd.f32 %v6641, %v6653
    %v6655 = vpop.f32.mrf.mxu0
    %6656 = vdwg.mxu0
    %6657 = vmatpush.bf16.msra.mxu0 %v5074
    %6658 = vmatpush.bf16.msra.mxu0 %v5070
    %6659 = vmatpush.bf16.msra.mxu0 %v5066
    %6660 = vmatpush.bf16.msra.mxu0 %v5062
    %6661 = vmatpush.bf16.msra.mxu0 %v5058
    %6662 = vmatpush.bf16.msra.mxu0 %v5054
    %6663 = vmatpush.bf16.msra.mxu0 %v5050
    %6664 = vmatpush.bf16.msra.mxu0 %v5046
    %6665 = vmatmul.bf16.gmra.mxu0 %v1193
    %v6666 = vpop.f32.mrf.mxu0
    %v6667 = vadd.f32 %v6654, %v6666
    %v6668 = vpop.f32.mrf.mxu0
    %6669 = vdwg.mxu0
    %6670 = vmatpush.bf16.msra.mxu0 %v5106
    %6671 = vmatpush.bf16.msra.mxu0 %v5102
    %6672 = vmatpush.bf16.msra.mxu0 %v5098
    %6673 = vmatpush.bf16.msra.mxu0 %v5094
    %6674 = vmatpush.bf16.msra.mxu0 %v5090
    %6675 = vmatpush.bf16.msra.mxu0 %v5086
    %6676 = vmatpush.bf16.msra.mxu0 %v5082
    %6677 = vmatpush.bf16.msra.mxu0 %v5078
    %6678 = vmatmul.bf16.gmra.mxu0 %v1198
    %v6679 = vpop.f32.mrf.mxu0
    %v6680 = vadd.f32 %v6667, %v6679
    %v6681 = vpop.f32.mrf.mxu0
    %6682 = vdwg.mxu0
    %6683 = vmatpush.bf16.msra.mxu0 %v5138
    %6684 = vmatpush.bf16.msra.mxu0 %v5134
    %6685 = vmatpush.bf16.msra.mxu0 %v5130
    %6686 = vmatpush.bf16.msra.mxu0 %v5126
    %6687 = vmatpush.bf16.msra.mxu0 %v5122
    %6688 = vmatpush.bf16.msra.mxu0 %v5118
    %6689 = vmatpush.bf16.msra.mxu0 %v5114
    %6690 = vmatpush.bf16.msra.mxu0 %v5110
    %6691 = vmatmul.bf16.gmra.mxu0 %v1199
    %v6692 = vpop.f32.mrf.mxu0
    %v6693 = vadd.f32 %v6680, %v6692
    %v6694 = vpop.f32.mrf.mxu0
    %6695 = vdwg.mxu0
    %6696 = vmatpush.bf16.msra.mxu0 %v5170
    %6697 = vmatpush.bf16.msra.mxu0 %v5166
    %6698 = vmatpush.bf16.msra.mxu0 %v5162
    %6699 = vmatpush.bf16.msra.mxu0 %v5158
    %6700 = vmatpush.bf16.msra.mxu0 %v5154
    %6701 = vmatpush.bf16.msra.mxu0 %v5150
    %6702 = vmatpush.bf16.msra.mxu0 %v5146
    %6703 = vmatpush.bf16.msra.mxu0 %v5142
    %6704 = vmatmul.bf16.gmra.mxu0 %v1200
    %v6705 = vpop.f32.mrf.mxu0
    %v6706 = vadd.f32 %v6693, %v6705
    %v6707 = vpop.f32.mrf.mxu0
    %6708 = vdwg.mxu0
    %6709 = vmatpush.bf16.msra.mxu0 %v5202
    %6710 = vmatpush.bf16.msra.mxu0 %v5198
    %6711 = vmatpush.bf16.msra.mxu0 %v5194
    %6712 = vmatpush.bf16.msra.mxu0 %v5190
    %6713 = vmatpush.bf16.msra.mxu0 %v5186
    %6714 = vmatpush.bf16.msra.mxu0 %v5182
    %6715 = vmatpush.bf16.msra.mxu0 %v5178
    %6716 = vmatpush.bf16.msra.mxu0 %v5174
    %6717 = vmatmul.bf16.gmra.mxu0 %v1201
    %v6718 = vpop.f32.mrf.mxu0
    %v6719 = vadd.f32 %v6706, %v6718
    %v6720 = vpop.f32.mrf.mxu0
    %6721 = vdwg.mxu0
    %6722 = vmatpush.bf16.msra.mxu0 %v5234
    %6723 = vmatpush.bf16.msra.mxu0 %v5230
    %6724 = vmatpush.bf16.msra.mxu0 %v5226
    %6725 = vmatpush.bf16.msra.mxu0 %v5222
    %6726 = vmatpush.bf16.msra.mxu0 %v5218
    %6727 = vmatpush.bf16.msra.mxu0 %v5214
    %6728 = vmatpush.bf16.msra.mxu0 %v5210
    %6729 = vmatpush.bf16.msra.mxu0 %v5206
    %6730 = vmatmul.bf16.gmra.mxu0 %v1202
    %v6731 = vpop.f32.mrf.mxu0
    %v6732 = vadd.f32 %v6719, %v6731
    %v6733 = vpop.f32.mrf.mxu0
    %6734 = vdwg.mxu0
    %6735 = vmatpush.bf16.msra.mxu0 %v5266
    %6736 = vmatpush.bf16.msra.mxu0 %v5262
    %6737 = vmatpush.bf16.msra.mxu0 %v5258
    %6738 = vmatpush.bf16.msra.mxu0 %v5254
    %6739 = vmatpush.bf16.msra.mxu0 %v5250
    %6740 = vmatpush.bf16.msra.mxu0 %v5246
    %6741 = vmatpush.bf16.msra.mxu0 %v5242
    %6742 = vmatpush.bf16.msra.mxu0 %v5238
    %6743 = vmatmul.bf16.gmra.mxu0 %v1203
    %v6744 = vpop.f32.mrf.mxu0
    %v6745 = vadd.f32 %v6732, %v6744
    %v6746 = vpop.f32.mrf.mxu0
    %6747 = vdwg.mxu0
    %6748 = vmatpush.bf16.msra.mxu0 %v5298
    %6749 = vmatpush.bf16.msra.mxu0 %v5294
    %6750 = vmatpush.bf16.msra.mxu0 %v5290
    %6751 = vmatpush.bf16.msra.mxu0 %v5286
    %6752 = vmatpush.bf16.msra.mxu0 %v5282
    %6753 = vmatpush.bf16.msra.mxu0 %v5278
    %6754 = vmatpush.bf16.msra.mxu0 %v5274
    %6755 = vmatpush.bf16.msra.mxu0 %v5270
    %6756 = vmatmul.bf16.gmra.mxu0 %v1204
    %v6757 = vpop.f32.mrf.mxu0
    %v6758 = vadd.f32 %v6745, %v6757
    %v6759 = vpop.f32.mrf.mxu0
    %6760 = vdwg.mxu0
    %6761 = vmatpush.bf16.msra.mxu0 %v5330
    %6762 = vmatpush.bf16.msra.mxu0 %v5326
    %6763 = vmatpush.bf16.msra.mxu0 %v5322
    %6764 = vmatpush.bf16.msra.mxu0 %v5318
    %6765 = vmatpush.bf16.msra.mxu0 %v5314
    %6766 = vmatpush.bf16.msra.mxu0 %v5310
    %6767 = vmatpush.bf16.msra.mxu0 %v5306
    %6768 = vmatpush.bf16.msra.mxu0 %v5302
    %6769 = vmatmul.bf16.gmra.mxu0 %v1205
    %v6770 = vpop.f32.mrf.mxu0
    %v6771 = vadd.f32 %v6758, %v6770
    %v6772 = vpop.f32.mrf.mxu0
    %6773 = vdwg.mxu0
    %6774 = vmatpush.bf16.msra.mxu0 %v4339
    %6775 = vmatpush.bf16.msra.mxu0 %v4335
    %6776 = vmatpush.bf16.msra.mxu0 %v4331
    %6777 = vmatpush.bf16.msra.mxu0 %v4327
    %6778 = vmatpush.bf16.msra.mxu0 %v4323
    %6779 = vmatpush.bf16.msra.mxu0 %v4319
    %6780 = vmatpush.bf16.msra.mxu0 %v4315
    %6781 = vmatpush.bf16.msra.mxu0 %v4311
    %6782 = vmatmul.bf16.gmra.mxu0 %v1162
    %v6783 = vpop.f32.mrf.mxu0
    %v6784 = vadd.f32 %v1150, %v6783
    %v6785 = vpop.f32.mrf.mxu0
    %6786 = vdwg.mxu0
    %6787 = vmatpush.bf16.msra.mxu0 %v4371
    %6788 = vmatpush.bf16.msra.mxu0 %v4367
    %6789 = vmatpush.bf16.msra.mxu0 %v4363
    %6790 = vmatpush.bf16.msra.mxu0 %v4359
    %6791 = vmatpush.bf16.msra.mxu0 %v4355
    %6792 = vmatpush.bf16.msra.mxu0 %v4351
    %6793 = vmatpush.bf16.msra.mxu0 %v4347
    %6794 = vmatpush.bf16.msra.mxu0 %v4343
    %6795 = vmatmul.bf16.gmra.mxu0 %v1163
    %v6796 = vpop.f32.mrf.mxu0
    %v6797 = vadd.f32 %v6784, %v6796
    %v6798 = vpop.f32.mrf.mxu0
    %6799 = vdwg.mxu0
    %6800 = vmatpush.bf16.msra.mxu0 %v4403
    %6801 = vmatpush.bf16.msra.mxu0 %v4399
    %6802 = vmatpush.bf16.msra.mxu0 %v4395
    %6803 = vmatpush.bf16.msra.mxu0 %v4391
    %6804 = vmatpush.bf16.msra.mxu0 %v4387
    %6805 = vmatpush.bf16.msra.mxu0 %v4383
    %6806 = vmatpush.bf16.msra.mxu0 %v4379
    %6807 = vmatpush.bf16.msra.mxu0 %v4375
    %6808 = vmatmul.bf16.gmra.mxu0 %v1164
    %v6809 = vpop.f32.mrf.mxu0
    %v6810 = vadd.f32 %v6797, %v6809
    %v6811 = vpop.f32.mrf.mxu0
    %6812 = vdwg.mxu0
    %6813 = vmatpush.bf16.msra.mxu0 %v4435
    %6814 = vmatpush.bf16.msra.mxu0 %v4431
    %6815 = vmatpush.bf16.msra.mxu0 %v4427
    %6816 = vmatpush.bf16.msra.mxu0 %v4423
    %6817 = vmatpush.bf16.msra.mxu0 %v4419
    %6818 = vmatpush.bf16.msra.mxu0 %v4415
    %6819 = vmatpush.bf16.msra.mxu0 %v4411
    %6820 = vmatpush.bf16.msra.mxu0 %v4407
    %6821 = vmatmul.bf16.gmra.mxu0 %v1165
    %v6822 = vpop.f32.mrf.mxu0
    %v6823 = vadd.f32 %v6810, %v6822
    %v6824 = vpop.f32.mrf.mxu0
    %6825 = vdwg.mxu0
    %6826 = vmatpush.bf16.msra.mxu0 %v4467
    %6827 = vmatpush.bf16.msra.mxu0 %v4463
    %6828 = vmatpush.bf16.msra.mxu0 %v4459
    %6829 = vmatpush.bf16.msra.mxu0 %v4455
    %6830 = vmatpush.bf16.msra.mxu0 %v4451
    %6831 = vmatpush.bf16.msra.mxu0 %v4447
    %6832 = vmatpush.bf16.msra.mxu0 %v4443
    %6833 = vmatpush.bf16.msra.mxu0 %v4439
    %6834 = vmatmul.bf16.gmra.mxu0 %v1166
    %v6835 = vpop.f32.mrf.mxu0
    %v6836 = vadd.f32 %v6823, %v6835
    %v6837 = vpop.f32.mrf.mxu0
    %6838 = vdwg.mxu0
    %6839 = vmatpush.bf16.msra.mxu0 %v4499
    %6840 = vmatpush.bf16.msra.mxu0 %v4495
    %6841 = vmatpush.bf16.msra.mxu0 %v4491
    %6842 = vmatpush.bf16.msra.mxu0 %v4487
    %6843 = vmatpush.bf16.msra.mxu0 %v4483
    %6844 = vmatpush.bf16.msra.mxu0 %v4479
    %6845 = vmatpush.bf16.msra.mxu0 %v4475
    %6846 = vmatpush.bf16.msra.mxu0 %v4471
    %6847 = vmatmul.bf16.gmra.mxu0 %v1167
    %v6848 = vpop.f32.mrf.mxu0
    %v6849 = vadd.f32 %v6836, %v6848
    %v6850 = vpop.f32.mrf.mxu0
    %6851 = vdwg.mxu0
    %6852 = vmatpush.bf16.msra.mxu0 %v4531
    %6853 = vmatpush.bf16.msra.mxu0 %v4527
    %6854 = vmatpush.bf16.msra.mxu0 %v4523
    %6855 = vmatpush.bf16.msra.mxu0 %v4519
    %6856 = vmatpush.bf16.msra.mxu0 %v4515
    %6857 = vmatpush.bf16.msra.mxu0 %v4511
    %6858 = vmatpush.bf16.msra.mxu0 %v4507
    %6859 = vmatpush.bf16.msra.mxu0 %v4503
    %6860 = vmatmul.bf16.gmra.mxu0 %v1168
    %v6861 = vpop.f32.mrf.mxu0
    %v6862 = vadd.f32 %v6849, %v6861
    %v6863 = vpop.f32.mrf.mxu0
    %6864 = vdwg.mxu0
    %6865 = vmatpush.bf16.msra.mxu0 %v4563
    %6866 = vmatpush.bf16.msra.mxu0 %v4559
    %6867 = vmatpush.bf16.msra.mxu0 %v4555
    %6868 = vmatpush.bf16.msra.mxu0 %v4551
    %6869 = vmatpush.bf16.msra.mxu0 %v4547
    %6870 = vmatpush.bf16.msra.mxu0 %v4543
    %6871 = vmatpush.bf16.msra.mxu0 %v4539
    %6872 = vmatpush.bf16.msra.mxu0 %v4535
    %6873 = vmatmul.bf16.gmra.mxu0 %v1169
    %v6874 = vpop.f32.mrf.mxu0
    %v6875 = vadd.f32 %v6862, %v6874
    %v6876 = vpop.f32.mrf.mxu0
    %6877 = vdwg.mxu0
    %6878 = vmatpush.bf16.msra.mxu0 %v4595
    %6879 = vmatpush.bf16.msra.mxu0 %v4591
    %6880 = vmatpush.bf16.msra.mxu0 %v4587
    %6881 = vmatpush.bf16.msra.mxu0 %v4583
    %6882 = vmatpush.bf16.msra.mxu0 %v4579
    %6883 = vmatpush.bf16.msra.mxu0 %v4575
    %6884 = vmatpush.bf16.msra.mxu0 %v4571
    %6885 = vmatpush.bf16.msra.mxu0 %v4567
    %6886 = vmatmul.bf16.gmra.mxu0 %v1174
    %v6887 = vpop.f32.mrf.mxu0
    %v6888 = vadd.f32 %v6875, %v6887
    %v6889 = vpop.f32.mrf.mxu0
    %6890 = vdwg.mxu0
    %6891 = vmatpush.bf16.msra.mxu0 %v4627
    %6892 = vmatpush.bf16.msra.mxu0 %v4623
    %6893 = vmatpush.bf16.msra.mxu0 %v4619
    %6894 = vmatpush.bf16.msra.mxu0 %v4615
    %6895 = vmatpush.bf16.msra.mxu0 %v4611
    %6896 = vmatpush.bf16.msra.mxu0 %v4607
    %6897 = vmatpush.bf16.msra.mxu0 %v4603
    %6898 = vmatpush.bf16.msra.mxu0 %v4599
    %6899 = vmatmul.bf16.gmra.mxu0 %v1175
    %v6900 = vpop.f32.mrf.mxu0
    %v6901 = vadd.f32 %v6888, %v6900
    %v6902 = vpop.f32.mrf.mxu0
    %6903 = vdwg.mxu0
    %6904 = vmatpush.bf16.msra.mxu0 %v4659
    %6905 = vmatpush.bf16.msra.mxu0 %v4655
    %6906 = vmatpush.bf16.msra.mxu0 %v4651
    %6907 = vmatpush.bf16.msra.mxu0 %v4647
    %6908 = vmatpush.bf16.msra.mxu0 %v4643
    %6909 = vmatpush.bf16.msra.mxu0 %v4639
    %6910 = vmatpush.bf16.msra.mxu0 %v4635
    %6911 = vmatpush.bf16.msra.mxu0 %v4631
    %6912 = vmatmul.bf16.gmra.mxu0 %v1176
    %v6913 = vpop.f32.mrf.mxu0
    %v6914 = vadd.f32 %v6901, %v6913
    %v6915 = vpop.f32.mrf.mxu0
    %6916 = vdwg.mxu0
    %6917 = vmatpush.bf16.msra.mxu0 %v4691
    %6918 = vmatpush.bf16.msra.mxu0 %v4687
    %6919 = vmatpush.bf16.msra.mxu0 %v4683
    %6920 = vmatpush.bf16.msra.mxu0 %v4679
    %6921 = vmatpush.bf16.msra.mxu0 %v4675
    %6922 = vmatpush.bf16.msra.mxu0 %v4671
    %6923 = vmatpush.bf16.msra.mxu0 %v4667
    %6924 = vmatpush.bf16.msra.mxu0 %v4663
    %6925 = vmatmul.bf16.gmra.mxu0 %v1177
    %v6926 = vpop.f32.mrf.mxu0
    %v6927 = vadd.f32 %v6914, %v6926
    %v6928 = vpop.f32.mrf.mxu0
    %6929 = vdwg.mxu0
    %6930 = vmatpush.bf16.msra.mxu0 %v4723
    %6931 = vmatpush.bf16.msra.mxu0 %v4719
    %6932 = vmatpush.bf16.msra.mxu0 %v4715
    %6933 = vmatpush.bf16.msra.mxu0 %v4711
    %6934 = vmatpush.bf16.msra.mxu0 %v4707
    %6935 = vmatpush.bf16.msra.mxu0 %v4703
    %6936 = vmatpush.bf16.msra.mxu0 %v4699
    %6937 = vmatpush.bf16.msra.mxu0 %v4695
    %6938 = vmatmul.bf16.gmra.mxu0 %v1178
    %v6939 = vpop.f32.mrf.mxu0
    %v6940 = vadd.f32 %v6927, %v6939
    %v6941 = vpop.f32.mrf.mxu0
    %6942 = vdwg.mxu0
    %6943 = vmatpush.bf16.msra.mxu0 %v4755
    %6944 = vmatpush.bf16.msra.mxu0 %v4751
    %6945 = vmatpush.bf16.msra.mxu0 %v4747
    %6946 = vmatpush.bf16.msra.mxu0 %v4743
    %6947 = vmatpush.bf16.msra.mxu0 %v4739
    %6948 = vmatpush.bf16.msra.mxu0 %v4735
    %6949 = vmatpush.bf16.msra.mxu0 %v4731
    %6950 = vmatpush.bf16.msra.mxu0 %v4727
    %6951 = vmatmul.bf16.gmra.mxu0 %v1179
    %v6952 = vpop.f32.mrf.mxu0
    %v6953 = vadd.f32 %v6940, %v6952
    %v6954 = vpop.f32.mrf.mxu0
    %6955 = vdwg.mxu0
    %6956 = vmatpush.bf16.msra.mxu0 %v4787
    %6957 = vmatpush.bf16.msra.mxu0 %v4783
    %6958 = vmatpush.bf16.msra.mxu0 %v4779
    %6959 = vmatpush.bf16.msra.mxu0 %v4775
    %6960 = vmatpush.bf16.msra.mxu0 %v4771
    %6961 = vmatpush.bf16.msra.mxu0 %v4767
    %6962 = vmatpush.bf16.msra.mxu0 %v4763
    %6963 = vmatpush.bf16.msra.mxu0 %v4759
    %6964 = vmatmul.bf16.gmra.mxu0 %v1180
    %v6965 = vpop.f32.mrf.mxu0
    %v6966 = vadd.f32 %v6953, %v6965
    %v6967 = vpop.f32.mrf.mxu0
    %6968 = vdwg.mxu0
    %6969 = vmatpush.bf16.msra.mxu0 %v4819
    %6970 = vmatpush.bf16.msra.mxu0 %v4815
    %6971 = vmatpush.bf16.msra.mxu0 %v4811
    %6972 = vmatpush.bf16.msra.mxu0 %v4807
    %6973 = vmatpush.bf16.msra.mxu0 %v4803
    %6974 = vmatpush.bf16.msra.mxu0 %v4799
    %6975 = vmatpush.bf16.msra.mxu0 %v4795
    %6976 = vmatpush.bf16.msra.mxu0 %v4791
    %6977 = vmatmul.bf16.gmra.mxu0 %v1181
    %v6978 = vpop.f32.mrf.mxu0
    %v6979 = vadd.f32 %v6966, %v6978
    %v6980 = vpop.f32.mrf.mxu0
    %6981 = vdwg.mxu0
    %6982 = vmatpush.bf16.msra.mxu0 %v4851
    %6983 = vmatpush.bf16.msra.mxu0 %v4847
    %6984 = vmatpush.bf16.msra.mxu0 %v4843
    %6985 = vmatpush.bf16.msra.mxu0 %v4839
    %6986 = vmatpush.bf16.msra.mxu0 %v4835
    %6987 = vmatpush.bf16.msra.mxu0 %v4831
    %6988 = vmatpush.bf16.msra.mxu0 %v4827
    %6989 = vmatpush.bf16.msra.mxu0 %v4823
    %6990 = vmatmul.bf16.gmra.mxu0 %v1186
    %v6991 = vpop.f32.mrf.mxu0
    %v6992 = vadd.f32 %v6979, %v6991
    %v6993 = vpop.f32.mrf.mxu0
    %6994 = vdwg.mxu0
    %6995 = vmatpush.bf16.msra.mxu0 %v4883
    %6996 = vmatpush.bf16.msra.mxu0 %v4879
    %6997 = vmatpush.bf16.msra.mxu0 %v4875
    %6998 = vmatpush.bf16.msra.mxu0 %v4871
    %6999 = vmatpush.bf16.msra.mxu0 %v4867
    %7000 = vmatpush.bf16.msra.mxu0 %v4863
    %7001 = vmatpush.bf16.msra.mxu0 %v4859
    %7002 = vmatpush.bf16.msra.mxu0 %v4855
    %7003 = vmatmul.bf16.gmra.mxu0 %v1187
    %v7004 = vpop.f32.mrf.mxu0
    %v7005 = vadd.f32 %v6992, %v7004
    %v7006 = vpop.f32.mrf.mxu0
    %7007 = vdwg.mxu0
    %7008 = vmatpush.bf16.msra.mxu0 %v4915
    %7009 = vmatpush.bf16.msra.mxu0 %v4911
    %7010 = vmatpush.bf16.msra.mxu0 %v4907
    %7011 = vmatpush.bf16.msra.mxu0 %v4903
    %7012 = vmatpush.bf16.msra.mxu0 %v4899
    %7013 = vmatpush.bf16.msra.mxu0 %v4895
    %7014 = vmatpush.bf16.msra.mxu0 %v4891
    %7015 = vmatpush.bf16.msra.mxu0 %v4887
    %7016 = vmatmul.bf16.gmra.mxu0 %v1188
    %v7017 = vpop.f32.mrf.mxu0
    %v7018 = vadd.f32 %v7005, %v7017
    %v7019 = vpop.f32.mrf.mxu0
    %7020 = vdwg.mxu0
    %7021 = vmatpush.bf16.msra.mxu0 %v4947
    %7022 = vmatpush.bf16.msra.mxu0 %v4943
    %7023 = vmatpush.bf16.msra.mxu0 %v4939
    %7024 = vmatpush.bf16.msra.mxu0 %v4935
    %7025 = vmatpush.bf16.msra.mxu0 %v4931
    %7026 = vmatpush.bf16.msra.mxu0 %v4927
    %7027 = vmatpush.bf16.msra.mxu0 %v4923
    %7028 = vmatpush.bf16.msra.mxu0 %v4919
    %7029 = vmatmul.bf16.gmra.mxu0 %v1189
    %v7030 = vpop.f32.mrf.mxu0
    %v7031 = vadd.f32 %v7018, %v7030
    %v7032 = vpop.f32.mrf.mxu0
    %7033 = vdwg.mxu0
    %7034 = vmatpush.bf16.msra.mxu0 %v4979
    %7035 = vmatpush.bf16.msra.mxu0 %v4975
    %7036 = vmatpush.bf16.msra.mxu0 %v4971
    %7037 = vmatpush.bf16.msra.mxu0 %v4967
    %7038 = vmatpush.bf16.msra.mxu0 %v4963
    %7039 = vmatpush.bf16.msra.mxu0 %v4959
    %7040 = vmatpush.bf16.msra.mxu0 %v4955
    %7041 = vmatpush.bf16.msra.mxu0 %v4951
    %7042 = vmatmul.bf16.gmra.mxu0 %v1190
    %v7043 = vpop.f32.mrf.mxu0
    %v7044 = vadd.f32 %v7031, %v7043
    %v7045 = vpop.f32.mrf.mxu0
    %7046 = vdwg.mxu0
    %7047 = vmatpush.bf16.msra.mxu0 %v5011
    %7048 = vmatpush.bf16.msra.mxu0 %v5007
    %7049 = vmatpush.bf16.msra.mxu0 %v5003
    %7050 = vmatpush.bf16.msra.mxu0 %v4999
    %7051 = vmatpush.bf16.msra.mxu0 %v4995
    %7052 = vmatpush.bf16.msra.mxu0 %v4991
    %7053 = vmatpush.bf16.msra.mxu0 %v4987
    %7054 = vmatpush.bf16.msra.mxu0 %v4983
    %7055 = vmatmul.bf16.gmra.mxu0 %v1191
    %v7056 = vpop.f32.mrf.mxu0
    %v7057 = vadd.f32 %v7044, %v7056
    %v7058 = vpop.f32.mrf.mxu0
    %7059 = vdwg.mxu0
    %7060 = vmatpush.bf16.msra.mxu0 %v5043
    %7061 = vmatpush.bf16.msra.mxu0 %v5039
    %7062 = vmatpush.bf16.msra.mxu0 %v5035
    %7063 = vmatpush.bf16.msra.mxu0 %v5031
    %7064 = vmatpush.bf16.msra.mxu0 %v5027
    %7065 = vmatpush.bf16.msra.mxu0 %v5023
    %7066 = vmatpush.bf16.msra.mxu0 %v5019
    %7067 = vmatpush.bf16.msra.mxu0 %v5015
    %7068 = vmatmul.bf16.gmra.mxu0 %v1192
    %v7069 = vpop.f32.mrf.mxu0
    %v7070 = vadd.f32 %v7057, %v7069
    %v7071 = vpop.f32.mrf.mxu0
    %7072 = vdwg.mxu0
    %7073 = vmatpush.bf16.msra.mxu0 %v5075
    %7074 = vmatpush.bf16.msra.mxu0 %v5071
    %7075 = vmatpush.bf16.msra.mxu0 %v5067
    %7076 = vmatpush.bf16.msra.mxu0 %v5063
    %7077 = vmatpush.bf16.msra.mxu0 %v5059
    %7078 = vmatpush.bf16.msra.mxu0 %v5055
    %7079 = vmatpush.bf16.msra.mxu0 %v5051
    %7080 = vmatpush.bf16.msra.mxu0 %v5047
    %7081 = vmatmul.bf16.gmra.mxu0 %v1193
    %v7082 = vpop.f32.mrf.mxu0
    %v7083 = vadd.f32 %v7070, %v7082
    %v7084 = vpop.f32.mrf.mxu0
    %7085 = vdwg.mxu0
    %7086 = vmatpush.bf16.msra.mxu0 %v5107
    %7087 = vmatpush.bf16.msra.mxu0 %v5103
    %7088 = vmatpush.bf16.msra.mxu0 %v5099
    %7089 = vmatpush.bf16.msra.mxu0 %v5095
    %7090 = vmatpush.bf16.msra.mxu0 %v5091
    %7091 = vmatpush.bf16.msra.mxu0 %v5087
    %7092 = vmatpush.bf16.msra.mxu0 %v5083
    %7093 = vmatpush.bf16.msra.mxu0 %v5079
    %7094 = vmatmul.bf16.gmra.mxu0 %v1198
    %v7095 = vpop.f32.mrf.mxu0
    %v7096 = vadd.f32 %v7083, %v7095
    %v7097 = vpop.f32.mrf.mxu0
    %7098 = vdwg.mxu0
    %7099 = vmatpush.bf16.msra.mxu0 %v5139
    %7100 = vmatpush.bf16.msra.mxu0 %v5135
    %7101 = vmatpush.bf16.msra.mxu0 %v5131
    %7102 = vmatpush.bf16.msra.mxu0 %v5127
    %7103 = vmatpush.bf16.msra.mxu0 %v5123
    %7104 = vmatpush.bf16.msra.mxu0 %v5119
    %7105 = vmatpush.bf16.msra.mxu0 %v5115
    %7106 = vmatpush.bf16.msra.mxu0 %v5111
    %7107 = vmatmul.bf16.gmra.mxu0 %v1199
    %v7108 = vpop.f32.mrf.mxu0
    %v7109 = vadd.f32 %v7096, %v7108
    %v7110 = vpop.f32.mrf.mxu0
    %7111 = vdwg.mxu0
    %7112 = vmatpush.bf16.msra.mxu0 %v5171
    %7113 = vmatpush.bf16.msra.mxu0 %v5167
    %7114 = vmatpush.bf16.msra.mxu0 %v5163
    %7115 = vmatpush.bf16.msra.mxu0 %v5159
    %7116 = vmatpush.bf16.msra.mxu0 %v5155
    %7117 = vmatpush.bf16.msra.mxu0 %v5151
    %7118 = vmatpush.bf16.msra.mxu0 %v5147
    %7119 = vmatpush.bf16.msra.mxu0 %v5143
    %7120 = vmatmul.bf16.gmra.mxu0 %v1200
    %v7121 = vpop.f32.mrf.mxu0
    %v7122 = vadd.f32 %v7109, %v7121
    %v7123 = vpop.f32.mrf.mxu0
    %7124 = vdwg.mxu0
    %7125 = vmatpush.bf16.msra.mxu0 %v5203
    %7126 = vmatpush.bf16.msra.mxu0 %v5199
    %7127 = vmatpush.bf16.msra.mxu0 %v5195
    %7128 = vmatpush.bf16.msra.mxu0 %v5191
    %7129 = vmatpush.bf16.msra.mxu0 %v5187
    %7130 = vmatpush.bf16.msra.mxu0 %v5183
    %7131 = vmatpush.bf16.msra.mxu0 %v5179
    %7132 = vmatpush.bf16.msra.mxu0 %v5175
    %7133 = vmatmul.bf16.gmra.mxu0 %v1201
    %v7134 = vpop.f32.mrf.mxu0
    %v7135 = vadd.f32 %v7122, %v7134
    %v7136 = vpop.f32.mrf.mxu0
    %7137 = vdwg.mxu0
    %7138 = vmatpush.bf16.msra.mxu0 %v5235
    %7139 = vmatpush.bf16.msra.mxu0 %v5231
    %7140 = vmatpush.bf16.msra.mxu0 %v5227
    %7141 = vmatpush.bf16.msra.mxu0 %v5223
    %7142 = vmatpush.bf16.msra.mxu0 %v5219
    %7143 = vmatpush.bf16.msra.mxu0 %v5215
    %7144 = vmatpush.bf16.msra.mxu0 %v5211
    %7145 = vmatpush.bf16.msra.mxu0 %v5207
    %7146 = vmatmul.bf16.gmra.mxu0 %v1202
    %v7147 = vpop.f32.mrf.mxu0
    %v7148 = vadd.f32 %v7135, %v7147
    %v7149 = vpop.f32.mrf.mxu0
    %7150 = vdwg.mxu0
    %7151 = vmatpush.bf16.msra.mxu0 %v5267
    %7152 = vmatpush.bf16.msra.mxu0 %v5263
    %7153 = vmatpush.bf16.msra.mxu0 %v5259
    %7154 = vmatpush.bf16.msra.mxu0 %v5255
    %7155 = vmatpush.bf16.msra.mxu0 %v5251
    %7156 = vmatpush.bf16.msra.mxu0 %v5247
    %7157 = vmatpush.bf16.msra.mxu0 %v5243
    %7158 = vmatpush.bf16.msra.mxu0 %v5239
    %7159 = vmatmul.bf16.gmra.mxu0 %v1203
    %v7160 = vpop.f32.mrf.mxu0
    %v7161 = vadd.f32 %v7148, %v7160
    %v7162 = vpop.f32.mrf.mxu0
    %7163 = vdwg.mxu0
    %7164 = vmatpush.bf16.msra.mxu0 %v5299
    %7165 = vmatpush.bf16.msra.mxu0 %v5295
    %7166 = vmatpush.bf16.msra.mxu0 %v5291
    %7167 = vmatpush.bf16.msra.mxu0 %v5287
    %7168 = vmatpush.bf16.msra.mxu0 %v5283
    %7169 = vmatpush.bf16.msra.mxu0 %v5279
    %7170 = vmatpush.bf16.msra.mxu0 %v5275
    %7171 = vmatpush.bf16.msra.mxu0 %v5271
    %7172 = vmatmul.bf16.gmra.mxu0 %v1204
    %v7173 = vpop.f32.mrf.mxu0
    %v7174 = vadd.f32 %v7161, %v7173
    %v7175 = vpop.f32.mrf.mxu0
    %7176 = vdwg.mxu0
    %7177 = vmatpush.bf16.msra.mxu0 %v5331
    %7178 = vmatpush.bf16.msra.mxu0 %v5327
    %7179 = vmatpush.bf16.msra.mxu0 %v5323
    %7180 = vmatpush.bf16.msra.mxu0 %v5319
    %7181 = vmatpush.bf16.msra.mxu0 %v5315
    %7182 = vmatpush.bf16.msra.mxu0 %v5311
    %7183 = vmatpush.bf16.msra.mxu0 %v5307
    %7184 = vmatpush.bf16.msra.mxu0 %v5303
    %7185 = vmatmul.bf16.gmra.mxu0 %v1205
    %v7186 = vpop.f32.mrf.mxu0
    %v7187 = vadd.f32 %v7174, %v7186
    %v7188 = vpop.f32.mrf.mxu0
    %7189 = vdwg.mxu0
    %7190 = vmatpush.bf16.msra.mxu0 %v4340
    %7191 = vmatpush.bf16.msra.mxu0 %v4336
    %7192 = vmatpush.bf16.msra.mxu0 %v4332
    %7193 = vmatpush.bf16.msra.mxu0 %v4328
    %7194 = vmatpush.bf16.msra.mxu0 %v4324
    %7195 = vmatpush.bf16.msra.mxu0 %v4320
    %7196 = vmatpush.bf16.msra.mxu0 %v4316
    %7197 = vmatpush.bf16.msra.mxu0 %v4312
    %7198 = vmatmul.bf16.gmra.mxu0 %v1162
    %v7199 = vpop.f32.mrf.mxu0
    %v7200 = vadd.f32 %v1151, %v7199
    %v7201 = vpop.f32.mrf.mxu0
    %7202 = vdwg.mxu0
    %7203 = vmatpush.bf16.msra.mxu0 %v4372
    %7204 = vmatpush.bf16.msra.mxu0 %v4368
    %7205 = vmatpush.bf16.msra.mxu0 %v4364
    %7206 = vmatpush.bf16.msra.mxu0 %v4360
    %7207 = vmatpush.bf16.msra.mxu0 %v4356
    %7208 = vmatpush.bf16.msra.mxu0 %v4352
    %7209 = vmatpush.bf16.msra.mxu0 %v4348
    %7210 = vmatpush.bf16.msra.mxu0 %v4344
    %7211 = vmatmul.bf16.gmra.mxu0 %v1163
    %v7212 = vpop.f32.mrf.mxu0
    %v7213 = vadd.f32 %v7200, %v7212
    %v7214 = vpop.f32.mrf.mxu0
    %7215 = vdwg.mxu0
    %7216 = vmatpush.bf16.msra.mxu0 %v4404
    %7217 = vmatpush.bf16.msra.mxu0 %v4400
    %7218 = vmatpush.bf16.msra.mxu0 %v4396
    %7219 = vmatpush.bf16.msra.mxu0 %v4392
    %7220 = vmatpush.bf16.msra.mxu0 %v4388
    %7221 = vmatpush.bf16.msra.mxu0 %v4384
    %7222 = vmatpush.bf16.msra.mxu0 %v4380
    %7223 = vmatpush.bf16.msra.mxu0 %v4376
    %7224 = vmatmul.bf16.gmra.mxu0 %v1164
    %v7225 = vpop.f32.mrf.mxu0
    %v7226 = vadd.f32 %v7213, %v7225
    %v7227 = vpop.f32.mrf.mxu0
    %7228 = vdwg.mxu0
    %7229 = vmatpush.bf16.msra.mxu0 %v4436
    %7230 = vmatpush.bf16.msra.mxu0 %v4432
    %7231 = vmatpush.bf16.msra.mxu0 %v4428
    %7232 = vmatpush.bf16.msra.mxu0 %v4424
    %7233 = vmatpush.bf16.msra.mxu0 %v4420
    %7234 = vmatpush.bf16.msra.mxu0 %v4416
    %7235 = vmatpush.bf16.msra.mxu0 %v4412
    %7236 = vmatpush.bf16.msra.mxu0 %v4408
    %7237 = vmatmul.bf16.gmra.mxu0 %v1165
    %v7238 = vpop.f32.mrf.mxu0
    %v7239 = vadd.f32 %v7226, %v7238
    %v7240 = vpop.f32.mrf.mxu0
    %7241 = vdwg.mxu0
    %7242 = vmatpush.bf16.msra.mxu0 %v4468
    %7243 = vmatpush.bf16.msra.mxu0 %v4464
    %7244 = vmatpush.bf16.msra.mxu0 %v4460
    %7245 = vmatpush.bf16.msra.mxu0 %v4456
    %7246 = vmatpush.bf16.msra.mxu0 %v4452
    %7247 = vmatpush.bf16.msra.mxu0 %v4448
    %7248 = vmatpush.bf16.msra.mxu0 %v4444
    %7249 = vmatpush.bf16.msra.mxu0 %v4440
    %7250 = vmatmul.bf16.gmra.mxu0 %v1166
    %v7251 = vpop.f32.mrf.mxu0
    %v7252 = vadd.f32 %v7239, %v7251
    %v7253 = vpop.f32.mrf.mxu0
    %7254 = vdwg.mxu0
    %7255 = vmatpush.bf16.msra.mxu0 %v4500
    %7256 = vmatpush.bf16.msra.mxu0 %v4496
    %7257 = vmatpush.bf16.msra.mxu0 %v4492
    %7258 = vmatpush.bf16.msra.mxu0 %v4488
    %7259 = vmatpush.bf16.msra.mxu0 %v4484
    %7260 = vmatpush.bf16.msra.mxu0 %v4480
    %7261 = vmatpush.bf16.msra.mxu0 %v4476
    %7262 = vmatpush.bf16.msra.mxu0 %v4472
    %7263 = vmatmul.bf16.gmra.mxu0 %v1167
    %v7264 = vpop.f32.mrf.mxu0
    %v7265 = vadd.f32 %v7252, %v7264
    %v7266 = vpop.f32.mrf.mxu0
    %7267 = vdwg.mxu0
    %7268 = vmatpush.bf16.msra.mxu0 %v4532
    %7269 = vmatpush.bf16.msra.mxu0 %v4528
    %7270 = vmatpush.bf16.msra.mxu0 %v4524
    %7271 = vmatpush.bf16.msra.mxu0 %v4520
    %7272 = vmatpush.bf16.msra.mxu0 %v4516
    %7273 = vmatpush.bf16.msra.mxu0 %v4512
    %7274 = vmatpush.bf16.msra.mxu0 %v4508
    %7275 = vmatpush.bf16.msra.mxu0 %v4504
    %7276 = vmatmul.bf16.gmra.mxu0 %v1168
    %v7277 = vpop.f32.mrf.mxu0
    %v7278 = vadd.f32 %v7265, %v7277
    %v7279 = vpop.f32.mrf.mxu0
    %7280 = vdwg.mxu0
    %7281 = vmatpush.bf16.msra.mxu0 %v4564
    %7282 = vmatpush.bf16.msra.mxu0 %v4560
    %7283 = vmatpush.bf16.msra.mxu0 %v4556
    %7284 = vmatpush.bf16.msra.mxu0 %v4552
    %7285 = vmatpush.bf16.msra.mxu0 %v4548
    %7286 = vmatpush.bf16.msra.mxu0 %v4544
    %7287 = vmatpush.bf16.msra.mxu0 %v4540
    %7288 = vmatpush.bf16.msra.mxu0 %v4536
    %7289 = vmatmul.bf16.gmra.mxu0 %v1169
    %v7290 = vpop.f32.mrf.mxu0
    %v7291 = vadd.f32 %v7278, %v7290
    %v7292 = vpop.f32.mrf.mxu0
    %7293 = vdwg.mxu0
    %7294 = vmatpush.bf16.msra.mxu0 %v4596
    %7295 = vmatpush.bf16.msra.mxu0 %v4592
    %7296 = vmatpush.bf16.msra.mxu0 %v4588
    %7297 = vmatpush.bf16.msra.mxu0 %v4584
    %7298 = vmatpush.bf16.msra.mxu0 %v4580
    %7299 = vmatpush.bf16.msra.mxu0 %v4576
    %7300 = vmatpush.bf16.msra.mxu0 %v4572
    %7301 = vmatpush.bf16.msra.mxu0 %v4568
    %7302 = vmatmul.bf16.gmra.mxu0 %v1174
    %v7303 = vpop.f32.mrf.mxu0
    %v7304 = vadd.f32 %v7291, %v7303
    %v7305 = vpop.f32.mrf.mxu0
    %7306 = vdwg.mxu0
    %7307 = vmatpush.bf16.msra.mxu0 %v4628
    %7308 = vmatpush.bf16.msra.mxu0 %v4624
    %7309 = vmatpush.bf16.msra.mxu0 %v4620
    %7310 = vmatpush.bf16.msra.mxu0 %v4616
    %7311 = vmatpush.bf16.msra.mxu0 %v4612
    %7312 = vmatpush.bf16.msra.mxu0 %v4608
    %7313 = vmatpush.bf16.msra.mxu0 %v4604
    %7314 = vmatpush.bf16.msra.mxu0 %v4600
    %7315 = vmatmul.bf16.gmra.mxu0 %v1175
    %v7316 = vpop.f32.mrf.mxu0
    %v7317 = vadd.f32 %v7304, %v7316
    %v7318 = vpop.f32.mrf.mxu0
    %7319 = vdwg.mxu0
    %7320 = vmatpush.bf16.msra.mxu0 %v4660
    %7321 = vmatpush.bf16.msra.mxu0 %v4656
    %7322 = vmatpush.bf16.msra.mxu0 %v4652
    %7323 = vmatpush.bf16.msra.mxu0 %v4648
    %7324 = vmatpush.bf16.msra.mxu0 %v4644
    %7325 = vmatpush.bf16.msra.mxu0 %v4640
    %7326 = vmatpush.bf16.msra.mxu0 %v4636
    %7327 = vmatpush.bf16.msra.mxu0 %v4632
    %7328 = vmatmul.bf16.gmra.mxu0 %v1176
    %v7329 = vpop.f32.mrf.mxu0
    %v7330 = vadd.f32 %v7317, %v7329
    %v7331 = vpop.f32.mrf.mxu0
    %7332 = vdwg.mxu0
    %7333 = vmatpush.bf16.msra.mxu0 %v4692
    %7334 = vmatpush.bf16.msra.mxu0 %v4688
    %7335 = vmatpush.bf16.msra.mxu0 %v4684
    %7336 = vmatpush.bf16.msra.mxu0 %v4680
    %7337 = vmatpush.bf16.msra.mxu0 %v4676
    %7338 = vmatpush.bf16.msra.mxu0 %v4672
    %7339 = vmatpush.bf16.msra.mxu0 %v4668
    %7340 = vmatpush.bf16.msra.mxu0 %v4664
    %7341 = vmatmul.bf16.gmra.mxu0 %v1177
    %v7342 = vpop.f32.mrf.mxu0
    %v7343 = vadd.f32 %v7330, %v7342
    %v7344 = vpop.f32.mrf.mxu0
    %7345 = vdwg.mxu0
    %7346 = vmatpush.bf16.msra.mxu0 %v4724
    %7347 = vmatpush.bf16.msra.mxu0 %v4720
    %7348 = vmatpush.bf16.msra.mxu0 %v4716
    %7349 = vmatpush.bf16.msra.mxu0 %v4712
    %7350 = vmatpush.bf16.msra.mxu0 %v4708
    %7351 = vmatpush.bf16.msra.mxu0 %v4704
    %7352 = vmatpush.bf16.msra.mxu0 %v4700
    %7353 = vmatpush.bf16.msra.mxu0 %v4696
    %7354 = vmatmul.bf16.gmra.mxu0 %v1178
    %v7355 = vpop.f32.mrf.mxu0
    %v7356 = vadd.f32 %v7343, %v7355
    %v7357 = vpop.f32.mrf.mxu0
    %7358 = vdwg.mxu0
    %7359 = vmatpush.bf16.msra.mxu0 %v4756
    %7360 = vmatpush.bf16.msra.mxu0 %v4752
    %7361 = vmatpush.bf16.msra.mxu0 %v4748
    %7362 = vmatpush.bf16.msra.mxu0 %v4744
    %7363 = vmatpush.bf16.msra.mxu0 %v4740
    %7364 = vmatpush.bf16.msra.mxu0 %v4736
    %7365 = vmatpush.bf16.msra.mxu0 %v4732
    %7366 = vmatpush.bf16.msra.mxu0 %v4728
    %7367 = vmatmul.bf16.gmra.mxu0 %v1179
    %v7368 = vpop.f32.mrf.mxu0
    %v7369 = vadd.f32 %v7356, %v7368
    %v7370 = vpop.f32.mrf.mxu0
    %7371 = vdwg.mxu0
    %7372 = vmatpush.bf16.msra.mxu0 %v4788
    %7373 = vmatpush.bf16.msra.mxu0 %v4784
    %7374 = vmatpush.bf16.msra.mxu0 %v4780
    %7375 = vmatpush.bf16.msra.mxu0 %v4776
    %7376 = vmatpush.bf16.msra.mxu0 %v4772
    %7377 = vmatpush.bf16.msra.mxu0 %v4768
    %7378 = vmatpush.bf16.msra.mxu0 %v4764
    %7379 = vmatpush.bf16.msra.mxu0 %v4760
    %7380 = vmatmul.bf16.gmra.mxu0 %v1180
    %v7381 = vpop.f32.mrf.mxu0
    %v7382 = vadd.f32 %v7369, %v7381
    %v7383 = vpop.f32.mrf.mxu0
    %7384 = vdwg.mxu0
    %7385 = vmatpush.bf16.msra.mxu0 %v4820
    %7386 = vmatpush.bf16.msra.mxu0 %v4816
    %7387 = vmatpush.bf16.msra.mxu0 %v4812
    %7388 = vmatpush.bf16.msra.mxu0 %v4808
    %7389 = vmatpush.bf16.msra.mxu0 %v4804
    %7390 = vmatpush.bf16.msra.mxu0 %v4800
    %7391 = vmatpush.bf16.msra.mxu0 %v4796
    %7392 = vmatpush.bf16.msra.mxu0 %v4792
    %7393 = vmatmul.bf16.gmra.mxu0 %v1181
    %v7394 = vpop.f32.mrf.mxu0
    %v7395 = vadd.f32 %v7382, %v7394
    %v7396 = vpop.f32.mrf.mxu0
    %7397 = vdwg.mxu0
    %7398 = vmatpush.bf16.msra.mxu0 %v4852
    %7399 = vmatpush.bf16.msra.mxu0 %v4848
    %7400 = vmatpush.bf16.msra.mxu0 %v4844
    %7401 = vmatpush.bf16.msra.mxu0 %v4840
    %7402 = vmatpush.bf16.msra.mxu0 %v4836
    %7403 = vmatpush.bf16.msra.mxu0 %v4832
    %7404 = vmatpush.bf16.msra.mxu0 %v4828
    %7405 = vmatpush.bf16.msra.mxu0 %v4824
    %7406 = vmatmul.bf16.gmra.mxu0 %v1186
    %v7407 = vpop.f32.mrf.mxu0
    %v7408 = vadd.f32 %v7395, %v7407
    %v7409 = vpop.f32.mrf.mxu0
    %7410 = vdwg.mxu0
    %7411 = vmatpush.bf16.msra.mxu0 %v4884
    %7412 = vmatpush.bf16.msra.mxu0 %v4880
    %7413 = vmatpush.bf16.msra.mxu0 %v4876
    %7414 = vmatpush.bf16.msra.mxu0 %v4872
    %7415 = vmatpush.bf16.msra.mxu0 %v4868
    %7416 = vmatpush.bf16.msra.mxu0 %v4864
    %7417 = vmatpush.bf16.msra.mxu0 %v4860
    %7418 = vmatpush.bf16.msra.mxu0 %v4856
    %7419 = vmatmul.bf16.gmra.mxu0 %v1187
    %v7420 = vpop.f32.mrf.mxu0
    %v7421 = vadd.f32 %v7408, %v7420
    %v7422 = vpop.f32.mrf.mxu0
    %7423 = vdwg.mxu0
    %7424 = vmatpush.bf16.msra.mxu0 %v4916
    %7425 = vmatpush.bf16.msra.mxu0 %v4912
    %7426 = vmatpush.bf16.msra.mxu0 %v4908
    %7427 = vmatpush.bf16.msra.mxu0 %v4904
    %7428 = vmatpush.bf16.msra.mxu0 %v4900
    %7429 = vmatpush.bf16.msra.mxu0 %v4896
    %7430 = vmatpush.bf16.msra.mxu0 %v4892
    %7431 = vmatpush.bf16.msra.mxu0 %v4888
    %7432 = vmatmul.bf16.gmra.mxu0 %v1188
    %v7433 = vpop.f32.mrf.mxu0
    %v7434 = vadd.f32 %v7421, %v7433
    %v7435 = vpop.f32.mrf.mxu0
    %7436 = vdwg.mxu0
    %7437 = vmatpush.bf16.msra.mxu0 %v4948
    %7438 = vmatpush.bf16.msra.mxu0 %v4944
    %7439 = vmatpush.bf16.msra.mxu0 %v4940
    %7440 = vmatpush.bf16.msra.mxu0 %v4936
    %7441 = vmatpush.bf16.msra.mxu0 %v4932
    %7442 = vmatpush.bf16.msra.mxu0 %v4928
    %7443 = vmatpush.bf16.msra.mxu0 %v4924
    %7444 = vmatpush.bf16.msra.mxu0 %v4920
    %7445 = vmatmul.bf16.gmra.mxu0 %v1189
    %v7446 = vpop.f32.mrf.mxu0
    %v7447 = vadd.f32 %v7434, %v7446
    %v7448 = vpop.f32.mrf.mxu0
    %7449 = vdwg.mxu0
    %7450 = vmatpush.bf16.msra.mxu0 %v4980
    %7451 = vmatpush.bf16.msra.mxu0 %v4976
    %7452 = vmatpush.bf16.msra.mxu0 %v4972
    %7453 = vmatpush.bf16.msra.mxu0 %v4968
    %7454 = vmatpush.bf16.msra.mxu0 %v4964
    %7455 = vmatpush.bf16.msra.mxu0 %v4960
    %7456 = vmatpush.bf16.msra.mxu0 %v4956
    %7457 = vmatpush.bf16.msra.mxu0 %v4952
    %7458 = vmatmul.bf16.gmra.mxu0 %v1190
    %v7459 = vpop.f32.mrf.mxu0
    %v7460 = vadd.f32 %v7447, %v7459
    %v7461 = vpop.f32.mrf.mxu0
    %7462 = vdwg.mxu0
    %7463 = vmatpush.bf16.msra.mxu0 %v5012
    %7464 = vmatpush.bf16.msra.mxu0 %v5008
    %7465 = vmatpush.bf16.msra.mxu0 %v5004
    %7466 = vmatpush.bf16.msra.mxu0 %v5000
    %7467 = vmatpush.bf16.msra.mxu0 %v4996
    %7468 = vmatpush.bf16.msra.mxu0 %v4992
    %7469 = vmatpush.bf16.msra.mxu0 %v4988
    %7470 = vmatpush.bf16.msra.mxu0 %v4984
    %7471 = vmatmul.bf16.gmra.mxu0 %v1191
    %v7472 = vpop.f32.mrf.mxu0
    %v7473 = vadd.f32 %v7460, %v7472
    %v7474 = vpop.f32.mrf.mxu0
    %7475 = vdwg.mxu0
    %7476 = vmatpush.bf16.msra.mxu0 %v5044
    %7477 = vmatpush.bf16.msra.mxu0 %v5040
    %7478 = vmatpush.bf16.msra.mxu0 %v5036
    %7479 = vmatpush.bf16.msra.mxu0 %v5032
    %7480 = vmatpush.bf16.msra.mxu0 %v5028
    %7481 = vmatpush.bf16.msra.mxu0 %v5024
    %7482 = vmatpush.bf16.msra.mxu0 %v5020
    %7483 = vmatpush.bf16.msra.mxu0 %v5016
    %7484 = vmatmul.bf16.gmra.mxu0 %v1192
    %v7485 = vpop.f32.mrf.mxu0
    %v7486 = vadd.f32 %v7473, %v7485
    %v7487 = vpop.f32.mrf.mxu0
    %7488 = vdwg.mxu0
    %7489 = vmatpush.bf16.msra.mxu0 %v5076
    %7490 = vmatpush.bf16.msra.mxu0 %v5072
    %7491 = vmatpush.bf16.msra.mxu0 %v5068
    %7492 = vmatpush.bf16.msra.mxu0 %v5064
    %7493 = vmatpush.bf16.msra.mxu0 %v5060
    %7494 = vmatpush.bf16.msra.mxu0 %v5056
    %7495 = vmatpush.bf16.msra.mxu0 %v5052
    %7496 = vmatpush.bf16.msra.mxu0 %v5048
    %7497 = vmatmul.bf16.gmra.mxu0 %v1193
    %v7498 = vpop.f32.mrf.mxu0
    %v7499 = vadd.f32 %v7486, %v7498
    %v7500 = vpop.f32.mrf.mxu0
    %7501 = vdwg.mxu0
    %7502 = vmatpush.bf16.msra.mxu0 %v5108
    %7503 = vmatpush.bf16.msra.mxu0 %v5104
    %7504 = vmatpush.bf16.msra.mxu0 %v5100
    %7505 = vmatpush.bf16.msra.mxu0 %v5096
    %7506 = vmatpush.bf16.msra.mxu0 %v5092
    %7507 = vmatpush.bf16.msra.mxu0 %v5088
    %7508 = vmatpush.bf16.msra.mxu0 %v5084
    %7509 = vmatpush.bf16.msra.mxu0 %v5080
    %7510 = vmatmul.bf16.gmra.mxu0 %v1198
    %v7511 = vpop.f32.mrf.mxu0
    %v7512 = vadd.f32 %v7499, %v7511
    %v7513 = vpop.f32.mrf.mxu0
    %7514 = vdwg.mxu0
    %7515 = vmatpush.bf16.msra.mxu0 %v5140
    %7516 = vmatpush.bf16.msra.mxu0 %v5136
    %7517 = vmatpush.bf16.msra.mxu0 %v5132
    %7518 = vmatpush.bf16.msra.mxu0 %v5128
    %7519 = vmatpush.bf16.msra.mxu0 %v5124
    %7520 = vmatpush.bf16.msra.mxu0 %v5120
    %7521 = vmatpush.bf16.msra.mxu0 %v5116
    %7522 = vmatpush.bf16.msra.mxu0 %v5112
    %7523 = vmatmul.bf16.gmra.mxu0 %v1199
    %v7524 = vpop.f32.mrf.mxu0
    %v7525 = vadd.f32 %v7512, %v7524
    %v7526 = vpop.f32.mrf.mxu0
    %7527 = vdwg.mxu0
    %7528 = vmatpush.bf16.msra.mxu0 %v5172
    %7529 = vmatpush.bf16.msra.mxu0 %v5168
    %7530 = vmatpush.bf16.msra.mxu0 %v5164
    %7531 = vmatpush.bf16.msra.mxu0 %v5160
    %7532 = vmatpush.bf16.msra.mxu0 %v5156
    %7533 = vmatpush.bf16.msra.mxu0 %v5152
    %7534 = vmatpush.bf16.msra.mxu0 %v5148
    %7535 = vmatpush.bf16.msra.mxu0 %v5144
    %7536 = vmatmul.bf16.gmra.mxu0 %v1200
    %v7537 = vpop.f32.mrf.mxu0
    %v7538 = vadd.f32 %v7525, %v7537
    %v7539 = vpop.f32.mrf.mxu0
    %7540 = vdwg.mxu0
    %7541 = vmatpush.bf16.msra.mxu0 %v5204
    %7542 = vmatpush.bf16.msra.mxu0 %v5200
    %7543 = vmatpush.bf16.msra.mxu0 %v5196
    %7544 = vmatpush.bf16.msra.mxu0 %v5192
    %7545 = vmatpush.bf16.msra.mxu0 %v5188
    %7546 = vmatpush.bf16.msra.mxu0 %v5184
    %7547 = vmatpush.bf16.msra.mxu0 %v5180
    %7548 = vmatpush.bf16.msra.mxu0 %v5176
    %7549 = vmatmul.bf16.gmra.mxu0 %v1201
    %v7550 = vpop.f32.mrf.mxu0
    %v7551 = vadd.f32 %v7538, %v7550
    %v7552 = vpop.f32.mrf.mxu0
    %7553 = vdwg.mxu0
    %7554 = vmatpush.bf16.msra.mxu0 %v5236
    %7555 = vmatpush.bf16.msra.mxu0 %v5232
    %7556 = vmatpush.bf16.msra.mxu0 %v5228
    %7557 = vmatpush.bf16.msra.mxu0 %v5224
    %7558 = vmatpush.bf16.msra.mxu0 %v5220
    %7559 = vmatpush.bf16.msra.mxu0 %v5216
    %7560 = vmatpush.bf16.msra.mxu0 %v5212
    %7561 = vmatpush.bf16.msra.mxu0 %v5208
    %7562 = vmatmul.bf16.gmra.mxu0 %v1202
    %v7563 = vpop.f32.mrf.mxu0
    %v7564 = vadd.f32 %v7551, %v7563
    %v7565 = vpop.f32.mrf.mxu0
    %7566 = vdwg.mxu0
    %7567 = vmatpush.bf16.msra.mxu0 %v5268
    %7568 = vmatpush.bf16.msra.mxu0 %v5264
    %7569 = vmatpush.bf16.msra.mxu0 %v5260
    %7570 = vmatpush.bf16.msra.mxu0 %v5256
    %7571 = vmatpush.bf16.msra.mxu0 %v5252
    %7572 = vmatpush.bf16.msra.mxu0 %v5248
    %7573 = vmatpush.bf16.msra.mxu0 %v5244
    %7574 = vmatpush.bf16.msra.mxu0 %v5240
    %7575 = vmatmul.bf16.gmra.mxu0 %v1203
    %v7576 = vpop.f32.mrf.mxu0
    %v7577 = vadd.f32 %v7564, %v7576
    %v7578 = vpop.f32.mrf.mxu0
    %7579 = vdwg.mxu0
    %7580 = vmatpush.bf16.msra.mxu0 %v5300
    %7581 = vmatpush.bf16.msra.mxu0 %v5296
    %7582 = vmatpush.bf16.msra.mxu0 %v5292
    %7583 = vmatpush.bf16.msra.mxu0 %v5288
    %7584 = vmatpush.bf16.msra.mxu0 %v5284
    %7585 = vmatpush.bf16.msra.mxu0 %v5280
    %7586 = vmatpush.bf16.msra.mxu0 %v5276
    %7587 = vmatpush.bf16.msra.mxu0 %v5272
    %7588 = vmatmul.bf16.gmra.mxu0 %v1204
    %v7589 = vpop.f32.mrf.mxu0
    %v7590 = vadd.f32 %v7577, %v7589
    %v7591 = vpop.f32.mrf.mxu0
    %7592 = vdwg.mxu0
    %7593 = vmatpush.bf16.msra.mxu0 %v5332
    %7594 = vmatpush.bf16.msra.mxu0 %v5328
    %7595 = vmatpush.bf16.msra.mxu0 %v5324
    %7596 = vmatpush.bf16.msra.mxu0 %v5320
    %7597 = vmatpush.bf16.msra.mxu0 %v5316
    %7598 = vmatpush.bf16.msra.mxu0 %v5312
    %7599 = vmatpush.bf16.msra.mxu0 %v5308
    %7600 = vmatpush.bf16.msra.mxu0 %v5304
    %7601 = vmatmul.bf16.gmra.mxu0 %v1205
    %v7602 = vpop.f32.mrf.mxu0
    %v7603 = vadd.f32 %v7590, %v7602
    %v7604 = vpop.f32.mrf.mxu0
    %7605 = vdwg.mxu0
    %7606 = vmatpush.bf16.msra.mxu0 %v4341
    %7607 = vmatpush.bf16.msra.mxu0 %v4337
    %7608 = vmatpush.bf16.msra.mxu0 %v4333
    %7609 = vmatpush.bf16.msra.mxu0 %v4329
    %7610 = vmatpush.bf16.msra.mxu0 %v4325
    %7611 = vmatpush.bf16.msra.mxu0 %v4321
    %7612 = vmatpush.bf16.msra.mxu0 %v4317
    %7613 = vmatpush.bf16.msra.mxu0 %v4313
    %7614 = vmatmul.bf16.gmra.mxu0 %v1162
    %v7615 = vpop.f32.mrf.mxu0
    %v7616 = vadd.f32 %v1152, %v7615
    %v7617 = vpop.f32.mrf.mxu0
    %7618 = vdwg.mxu0
    %7619 = vmatpush.bf16.msra.mxu0 %v4373
    %7620 = vmatpush.bf16.msra.mxu0 %v4369
    %7621 = vmatpush.bf16.msra.mxu0 %v4365
    %7622 = vmatpush.bf16.msra.mxu0 %v4361
    %7623 = vmatpush.bf16.msra.mxu0 %v4357
    %7624 = vmatpush.bf16.msra.mxu0 %v4353
    %7625 = vmatpush.bf16.msra.mxu0 %v4349
    %7626 = vmatpush.bf16.msra.mxu0 %v4345
    %7627 = vmatmul.bf16.gmra.mxu0 %v1163
    %v7628 = vpop.f32.mrf.mxu0
    %v7629 = vadd.f32 %v7616, %v7628
    %v7630 = vpop.f32.mrf.mxu0
    %7631 = vdwg.mxu0
    %7632 = vmatpush.bf16.msra.mxu0 %v4405
    %7633 = vmatpush.bf16.msra.mxu0 %v4401
    %7634 = vmatpush.bf16.msra.mxu0 %v4397
    %7635 = vmatpush.bf16.msra.mxu0 %v4393
    %7636 = vmatpush.bf16.msra.mxu0 %v4389
    %7637 = vmatpush.bf16.msra.mxu0 %v4385
    %7638 = vmatpush.bf16.msra.mxu0 %v4381
    %7639 = vmatpush.bf16.msra.mxu0 %v4377
    %7640 = vmatmul.bf16.gmra.mxu0 %v1164
    %v7641 = vpop.f32.mrf.mxu0
    %v7642 = vadd.f32 %v7629, %v7641
    %v7643 = vpop.f32.mrf.mxu0
    %7644 = vdwg.mxu0
    %7645 = vmatpush.bf16.msra.mxu0 %v4437
    %7646 = vmatpush.bf16.msra.mxu0 %v4433
    %7647 = vmatpush.bf16.msra.mxu0 %v4429
    %7648 = vmatpush.bf16.msra.mxu0 %v4425
    %7649 = vmatpush.bf16.msra.mxu0 %v4421
    %7650 = vmatpush.bf16.msra.mxu0 %v4417
    %7651 = vmatpush.bf16.msra.mxu0 %v4413
    %7652 = vmatpush.bf16.msra.mxu0 %v4409
    %7653 = vmatmul.bf16.gmra.mxu0 %v1165
    %v7654 = vpop.f32.mrf.mxu0
    %v7655 = vadd.f32 %v7642, %v7654
    %v7656 = vpop.f32.mrf.mxu0
    %7657 = vdwg.mxu0
    %7658 = vmatpush.bf16.msra.mxu0 %v4469
    %7659 = vmatpush.bf16.msra.mxu0 %v4465
    %7660 = vmatpush.bf16.msra.mxu0 %v4461
    %7661 = vmatpush.bf16.msra.mxu0 %v4457
    %7662 = vmatpush.bf16.msra.mxu0 %v4453
    %7663 = vmatpush.bf16.msra.mxu0 %v4449
    %7664 = vmatpush.bf16.msra.mxu0 %v4445
    %7665 = vmatpush.bf16.msra.mxu0 %v4441
    %7666 = vmatmul.bf16.gmra.mxu0 %v1166
    %v7667 = vpop.f32.mrf.mxu0
    %v7668 = vadd.f32 %v7655, %v7667
    %v7669 = vpop.f32.mrf.mxu0
    %7670 = vdwg.mxu0
    %7671 = vmatpush.bf16.msra.mxu0 %v4501
    %7672 = vmatpush.bf16.msra.mxu0 %v4497
    %7673 = vmatpush.bf16.msra.mxu0 %v4493
    %7674 = vmatpush.bf16.msra.mxu0 %v4489
    %7675 = vmatpush.bf16.msra.mxu0 %v4485
    %7676 = vmatpush.bf16.msra.mxu0 %v4481
    %7677 = vmatpush.bf16.msra.mxu0 %v4477
    %7678 = vmatpush.bf16.msra.mxu0 %v4473
    %7679 = vmatmul.bf16.gmra.mxu0 %v1167
    %v7680 = vpop.f32.mrf.mxu0
    %v7681 = vadd.f32 %v7668, %v7680
    %v7682 = vpop.f32.mrf.mxu0
    %7683 = vdwg.mxu0
    %7684 = vmatpush.bf16.msra.mxu0 %v4533
    %7685 = vmatpush.bf16.msra.mxu0 %v4529
    %7686 = vmatpush.bf16.msra.mxu0 %v4525
    %7687 = vmatpush.bf16.msra.mxu0 %v4521
    %7688 = vmatpush.bf16.msra.mxu0 %v4517
    %7689 = vmatpush.bf16.msra.mxu0 %v4513
    %7690 = vmatpush.bf16.msra.mxu0 %v4509
    %7691 = vmatpush.bf16.msra.mxu0 %v4505
    %7692 = vmatmul.bf16.gmra.mxu0 %v1168
    %v7693 = vpop.f32.mrf.mxu0
    %v7694 = vadd.f32 %v7681, %v7693
    %v7695 = vpop.f32.mrf.mxu0
    %7696 = vdwg.mxu0
    %7697 = vmatpush.bf16.msra.mxu0 %v4565
    %7698 = vmatpush.bf16.msra.mxu0 %v4561
    %7699 = vmatpush.bf16.msra.mxu0 %v4557
    %7700 = vmatpush.bf16.msra.mxu0 %v4553
    %7701 = vmatpush.bf16.msra.mxu0 %v4549
    %7702 = vmatpush.bf16.msra.mxu0 %v4545
    %7703 = vmatpush.bf16.msra.mxu0 %v4541
    %7704 = vmatpush.bf16.msra.mxu0 %v4537
    %7705 = vmatmul.bf16.gmra.mxu0 %v1169
    %v7706 = vpop.f32.mrf.mxu0
    %v7707 = vadd.f32 %v7694, %v7706
    %v7708 = vpop.f32.mrf.mxu0
    %7709 = vdwg.mxu0
    %7710 = vmatpush.bf16.msra.mxu0 %v4597
    %7711 = vmatpush.bf16.msra.mxu0 %v4593
    %7712 = vmatpush.bf16.msra.mxu0 %v4589
    %7713 = vmatpush.bf16.msra.mxu0 %v4585
    %7714 = vmatpush.bf16.msra.mxu0 %v4581
    %7715 = vmatpush.bf16.msra.mxu0 %v4577
    %7716 = vmatpush.bf16.msra.mxu0 %v4573
    %7717 = vmatpush.bf16.msra.mxu0 %v4569
    %7718 = vmatmul.bf16.gmra.mxu0 %v1174
    %v7719 = vpop.f32.mrf.mxu0
    %v7720 = vadd.f32 %v7707, %v7719
    %v7721 = vpop.f32.mrf.mxu0
    %7722 = vdwg.mxu0
    %7723 = vmatpush.bf16.msra.mxu0 %v4629
    %7724 = vmatpush.bf16.msra.mxu0 %v4625
    %7725 = vmatpush.bf16.msra.mxu0 %v4621
    %7726 = vmatpush.bf16.msra.mxu0 %v4617
    %7727 = vmatpush.bf16.msra.mxu0 %v4613
    %7728 = vmatpush.bf16.msra.mxu0 %v4609
    %7729 = vmatpush.bf16.msra.mxu0 %v4605
    %7730 = vmatpush.bf16.msra.mxu0 %v4601
    %7731 = vmatmul.bf16.gmra.mxu0 %v1175
    %v7732 = vpop.f32.mrf.mxu0
    %v7733 = vadd.f32 %v7720, %v7732
    %v7734 = vpop.f32.mrf.mxu0
    %7735 = vdwg.mxu0
    %7736 = vmatpush.bf16.msra.mxu0 %v4661
    %7737 = vmatpush.bf16.msra.mxu0 %v4657
    %7738 = vmatpush.bf16.msra.mxu0 %v4653
    %7739 = vmatpush.bf16.msra.mxu0 %v4649
    %7740 = vmatpush.bf16.msra.mxu0 %v4645
    %7741 = vmatpush.bf16.msra.mxu0 %v4641
    %7742 = vmatpush.bf16.msra.mxu0 %v4637
    %7743 = vmatpush.bf16.msra.mxu0 %v4633
    %7744 = vmatmul.bf16.gmra.mxu0 %v1176
    %v7745 = vpop.f32.mrf.mxu0
    %v7746 = vadd.f32 %v7733, %v7745
    %v7747 = vpop.f32.mrf.mxu0
    %7748 = vdwg.mxu0
    %7749 = vmatpush.bf16.msra.mxu0 %v4693
    %7750 = vmatpush.bf16.msra.mxu0 %v4689
    %7751 = vmatpush.bf16.msra.mxu0 %v4685
    %7752 = vmatpush.bf16.msra.mxu0 %v4681
    %7753 = vmatpush.bf16.msra.mxu0 %v4677
    %7754 = vmatpush.bf16.msra.mxu0 %v4673
    %7755 = vmatpush.bf16.msra.mxu0 %v4669
    %7756 = vmatpush.bf16.msra.mxu0 %v4665
    %7757 = vmatmul.bf16.gmra.mxu0 %v1177
    %v7758 = vpop.f32.mrf.mxu0
    %v7759 = vadd.f32 %v7746, %v7758
    %v7760 = vpop.f32.mrf.mxu0
    %7761 = vdwg.mxu0
    %7762 = vmatpush.bf16.msra.mxu0 %v4725
    %7763 = vmatpush.bf16.msra.mxu0 %v4721
    %7764 = vmatpush.bf16.msra.mxu0 %v4717
    %7765 = vmatpush.bf16.msra.mxu0 %v4713
    %7766 = vmatpush.bf16.msra.mxu0 %v4709
    %7767 = vmatpush.bf16.msra.mxu0 %v4705
    %7768 = vmatpush.bf16.msra.mxu0 %v4701
    %7769 = vmatpush.bf16.msra.mxu0 %v4697
    %7770 = vmatmul.bf16.gmra.mxu0 %v1178
    %v7771 = vpop.f32.mrf.mxu0
    %v7772 = vadd.f32 %v7759, %v7771
    %v7773 = vpop.f32.mrf.mxu0
    %7774 = vdwg.mxu0
    %7775 = vmatpush.bf16.msra.mxu0 %v4757
    %7776 = vmatpush.bf16.msra.mxu0 %v4753
    %7777 = vmatpush.bf16.msra.mxu0 %v4749
    %7778 = vmatpush.bf16.msra.mxu0 %v4745
    %7779 = vmatpush.bf16.msra.mxu0 %v4741
    %7780 = vmatpush.bf16.msra.mxu0 %v4737
    %7781 = vmatpush.bf16.msra.mxu0 %v4733
    %7782 = vmatpush.bf16.msra.mxu0 %v4729
    %7783 = vmatmul.bf16.gmra.mxu0 %v1179
    %v7784 = vpop.f32.mrf.mxu0
    %v7785 = vadd.f32 %v7772, %v7784
    %v7786 = vpop.f32.mrf.mxu0
    %7787 = vdwg.mxu0
    %7788 = vmatpush.bf16.msra.mxu0 %v4789
    %7789 = vmatpush.bf16.msra.mxu0 %v4785
    %7790 = vmatpush.bf16.msra.mxu0 %v4781
    %7791 = vmatpush.bf16.msra.mxu0 %v4777
    %7792 = vmatpush.bf16.msra.mxu0 %v4773
    %7793 = vmatpush.bf16.msra.mxu0 %v4769
    %7794 = vmatpush.bf16.msra.mxu0 %v4765
    %7795 = vmatpush.bf16.msra.mxu0 %v4761
    %7796 = vmatmul.bf16.gmra.mxu0 %v1180
    %v7797 = vpop.f32.mrf.mxu0
    %v7798 = vadd.f32 %v7785, %v7797
    %v7799 = vpop.f32.mrf.mxu0
    %7800 = vdwg.mxu0
    %7801 = vmatpush.bf16.msra.mxu0 %v4821
    %7802 = vmatpush.bf16.msra.mxu0 %v4817
    %7803 = vmatpush.bf16.msra.mxu0 %v4813
    %7804 = vmatpush.bf16.msra.mxu0 %v4809
    %7805 = vmatpush.bf16.msra.mxu0 %v4805
    %7806 = vmatpush.bf16.msra.mxu0 %v4801
    %7807 = vmatpush.bf16.msra.mxu0 %v4797
    %7808 = vmatpush.bf16.msra.mxu0 %v4793
    %7809 = vmatmul.bf16.gmra.mxu0 %v1181
    %v7810 = vpop.f32.mrf.mxu0
    %v7811 = vadd.f32 %v7798, %v7810
    %v7812 = vpop.f32.mrf.mxu0
    %7813 = vdwg.mxu0
    %7814 = vmatpush.bf16.msra.mxu0 %v4853
    %7815 = vmatpush.bf16.msra.mxu0 %v4849
    %7816 = vmatpush.bf16.msra.mxu0 %v4845
    %7817 = vmatpush.bf16.msra.mxu0 %v4841
    %7818 = vmatpush.bf16.msra.mxu0 %v4837
    %7819 = vmatpush.bf16.msra.mxu0 %v4833
    %7820 = vmatpush.bf16.msra.mxu0 %v4829
    %7821 = vmatpush.bf16.msra.mxu0 %v4825
    %7822 = vmatmul.bf16.gmra.mxu0 %v1186
    %v7823 = vpop.f32.mrf.mxu0
    %v7824 = vadd.f32 %v7811, %v7823
    %v7825 = vpop.f32.mrf.mxu0
    %7826 = vdwg.mxu0
    %7827 = vmatpush.bf16.msra.mxu0 %v4885
    %7828 = vmatpush.bf16.msra.mxu0 %v4881
    %7829 = vmatpush.bf16.msra.mxu0 %v4877
    %7830 = vmatpush.bf16.msra.mxu0 %v4873
    %7831 = vmatpush.bf16.msra.mxu0 %v4869
    %7832 = vmatpush.bf16.msra.mxu0 %v4865
    %7833 = vmatpush.bf16.msra.mxu0 %v4861
    %7834 = vmatpush.bf16.msra.mxu0 %v4857
    %7835 = vmatmul.bf16.gmra.mxu0 %v1187
    %v7836 = vpop.f32.mrf.mxu0
    %v7837 = vadd.f32 %v7824, %v7836
    %v7838 = vpop.f32.mrf.mxu0
    %7839 = vdwg.mxu0
    %7840 = vmatpush.bf16.msra.mxu0 %v4917
    %7841 = vmatpush.bf16.msra.mxu0 %v4913
    %7842 = vmatpush.bf16.msra.mxu0 %v4909
    %7843 = vmatpush.bf16.msra.mxu0 %v4905
    %7844 = vmatpush.bf16.msra.mxu0 %v4901
    %7845 = vmatpush.bf16.msra.mxu0 %v4897
    %7846 = vmatpush.bf16.msra.mxu0 %v4893
    %7847 = vmatpush.bf16.msra.mxu0 %v4889
    %7848 = vmatmul.bf16.gmra.mxu0 %v1188
    %v7849 = vpop.f32.mrf.mxu0
    %v7850 = vadd.f32 %v7837, %v7849
    %v7851 = vpop.f32.mrf.mxu0
    %7852 = vdwg.mxu0
    %7853 = vmatpush.bf16.msra.mxu0 %v4949
    %7854 = vmatpush.bf16.msra.mxu0 %v4945
    %7855 = vmatpush.bf16.msra.mxu0 %v4941
    %7856 = vmatpush.bf16.msra.mxu0 %v4937
    %7857 = vmatpush.bf16.msra.mxu0 %v4933
    %7858 = vmatpush.bf16.msra.mxu0 %v4929
    %7859 = vmatpush.bf16.msra.mxu0 %v4925
    %7860 = vmatpush.bf16.msra.mxu0 %v4921
    %7861 = vmatmul.bf16.gmra.mxu0 %v1189
    %v7862 = vpop.f32.mrf.mxu0
    %v7863 = vadd.f32 %v7850, %v7862
    %v7864 = vpop.f32.mrf.mxu0
    %7865 = vdwg.mxu0
    %7866 = vmatpush.bf16.msra.mxu0 %v4981
    %7867 = vmatpush.bf16.msra.mxu0 %v4977
    %7868 = vmatpush.bf16.msra.mxu0 %v4973
    %7869 = vmatpush.bf16.msra.mxu0 %v4969
    %7870 = vmatpush.bf16.msra.mxu0 %v4965
    %7871 = vmatpush.bf16.msra.mxu0 %v4961
    %7872 = vmatpush.bf16.msra.mxu0 %v4957
    %7873 = vmatpush.bf16.msra.mxu0 %v4953
    %7874 = vmatmul.bf16.gmra.mxu0 %v1190
    %v7875 = vpop.f32.mrf.mxu0
    %v7876 = vadd.f32 %v7863, %v7875
    %v7877 = vpop.f32.mrf.mxu0
    %7878 = vdwg.mxu0
    %7879 = vmatpush.bf16.msra.mxu0 %v5013
    %7880 = vmatpush.bf16.msra.mxu0 %v5009
    %7881 = vmatpush.bf16.msra.mxu0 %v5005
    %7882 = vmatpush.bf16.msra.mxu0 %v5001
    %7883 = vmatpush.bf16.msra.mxu0 %v4997
    %7884 = vmatpush.bf16.msra.mxu0 %v4993
    %7885 = vmatpush.bf16.msra.mxu0 %v4989
    %7886 = vmatpush.bf16.msra.mxu0 %v4985
    %7887 = vmatmul.bf16.gmra.mxu0 %v1191
    %v7888 = vpop.f32.mrf.mxu0
    %v7889 = vadd.f32 %v7876, %v7888
    %v7890 = vpop.f32.mrf.mxu0
    %7891 = vdwg.mxu0
    %7892 = vmatpush.bf16.msra.mxu0 %v5045
    %7893 = vmatpush.bf16.msra.mxu0 %v5041
    %7894 = vmatpush.bf16.msra.mxu0 %v5037
    %7895 = vmatpush.bf16.msra.mxu0 %v5033
    %7896 = vmatpush.bf16.msra.mxu0 %v5029
    %7897 = vmatpush.bf16.msra.mxu0 %v5025
    %7898 = vmatpush.bf16.msra.mxu0 %v5021
    %7899 = vmatpush.bf16.msra.mxu0 %v5017
    %7900 = vmatmul.bf16.gmra.mxu0 %v1192
    %v7901 = vpop.f32.mrf.mxu0
    %v7902 = vadd.f32 %v7889, %v7901
    %v7903 = vpop.f32.mrf.mxu0
    %7904 = vdwg.mxu0
    %7905 = vmatpush.bf16.msra.mxu0 %v5077
    %7906 = vmatpush.bf16.msra.mxu0 %v5073
    %7907 = vmatpush.bf16.msra.mxu0 %v5069
    %7908 = vmatpush.bf16.msra.mxu0 %v5065
    %7909 = vmatpush.bf16.msra.mxu0 %v5061
    %7910 = vmatpush.bf16.msra.mxu0 %v5057
    %7911 = vmatpush.bf16.msra.mxu0 %v5053
    %7912 = vmatpush.bf16.msra.mxu0 %v5049
    %7913 = vmatmul.bf16.gmra.mxu0 %v1193
    %v7914 = vpop.f32.mrf.mxu0
    %v7915 = vadd.f32 %v7902, %v7914
    %v7916 = vpop.f32.mrf.mxu0
    %7917 = vdwg.mxu0
    %7918 = vmatpush.bf16.msra.mxu0 %v5109
    %7919 = vmatpush.bf16.msra.mxu0 %v5105
    %7920 = vmatpush.bf16.msra.mxu0 %v5101
    %7921 = vmatpush.bf16.msra.mxu0 %v5097
    %7922 = vmatpush.bf16.msra.mxu0 %v5093
    %7923 = vmatpush.bf16.msra.mxu0 %v5089
    %7924 = vmatpush.bf16.msra.mxu0 %v5085
    %7925 = vmatpush.bf16.msra.mxu0 %v5081
    %7926 = vmatmul.bf16.gmra.mxu0 %v1198
    %v7927 = vpop.f32.mrf.mxu0
    %v7928 = vadd.f32 %v7915, %v7927
    %v7929 = vpop.f32.mrf.mxu0
    %7930 = vdwg.mxu0
    %7931 = vmatpush.bf16.msra.mxu0 %v5141
    %7932 = vmatpush.bf16.msra.mxu0 %v5137
    %7933 = vmatpush.bf16.msra.mxu0 %v5133
    %7934 = vmatpush.bf16.msra.mxu0 %v5129
    %7935 = vmatpush.bf16.msra.mxu0 %v5125
    %7936 = vmatpush.bf16.msra.mxu0 %v5121
    %7937 = vmatpush.bf16.msra.mxu0 %v5117
    %7938 = vmatpush.bf16.msra.mxu0 %v5113
    %7939 = vmatmul.bf16.gmra.mxu0 %v1199
    %v7940 = vpop.f32.mrf.mxu0
    %v7941 = vadd.f32 %v7928, %v7940
    %v7942 = vpop.f32.mrf.mxu0
    %7943 = vdwg.mxu0
    %7944 = vmatpush.bf16.msra.mxu0 %v5173
    %7945 = vmatpush.bf16.msra.mxu0 %v5169
    %7946 = vmatpush.bf16.msra.mxu0 %v5165
    %7947 = vmatpush.bf16.msra.mxu0 %v5161
    %7948 = vmatpush.bf16.msra.mxu0 %v5157
    %7949 = vmatpush.bf16.msra.mxu0 %v5153
    %7950 = vmatpush.bf16.msra.mxu0 %v5149
    %7951 = vmatpush.bf16.msra.mxu0 %v5145
    %7952 = vmatmul.bf16.gmra.mxu0 %v1200
    %v7953 = vpop.f32.mrf.mxu0
    %v7954 = vadd.f32 %v7941, %v7953
    %v7955 = vpop.f32.mrf.mxu0
    %7956 = vdwg.mxu0
    %7957 = vmatpush.bf16.msra.mxu0 %v5205
    %7958 = vmatpush.bf16.msra.mxu0 %v5201
    %7959 = vmatpush.bf16.msra.mxu0 %v5197
    %7960 = vmatpush.bf16.msra.mxu0 %v5193
    %7961 = vmatpush.bf16.msra.mxu0 %v5189
    %7962 = vmatpush.bf16.msra.mxu0 %v5185
    %7963 = vmatpush.bf16.msra.mxu0 %v5181
    %7964 = vmatpush.bf16.msra.mxu0 %v5177
    %7965 = vmatmul.bf16.gmra.mxu0 %v1201
    %v7966 = vpop.f32.mrf.mxu0
    %v7967 = vadd.f32 %v7954, %v7966
    %v7968 = vpop.f32.mrf.mxu0
    %7969 = vdwg.mxu0
    %7970 = vmatpush.bf16.msra.mxu0 %v5237
    %7971 = vmatpush.bf16.msra.mxu0 %v5233
    %7972 = vmatpush.bf16.msra.mxu0 %v5229
    %7973 = vmatpush.bf16.msra.mxu0 %v5225
    %7974 = vmatpush.bf16.msra.mxu0 %v5221
    %7975 = vmatpush.bf16.msra.mxu0 %v5217
    %7976 = vmatpush.bf16.msra.mxu0 %v5213
    %7977 = vmatpush.bf16.msra.mxu0 %v5209
    %7978 = vmatmul.bf16.gmra.mxu0 %v1202
    %v7979 = vpop.f32.mrf.mxu0
    %v7980 = vadd.f32 %v7967, %v7979
    %v7981 = vpop.f32.mrf.mxu0
    %7982 = vdwg.mxu0
    %7983 = vmatpush.bf16.msra.mxu0 %v5269
    %7984 = vmatpush.bf16.msra.mxu0 %v5265
    %7985 = vmatpush.bf16.msra.mxu0 %v5261
    %7986 = vmatpush.bf16.msra.mxu0 %v5257
    %7987 = vmatpush.bf16.msra.mxu0 %v5253
    %7988 = vmatpush.bf16.msra.mxu0 %v5249
    %7989 = vmatpush.bf16.msra.mxu0 %v5245
    %7990 = vmatpush.bf16.msra.mxu0 %v5241
    %7991 = vmatmul.bf16.gmra.mxu0 %v1203
    %v7992 = vpop.f32.mrf.mxu0
    %v7993 = vadd.f32 %v7980, %v7992
    %v7994 = vpop.f32.mrf.mxu0
    %7995 = vdwg.mxu0
    %7996 = vmatpush.bf16.msra.mxu0 %v5301
    %7997 = vmatpush.bf16.msra.mxu0 %v5297
    %7998 = vmatpush.bf16.msra.mxu0 %v5293
    %7999 = vmatpush.bf16.msra.mxu0 %v5289
    %8000 = vmatpush.bf16.msra.mxu0 %v5285
    %8001 = vmatpush.bf16.msra.mxu0 %v5281
    %8002 = vmatpush.bf16.msra.mxu0 %v5277
    %8003 = vmatpush.bf16.msra.mxu0 %v5273
    %8004 = vmatmul.bf16.gmra.mxu0 %v1204
    %v8005 = vpop.f32.mrf.mxu0
    %v8006 = vadd.f32 %v7993, %v8005
    %v8007 = vpop.f32.mrf.mxu0
    %8008 = vdwg.mxu0
    %8009 = vmatpush.bf16.msra.mxu0 %v5333
    %8010 = vmatpush.bf16.msra.mxu0 %v5329
    %8011 = vmatpush.bf16.msra.mxu0 %v5325
    %8012 = vmatpush.bf16.msra.mxu0 %v5321
    %8013 = vmatpush.bf16.msra.mxu0 %v5317
    %8014 = vmatpush.bf16.msra.mxu0 %v5313
    %8015 = vmatpush.bf16.msra.mxu0 %v5309
    %8016 = vmatpush.bf16.msra.mxu0 %v5305
    %8017 = vmatmul.bf16.gmra.mxu0 %v1205
    %v8018 = vpop.f32.mrf.mxu0
    %v8019 = vadd.f32 %v8006, %v8018
    %v8020 = vpop.f32.mrf.mxu0
    %8021 = vdwg.mxu0
    %v8022 = vmax.f32 %v6771, 0.0
    %v8023 = vmax.f32 %v7187, 0.0
    %v8024 = vmax.f32 %v7603, 0.0
    %v8025 = vmax.f32 %v8019, 0.0
    %v8026 = vpack.c.bf16 %v8022, %v8022
    %v8027 = vpack.c.bf16 %v8023, %v8023
    %v8028 = vpack.c.bf16 %v8024, %v8024
    %v8029 = vpack.c.bf16 %v8025, %v8025
    %v8030 = vld [vmem:[#allocation7] sm:$0xff]
    %v8031 = vld [vmem:[#allocation7 + $0x8] sm:$0xff]
    %v8032 = vld [vmem:[#allocation7 + $0x10] sm:$0xff]
    %v8033 = vld [vmem:[#allocation7 + $0x18] sm:$0xff]
    %v8034 = vld [vmem:[#allocation7 + $0x20] sm:$0xff]
    %v8035 = vld [vmem:[#allocation7 + $0x28] sm:$0xff]
    %v8036 = vld [vmem:[#allocation7 + $0x30] sm:$0xff]
    %v8037 = vld [vmem:[#allocation7 + $0x38] sm:$0xff]
    %v8038 = vld [vmem:[#allocation7 + $0x40] sm:$0xff]
    %v8039 = vld [vmem:[#allocation7 + $0x48] sm:$0xff]
    %v8040 = vld [vmem:[#allocation7 + $0x50] sm:$0xff]
    %v8041 = vld [vmem:[#allocation7 + $0x58] sm:$0xff]
    %v8042 = vld [vmem:[#allocation7 + $0x60] sm:$0xff]
    %v8043 = vld [vmem:[#allocation7 + $0x68] sm:$0xff]
    %v8044 = vld [vmem:[#allocation7 + $0x70] sm:$0xff]
    %v8045 = vld [vmem:[#allocation7 + $0x78] sm:$0xff]
    %v8046 = vld [vmem:[#allocation7 + $0x80] sm:$0xff]
    %v8047 = vld [vmem:[#allocation7 + $0x88] sm:$0xff]
    %v8048 = vld [vmem:[#allocation7 + $0x90] sm:$0xff]
    %v8049 = vld [vmem:[#allocation7 + $0x98] sm:$0xff]
    %v8050 = vld [vmem:[#allocation7 + $0xa0] sm:$0xff]
    %v8051 = vld [vmem:[#allocation7 + $0xa8] sm:$0xff]
    %v8052 = vld [vmem:[#allocation7 + $0xb0] sm:$0xff]
    %v8053 = vld [vmem:[#allocation7 + $0xb8] sm:$0xff]
    %v8054 = vld [vmem:[#allocation7 + $0xc0] sm:$0xff]
    %v8055 = vld [vmem:[#allocation7 + $0xc8] sm:$0xff]
    %v8056 = vld [vmem:[#allocation7 + $0xd0] sm:$0xff]
    %v8057 = vld [vmem:[#allocation7 + $0xd8] sm:$0xff]
    %v8058 = vld [vmem:[#allocation7 + $0xe0] sm:$0xff]
    %v8059 = vld [vmem:[#allocation7 + $0xe8] sm:$0xff]
    %v8060 = vld [vmem:[#allocation7 + $0xf0] sm:$0xff]
    %v8061 = vld [vmem:[#allocation7 + $0xf8] sm:$0xff]
    %v8062 = vld [vmem:[#allocation7 + $0x100] sm:$0xff]
    %v8063 = vld [vmem:[#allocation7 + $0x108] sm:$0xff]
    %v8064 = vld [vmem:[#allocation7 + $0x110] sm:$0xff]
    %v8065 = vld [vmem:[#allocation7 + $0x118] sm:$0xff]
    %v8066 = vld [vmem:[#allocation7 + $0x120] sm:$0xff]
    %v8067 = vld [vmem:[#allocation7 + $0x128] sm:$0xff]
    %v8068 = vld [vmem:[#allocation7 + $0x130] sm:$0xff]
    %v8069 = vld [vmem:[#allocation7 + $0x138] sm:$0xff]
    %v8070 = vld [vmem:[#allocation7 + $0x140] sm:$0xff]
    %v8071 = vld [vmem:[#allocation7 + $0x148] sm:$0xff]
    %v8072 = vld [vmem:[#allocation7 + $0x150] sm:$0xff]
    %v8073 = vld [vmem:[#allocation7 + $0x158] sm:$0xff]
    %v8074 = vld [vmem:[#allocation7 + $0x160] sm:$0xff]
    %v8075 = vld [vmem:[#allocation7 + $0x168] sm:$0xff]
    %v8076 = vld [vmem:[#allocation7 + $0x170] sm:$0xff]
    %v8077 = vld [vmem:[#allocation7 + $0x178] sm:$0xff]
    %v8078 = vld [vmem:[#allocation7 + $0x180] sm:$0xff]
    %v8079 = vld [vmem:[#allocation7 + $0x188] sm:$0xff]
    %v8080 = vld [vmem:[#allocation7 + $0x190] sm:$0xff]
    %v8081 = vld [vmem:[#allocation7 + $0x198] sm:$0xff]
    %v8082 = vld [vmem:[#allocation7 + $0x1a0] sm:$0xff]
    %v8083 = vld [vmem:[#allocation7 + $0x1a8] sm:$0xff]
    %v8084 = vld [vmem:[#allocation7 + $0x1b0] sm:$0xff]
    %v8085 = vld [vmem:[#allocation7 + $0x1b8] sm:$0xff]
    %v8086 = vld [vmem:[#allocation7 + $0x1c0] sm:$0xff]
    %v8087 = vld [vmem:[#allocation7 + $0x1c8] sm:$0xff]
    %v8088 = vld [vmem:[#allocation7 + $0x1d0] sm:$0xff]
    %v8089 = vld [vmem:[#allocation7 + $0x1d8] sm:$0xff]
    %v8090 = vld [vmem:[#allocation7 + $0x1e0] sm:$0xff]
    %v8091 = vld [vmem:[#allocation7 + $0x1e8] sm:$0xff]
    %v8092 = vld [vmem:[#allocation7 + $0x1f0] sm:$0xff]
    %v8093 = vld [vmem:[#allocation7 + $0x1f8] sm:$0xff]
    %v8094 = vld [vmem:[#allocation7 + $0x200] sm:$0xff]
    %v8095 = vld [vmem:[#allocation7 + $0x208] sm:$0xff]
    %v8096 = vld [vmem:[#allocation7 + $0x210] sm:$0xff]
    %v8097 = vld [vmem:[#allocation7 + $0x218] sm:$0xff]
    %v8098 = vld [vmem:[#allocation7 + $0x220] sm:$0xff]
    %v8099 = vld [vmem:[#allocation7 + $0x228] sm:$0xff]
    %v8100 = vld [vmem:[#allocation7 + $0x230] sm:$0xff]
    %v8101 = vld [vmem:[#allocation7 + $0x238] sm:$0xff]
    %v8102 = vld [vmem:[#allocation7 + $0x240] sm:$0xff]
    %v8103 = vld [vmem:[#allocation7 + $0x248] sm:$0xff]
    %v8104 = vld [vmem:[#allocation7 + $0x250] sm:$0xff]
    %v8105 = vld [vmem:[#allocation7 + $0x258] sm:$0xff]
    %v8106 = vld [vmem:[#allocation7 + $0x260] sm:$0xff]
    %v8107 = vld [vmem:[#allocation7 + $0x268] sm:$0xff]
    %v8108 = vld [vmem:[#allocation7 + $0x270] sm:$0xff]
    %v8109 = vld [vmem:[#allocation7 + $0x278] sm:$0xff]
    %v8110 = vld [vmem:[#allocation7 + $0x280] sm:$0xff]
    %v8111 = vld [vmem:[#allocation7 + $0x288] sm:$0xff]
    %v8112 = vld [vmem:[#allocation7 + $0x290] sm:$0xff]
    %v8113 = vld [vmem:[#allocation7 + $0x298] sm:$0xff]
    %v8114 = vld [vmem:[#allocation7 + $0x2a0] sm:$0xff]
    %v8115 = vld [vmem:[#allocation7 + $0x2a8] sm:$0xff]
    %v8116 = vld [vmem:[#allocation7 + $0x2b0] sm:$0xff]
    %v8117 = vld [vmem:[#allocation7 + $0x2b8] sm:$0xff]
    %v8118 = vld [vmem:[#allocation7 + $0x2c0] sm:$0xff]
    %v8119 = vld [vmem:[#allocation7 + $0x2c8] sm:$0xff]
    %v8120 = vld [vmem:[#allocation7 + $0x2d0] sm:$0xff]
    %v8121 = vld [vmem:[#allocation7 + $0x2d8] sm:$0xff]
    %v8122 = vld [vmem:[#allocation7 + $0x2e0] sm:$0xff]
    %v8123 = vld [vmem:[#allocation7 + $0x2e8] sm:$0xff]
    %v8124 = vld [vmem:[#allocation7 + $0x2f0] sm:$0xff]
    %v8125 = vld [vmem:[#allocation7 + $0x2f8] sm:$0xff]
    %v8126 = vld [vmem:[#allocation7 + $0x300] sm:$0xff]
    %v8127 = vld [vmem:[#allocation7 + $0x308] sm:$0xff]
    %v8128 = vld [vmem:[#allocation7 + $0x310] sm:$0xff]
    %v8129 = vld [vmem:[#allocation7 + $0x318] sm:$0xff]
    %v8130 = vld [vmem:[#allocation7 + $0x320] sm:$0xff]
    %v8131 = vld [vmem:[#allocation7 + $0x328] sm:$0xff]
    %v8132 = vld [vmem:[#allocation7 + $0x330] sm:$0xff]
    %v8133 = vld [vmem:[#allocation7 + $0x338] sm:$0xff]
    %v8134 = vld [vmem:[#allocation7 + $0x340] sm:$0xff]
    %v8135 = vld [vmem:[#allocation7 + $0x348] sm:$0xff]
    %v8136 = vld [vmem:[#allocation7 + $0x350] sm:$0xff]
    %v8137 = vld [vmem:[#allocation7 + $0x358] sm:$0xff]
    %v8138 = vld [vmem:[#allocation7 + $0x360] sm:$0xff]
    %v8139 = vld [vmem:[#allocation7 + $0x368] sm:$0xff]
    %v8140 = vld [vmem:[#allocation7 + $0x370] sm:$0xff]
    %v8141 = vld [vmem:[#allocation7 + $0x378] sm:$0xff]
    %v8142 = vld [vmem:[#allocation7 + $0x380] sm:$0xff]
    %v8143 = vld [vmem:[#allocation7 + $0x388] sm:$0xff]
    %v8144 = vld [vmem:[#allocation7 + $0x390] sm:$0xff]
    %v8145 = vld [vmem:[#allocation7 + $0x398] sm:$0xff]
    %v8146 = vld [vmem:[#allocation7 + $0x3a0] sm:$0xff]
    %v8147 = vld [vmem:[#allocation7 + $0x3a8] sm:$0xff]
    %v8148 = vld [vmem:[#allocation7 + $0x3b0] sm:$0xff]
    %v8149 = vld [vmem:[#allocation7 + $0x3b8] sm:$0xff]
    %v8150 = vld [vmem:[#allocation7 + $0x3c0] sm:$0xff]
    %v8151 = vld [vmem:[#allocation7 + $0x3c8] sm:$0xff]
    %v8152 = vld [vmem:[#allocation7 + $0x3d0] sm:$0xff]
    %v8153 = vld [vmem:[#allocation7 + $0x3d8] sm:$0xff]
    %v8154 = vld [vmem:[#allocation7 + $0x3e0] sm:$0xff]
    %v8155 = vld [vmem:[#allocation7 + $0x3e8] sm:$0xff]
    %v8156 = vld [vmem:[#allocation7 + $0x3f0] sm:$0xff]
    %v8157 = vld [vmem:[#allocation7 + $0x3f8] sm:$0xff]
    %v8158 = vld [vmem:[#allocation7 + $0x400] sm:$0xff]
    %v8159 = vld [vmem:[#allocation7 + $0x408] sm:$0xff]
    %v8160 = vld [vmem:[#allocation7 + $0x410] sm:$0xff]
    %v8161 = vld [vmem:[#allocation7 + $0x418] sm:$0xff]
    %v8162 = vld [vmem:[#allocation7 + $0x420] sm:$0xff]
    %v8163 = vld [vmem:[#allocation7 + $0x428] sm:$0xff]
    %v8164 = vld [vmem:[#allocation7 + $0x430] sm:$0xff]
    %v8165 = vld [vmem:[#allocation7 + $0x438] sm:$0xff]
    %v8166 = vld [vmem:[#allocation7 + $0x440] sm:$0xff]
    %v8167 = vld [vmem:[#allocation7 + $0x448] sm:$0xff]
    %v8168 = vld [vmem:[#allocation7 + $0x450] sm:$0xff]
    %v8169 = vld [vmem:[#allocation7 + $0x458] sm:$0xff]
    %v8170 = vld [vmem:[#allocation7 + $0x460] sm:$0xff]
    %v8171 = vld [vmem:[#allocation7 + $0x468] sm:$0xff]
    %v8172 = vld [vmem:[#allocation7 + $0x470] sm:$0xff]
    %v8173 = vld [vmem:[#allocation7 + $0x478] sm:$0xff]
    %v8174 = vld [vmem:[#allocation7 + $0x480] sm:$0xff]
    %v8175 = vld [vmem:[#allocation7 + $0x488] sm:$0xff]
    %v8176 = vld [vmem:[#allocation7 + $0x490] sm:$0xff]
    %v8177 = vld [vmem:[#allocation7 + $0x498] sm:$0xff]
    %v8178 = vld [vmem:[#allocation7 + $0x4a0] sm:$0xff]
    %v8179 = vld [vmem:[#allocation7 + $0x4a8] sm:$0xff]
    %v8180 = vld [vmem:[#allocation7 + $0x4b0] sm:$0xff]
    %v8181 = vld [vmem:[#allocation7 + $0x4b8] sm:$0xff]
    %v8182 = vld [vmem:[#allocation7 + $0x4c0] sm:$0xff]
    %v8183 = vld [vmem:[#allocation7 + $0x4c8] sm:$0xff]
    %v8184 = vld [vmem:[#allocation7 + $0x4d0] sm:$0xff]
    %v8185 = vld [vmem:[#allocation7 + $0x4d8] sm:$0xff]
    %v8186 = vld [vmem:[#allocation7 + $0x4e0] sm:$0xff]
    %v8187 = vld [vmem:[#allocation7 + $0x4e8] sm:$0xff]
    %v8188 = vld [vmem:[#allocation7 + $0x4f0] sm:$0xff]
    %v8189 = vld [vmem:[#allocation7 + $0x4f8] sm:$0xff]
    %v8190 = vld [vmem:[#allocation7 + $0x500] sm:$0xff]
    %v8191 = vld [vmem:[#allocation7 + $0x508] sm:$0xff]
    %v8192 = vld [vmem:[#allocation7 + $0x510] sm:$0xff]
    %v8193 = vld [vmem:[#allocation7 + $0x518] sm:$0xff]
    %v8194 = vld [vmem:[#allocation7 + $0x520] sm:$0xff]
    %v8195 = vld [vmem:[#allocation7 + $0x528] sm:$0xff]
    %v8196 = vld [vmem:[#allocation7 + $0x530] sm:$0xff]
    %v8197 = vld [vmem:[#allocation7 + $0x538] sm:$0xff]
    %v8198 = vld [vmem:[#allocation7 + $0x540] sm:$0xff]
    %v8199 = vld [vmem:[#allocation7 + $0x548] sm:$0xff]
    %v8200 = vld [vmem:[#allocation7 + $0x550] sm:$0xff]
    %v8201 = vld [vmem:[#allocation7 + $0x558] sm:$0xff]
    %v8202 = vld [vmem:[#allocation7 + $0x560] sm:$0xff]
    %v8203 = vld [vmem:[#allocation7 + $0x568] sm:$0xff]
    %v8204 = vld [vmem:[#allocation7 + $0x570] sm:$0xff]
    %v8205 = vld [vmem:[#allocation7 + $0x578] sm:$0xff]
    %v8206 = vld [vmem:[#allocation7 + $0x580] sm:$0xff]
    %v8207 = vld [vmem:[#allocation7 + $0x588] sm:$0xff]
    %v8208 = vld [vmem:[#allocation7 + $0x590] sm:$0xff]
    %v8209 = vld [vmem:[#allocation7 + $0x598] sm:$0xff]
    %v8210 = vld [vmem:[#allocation7 + $0x5a0] sm:$0xff]
    %v8211 = vld [vmem:[#allocation7 + $0x5a8] sm:$0xff]
    %v8212 = vld [vmem:[#allocation7 + $0x5b0] sm:$0xff]
    %v8213 = vld [vmem:[#allocation7 + $0x5b8] sm:$0xff]
    %v8214 = vld [vmem:[#allocation7 + $0x5c0] sm:$0xff]
    %v8215 = vld [vmem:[#allocation7 + $0x5c8] sm:$0xff]
    %v8216 = vld [vmem:[#allocation7 + $0x5d0] sm:$0xff]
    %v8217 = vld [vmem:[#allocation7 + $0x5d8] sm:$0xff]
    %v8218 = vld [vmem:[#allocation7 + $0x5e0] sm:$0xff]
    %v8219 = vld [vmem:[#allocation7 + $0x5e8] sm:$0xff]
    %v8220 = vld [vmem:[#allocation7 + $0x5f0] sm:$0xff]
    %v8221 = vld [vmem:[#allocation7 + $0x5f8] sm:$0xff]
    %v8222 = vld [vmem:[#allocation7 + $0x600] sm:$0xff]
    %v8223 = vld [vmem:[#allocation7 + $0x608] sm:$0xff]
    %v8224 = vld [vmem:[#allocation7 + $0x610] sm:$0xff]
    %v8225 = vld [vmem:[#allocation7 + $0x618] sm:$0xff]
    %v8226 = vld [vmem:[#allocation7 + $0x620] sm:$0xff]
    %v8227 = vld [vmem:[#allocation7 + $0x628] sm:$0xff]
    %v8228 = vld [vmem:[#allocation7 + $0x630] sm:$0xff]
    %v8229 = vld [vmem:[#allocation7 + $0x638] sm:$0xff]
    %v8230 = vld [vmem:[#allocation7 + $0x640] sm:$0xff]
    %v8231 = vld [vmem:[#allocation7 + $0x648] sm:$0xff]
    %v8232 = vld [vmem:[#allocation7 + $0x650] sm:$0xff]
    %v8233 = vld [vmem:[#allocation7 + $0x658] sm:$0xff]
    %v8234 = vld [vmem:[#allocation7 + $0x660] sm:$0xff]
    %v8235 = vld [vmem:[#allocation7 + $0x668] sm:$0xff]
    %v8236 = vld [vmem:[#allocation7 + $0x670] sm:$0xff]
    %v8237 = vld [vmem:[#allocation7 + $0x678] sm:$0xff]
    %v8238 = vld [vmem:[#allocation7 + $0x680] sm:$0xff]
    %v8239 = vld [vmem:[#allocation7 + $0x688] sm:$0xff]
    %v8240 = vld [vmem:[#allocation7 + $0x690] sm:$0xff]
    %v8241 = vld [vmem:[#allocation7 + $0x698] sm:$0xff]
    %v8242 = vld [vmem:[#allocation7 + $0x6a0] sm:$0xff]
    %v8243 = vld [vmem:[#allocation7 + $0x6a8] sm:$0xff]
    %v8244 = vld [vmem:[#allocation7 + $0x6b0] sm:$0xff]
    %v8245 = vld [vmem:[#allocation7 + $0x6b8] sm:$0xff]
    %v8246 = vld [vmem:[#allocation7 + $0x6c0] sm:$0xff]
    %v8247 = vld [vmem:[#allocation7 + $0x6c8] sm:$0xff]
    %v8248 = vld [vmem:[#allocation7 + $0x6d0] sm:$0xff]
    %v8249 = vld [vmem:[#allocation7 + $0x6d8] sm:$0xff]
    %v8250 = vld [vmem:[#allocation7 + $0x6e0] sm:$0xff]
    %v8251 = vld [vmem:[#allocation7 + $0x6e8] sm:$0xff]
    %v8252 = vld [vmem:[#allocation7 + $0x6f0] sm:$0xff]
    %v8253 = vld [vmem:[#allocation7 + $0x6f8] sm:$0xff]
    %v8254 = vld [vmem:[#allocation7 + $0x700] sm:$0xff]
    %v8255 = vld [vmem:[#allocation7 + $0x708] sm:$0xff]
    %v8256 = vld [vmem:[#allocation7 + $0x710] sm:$0xff]
    %v8257 = vld [vmem:[#allocation7 + $0x718] sm:$0xff]
    %v8258 = vld [vmem:[#allocation7 + $0x720] sm:$0xff]
    %v8259 = vld [vmem:[#allocation7 + $0x728] sm:$0xff]
    %v8260 = vld [vmem:[#allocation7 + $0x730] sm:$0xff]
    %v8261 = vld [vmem:[#allocation7 + $0x738] sm:$0xff]
    %v8262 = vld [vmem:[#allocation7 + $0x740] sm:$0xff]
    %v8263 = vld [vmem:[#allocation7 + $0x748] sm:$0xff]
    %v8264 = vld [vmem:[#allocation7 + $0x750] sm:$0xff]
    %v8265 = vld [vmem:[#allocation7 + $0x758] sm:$0xff]
    %v8266 = vld [vmem:[#allocation7 + $0x760] sm:$0xff]
    %v8267 = vld [vmem:[#allocation7 + $0x768] sm:$0xff]
    %v8268 = vld [vmem:[#allocation7 + $0x770] sm:$0xff]
    %v8269 = vld [vmem:[#allocation7 + $0x778] sm:$0xff]
    %v8270 = vld [vmem:[#allocation7 + $0x780] sm:$0xff]
    %v8271 = vld [vmem:[#allocation7 + $0x788] sm:$0xff]
    %v8272 = vld [vmem:[#allocation7 + $0x790] sm:$0xff]
    %v8273 = vld [vmem:[#allocation7 + $0x798] sm:$0xff]
    %v8274 = vld [vmem:[#allocation7 + $0x7a0] sm:$0xff]
    %v8275 = vld [vmem:[#allocation7 + $0x7a8] sm:$0xff]
    %v8276 = vld [vmem:[#allocation7 + $0x7b0] sm:$0xff]
    %v8277 = vld [vmem:[#allocation7 + $0x7b8] sm:$0xff]
    %v8278 = vld [vmem:[#allocation7 + $0x7c0] sm:$0xff]
    %v8279 = vld [vmem:[#allocation7 + $0x7c8] sm:$0xff]
    %v8280 = vld [vmem:[#allocation7 + $0x7d0] sm:$0xff]
    %v8281 = vld [vmem:[#allocation7 + $0x7d8] sm:$0xff]
    %v8282 = vld [vmem:[#allocation7 + $0x7e0] sm:$0xff]
    %v8283 = vld [vmem:[#allocation7 + $0x7e8] sm:$0xff]
    %v8284 = vld [vmem:[#allocation7 + $0x7f0] sm:$0xff]
    %v8285 = vld [vmem:[#allocation7 + $0x7f8] sm:$0xff]
    %v8286 = vld [vmem:[#allocation8] sm:$0xff]
    %v8288 = vperm.slane %v8286, 0
    %v8289 = vperm.slane %v8286, 1
    %v8290 = vperm.slane %v8286, 2
    %v8291 = vperm.slane %v8286, 3
    %v8292 = vperm.slane %v8286, 4
    %v8293 = vperm.slane %v8286, 5
    %v8294 = vperm.slane %v8286, 6
    %v8295 = vperm.slane %v8286, 7
    %v8560 = vunpack.c.l.b16 %v8030
    %v8561 = vunpack.c.h.b16 %v8030
    %v8562 = vunpack.c.l.b16 %v8031
    %v8563 = vunpack.c.h.b16 %v8031
    %v8564 = vunpack.c.l.b16 %v8032
    %v8565 = vunpack.c.h.b16 %v8032
    %v8566 = vunpack.c.l.b16 %v8033
    %v8567 = vunpack.c.h.b16 %v8033
    %v8568 = vunpack.c.l.b16 %v8034
    %v8569 = vunpack.c.h.b16 %v8034
    %v8570 = vunpack.c.l.b16 %v8035
    %v8571 = vunpack.c.h.b16 %v8035
    %v8572 = vunpack.c.l.b16 %v8036
    %v8573 = vunpack.c.h.b16 %v8036
    %v8574 = vunpack.c.l.b16 %v8037
    %v8575 = vunpack.c.h.b16 %v8037
    %v8576 = vunpack.c.l.b16 %v8038
    %v8577 = vunpack.c.h.b16 %v8038
    %v8578 = vunpack.c.l.b16 %v8039
    %v8579 = vunpack.c.h.b16 %v8039
    %v8580 = vunpack.c.l.b16 %v8040
    %v8581 = vunpack.c.h.b16 %v8040
    %v8582 = vunpack.c.l.b16 %v8041
    %v8583 = vunpack.c.h.b16 %v8041
    %v8584 = vunpack.c.l.b16 %v8042
    %v8585 = vunpack.c.h.b16 %v8042
    %v8586 = vunpack.c.l.b16 %v8043
    %v8587 = vunpack.c.h.b16 %v8043
    %v8588 = vunpack.c.l.b16 %v8044
    %v8589 = vunpack.c.h.b16 %v8044
    %v8590 = vunpack.c.l.b16 %v8045
    %v8591 = vunpack.c.h.b16 %v8045
    %v8592 = vunpack.c.l.b16 %v8046
    %v8593 = vunpack.c.h.b16 %v8046
    %v8594 = vunpack.c.l.b16 %v8047
    %v8595 = vunpack.c.h.b16 %v8047
    %v8596 = vunpack.c.l.b16 %v8048
    %v8597 = vunpack.c.h.b16 %v8048
    %v8598 = vunpack.c.l.b16 %v8049
    %v8599 = vunpack.c.h.b16 %v8049
    %v8600 = vunpack.c.l.b16 %v8050
    %v8601 = vunpack.c.h.b16 %v8050
    %v8602 = vunpack.c.l.b16 %v8051
    %v8603 = vunpack.c.h.b16 %v8051
    %v8604 = vunpack.c.l.b16 %v8052
    %v8605 = vunpack.c.h.b16 %v8052
    %v8606 = vunpack.c.l.b16 %v8053
    %v8607 = vunpack.c.h.b16 %v8053
    %v8608 = vunpack.c.l.b16 %v8054
    %v8609 = vunpack.c.h.b16 %v8054
    %v8610 = vunpack.c.l.b16 %v8055
    %v8611 = vunpack.c.h.b16 %v8055
    %v8612 = vunpack.c.l.b16 %v8056
    %v8613 = vunpack.c.h.b16 %v8056
    %v8614 = vunpack.c.l.b16 %v8057
    %v8615 = vunpack.c.h.b16 %v8057
    %v8616 = vunpack.c.l.b16 %v8058
    %v8617 = vunpack.c.h.b16 %v8058
    %v8618 = vunpack.c.l.b16 %v8059
    %v8619 = vunpack.c.h.b16 %v8059
    %v8620 = vunpack.c.l.b16 %v8060
    %v8621 = vunpack.c.h.b16 %v8060
    %v8622 = vunpack.c.l.b16 %v8061
    %v8623 = vunpack.c.h.b16 %v8061
    %v8624 = vunpack.c.l.b16 %v8062
    %v8625 = vunpack.c.h.b16 %v8062
    %v8626 = vunpack.c.l.b16 %v8063
    %v8627 = vunpack.c.h.b16 %v8063
    %v8628 = vunpack.c.l.b16 %v8064
    %v8629 = vunpack.c.h.b16 %v8064
    %v8630 = vunpack.c.l.b16 %v8065
    %v8631 = vunpack.c.h.b16 %v8065
    %v8632 = vunpack.c.l.b16 %v8066
    %v8633 = vunpack.c.h.b16 %v8066
    %v8634 = vunpack.c.l.b16 %v8067
    %v8635 = vunpack.c.h.b16 %v8067
    %v8636 = vunpack.c.l.b16 %v8068
    %v8637 = vunpack.c.h.b16 %v8068
    %v8638 = vunpack.c.l.b16 %v8069
    %v8639 = vunpack.c.h.b16 %v8069
    %v8640 = vunpack.c.l.b16 %v8070
    %v8641 = vunpack.c.h.b16 %v8070
    %v8642 = vunpack.c.l.b16 %v8071
    %v8643 = vunpack.c.h.b16 %v8071
    %v8644 = vunpack.c.l.b16 %v8072
    %v8645 = vunpack.c.h.b16 %v8072
    %v8646 = vunpack.c.l.b16 %v8073
    %v8647 = vunpack.c.h.b16 %v8073
    %v8648 = vunpack.c.l.b16 %v8074
    %v8649 = vunpack.c.h.b16 %v8074
    %v8650 = vunpack.c.l.b16 %v8075
    %v8651 = vunpack.c.h.b16 %v8075
    %v8652 = vunpack.c.l.b16 %v8076
    %v8653 = vunpack.c.h.b16 %v8076
    %v8654 = vunpack.c.l.b16 %v8077
    %v8655 = vunpack.c.h.b16 %v8077
    %v8656 = vunpack.c.l.b16 %v8078
    %v8657 = vunpack.c.h.b16 %v8078
    %v8658 = vunpack.c.l.b16 %v8079
    %v8659 = vunpack.c.h.b16 %v8079
    %v8660 = vunpack.c.l.b16 %v8080
    %v8661 = vunpack.c.h.b16 %v8080
    %v8662 = vunpack.c.l.b16 %v8081
    %v8663 = vunpack.c.h.b16 %v8081
    %v8664 = vunpack.c.l.b16 %v8082
    %v8665 = vunpack.c.h.b16 %v8082
    %v8666 = vunpack.c.l.b16 %v8083
    %v8667 = vunpack.c.h.b16 %v8083
    %v8668 = vunpack.c.l.b16 %v8084
    %v8669 = vunpack.c.h.b16 %v8084
    %v8670 = vunpack.c.l.b16 %v8085
    %v8671 = vunpack.c.h.b16 %v8085
    %v8672 = vunpack.c.l.b16 %v8086
    %v8673 = vunpack.c.h.b16 %v8086
    %v8674 = vunpack.c.l.b16 %v8087
    %v8675 = vunpack.c.h.b16 %v8087
    %v8676 = vunpack.c.l.b16 %v8088
    %v8677 = vunpack.c.h.b16 %v8088
    %v8678 = vunpack.c.l.b16 %v8089
    %v8679 = vunpack.c.h.b16 %v8089
    %v8680 = vunpack.c.l.b16 %v8090
    %v8681 = vunpack.c.h.b16 %v8090
    %v8682 = vunpack.c.l.b16 %v8091
    %v8683 = vunpack.c.h.b16 %v8091
    %v8684 = vunpack.c.l.b16 %v8092
    %v8685 = vunpack.c.h.b16 %v8092
    %v8686 = vunpack.c.l.b16 %v8093
    %v8687 = vunpack.c.h.b16 %v8093
    %v8688 = vunpack.c.l.b16 %v8094
    %v8689 = vunpack.c.h.b16 %v8094
    %v8690 = vunpack.c.l.b16 %v8095
    %v8691 = vunpack.c.h.b16 %v8095
    %v8692 = vunpack.c.l.b16 %v8096
    %v8693 = vunpack.c.h.b16 %v8096
    %v8694 = vunpack.c.l.b16 %v8097
    %v8695 = vunpack.c.h.b16 %v8097
    %v8696 = vunpack.c.l.b16 %v8098
    %v8697 = vunpack.c.h.b16 %v8098
    %v8698 = vunpack.c.l.b16 %v8099
    %v8699 = vunpack.c.h.b16 %v8099
    %v8700 = vunpack.c.l.b16 %v8100
    %v8701 = vunpack.c.h.b16 %v8100
    %v8702 = vunpack.c.l.b16 %v8101
    %v8703 = vunpack.c.h.b16 %v8101
    %v8704 = vunpack.c.l.b16 %v8102
    %v8705 = vunpack.c.h.b16 %v8102
    %v8706 = vunpack.c.l.b16 %v8103
    %v8707 = vunpack.c.h.b16 %v8103
    %v8708 = vunpack.c.l.b16 %v8104
    %v8709 = vunpack.c.h.b16 %v8104
    %v8710 = vunpack.c.l.b16 %v8105
    %v8711 = vunpack.c.h.b16 %v8105
    %v8712 = vunpack.c.l.b16 %v8106
    %v8713 = vunpack.c.h.b16 %v8106
    %v8714 = vunpack.c.l.b16 %v8107
    %v8715 = vunpack.c.h.b16 %v8107
    %v8716 = vunpack.c.l.b16 %v8108
    %v8717 = vunpack.c.h.b16 %v8108
    %v8718 = vunpack.c.l.b16 %v8109
    %v8719 = vunpack.c.h.b16 %v8109
    %v8720 = vunpack.c.l.b16 %v8110
    %v8721 = vunpack.c.h.b16 %v8110
    %v8722 = vunpack.c.l.b16 %v8111
    %v8723 = vunpack.c.h.b16 %v8111
    %v8724 = vunpack.c.l.b16 %v8112
    %v8725 = vunpack.c.h.b16 %v8112
    %v8726 = vunpack.c.l.b16 %v8113
    %v8727 = vunpack.c.h.b16 %v8113
    %v8728 = vunpack.c.l.b16 %v8114
    %v8729 = vunpack.c.h.b16 %v8114
    %v8730 = vunpack.c.l.b16 %v8115
    %v8731 = vunpack.c.h.b16 %v8115
    %v8732 = vunpack.c.l.b16 %v8116
    %v8733 = vunpack.c.h.b16 %v8116
    %v8734 = vunpack.c.l.b16 %v8117
    %v8735 = vunpack.c.h.b16 %v8117
    %v8736 = vunpack.c.l.b16 %v8118
    %v8737 = vunpack.c.h.b16 %v8118
    %v8738 = vunpack.c.l.b16 %v8119
    %v8739 = vunpack.c.h.b16 %v8119
    %v8740 = vunpack.c.l.b16 %v8120
    %v8741 = vunpack.c.h.b16 %v8120
    %v8742 = vunpack.c.l.b16 %v8121
    %v8743 = vunpack.c.h.b16 %v8121
    %v8744 = vunpack.c.l.b16 %v8122
    %v8745 = vunpack.c.h.b16 %v8122
    %v8746 = vunpack.c.l.b16 %v8123
    %v8747 = vunpack.c.h.b16 %v8123
    %v8748 = vunpack.c.l.b16 %v8124
    %v8749 = vunpack.c.h.b16 %v8124
    %v8750 = vunpack.c.l.b16 %v8125
    %v8751 = vunpack.c.h.b16 %v8125
    %v8752 = vunpack.c.l.b16 %v8126
    %v8753 = vunpack.c.h.b16 %v8126
    %v8754 = vunpack.c.l.b16 %v8127
    %v8755 = vunpack.c.h.b16 %v8127
    %v8756 = vunpack.c.l.b16 %v8128
    %v8757 = vunpack.c.h.b16 %v8128
    %v8758 = vunpack.c.l.b16 %v8129
    %v8759 = vunpack.c.h.b16 %v8129
    %v8760 = vunpack.c.l.b16 %v8130
    %v8761 = vunpack.c.h.b16 %v8130
    %v8762 = vunpack.c.l.b16 %v8131
    %v8763 = vunpack.c.h.b16 %v8131
    %v8764 = vunpack.c.l.b16 %v8132
    %v8765 = vunpack.c.h.b16 %v8132
    %v8766 = vunpack.c.l.b16 %v8133
    %v8767 = vunpack.c.h.b16 %v8133
    %v8768 = vunpack.c.l.b16 %v8134
    %v8769 = vunpack.c.h.b16 %v8134
    %v8770 = vunpack.c.l.b16 %v8135
    %v8771 = vunpack.c.h.b16 %v8135
    %v8772 = vunpack.c.l.b16 %v8136
    %v8773 = vunpack.c.h.b16 %v8136
    %v8774 = vunpack.c.l.b16 %v8137
    %v8775 = vunpack.c.h.b16 %v8137
    %v8776 = vunpack.c.l.b16 %v8138
    %v8777 = vunpack.c.h.b16 %v8138
    %v8778 = vunpack.c.l.b16 %v8139
    %v8779 = vunpack.c.h.b16 %v8139
    %v8780 = vunpack.c.l.b16 %v8140
    %v8781 = vunpack.c.h.b16 %v8140
    %v8782 = vunpack.c.l.b16 %v8141
    %v8783 = vunpack.c.h.b16 %v8141
    %v8784 = vunpack.c.l.b16 %v8142
    %v8785 = vunpack.c.h.b16 %v8142
    %v8786 = vunpack.c.l.b16 %v8143
    %v8787 = vunpack.c.h.b16 %v8143
    %v8788 = vunpack.c.l.b16 %v8144
    %v8789 = vunpack.c.h.b16 %v8144
    %v8790 = vunpack.c.l.b16 %v8145
    %v8791 = vunpack.c.h.b16 %v8145
    %v8792 = vunpack.c.l.b16 %v8146
    %v8793 = vunpack.c.h.b16 %v8146
    %v8794 = vunpack.c.l.b16 %v8147
    %v8795 = vunpack.c.h.b16 %v8147
    %v8796 = vunpack.c.l.b16 %v8148
    %v8797 = vunpack.c.h.b16 %v8148
    %v8798 = vunpack.c.l.b16 %v8149
    %v8799 = vunpack.c.h.b16 %v8149
    %v8800 = vunpack.c.l.b16 %v8150
    %v8801 = vunpack.c.h.b16 %v8150
    %v8802 = vunpack.c.l.b16 %v8151
    %v8803 = vunpack.c.h.b16 %v8151
    %v8804 = vunpack.c.l.b16 %v8152
    %v8805 = vunpack.c.h.b16 %v8152
    %v8806 = vunpack.c.l.b16 %v8153
    %v8807 = vunpack.c.h.b16 %v8153
    %v8808 = vunpack.c.l.b16 %v8154
    %v8809 = vunpack.c.h.b16 %v8154
    %v8810 = vunpack.c.l.b16 %v8155
    %v8811 = vunpack.c.h.b16 %v8155
    %v8812 = vunpack.c.l.b16 %v8156
    %v8813 = vunpack.c.h.b16 %v8156
    %v8814 = vunpack.c.l.b16 %v8157
    %v8815 = vunpack.c.h.b16 %v8157
    %v8816 = vunpack.c.l.b16 %v8158
    %v8817 = vunpack.c.h.b16 %v8158
    %v8818 = vunpack.c.l.b16 %v8159
    %v8819 = vunpack.c.h.b16 %v8159
    %v8820 = vunpack.c.l.b16 %v8160
    %v8821 = vunpack.c.h.b16 %v8160
    %v8822 = vunpack.c.l.b16 %v8161
    %v8823 = vunpack.c.h.b16 %v8161
    %v8824 = vunpack.c.l.b16 %v8162
    %v8825 = vunpack.c.h.b16 %v8162
    %v8826 = vunpack.c.l.b16 %v8163
    %v8827 = vunpack.c.h.b16 %v8163
    %v8828 = vunpack.c.l.b16 %v8164
    %v8829 = vunpack.c.h.b16 %v8164
    %v8830 = vunpack.c.l.b16 %v8165
    %v8831 = vunpack.c.h.b16 %v8165
    %v8832 = vunpack.c.l.b16 %v8166
    %v8833 = vunpack.c.h.b16 %v8166
    %v8834 = vunpack.c.l.b16 %v8167
    %v8835 = vunpack.c.h.b16 %v8167
    %v8836 = vunpack.c.l.b16 %v8168
    %v8837 = vunpack.c.h.b16 %v8168
    %v8838 = vunpack.c.l.b16 %v8169
    %v8839 = vunpack.c.h.b16 %v8169
    %v8840 = vunpack.c.l.b16 %v8170
    %v8841 = vunpack.c.h.b16 %v8170
    %v8842 = vunpack.c.l.b16 %v8171
    %v8843 = vunpack.c.h.b16 %v8171
    %v8844 = vunpack.c.l.b16 %v8172
    %v8845 = vunpack.c.h.b16 %v8172
    %v8846 = vunpack.c.l.b16 %v8173
    %v8847 = vunpack.c.h.b16 %v8173
    %v8848 = vunpack.c.l.b16 %v8174
    %v8849 = vunpack.c.h.b16 %v8174
    %v8850 = vunpack.c.l.b16 %v8175
    %v8851 = vunpack.c.h.b16 %v8175
    %v8852 = vunpack.c.l.b16 %v8176
    %v8853 = vunpack.c.h.b16 %v8176
    %v8854 = vunpack.c.l.b16 %v8177
    %v8855 = vunpack.c.h.b16 %v8177
    %v8856 = vunpack.c.l.b16 %v8178
    %v8857 = vunpack.c.h.b16 %v8178
    %v8858 = vunpack.c.l.b16 %v8179
    %v8859 = vunpack.c.h.b16 %v8179
    %v8860 = vunpack.c.l.b16 %v8180
    %v8861 = vunpack.c.h.b16 %v8180
    %v8862 = vunpack.c.l.b16 %v8181
    %v8863 = vunpack.c.h.b16 %v8181
    %v8864 = vunpack.c.l.b16 %v8182
    %v8865 = vunpack.c.h.b16 %v8182
    %v8866 = vunpack.c.l.b16 %v8183
    %v8867 = vunpack.c.h.b16 %v8183
    %v8868 = vunpack.c.l.b16 %v8184
    %v8869 = vunpack.c.h.b16 %v8184
    %v8870 = vunpack.c.l.b16 %v8185
    %v8871 = vunpack.c.h.b16 %v8185
    %v8872 = vunpack.c.l.b16 %v8186
    %v8873 = vunpack.c.h.b16 %v8186
    %v8874 = vunpack.c.l.b16 %v8187
    %v8875 = vunpack.c.h.b16 %v8187
    %v8876 = vunpack.c.l.b16 %v8188
    %v8877 = vunpack.c.h.b16 %v8188
    %v8878 = vunpack.c.l.b16 %v8189
    %v8879 = vunpack.c.h.b16 %v8189
    %v8880 = vunpack.c.l.b16 %v8190
    %v8881 = vunpack.c.h.b16 %v8190
    %v8882 = vunpack.c.l.b16 %v8191
    %v8883 = vunpack.c.h.b16 %v8191
    %v8884 = vunpack.c.l.b16 %v8192
    %v8885 = vunpack.c.h.b16 %v8192
    %v8886 = vunpack.c.l.b16 %v8193
    %v8887 = vunpack.c.h.b16 %v8193
    %v8888 = vunpack.c.l.b16 %v8194
    %v8889 = vunpack.c.h.b16 %v8194
    %v8890 = vunpack.c.l.b16 %v8195
    %v8891 = vunpack.c.h.b16 %v8195
    %v8892 = vunpack.c.l.b16 %v8196
    %v8893 = vunpack.c.h.b16 %v8196
    %v8894 = vunpack.c.l.b16 %v8197
    %v8895 = vunpack.c.h.b16 %v8197
    %v8896 = vunpack.c.l.b16 %v8198
    %v8897 = vunpack.c.h.b16 %v8198
    %v8898 = vunpack.c.l.b16 %v8199
    %v8899 = vunpack.c.h.b16 %v8199
    %v8900 = vunpack.c.l.b16 %v8200
    %v8901 = vunpack.c.h.b16 %v8200
    %v8902 = vunpack.c.l.b16 %v8201
    %v8903 = vunpack.c.h.b16 %v8201
    %v8904 = vunpack.c.l.b16 %v8202
    %v8905 = vunpack.c.h.b16 %v8202
    %v8906 = vunpack.c.l.b16 %v8203
    %v8907 = vunpack.c.h.b16 %v8203
    %v8908 = vunpack.c.l.b16 %v8204
    %v8909 = vunpack.c.h.b16 %v8204
    %v8910 = vunpack.c.l.b16 %v8205
    %v8911 = vunpack.c.h.b16 %v8205
    %v8912 = vunpack.c.l.b16 %v8206
    %v8913 = vunpack.c.h.b16 %v8206
    %v8914 = vunpack.c.l.b16 %v8207
    %v8915 = vunpack.c.h.b16 %v8207
    %v8916 = vunpack.c.l.b16 %v8208
    %v8917 = vunpack.c.h.b16 %v8208
    %v8918 = vunpack.c.l.b16 %v8209
    %v8919 = vunpack.c.h.b16 %v8209
    %v8920 = vunpack.c.l.b16 %v8210
    %v8921 = vunpack.c.h.b16 %v8210
    %v8922 = vunpack.c.l.b16 %v8211
    %v8923 = vunpack.c.h.b16 %v8211
    %v8924 = vunpack.c.l.b16 %v8212
    %v8925 = vunpack.c.h.b16 %v8212
    %v8926 = vunpack.c.l.b16 %v8213
    %v8927 = vunpack.c.h.b16 %v8213
    %v8928 = vunpack.c.l.b16 %v8214
    %v8929 = vunpack.c.h.b16 %v8214
    %v8930 = vunpack.c.l.b16 %v8215
    %v8931 = vunpack.c.h.b16 %v8215
    %v8932 = vunpack.c.l.b16 %v8216
    %v8933 = vunpack.c.h.b16 %v8216
    %v8934 = vunpack.c.l.b16 %v8217
    %v8935 = vunpack.c.h.b16 %v8217
    %v8936 = vunpack.c.l.b16 %v8218
    %v8937 = vunpack.c.h.b16 %v8218
    %v8938 = vunpack.c.l.b16 %v8219
    %v8939 = vunpack.c.h.b16 %v8219
    %v8940 = vunpack.c.l.b16 %v8220
    %v8941 = vunpack.c.h.b16 %v8220
    %v8942 = vunpack.c.l.b16 %v8221
    %v8943 = vunpack.c.h.b16 %v8221
    %v8944 = vunpack.c.l.b16 %v8222
    %v8945 = vunpack.c.h.b16 %v8222
    %v8946 = vunpack.c.l.b16 %v8223
    %v8947 = vunpack.c.h.b16 %v8223
    %v8948 = vunpack.c.l.b16 %v8224
    %v8949 = vunpack.c.h.b16 %v8224
    %v8950 = vunpack.c.l.b16 %v8225
    %v8951 = vunpack.c.h.b16 %v8225
    %v8952 = vunpack.c.l.b16 %v8226
    %v8953 = vunpack.c.h.b16 %v8226
    %v8954 = vunpack.c.l.b16 %v8227
    %v8955 = vunpack.c.h.b16 %v8227
    %v8956 = vunpack.c.l.b16 %v8228
    %v8957 = vunpack.c.h.b16 %v8228
    %v8958 = vunpack.c.l.b16 %v8229
    %v8959 = vunpack.c.h.b16 %v8229
    %v8960 = vunpack.c.l.b16 %v8230
    %v8961 = vunpack.c.h.b16 %v8230
    %v8962 = vunpack.c.l.b16 %v8231
    %v8963 = vunpack.c.h.b16 %v8231
    %v8964 = vunpack.c.l.b16 %v8232
    %v8965 = vunpack.c.h.b16 %v8232
    %v8966 = vunpack.c.l.b16 %v8233
    %v8967 = vunpack.c.h.b16 %v8233
    %v8968 = vunpack.c.l.b16 %v8234
    %v8969 = vunpack.c.h.b16 %v8234
    %v8970 = vunpack.c.l.b16 %v8235
    %v8971 = vunpack.c.h.b16 %v8235
    %v8972 = vunpack.c.l.b16 %v8236
    %v8973 = vunpack.c.h.b16 %v8236
    %v8974 = vunpack.c.l.b16 %v8237
    %v8975 = vunpack.c.h.b16 %v8237
    %v8976 = vunpack.c.l.b16 %v8238
    %v8977 = vunpack.c.h.b16 %v8238
    %v8978 = vunpack.c.l.b16 %v8239
    %v8979 = vunpack.c.h.b16 %v8239
    %v8980 = vunpack.c.l.b16 %v8240
    %v8981 = vunpack.c.h.b16 %v8240
    %v8982 = vunpack.c.l.b16 %v8241
    %v8983 = vunpack.c.h.b16 %v8241
    %v8984 = vunpack.c.l.b16 %v8242
    %v8985 = vunpack.c.h.b16 %v8242
    %v8986 = vunpack.c.l.b16 %v8243
    %v8987 = vunpack.c.h.b16 %v8243
    %v8988 = vunpack.c.l.b16 %v8244
    %v8989 = vunpack.c.h.b16 %v8244
    %v8990 = vunpack.c.l.b16 %v8245
    %v8991 = vunpack.c.h.b16 %v8245
    %v8992 = vunpack.c.l.b16 %v8246
    %v8993 = vunpack.c.h.b16 %v8246
    %v8994 = vunpack.c.l.b16 %v8247
    %v8995 = vunpack.c.h.b16 %v8247
    %v8996 = vunpack.c.l.b16 %v8248
    %v8997 = vunpack.c.h.b16 %v8248
    %v8998 = vunpack.c.l.b16 %v8249
    %v8999 = vunpack.c.h.b16 %v8249
    %v9000 = vunpack.c.l.b16 %v8250
    %v9001 = vunpack.c.h.b16 %v8250
    %v9002 = vunpack.c.l.b16 %v8251
    %v9003 = vunpack.c.h.b16 %v8251
    %v9004 = vunpack.c.l.b16 %v8252
    %v9005 = vunpack.c.h.b16 %v8252
    %v9006 = vunpack.c.l.b16 %v8253
    %v9007 = vunpack.c.h.b16 %v8253
    %v9008 = vunpack.c.l.b16 %v8254
    %v9009 = vunpack.c.h.b16 %v8254
    %v9010 = vunpack.c.l.b16 %v8255
    %v9011 = vunpack.c.h.b16 %v8255
    %v9012 = vunpack.c.l.b16 %v8256
    %v9013 = vunpack.c.h.b16 %v8256
    %v9014 = vunpack.c.l.b16 %v8257
    %v9015 = vunpack.c.h.b16 %v8257
    %v9016 = vunpack.c.l.b16 %v8258
    %v9017 = vunpack.c.h.b16 %v8258
    %v9018 = vunpack.c.l.b16 %v8259
    %v9019 = vunpack.c.h.b16 %v8259
    %v9020 = vunpack.c.l.b16 %v8260
    %v9021 = vunpack.c.h.b16 %v8260
    %v9022 = vunpack.c.l.b16 %v8261
    %v9023 = vunpack.c.h.b16 %v8261
    %v9024 = vunpack.c.l.b16 %v8262
    %v9025 = vunpack.c.h.b16 %v8262
    %v9026 = vunpack.c.l.b16 %v8263
    %v9027 = vunpack.c.h.b16 %v8263
    %v9028 = vunpack.c.l.b16 %v8264
    %v9029 = vunpack.c.h.b16 %v8264
    %v9030 = vunpack.c.l.b16 %v8265
    %v9031 = vunpack.c.h.b16 %v8265
    %v9032 = vunpack.c.l.b16 %v8266
    %v9033 = vunpack.c.h.b16 %v8266
    %v9034 = vunpack.c.l.b16 %v8267
    %v9035 = vunpack.c.h.b16 %v8267
    %v9036 = vunpack.c.l.b16 %v8268
    %v9037 = vunpack.c.h.b16 %v8268
    %v9038 = vunpack.c.l.b16 %v8269
    %v9039 = vunpack.c.h.b16 %v8269
    %v9040 = vunpack.c.l.b16 %v8270
    %v9041 = vunpack.c.h.b16 %v8270
    %v9042 = vunpack.c.l.b16 %v8271
    %v9043 = vunpack.c.h.b16 %v8271
    %v9044 = vunpack.c.l.b16 %v8272
    %v9045 = vunpack.c.h.b16 %v8272
    %v9046 = vunpack.c.l.b16 %v8273
    %v9047 = vunpack.c.h.b16 %v8273
    %v9048 = vunpack.c.l.b16 %v8274
    %v9049 = vunpack.c.h.b16 %v8274
    %v9050 = vunpack.c.l.b16 %v8275
    %v9051 = vunpack.c.h.b16 %v8275
    %v9052 = vunpack.c.l.b16 %v8276
    %v9053 = vunpack.c.h.b16 %v8276
    %v9054 = vunpack.c.l.b16 %v8277
    %v9055 = vunpack.c.h.b16 %v8277
    %v9056 = vunpack.c.l.b16 %v8278
    %v9057 = vunpack.c.h.b16 %v8278
    %v9058 = vunpack.c.l.b16 %v8279
    %v9059 = vunpack.c.h.b16 %v8279
    %v9060 = vunpack.c.l.b16 %v8280
    %v9061 = vunpack.c.h.b16 %v8280
    %v9062 = vunpack.c.l.b16 %v8281
    %v9063 = vunpack.c.h.b16 %v8281
    %v9064 = vunpack.c.l.b16 %v8282
    %v9065 = vunpack.c.h.b16 %v8282
    %v9066 = vunpack.c.l.b16 %v8283
    %v9067 = vunpack.c.h.b16 %v8283
    %v9068 = vunpack.c.l.b16 %v8284
    %v9069 = vunpack.c.h.b16 %v8284
    %v9070 = vunpack.c.l.b16 %v8285
    %v9071 = vunpack.c.h.b16 %v8285
    %v9072 = vpack.c.b16 %v8568, %v8560
    %v9073 = vpack.c.b16 %v8569, %v8561
    %v9074 = vpack.c.b16 %v8570, %v8562
    %v9075 = vpack.c.b16 %v8571, %v8563
    %v9076 = vpack.c.b16 %v8572, %v8564
    %v9077 = vpack.c.b16 %v8573, %v8565
    %v9078 = vpack.c.b16 %v8574, %v8566
    %v9079 = vpack.c.b16 %v8575, %v8567
    %v9080 = vpack.c.b16 %v8584, %v8576
    %v9081 = vpack.c.b16 %v8585, %v8577
    %v9082 = vpack.c.b16 %v8586, %v8578
    %v9083 = vpack.c.b16 %v8587, %v8579
    %v9084 = vpack.c.b16 %v8588, %v8580
    %v9085 = vpack.c.b16 %v8589, %v8581
    %v9086 = vpack.c.b16 %v8590, %v8582
    %v9087 = vpack.c.b16 %v8591, %v8583
    %v9088 = vpack.c.b16 %v8600, %v8592
    %v9089 = vpack.c.b16 %v8601, %v8593
    %v9090 = vpack.c.b16 %v8602, %v8594
    %v9091 = vpack.c.b16 %v8603, %v8595
    %v9092 = vpack.c.b16 %v8604, %v8596
    %v9093 = vpack.c.b16 %v8605, %v8597
    %v9094 = vpack.c.b16 %v8606, %v8598
    %v9095 = vpack.c.b16 %v8607, %v8599
    %v9096 = vpack.c.b16 %v8616, %v8608
    %v9097 = vpack.c.b16 %v8617, %v8609
    %v9098 = vpack.c.b16 %v8618, %v8610
    %v9099 = vpack.c.b16 %v8619, %v8611
    %v9100 = vpack.c.b16 %v8620, %v8612
    %v9101 = vpack.c.b16 %v8621, %v8613
    %v9102 = vpack.c.b16 %v8622, %v8614
    %v9103 = vpack.c.b16 %v8623, %v8615
    %v9104 = vpack.c.b16 %v8632, %v8624
    %v9105 = vpack.c.b16 %v8633, %v8625
    %v9106 = vpack.c.b16 %v8634, %v8626
    %v9107 = vpack.c.b16 %v8635, %v8627
    %v9108 = vpack.c.b16 %v8636, %v8628
    %v9109 = vpack.c.b16 %v8637, %v8629
    %v9110 = vpack.c.b16 %v8638, %v8630
    %v9111 = vpack.c.b16 %v8639, %v8631
    %v9112 = vpack.c.b16 %v8648, %v8640
    %v9113 = vpack.c.b16 %v8649, %v8641
    %v9114 = vpack.c.b16 %v8650, %v8642
    %v9115 = vpack.c.b16 %v8651, %v8643
    %v9116 = vpack.c.b16 %v8652, %v8644
    %v9117 = vpack.c.b16 %v8653, %v8645
    %v9118 = vpack.c.b16 %v8654, %v8646
    %v9119 = vpack.c.b16 %v8655, %v8647
    %v9120 = vpack.c.b16 %v8664, %v8656
    %v9121 = vpack.c.b16 %v8665, %v8657
    %v9122 = vpack.c.b16 %v8666, %v8658
    %v9123 = vpack.c.b16 %v8667, %v8659
    %v9124 = vpack.c.b16 %v8668, %v8660
    %v9125 = vpack.c.b16 %v8669, %v8661
    %v9126 = vpack.c.b16 %v8670, %v8662
    %v9127 = vpack.c.b16 %v8671, %v8663
    %v9128 = vpack.c.b16 %v8680, %v8672
    %v9129 = vpack.c.b16 %v8681, %v8673
    %v9130 = vpack.c.b16 %v8682, %v8674
    %v9131 = vpack.c.b16 %v8683, %v8675
    %v9132 = vpack.c.b16 %v8684, %v8676
    %v9133 = vpack.c.b16 %v8685, %v8677
    %v9134 = vpack.c.b16 %v8686, %v8678
    %v9135 = vpack.c.b16 %v8687, %v8679
    %v9136 = vpack.c.b16 %v8696, %v8688
    %v9137 = vpack.c.b16 %v8697, %v8689
    %v9138 = vpack.c.b16 %v8698, %v8690
    %v9139 = vpack.c.b16 %v8699, %v8691
    %v9140 = vpack.c.b16 %v8700, %v8692
    %v9141 = vpack.c.b16 %v8701, %v8693
    %v9142 = vpack.c.b16 %v8702, %v8694
    %v9143 = vpack.c.b16 %v8703, %v8695
    %v9144 = vpack.c.b16 %v8712, %v8704
    %v9145 = vpack.c.b16 %v8713, %v8705
    %v9146 = vpack.c.b16 %v8714, %v8706
    %v9147 = vpack.c.b16 %v8715, %v8707
    %v9148 = vpack.c.b16 %v8716, %v8708
    %v9149 = vpack.c.b16 %v8717, %v8709
    %v9150 = vpack.c.b16 %v8718, %v8710
    %v9151 = vpack.c.b16 %v8719, %v8711
    %v9152 = vpack.c.b16 %v8728, %v8720
    %v9153 = vpack.c.b16 %v8729, %v8721
    %v9154 = vpack.c.b16 %v8730, %v8722
    %v9155 = vpack.c.b16 %v8731, %v8723
    %v9156 = vpack.c.b16 %v8732, %v8724
    %v9157 = vpack.c.b16 %v8733, %v8725
    %v9158 = vpack.c.b16 %v8734, %v8726
    %v9159 = vpack.c.b16 %v8735, %v8727
    %v9160 = vpack.c.b16 %v8744, %v8736
    %v9161 = vpack.c.b16 %v8745, %v8737
    %v9162 = vpack.c.b16 %v8746, %v8738
    %v9163 = vpack.c.b16 %v8747, %v8739
    %v9164 = vpack.c.b16 %v8748, %v8740
    %v9165 = vpack.c.b16 %v8749, %v8741
    %v9166 = vpack.c.b16 %v8750, %v8742
    %v9167 = vpack.c.b16 %v8751, %v8743
    %v9168 = vpack.c.b16 %v8760, %v8752
    %v9169 = vpack.c.b16 %v8761, %v8753
    %v9170 = vpack.c.b16 %v8762, %v8754
    %v9171 = vpack.c.b16 %v8763, %v8755
    %v9172 = vpack.c.b16 %v8764, %v8756
    %v9173 = vpack.c.b16 %v8765, %v8757
    %v9174 = vpack.c.b16 %v8766, %v8758
    %v9175 = vpack.c.b16 %v8767, %v8759
    %v9176 = vpack.c.b16 %v8776, %v8768
    %v9177 = vpack.c.b16 %v8777, %v8769
    %v9178 = vpack.c.b16 %v8778, %v8770
    %v9179 = vpack.c.b16 %v8779, %v8771
    %v9180 = vpack.c.b16 %v8780, %v8772
    %v9181 = vpack.c.b16 %v8781, %v8773
    %v9182 = vpack.c.b16 %v8782, %v8774
    %v9183 = vpack.c.b16 %v8783, %v8775
    %v9184 = vpack.c.b16 %v8792, %v8784
    %v9185 = vpack.c.b16 %v8793, %v8785
    %v9186 = vpack.c.b16 %v8794, %v8786
    %v9187 = vpack.c.b16 %v8795, %v8787
    %v9188 = vpack.c.b16 %v8796, %v8788
    %v9189 = vpack.c.b16 %v8797, %v8789
    %v9190 = vpack.c.b16 %v8798, %v8790
    %v9191 = vpack.c.b16 %v8799, %v8791
    %v9192 = vpack.c.b16 %v8808, %v8800
    %v9193 = vpack.c.b16 %v8809, %v8801
    %v9194 = vpack.c.b16 %v8810, %v8802
    %v9195 = vpack.c.b16 %v8811, %v8803
    %v9196 = vpack.c.b16 %v8812, %v8804
    %v9197 = vpack.c.b16 %v8813, %v8805
    %v9198 = vpack.c.b16 %v8814, %v8806
    %v9199 = vpack.c.b16 %v8815, %v8807
    %v9200 = vpack.c.b16 %v8824, %v8816
    %v9201 = vpack.c.b16 %v8825, %v8817
    %v9202 = vpack.c.b16 %v8826, %v8818
    %v9203 = vpack.c.b16 %v8827, %v8819
    %v9204 = vpack.c.b16 %v8828, %v8820
    %v9205 = vpack.c.b16 %v8829, %v8821
    %v9206 = vpack.c.b16 %v8830, %v8822
    %v9207 = vpack.c.b16 %v8831, %v8823
    %v9208 = vpack.c.b16 %v8840, %v8832
    %v9209 = vpack.c.b16 %v8841, %v8833
    %v9210 = vpack.c.b16 %v8842, %v8834
    %v9211 = vpack.c.b16 %v8843, %v8835
    %v9212 = vpack.c.b16 %v8844, %v8836
    %v9213 = vpack.c.b16 %v8845, %v8837
    %v9214 = vpack.c.b16 %v8846, %v8838
    %v9215 = vpack.c.b16 %v8847, %v8839
    %v9216 = vpack.c.b16 %v8856, %v8848
    %v9217 = vpack.c.b16 %v8857, %v8849
    %v9218 = vpack.c.b16 %v8858, %v8850
    %v9219 = vpack.c.b16 %v8859, %v8851
    %v9220 = vpack.c.b16 %v8860, %v8852
    %v9221 = vpack.c.b16 %v8861, %v8853
    %v9222 = vpack.c.b16 %v8862, %v8854
    %v9223 = vpack.c.b16 %v8863, %v8855
    %v9224 = vpack.c.b16 %v8872, %v8864
    %v9225 = vpack.c.b16 %v8873, %v8865
    %v9226 = vpack.c.b16 %v8874, %v8866
    %v9227 = vpack.c.b16 %v8875, %v8867
    %v9228 = vpack.c.b16 %v8876, %v8868
    %v9229 = vpack.c.b16 %v8877, %v8869
    %v9230 = vpack.c.b16 %v8878, %v8870
    %v9231 = vpack.c.b16 %v8879, %v8871
    %v9232 = vpack.c.b16 %v8888, %v8880
    %v9233 = vpack.c.b16 %v8889, %v8881
    %v9234 = vpack.c.b16 %v8890, %v8882
    %v9235 = vpack.c.b16 %v8891, %v8883
    %v9236 = vpack.c.b16 %v8892, %v8884
    %v9237 = vpack.c.b16 %v8893, %v8885
    %v9238 = vpack.c.b16 %v8894, %v8886
    %v9239 = vpack.c.b16 %v8895, %v8887
    %v9240 = vpack.c.b16 %v8904, %v8896
    %v9241 = vpack.c.b16 %v8905, %v8897
    %v9242 = vpack.c.b16 %v8906, %v8898
    %v9243 = vpack.c.b16 %v8907, %v8899
    %v9244 = vpack.c.b16 %v8908, %v8900
    %v9245 = vpack.c.b16 %v8909, %v8901
    %v9246 = vpack.c.b16 %v8910, %v8902
    %v9247 = vpack.c.b16 %v8911, %v8903
    %v9248 = vpack.c.b16 %v8920, %v8912
    %v9249 = vpack.c.b16 %v8921, %v8913
    %v9250 = vpack.c.b16 %v8922, %v8914
    %v9251 = vpack.c.b16 %v8923, %v8915
    %v9252 = vpack.c.b16 %v8924, %v8916
    %v9253 = vpack.c.b16 %v8925, %v8917
    %v9254 = vpack.c.b16 %v8926, %v8918
    %v9255 = vpack.c.b16 %v8927, %v8919
    %v9256 = vpack.c.b16 %v8936, %v8928
    %v9257 = vpack.c.b16 %v8937, %v8929
    %v9258 = vpack.c.b16 %v8938, %v8930
    %v9259 = vpack.c.b16 %v8939, %v8931
    %v9260 = vpack.c.b16 %v8940, %v8932
    %v9261 = vpack.c.b16 %v8941, %v8933
    %v9262 = vpack.c.b16 %v8942, %v8934
    %v9263 = vpack.c.b16 %v8943, %v8935
    %v9264 = vpack.c.b16 %v8952, %v8944
    %v9265 = vpack.c.b16 %v8953, %v8945
    %v9266 = vpack.c.b16 %v8954, %v8946
    %v9267 = vpack.c.b16 %v8955, %v8947
    %v9268 = vpack.c.b16 %v8956, %v8948
    %v9269 = vpack.c.b16 %v8957, %v8949
    %v9270 = vpack.c.b16 %v8958, %v8950
    %v9271 = vpack.c.b16 %v8959, %v8951
    %v9272 = vpack.c.b16 %v8968, %v8960
    %v9273 = vpack.c.b16 %v8969, %v8961
    %v9274 = vpack.c.b16 %v8970, %v8962
    %v9275 = vpack.c.b16 %v8971, %v8963
    %v9276 = vpack.c.b16 %v8972, %v8964
    %v9277 = vpack.c.b16 %v8973, %v8965
    %v9278 = vpack.c.b16 %v8974, %v8966
    %v9279 = vpack.c.b16 %v8975, %v8967
    %v9280 = vpack.c.b16 %v8984, %v8976
    %v9281 = vpack.c.b16 %v8985, %v8977
    %v9282 = vpack.c.b16 %v8986, %v8978
    %v9283 = vpack.c.b16 %v8987, %v8979
    %v9284 = vpack.c.b16 %v8988, %v8980
    %v9285 = vpack.c.b16 %v8989, %v8981
    %v9286 = vpack.c.b16 %v8990, %v8982
    %v9287 = vpack.c.b16 %v8991, %v8983
    %v9288 = vpack.c.b16 %v9000, %v8992
    %v9289 = vpack.c.b16 %v9001, %v8993
    %v9290 = vpack.c.b16 %v9002, %v8994
    %v9291 = vpack.c.b16 %v9003, %v8995
    %v9292 = vpack.c.b16 %v9004, %v8996
    %v9293 = vpack.c.b16 %v9005, %v8997
    %v9294 = vpack.c.b16 %v9006, %v8998
    %v9295 = vpack.c.b16 %v9007, %v8999
    %v9296 = vpack.c.b16 %v9016, %v9008
    %v9297 = vpack.c.b16 %v9017, %v9009
    %v9298 = vpack.c.b16 %v9018, %v9010
    %v9299 = vpack.c.b16 %v9019, %v9011
    %v9300 = vpack.c.b16 %v9020, %v9012
    %v9301 = vpack.c.b16 %v9021, %v9013
    %v9302 = vpack.c.b16 %v9022, %v9014
    %v9303 = vpack.c.b16 %v9023, %v9015
    %v9304 = vpack.c.b16 %v9032, %v9024
    %v9305 = vpack.c.b16 %v9033, %v9025
    %v9306 = vpack.c.b16 %v9034, %v9026
    %v9307 = vpack.c.b16 %v9035, %v9027
    %v9308 = vpack.c.b16 %v9036, %v9028
    %v9309 = vpack.c.b16 %v9037, %v9029
    %v9310 = vpack.c.b16 %v9038, %v9030
    %v9311 = vpack.c.b16 %v9039, %v9031
    %v9312 = vpack.c.b16 %v9048, %v9040
    %v9313 = vpack.c.b16 %v9049, %v9041
    %v9314 = vpack.c.b16 %v9050, %v9042
    %v9315 = vpack.c.b16 %v9051, %v9043
    %v9316 = vpack.c.b16 %v9052, %v9044
    %v9317 = vpack.c.b16 %v9053, %v9045
    %v9318 = vpack.c.b16 %v9054, %v9046
    %v9319 = vpack.c.b16 %v9055, %v9047
    %v9320 = vpack.c.b16 %v9064, %v9056
    %v9321 = vpack.c.b16 %v9065, %v9057
    %v9322 = vpack.c.b16 %v9066, %v9058
    %v9323 = vpack.c.b16 %v9067, %v9059
    %v9324 = vpack.c.b16 %v9068, %v9060
    %v9325 = vpack.c.b16 %v9069, %v9061
    %v9326 = vpack.c.b16 %v9070, %v9062
    %v9327 = vpack.c.b16 %v9071, %v9063
    %9584 = vmatpush.bf16.msra.mxu0 %v9128
    %9585 = vmatpush.bf16.msra.mxu0 %v9120
    %9586 = vmatpush.bf16.msra.mxu0 %v9112
    %9587 = vmatpush.bf16.msra.mxu0 %v9104
    %9588 = vmatpush.bf16.msra.mxu0 %v9096
    %9589 = vmatpush.bf16.msra.mxu0 %v9088
    %9590 = vmatpush.bf16.msra.mxu0 %v9080
    %9591 = vmatpush.bf16.msra.mxu0 %v9072
    %9592 = vmatmul.bf16.gmra.mxu0 %v8026
    %v9593 = vpop.f32.mrf.mxu0
    %v9594 = vadd.f32 %v8288, %v9593
    %v9595 = vpop.f32.mrf.mxu0
    %9596 = vdwg.mxu0
    %9597 = vmatpush.bf16.msra.mxu0 %v9192
    %9598 = vmatpush.bf16.msra.mxu0 %v9184
    %9599 = vmatpush.bf16.msra.mxu0 %v9176
    %9600 = vmatpush.bf16.msra.mxu0 %v9168
    %9601 = vmatpush.bf16.msra.mxu0 %v9160
    %9602 = vmatpush.bf16.msra.mxu0 %v9152
    %9603 = vmatpush.bf16.msra.mxu0 %v9144
    %9604 = vmatpush.bf16.msra.mxu0 %v9136
    %9605 = vmatmul.bf16.gmra.mxu0 %v8027
    %v9606 = vpop.f32.mrf.mxu0
    %v9607 = vadd.f32 %v9594, %v9606
    %v9608 = vpop.f32.mrf.mxu0
    %9609 = vdwg.mxu0
    %9610 = vmatpush.bf16.msra.mxu0 %v9256
    %9611 = vmatpush.bf16.msra.mxu0 %v9248
    %9612 = vmatpush.bf16.msra.mxu0 %v9240
    %9613 = vmatpush.bf16.msra.mxu0 %v9232
    %9614 = vmatpush.bf16.msra.mxu0 %v9224
    %9615 = vmatpush.bf16.msra.mxu0 %v9216
    %9616 = vmatpush.bf16.msra.mxu0 %v9208
    %9617 = vmatpush.bf16.msra.mxu0 %v9200
    %9618 = vmatmul.bf16.gmra.mxu0 %v8028
    %v9619 = vpop.f32.mrf.mxu0
    %v9620 = vadd.f32 %v9607, %v9619
    %v9621 = vpop.f32.mrf.mxu0
    %9622 = vdwg.mxu0
    %9623 = vmatpush.bf16.msra.mxu0 %v9320
    %9624 = vmatpush.bf16.msra.mxu0 %v9312
    %9625 = vmatpush.bf16.msra.mxu0 %v9304
    %9626 = vmatpush.bf16.msra.mxu0 %v9296
    %9627 = vmatpush.bf16.msra.mxu0 %v9288
    %9628 = vmatpush.bf16.msra.mxu0 %v9280
    %9629 = vmatpush.bf16.msra.mxu0 %v9272
    %9630 = vmatpush.bf16.msra.mxu0 %v9264
    %9631 = vmatmul.bf16.gmra.mxu0 %v8029
    %v9632 = vpop.f32.mrf.mxu0
    %v9633 = vadd.f32 %v9620, %v9632
    %v9634 = vpop.f32.mrf.mxu0
    %9635 = vdwg.mxu0
    %9636 = vmatpush.bf16.msra.mxu0 %v9129
    %9637 = vmatpush.bf16.msra.mxu0 %v9121
    %9638 = vmatpush.bf16.msra.mxu0 %v9113
    %9639 = vmatpush.bf16.msra.mxu0 %v9105
    %9640 = vmatpush.bf16.msra.mxu0 %v9097
    %9641 = vmatpush.bf16.msra.mxu0 %v9089
    %9642 = vmatpush.bf16.msra.mxu0 %v9081
    %9643 = vmatpush.bf16.msra.mxu0 %v9073
    %9644 = vmatmul.bf16.gmra.mxu0 %v8026
    %v9645 = vpop.f32.mrf.mxu0
    %v9646 = vadd.f32 %v8289, %v9645
    %v9647 = vpop.f32.mrf.mxu0
    %9648 = vdwg.mxu0
    %9649 = vmatpush.bf16.msra.mxu0 %v9193
    %9650 = vmatpush.bf16.msra.mxu0 %v9185
    %9651 = vmatpush.bf16.msra.mxu0 %v9177
    %9652 = vmatpush.bf16.msra.mxu0 %v9169
    %9653 = vmatpush.bf16.msra.mxu0 %v9161
    %9654 = vmatpush.bf16.msra.mxu0 %v9153
    %9655 = vmatpush.bf16.msra.mxu0 %v9145
    %9656 = vmatpush.bf16.msra.mxu0 %v9137
    %9657 = vmatmul.bf16.gmra.mxu0 %v8027
    %v9658 = vpop.f32.mrf.mxu0
    %v9659 = vadd.f32 %v9646, %v9658
    %v9660 = vpop.f32.mrf.mxu0
    %9661 = vdwg.mxu0
    %9662 = vmatpush.bf16.msra.mxu0 %v9257
    %9663 = vmatpush.bf16.msra.mxu0 %v9249
    %9664 = vmatpush.bf16.msra.mxu0 %v9241
    %9665 = vmatpush.bf16.msra.mxu0 %v9233
    %9666 = vmatpush.bf16.msra.mxu0 %v9225
    %9667 = vmatpush.bf16.msra.mxu0 %v9217
    %9668 = vmatpush.bf16.msra.mxu0 %v9209
    %9669 = vmatpush.bf16.msra.mxu0 %v9201
    %9670 = vmatmul.bf16.gmra.mxu0 %v8028
    %v9671 = vpop.f32.mrf.mxu0
    %v9672 = vadd.f32 %v9659, %v9671
    %v9673 = vpop.f32.mrf.mxu0
    %9674 = vdwg.mxu0
    %9675 = vmatpush.bf16.msra.mxu0 %v9321
    %9676 = vmatpush.bf16.msra.mxu0 %v9313
    %9677 = vmatpush.bf16.msra.mxu0 %v9305
    %9678 = vmatpush.bf16.msra.mxu0 %v9297
    %9679 = vmatpush.bf16.msra.mxu0 %v9289
    %9680 = vmatpush.bf16.msra.mxu0 %v9281
    %9681 = vmatpush.bf16.msra.mxu0 %v9273
    %9682 = vmatpush.bf16.msra.mxu0 %v9265
    %9683 = vmatmul.bf16.gmra.mxu0 %v8029
    %v9684 = vpop.f32.mrf.mxu0
    %v9685 = vadd.f32 %v9672, %v9684
    %v9686 = vpop.f32.mrf.mxu0
    %9687 = vdwg.mxu0
    %9688 = vmatpush.bf16.msra.mxu0 %v9130
    %9689 = vmatpush.bf16.msra.mxu0 %v9122
    %9690 = vmatpush.bf16.msra.mxu0 %v9114
    %9691 = vmatpush.bf16.msra.mxu0 %v9106
    %9692 = vmatpush.bf16.msra.mxu0 %v9098
    %9693 = vmatpush.bf16.msra.mxu0 %v9090
    %9694 = vmatpush.bf16.msra.mxu0 %v9082
    %9695 = vmatpush.bf16.msra.mxu0 %v9074
    %9696 = vmatmul.bf16.gmra.mxu0 %v8026
    %v9697 = vpop.f32.mrf.mxu0
    %v9698 = vadd.f32 %v8290, %v9697
    %v9699 = vpop.f32.mrf.mxu0
    %9700 = vdwg.mxu0
    %9701 = vmatpush.bf16.msra.mxu0 %v9194
    %9702 = vmatpush.bf16.msra.mxu0 %v9186
    %9703 = vmatpush.bf16.msra.mxu0 %v9178
    %9704 = vmatpush.bf16.msra.mxu0 %v9170
    %9705 = vmatpush.bf16.msra.mxu0 %v9162
    %9706 = vmatpush.bf16.msra.mxu0 %v9154
    %9707 = vmatpush.bf16.msra.mxu0 %v9146
    %9708 = vmatpush.bf16.msra.mxu0 %v9138
    %9709 = vmatmul.bf16.gmra.mxu0 %v8027
    %v9710 = vpop.f32.mrf.mxu0
    %v9711 = vadd.f32 %v9698, %v9710
    %v9712 = vpop.f32.mrf.mxu0
    %9713 = vdwg.mxu0
    %9714 = vmatpush.bf16.msra.mxu0 %v9258
    %9715 = vmatpush.bf16.msra.mxu0 %v9250
    %9716 = vmatpush.bf16.msra.mxu0 %v9242
    %9717 = vmatpush.bf16.msra.mxu0 %v9234
    %9718 = vmatpush.bf16.msra.mxu0 %v9226
    %9719 = vmatpush.bf16.msra.mxu0 %v9218
    %9720 = vmatpush.bf16.msra.mxu0 %v9210
    %9721 = vmatpush.bf16.msra.mxu0 %v9202
    %9722 = vmatmul.bf16.gmra.mxu0 %v8028
    %v9723 = vpop.f32.mrf.mxu0
    %v9724 = vadd.f32 %v9711, %v9723
    %v9725 = vpop.f32.mrf.mxu0
    %9726 = vdwg.mxu0
    %9727 = vmatpush.bf16.msra.mxu0 %v9322
    %9728 = vmatpush.bf16.msra.mxu0 %v9314
    %9729 = vmatpush.bf16.msra.mxu0 %v9306
    %9730 = vmatpush.bf16.msra.mxu0 %v9298
    %9731 = vmatpush.bf16.msra.mxu0 %v9290
    %9732 = vmatpush.bf16.msra.mxu0 %v9282
    %9733 = vmatpush.bf16.msra.mxu0 %v9274
    %9734 = vmatpush.bf16.msra.mxu0 %v9266
    %9735 = vmatmul.bf16.gmra.mxu0 %v8029
    %v9736 = vpop.f32.mrf.mxu0
    %v9737 = vadd.f32 %v9724, %v9736
    %v9738 = vpop.f32.mrf.mxu0
    %9739 = vdwg.mxu0
    %9740 = vmatpush.bf16.msra.mxu0 %v9131
    %9741 = vmatpush.bf16.msra.mxu0 %v9123
    %9742 = vmatpush.bf16.msra.mxu0 %v9115
    %9743 = vmatpush.bf16.msra.mxu0 %v9107
    %9744 = vmatpush.bf16.msra.mxu0 %v9099
    %9745 = vmatpush.bf16.msra.mxu0 %v9091
    %9746 = vmatpush.bf16.msra.mxu0 %v9083
    %9747 = vmatpush.bf16.msra.mxu0 %v9075
    %9748 = vmatmul.bf16.gmra.mxu0 %v8026
    %v9749 = vpop.f32.mrf.mxu0
    %v9750 = vadd.f32 %v8291, %v9749
    %v9751 = vpop.f32.mrf.mxu0
    %9752 = vdwg.mxu0
    %9753 = vmatpush.bf16.msra.mxu0 %v9195
    %9754 = vmatpush.bf16.msra.mxu0 %v9187
    %9755 = vmatpush.bf16.msra.mxu0 %v9179
    %9756 = vmatpush.bf16.msra.mxu0 %v9171
    %9757 = vmatpush.bf16.msra.mxu0 %v9163
    %9758 = vmatpush.bf16.msra.mxu0 %v9155
    %9759 = vmatpush.bf16.msra.mxu0 %v9147
    %9760 = vmatpush.bf16.msra.mxu0 %v9139
    %9761 = vmatmul.bf16.gmra.mxu0 %v8027
    %v9762 = vpop.f32.mrf.mxu0
    %v9763 = vadd.f32 %v9750, %v9762
    %v9764 = vpop.f32.mrf.mxu0
    %9765 = vdwg.mxu0
    %9766 = vmatpush.bf16.msra.mxu0 %v9259
    %9767 = vmatpush.bf16.msra.mxu0 %v9251
    %9768 = vmatpush.bf16.msra.mxu0 %v9243
    %9769 = vmatpush.bf16.msra.mxu0 %v9235
    %9770 = vmatpush.bf16.msra.mxu0 %v9227
    %9771 = vmatpush.bf16.msra.mxu0 %v9219
    %9772 = vmatpush.bf16.msra.mxu0 %v9211
    %9773 = vmatpush.bf16.msra.mxu0 %v9203
    %9774 = vmatmul.bf16.gmra.mxu0 %v8028
    %v9775 = vpop.f32.mrf.mxu0
    %v9776 = vadd.f32 %v9763, %v9775
    %v9777 = vpop.f32.mrf.mxu0
    %9778 = vdwg.mxu0
    %9779 = vmatpush.bf16.msra.mxu0 %v9323
    %9780 = vmatpush.bf16.msra.mxu0 %v9315
    %9781 = vmatpush.bf16.msra.mxu0 %v9307
    %9782 = vmatpush.bf16.msra.mxu0 %v9299
    %9783 = vmatpush.bf16.msra.mxu0 %v9291
    %9784 = vmatpush.bf16.msra.mxu0 %v9283
    %9785 = vmatpush.bf16.msra.mxu0 %v9275
    %9786 = vmatpush.bf16.msra.mxu0 %v9267
    %9787 = vmatmul.bf16.gmra.mxu0 %v8029
    %v9788 = vpop.f32.mrf.mxu0
    %v9789 = vadd.f32 %v9776, %v9788
    %v9790 = vpop.f32.mrf.mxu0
    %9791 = vdwg.mxu0
    %9792 = vmatpush.bf16.msra.mxu0 %v9132
    %9793 = vmatpush.bf16.msra.mxu0 %v9124
    %9794 = vmatpush.bf16.msra.mxu0 %v9116
    %9795 = vmatpush.bf16.msra.mxu0 %v9108
    %9796 = vmatpush.bf16.msra.mxu0 %v9100
    %9797 = vmatpush.bf16.msra.mxu0 %v9092
    %9798 = vmatpush.bf16.msra.mxu0 %v9084
    %9799 = vmatpush.bf16.msra.mxu0 %v9076
    %9800 = vmatmul.bf16.gmra.mxu0 %v8026
    %v9801 = vpop.f32.mrf.mxu0
    %v9802 = vadd.f32 %v8292, %v9801
    %v9803 = vpop.f32.mrf.mxu0
    %9804 = vdwg.mxu0
    %9805 = vmatpush.bf16.msra.mxu0 %v9196
    %9806 = vmatpush.bf16.msra.mxu0 %v9188
    %9807 = vmatpush.bf16.msra.mxu0 %v9180
    %9808 = vmatpush.bf16.msra.mxu0 %v9172
    %9809 = vmatpush.bf16.msra.mxu0 %v9164
    %9810 = vmatpush.bf16.msra.mxu0 %v9156
    %9811 = vmatpush.bf16.msra.mxu0 %v9148
    %9812 = vmatpush.bf16.msra.mxu0 %v9140
    %9813 = vmatmul.bf16.gmra.mxu0 %v8027
    %v9814 = vpop.f32.mrf.mxu0
    %v9815 = vadd.f32 %v9802, %v9814
    %v9816 = vpop.f32.mrf.mxu0
    %9817 = vdwg.mxu0
    %9818 = vmatpush.bf16.msra.mxu0 %v9260
    %9819 = vmatpush.bf16.msra.mxu0 %v9252
    %9820 = vmatpush.bf16.msra.mxu0 %v9244
    %9821 = vmatpush.bf16.msra.mxu0 %v9236
    %9822 = vmatpush.bf16.msra.mxu0 %v9228
    %9823 = vmatpush.bf16.msra.mxu0 %v9220
    %9824 = vmatpush.bf16.msra.mxu0 %v9212
    %9825 = vmatpush.bf16.msra.mxu0 %v9204
    %9826 = vmatmul.bf16.gmra.mxu0 %v8028
    %v9827 = vpop.f32.mrf.mxu0
    %v9828 = vadd.f32 %v9815, %v9827
    %v9829 = vpop.f32.mrf.mxu0
    %9830 = vdwg.mxu0
    %9831 = vmatpush.bf16.msra.mxu0 %v9324
    %9832 = vmatpush.bf16.msra.mxu0 %v9316
    %9833 = vmatpush.bf16.msra.mxu0 %v9308
    %9834 = vmatpush.bf16.msra.mxu0 %v9300
    %9835 = vmatpush.bf16.msra.mxu0 %v9292
    %9836 = vmatpush.bf16.msra.mxu0 %v9284
    %9837 = vmatpush.bf16.msra.mxu0 %v9276
    %9838 = vmatpush.bf16.msra.mxu0 %v9268
    %9839 = vmatmul.bf16.gmra.mxu0 %v8029
    %v9840 = vpop.f32.mrf.mxu0
    %v9841 = vadd.f32 %v9828, %v9840
    %v9842 = vpop.f32.mrf.mxu0
    %9843 = vdwg.mxu0
    %9844 = vmatpush.bf16.msra.mxu0 %v9133
    %9845 = vmatpush.bf16.msra.mxu0 %v9125
    %9846 = vmatpush.bf16.msra.mxu0 %v9117
    %9847 = vmatpush.bf16.msra.mxu0 %v9109
    %9848 = vmatpush.bf16.msra.mxu0 %v9101
    %9849 = vmatpush.bf16.msra.mxu0 %v9093
    %9850 = vmatpush.bf16.msra.mxu0 %v9085
    %9851 = vmatpush.bf16.msra.mxu0 %v9077
    %9852 = vmatmul.bf16.gmra.mxu0 %v8026
    %v9853 = vpop.f32.mrf.mxu0
    %v9854 = vadd.f32 %v8293, %v9853
    %v9855 = vpop.f32.mrf.mxu0
    %9856 = vdwg.mxu0
    %9857 = vmatpush.bf16.msra.mxu0 %v9197
    %9858 = vmatpush.bf16.msra.mxu0 %v9189
    %9859 = vmatpush.bf16.msra.mxu0 %v9181
    %9860 = vmatpush.bf16.msra.mxu0 %v9173
    %9861 = vmatpush.bf16.msra.mxu0 %v9165
    %9862 = vmatpush.bf16.msra.mxu0 %v9157
    %9863 = vmatpush.bf16.msra.mxu0 %v9149
    %9864 = vmatpush.bf16.msra.mxu0 %v9141
    %9865 = vmatmul.bf16.gmra.mxu0 %v8027
    %v9866 = vpop.f32.mrf.mxu0
    %v9867 = vadd.f32 %v9854, %v9866
    %v9868 = vpop.f32.mrf.mxu0
    %9869 = vdwg.mxu0
    %9870 = vmatpush.bf16.msra.mxu0 %v9261
    %9871 = vmatpush.bf16.msra.mxu0 %v9253
    %9872 = vmatpush.bf16.msra.mxu0 %v9245
    %9873 = vmatpush.bf16.msra.mxu0 %v9237
    %9874 = vmatpush.bf16.msra.mxu0 %v9229
    %9875 = vmatpush.bf16.msra.mxu0 %v9221
    %9876 = vmatpush.bf16.msra.mxu0 %v9213
    %9877 = vmatpush.bf16.msra.mxu0 %v9205
    %9878 = vmatmul.bf16.gmra.mxu0 %v8028
    %v9879 = vpop.f32.mrf.mxu0
    %v9880 = vadd.f32 %v9867, %v9879
    %v9881 = vpop.f32.mrf.mxu0
    %9882 = vdwg.mxu0
    %9883 = vmatpush.bf16.msra.mxu0 %v9325
    %9884 = vmatpush.bf16.msra.mxu0 %v9317
    %9885 = vmatpush.bf16.msra.mxu0 %v9309
    %9886 = vmatpush.bf16.msra.mxu0 %v9301
    %9887 = vmatpush.bf16.msra.mxu0 %v9293
    %9888 = vmatpush.bf16.msra.mxu0 %v9285
    %9889 = vmatpush.bf16.msra.mxu0 %v9277
    %9890 = vmatpush.bf16.msra.mxu0 %v9269
    %9891 = vmatmul.bf16.gmra.mxu0 %v8029
    %v9892 = vpop.f32.mrf.mxu0
    %v9893 = vadd.f32 %v9880, %v9892
    %v9894 = vpop.f32.mrf.mxu0
    %9895 = vdwg.mxu0
    %9896 = vmatpush.bf16.msra.mxu0 %v9134
    %9897 = vmatpush.bf16.msra.mxu0 %v9126
    %9898 = vmatpush.bf16.msra.mxu0 %v9118
    %9899 = vmatpush.bf16.msra.mxu0 %v9110
    %9900 = vmatpush.bf16.msra.mxu0 %v9102
    %9901 = vmatpush.bf16.msra.mxu0 %v9094
    %9902 = vmatpush.bf16.msra.mxu0 %v9086
    %9903 = vmatpush.bf16.msra.mxu0 %v9078
    %9904 = vmatmul.bf16.gmra.mxu0 %v8026
    %v9905 = vpop.f32.mrf.mxu0
    %v9906 = vadd.f32 %v8294, %v9905
    %v9907 = vpop.f32.mrf.mxu0
    %9908 = vdwg.mxu0
    %9909 = vmatpush.bf16.msra.mxu0 %v9198
    %9910 = vmatpush.bf16.msra.mxu0 %v9190
    %9911 = vmatpush.bf16.msra.mxu0 %v9182
    %9912 = vmatpush.bf16.msra.mxu0 %v9174
    %9913 = vmatpush.bf16.msra.mxu0 %v9166
    %9914 = vmatpush.bf16.msra.mxu0 %v9158
    %9915 = vmatpush.bf16.msra.mxu0 %v9150
    %9916 = vmatpush.bf16.msra.mxu0 %v9142
    %9917 = vmatmul.bf16.gmra.mxu0 %v8027
    %v9918 = vpop.f32.mrf.mxu0
    %v9919 = vadd.f32 %v9906, %v9918
    %v9920 = vpop.f32.mrf.mxu0
    %9921 = vdwg.mxu0
    %9922 = vmatpush.bf16.msra.mxu0 %v9262
    %9923 = vmatpush.bf16.msra.mxu0 %v9254
    %9924 = vmatpush.bf16.msra.mxu0 %v9246
    %9925 = vmatpush.bf16.msra.mxu0 %v9238
    %9926 = vmatpush.bf16.msra.mxu0 %v9230
    %9927 = vmatpush.bf16.msra.mxu0 %v9222
    %9928 = vmatpush.bf16.msra.mxu0 %v9214
    %9929 = vmatpush.bf16.msra.mxu0 %v9206
    %9930 = vmatmul.bf16.gmra.mxu0 %v8028
    %v9931 = vpop.f32.mrf.mxu0
    %v9932 = vadd.f32 %v9919, %v9931
    %v9933 = vpop.f32.mrf.mxu0
    %9934 = vdwg.mxu0
    %9935 = vmatpush.bf16.msra.mxu0 %v9326
    %9936 = vmatpush.bf16.msra.mxu0 %v9318
    %9937 = vmatpush.bf16.msra.mxu0 %v9310
    %9938 = vmatpush.bf16.msra.mxu0 %v9302
    %9939 = vmatpush.bf16.msra.mxu0 %v9294
    %9940 = vmatpush.bf16.msra.mxu0 %v9286
    %9941 = vmatpush.bf16.msra.mxu0 %v9278
    %9942 = vmatpush.bf16.msra.mxu0 %v9270
    %9943 = vmatmul.bf16.gmra.mxu0 %v8029
    %v9944 = vpop.f32.mrf.mxu0
    %v9945 = vadd.f32 %v9932, %v9944
    %v9946 = vpop.f32.mrf.mxu0
    %9947 = vdwg.mxu0
    %9948 = vmatpush.bf16.msra.mxu0 %v9135
    %9949 = vmatpush.bf16.msra.mxu0 %v9127
    %9950 = vmatpush.bf16.msra.mxu0 %v9119
    %9951 = vmatpush.bf16.msra.mxu0 %v9111
    %9952 = vmatpush.bf16.msra.mxu0 %v9103
    %9953 = vmatpush.bf16.msra.mxu0 %v9095
    %9954 = vmatpush.bf16.msra.mxu0 %v9087
    %9955 = vmatpush.bf16.msra.mxu0 %v9079
    %9956 = vmatmul.bf16.gmra.mxu0 %v8026
    %v9957 = vpop.f32.mrf.mxu0
    %v9958 = vadd.f32 %v8295, %v9957
    %v9959 = vpop.f32.mrf.mxu0
    %9960 = vdwg.mxu0
    %9961 = vmatpush.bf16.msra.mxu0 %v9199
    %9962 = vmatpush.bf16.msra.mxu0 %v9191
    %9963 = vmatpush.bf16.msra.mxu0 %v9183
    %9964 = vmatpush.bf16.msra.mxu0 %v9175
    %9965 = vmatpush.bf16.msra.mxu0 %v9167
    %9966 = vmatpush.bf16.msra.mxu0 %v9159
    %9967 = vmatpush.bf16.msra.mxu0 %v9151
    %9968 = vmatpush.bf16.msra.mxu0 %v9143
    %9969 = vmatmul.bf16.gmra.mxu0 %v8027
    %v9970 = vpop.f32.mrf.mxu0
    %v9971 = vadd.f32 %v9958, %v9970
    %v9972 = vpop.f32.mrf.mxu0
    %9973 = vdwg.mxu0
    %9974 = vmatpush.bf16.msra.mxu0 %v9263
    %9975 = vmatpush.bf16.msra.mxu0 %v9255
    %9976 = vmatpush.bf16.msra.mxu0 %v9247
    %9977 = vmatpush.bf16.msra.mxu0 %v9239
    %9978 = vmatpush.bf16.msra.mxu0 %v9231
    %9979 = vmatpush.bf16.msra.mxu0 %v9223
    %9980 = vmatpush.bf16.msra.mxu0 %v9215
    %9981 = vmatpush.bf16.msra.mxu0 %v9207
    %9982 = vmatmul.bf16.gmra.mxu0 %v8028
    %v9983 = vpop.f32.mrf.mxu0
    %v9984 = vadd.f32 %v9971, %v9983
    %v9985 = vpop.f32.mrf.mxu0
    %9986 = vdwg.mxu0
    %9987 = vmatpush.bf16.msra.mxu0 %v9327
    %9988 = vmatpush.bf16.msra.mxu0 %v9319
    %9989 = vmatpush.bf16.msra.mxu0 %v9311
    %9990 = vmatpush.bf16.msra.mxu0 %v9303
    %9991 = vmatpush.bf16.msra.mxu0 %v9295
    %9992 = vmatpush.bf16.msra.mxu0 %v9287
    %9993 = vmatpush.bf16.msra.mxu0 %v9279
    %9994 = vmatpush.bf16.msra.mxu0 %v9271
    %9995 = vmatmul.bf16.gmra.mxu0 %v8029
    %v9996 = vpop.f32.mrf.mxu0
    %v9997 = vadd.f32 %v9984, %v9996
    %v9998 = vpop.f32.mrf.mxu0
    %9999 = vdwg.mxu0
    %v10000 = vmax.f32 %v9633, 0.0
    %v10001 = vmax.f32 %v9685, 0.0
    %v10002 = vmax.f32 %v9737, 0.0
    %v10003 = vmax.f32 %v9789, 0.0
    %v10004 = vmax.f32 %v9841, 0.0
    %v10005 = vmax.f32 %v9893, 0.0
    %v10006 = vmax.f32 %v9945, 0.0
    %v10007 = vmax.f32 %v9997, 0.0
    %v10008 = vpack.c.bf16 %v10000, %v10000
    %v10009 = vpack.c.bf16 %v10001, %v10001
    %v10010 = vpack.c.bf16 %v10002, %v10002
    %v10011 = vpack.c.bf16 %v10003, %v10003
    %v10012 = vpack.c.bf16 %v10004, %v10004
    %v10013 = vpack.c.bf16 %v10005, %v10005
    %v10014 = vpack.c.bf16 %v10006, %v10006
    %v10015 = vpack.c.bf16 %v10007, %v10007
    %v10016 = vld [vmem:[#allocation10] sm:$0xf]
    %v10017 = vld [vmem:[#allocation10 + $0x4] sm:$0xf]
    %v10018 = vld [vmem:[#allocation10 + $0x8] sm:$0xf]
    %v10019 = vld [vmem:[#allocation10 + $0xc] sm:$0xf]
    %v10020 = vld [vmem:[#allocation10 + $0x10] sm:$0xf]
    %v10021 = vld [vmem:[#allocation10 + $0x14] sm:$0xf]
    %v10022 = vld [vmem:[#allocation10 + $0x18] sm:$0xf]
    %v10023 = vld [vmem:[#allocation10 + $0x1c] sm:$0xf]
    %v10024 = vld [vmem:[#allocation10 + $0x20] sm:$0xf]
    %v10025 = vld [vmem:[#allocation10 + $0x24] sm:$0xf]
    %v10026 = vld [vmem:[#allocation10 + $0x28] sm:$0xf]
    %v10027 = vld [vmem:[#allocation10 + $0x2c] sm:$0xf]
    %v10028 = vld [vmem:[#allocation10 + $0x30] sm:$0xf]
    %v10029 = vld [vmem:[#allocation10 + $0x34] sm:$0xf]
    %v10030 = vld [vmem:[#allocation10 + $0x38] sm:$0xf]
    %v10031 = vld [vmem:[#allocation10 + $0x3c] sm:$0xf]
    %v10032 = vld [vmem:[#allocation10 + $0x40] sm:$0xf]
    %v10033 = vld [vmem:[#allocation10 + $0x44] sm:$0xf]
    %v10034 = vld [vmem:[#allocation10 + $0x48] sm:$0xf]
    %v10035 = vld [vmem:[#allocation10 + $0x4c] sm:$0xf]
    %v10036 = vld [vmem:[#allocation10 + $0x50] sm:$0xf]
    %v10037 = vld [vmem:[#allocation10 + $0x54] sm:$0xf]
    %v10038 = vld [vmem:[#allocation10 + $0x58] sm:$0xf]
    %v10039 = vld [vmem:[#allocation10 + $0x5c] sm:$0xf]
    %v10040 = vld [vmem:[#allocation10 + $0x60] sm:$0xf]
    %v10041 = vld [vmem:[#allocation10 + $0x64] sm:$0xf]
    %v10042 = vld [vmem:[#allocation10 + $0x68] sm:$0xf]
    %v10043 = vld [vmem:[#allocation10 + $0x6c] sm:$0xf]
    %v10044 = vld [vmem:[#allocation10 + $0x70] sm:$0xf]
    %v10045 = vld [vmem:[#allocation10 + $0x74] sm:$0xf]
    %v10046 = vld [vmem:[#allocation10 + $0x78] sm:$0xf]
    %v10047 = vld [vmem:[#allocation10 + $0x7c] sm:$0xf]
    %v10048 = vld [vmem:[#allocation10 + $0x80] sm:$0xf]
    %v10049 = vld [vmem:[#allocation10 + $0x84] sm:$0xf]
    %v10050 = vld [vmem:[#allocation10 + $0x88] sm:$0xf]
    %v10051 = vld [vmem:[#allocation10 + $0x8c] sm:$0xf]
    %v10052 = vld [vmem:[#allocation10 + $0x90] sm:$0xf]
    %v10053 = vld [vmem:[#allocation10 + $0x94] sm:$0xf]
    %v10054 = vld [vmem:[#allocation10 + $0x98] sm:$0xf]
    %v10055 = vld [vmem:[#allocation10 + $0x9c] sm:$0xf]
    %v10056 = vld [vmem:[#allocation10 + $0xa0] sm:$0xf]
    %v10057 = vld [vmem:[#allocation10 + $0xa4] sm:$0xf]
    %v10058 = vld [vmem:[#allocation10 + $0xa8] sm:$0xf]
    %v10059 = vld [vmem:[#allocation10 + $0xac] sm:$0xf]
    %v10060 = vld [vmem:[#allocation10 + $0xb0] sm:$0xf]
    %v10061 = vld [vmem:[#allocation10 + $0xb4] sm:$0xf]
    %v10062 = vld [vmem:[#allocation10 + $0xb8] sm:$0xf]
    %v10063 = vld [vmem:[#allocation10 + $0xbc] sm:$0xf]
    %v10064 = vld [vmem:[#allocation10 + $0xc0] sm:$0xf]
    %v10065 = vld [vmem:[#allocation10 + $0xc4] sm:$0xf]
    %v10066 = vld [vmem:[#allocation10 + $0xc8] sm:$0xf]
    %v10067 = vld [vmem:[#allocation10 + $0xcc] sm:$0xf]
    %v10068 = vld [vmem:[#allocation10 + $0xd0] sm:$0xf]
    %v10069 = vld [vmem:[#allocation10 + $0xd4] sm:$0xf]
    %v10070 = vld [vmem:[#allocation10 + $0xd8] sm:$0xf]
    %v10071 = vld [vmem:[#allocation10 + $0xdc] sm:$0xf]
    %v10072 = vld [vmem:[#allocation10 + $0xe0] sm:$0xf]
    %v10073 = vld [vmem:[#allocation10 + $0xe4] sm:$0xf]
    %v10074 = vld [vmem:[#allocation10 + $0xe8] sm:$0xf]
    %v10075 = vld [vmem:[#allocation10 + $0xec] sm:$0xf]
    %v10076 = vld [vmem:[#allocation10 + $0xf0] sm:$0xf]
    %v10077 = vld [vmem:[#allocation10 + $0xf4] sm:$0xf]
    %v10078 = vld [vmem:[#allocation10 + $0xf8] sm:$0xf]
    %v10079 = vld [vmem:[#allocation10 + $0xfc] sm:$0xf]
    %v10080 = vld [vmem:[#allocation10 + $0x100] sm:$0xf]
    %v10081 = vld [vmem:[#allocation10 + $0x104] sm:$0xf]
    %v10082 = vld [vmem:[#allocation10 + $0x108] sm:$0xf]
    %v10083 = vld [vmem:[#allocation10 + $0x10c] sm:$0xf]
    %v10084 = vld [vmem:[#allocation10 + $0x110] sm:$0xf]
    %v10085 = vld [vmem:[#allocation10 + $0x114] sm:$0xf]
    %v10086 = vld [vmem:[#allocation10 + $0x118] sm:$0xf]
    %v10087 = vld [vmem:[#allocation10 + $0x11c] sm:$0xf]
    %v10088 = vld [vmem:[#allocation10 + $0x120] sm:$0xf]
    %v10089 = vld [vmem:[#allocation10 + $0x124] sm:$0xf]
    %v10090 = vld [vmem:[#allocation10 + $0x128] sm:$0xf]
    %v10091 = vld [vmem:[#allocation10 + $0x12c] sm:$0xf]
    %v10092 = vld [vmem:[#allocation10 + $0x130] sm:$0xf]
    %v10093 = vld [vmem:[#allocation10 + $0x134] sm:$0xf]
    %v10094 = vld [vmem:[#allocation10 + $0x138] sm:$0xf]
    %v10095 = vld [vmem:[#allocation10 + $0x13c] sm:$0xf]
    %v10096 = vld [vmem:[#allocation10 + $0x140] sm:$0xf]
    %v10097 = vld [vmem:[#allocation10 + $0x144] sm:$0xf]
    %v10098 = vld [vmem:[#allocation10 + $0x148] sm:$0xf]
    %v10099 = vld [vmem:[#allocation10 + $0x14c] sm:$0xf]
    %v10100 = vld [vmem:[#allocation10 + $0x150] sm:$0xf]
    %v10101 = vld [vmem:[#allocation10 + $0x154] sm:$0xf]
    %v10102 = vld [vmem:[#allocation10 + $0x158] sm:$0xf]
    %v10103 = vld [vmem:[#allocation10 + $0x15c] sm:$0xf]
    %v10104 = vld [vmem:[#allocation10 + $0x160] sm:$0xf]
    %v10105 = vld [vmem:[#allocation10 + $0x164] sm:$0xf]
    %v10106 = vld [vmem:[#allocation10 + $0x168] sm:$0xf]
    %v10107 = vld [vmem:[#allocation10 + $0x16c] sm:$0xf]
    %v10108 = vld [vmem:[#allocation10 + $0x170] sm:$0xf]
    %v10109 = vld [vmem:[#allocation10 + $0x174] sm:$0xf]
    %v10110 = vld [vmem:[#allocation10 + $0x178] sm:$0xf]
    %v10111 = vld [vmem:[#allocation10 + $0x17c] sm:$0xf]
    %v10112 = vld [vmem:[#allocation10 + $0x180] sm:$0xf]
    %v10113 = vld [vmem:[#allocation10 + $0x184] sm:$0xf]
    %v10114 = vld [vmem:[#allocation10 + $0x188] sm:$0xf]
    %v10115 = vld [vmem:[#allocation10 + $0x18c] sm:$0xf]
    %v10116 = vld [vmem:[#allocation10 + $0x190] sm:$0xf]
    %v10117 = vld [vmem:[#allocation10 + $0x194] sm:$0xf]
    %v10118 = vld [vmem:[#allocation10 + $0x198] sm:$0xf]
    %v10119 = vld [vmem:[#allocation10 + $0x19c] sm:$0xf]
    %v10120 = vld [vmem:[#allocation10 + $0x1a0] sm:$0xf]
    %v10121 = vld [vmem:[#allocation10 + $0x1a4] sm:$0xf]
    %v10122 = vld [vmem:[#allocation10 + $0x1a8] sm:$0xf]
    %v10123 = vld [vmem:[#allocation10 + $0x1ac] sm:$0xf]
    %v10124 = vld [vmem:[#allocation10 + $0x1b0] sm:$0xf]
    %v10125 = vld [vmem:[#allocation10 + $0x1b4] sm:$0xf]
    %v10126 = vld [vmem:[#allocation10 + $0x1b8] sm:$0xf]
    %v10127 = vld [vmem:[#allocation10 + $0x1bc] sm:$0xf]
    %v10128 = vld [vmem:[#allocation10 + $0x1c0] sm:$0xf]
    %v10129 = vld [vmem:[#allocation10 + $0x1c4] sm:$0xf]
    %v10130 = vld [vmem:[#allocation10 + $0x1c8] sm:$0xf]
    %v10131 = vld [vmem:[#allocation10 + $0x1cc] sm:$0xf]
    %v10132 = vld [vmem:[#allocation10 + $0x1d0] sm:$0xf]
    %v10133 = vld [vmem:[#allocation10 + $0x1d4] sm:$0xf]
    %v10134 = vld [vmem:[#allocation10 + $0x1d8] sm:$0xf]
    %v10135 = vld [vmem:[#allocation10 + $0x1dc] sm:$0xf]
    %v10136 = vld [vmem:[#allocation10 + $0x1e0] sm:$0xf]
    %v10137 = vld [vmem:[#allocation10 + $0x1e4] sm:$0xf]
    %v10138 = vld [vmem:[#allocation10 + $0x1e8] sm:$0xf]
    %v10139 = vld [vmem:[#allocation10 + $0x1ec] sm:$0xf]
    %v10140 = vld [vmem:[#allocation10 + $0x1f0] sm:$0xf]
    %v10141 = vld [vmem:[#allocation10 + $0x1f4] sm:$0xf]
    %v10142 = vld [vmem:[#allocation10 + $0x1f8] sm:$0xf]
    %v10143 = vld [vmem:[#allocation10 + $0x1fc] sm:$0xf]
    %v10144 = vld [vmem:[#allocation11] sm:$0x1]
    %v10146 = vperm.slane %v10144, 0
    %v10276 = vunpack.c.l.b16 %v10016
    %v10277 = vunpack.c.l.b16 %v10017
    %v10278 = vunpack.c.l.b16 %v10018
    %v10279 = vunpack.c.l.b16 %v10019
    %v10280 = vunpack.c.l.b16 %v10020
    %v10281 = vunpack.c.l.b16 %v10021
    %v10282 = vunpack.c.l.b16 %v10022
    %v10283 = vunpack.c.l.b16 %v10023
    %v10284 = vunpack.c.l.b16 %v10024
    %v10285 = vunpack.c.l.b16 %v10025
    %v10286 = vunpack.c.l.b16 %v10026
    %v10287 = vunpack.c.l.b16 %v10027
    %v10288 = vunpack.c.l.b16 %v10028
    %v10289 = vunpack.c.l.b16 %v10029
    %v10290 = vunpack.c.l.b16 %v10030
    %v10291 = vunpack.c.l.b16 %v10031
    %v10292 = vunpack.c.l.b16 %v10032
    %v10293 = vunpack.c.l.b16 %v10033
    %v10294 = vunpack.c.l.b16 %v10034
    %v10295 = vunpack.c.l.b16 %v10035
    %v10296 = vunpack.c.l.b16 %v10036
    %v10297 = vunpack.c.l.b16 %v10037
    %v10298 = vunpack.c.l.b16 %v10038
    %v10299 = vunpack.c.l.b16 %v10039
    %v10300 = vunpack.c.l.b16 %v10040
    %v10301 = vunpack.c.l.b16 %v10041
    %v10302 = vunpack.c.l.b16 %v10042
    %v10303 = vunpack.c.l.b16 %v10043
    %v10304 = vunpack.c.l.b16 %v10044
    %v10305 = vunpack.c.l.b16 %v10045
    %v10306 = vunpack.c.l.b16 %v10046
    %v10307 = vunpack.c.l.b16 %v10047
    %v10308 = vunpack.c.l.b16 %v10048
    %v10309 = vunpack.c.l.b16 %v10049
    %v10310 = vunpack.c.l.b16 %v10050
    %v10311 = vunpack.c.l.b16 %v10051
    %v10312 = vunpack.c.l.b16 %v10052
    %v10313 = vunpack.c.l.b16 %v10053
    %v10314 = vunpack.c.l.b16 %v10054
    %v10315 = vunpack.c.l.b16 %v10055
    %v10316 = vunpack.c.l.b16 %v10056
    %v10317 = vunpack.c.l.b16 %v10057
    %v10318 = vunpack.c.l.b16 %v10058
    %v10319 = vunpack.c.l.b16 %v10059
    %v10320 = vunpack.c.l.b16 %v10060
    %v10321 = vunpack.c.l.b16 %v10061
    %v10322 = vunpack.c.l.b16 %v10062
    %v10323 = vunpack.c.l.b16 %v10063
    %v10324 = vunpack.c.l.b16 %v10064
    %v10325 = vunpack.c.l.b16 %v10065
    %v10326 = vunpack.c.l.b16 %v10066
    %v10327 = vunpack.c.l.b16 %v10067
    %v10328 = vunpack.c.l.b16 %v10068
    %v10329 = vunpack.c.l.b16 %v10069
    %v10330 = vunpack.c.l.b16 %v10070
    %v10331 = vunpack.c.l.b16 %v10071
    %v10332 = vunpack.c.l.b16 %v10072
    %v10333 = vunpack.c.l.b16 %v10073
    %v10334 = vunpack.c.l.b16 %v10074
    %v10335 = vunpack.c.l.b16 %v10075
    %v10336 = vunpack.c.l.b16 %v10076
    %v10337 = vunpack.c.l.b16 %v10077
    %v10338 = vunpack.c.l.b16 %v10078
    %v10339 = vunpack.c.l.b16 %v10079
    %v10340 = vunpack.c.l.b16 %v10080
    %v10341 = vunpack.c.l.b16 %v10081
    %v10342 = vunpack.c.l.b16 %v10082
    %v10343 = vunpack.c.l.b16 %v10083
    %v10344 = vunpack.c.l.b16 %v10084
    %v10345 = vunpack.c.l.b16 %v10085
    %v10346 = vunpack.c.l.b16 %v10086
    %v10347 = vunpack.c.l.b16 %v10087
    %v10348 = vunpack.c.l.b16 %v10088
    %v10349 = vunpack.c.l.b16 %v10089
    %v10350 = vunpack.c.l.b16 %v10090
    %v10351 = vunpack.c.l.b16 %v10091
    %v10352 = vunpack.c.l.b16 %v10092
    %v10353 = vunpack.c.l.b16 %v10093
    %v10354 = vunpack.c.l.b16 %v10094
    %v10355 = vunpack.c.l.b16 %v10095
    %v10356 = vunpack.c.l.b16 %v10096
    %v10357 = vunpack.c.l.b16 %v10097
    %v10358 = vunpack.c.l.b16 %v10098
    %v10359 = vunpack.c.l.b16 %v10099
    %v10360 = vunpack.c.l.b16 %v10100
    %v10361 = vunpack.c.l.b16 %v10101
    %v10362 = vunpack.c.l.b16 %v10102
    %v10363 = vunpack.c.l.b16 %v10103
    %v10364 = vunpack.c.l.b16 %v10104
    %v10365 = vunpack.c.l.b16 %v10105
    %v10366 = vunpack.c.l.b16 %v10106
    %v10367 = vunpack.c.l.b16 %v10107
    %v10368 = vunpack.c.l.b16 %v10108
    %v10369 = vunpack.c.l.b16 %v10109
    %v10370 = vunpack.c.l.b16 %v10110
    %v10371 = vunpack.c.l.b16 %v10111
    %v10372 = vunpack.c.l.b16 %v10112
    %v10373 = vunpack.c.l.b16 %v10113
    %v10374 = vunpack.c.l.b16 %v10114
    %v10375 = vunpack.c.l.b16 %v10115
    %v10376 = vunpack.c.l.b16 %v10116
    %v10377 = vunpack.c.l.b16 %v10117
    %v10378 = vunpack.c.l.b16 %v10118
    %v10379 = vunpack.c.l.b16 %v10119
    %v10380 = vunpack.c.l.b16 %v10120
    %v10381 = vunpack.c.l.b16 %v10121
    %v10382 = vunpack.c.l.b16 %v10122
    %v10383 = vunpack.c.l.b16 %v10123
    %v10384 = vunpack.c.l.b16 %v10124
    %v10385 = vunpack.c.l.b16 %v10125
    %v10386 = vunpack.c.l.b16 %v10126
    %v10387 = vunpack.c.l.b16 %v10127
    %v10388 = vunpack.c.l.b16 %v10128
    %v10389 = vunpack.c.l.b16 %v10129
    %v10390 = vunpack.c.l.b16 %v10130
    %v10391 = vunpack.c.l.b16 %v10131
    %v10392 = vunpack.c.l.b16 %v10132
    %v10393 = vunpack.c.l.b16 %v10133
    %v10394 = vunpack.c.l.b16 %v10134
    %v10395 = vunpack.c.l.b16 %v10135
    %v10396 = vunpack.c.l.b16 %v10136
    %v10397 = vunpack.c.l.b16 %v10137
    %v10398 = vunpack.c.l.b16 %v10138
    %v10399 = vunpack.c.l.b16 %v10139
    %v10400 = vunpack.c.l.b16 %v10140
    %v10401 = vunpack.c.l.b16 %v10141
    %v10402 = vunpack.c.l.b16 %v10142
    %v10403 = vunpack.c.l.b16 %v10143
    %v10404 = vpack.c.b16 %v10277, %v10276
    %v10405 = vpack.c.b16 %v10279, %v10278
    %v10406 = vpack.c.b16 %v10281, %v10280
    %v10407 = vpack.c.b16 %v10283, %v10282
    %v10408 = vpack.c.b16 %v10285, %v10284
    %v10409 = vpack.c.b16 %v10287, %v10286
    %v10410 = vpack.c.b16 %v10289, %v10288
    %v10411 = vpack.c.b16 %v10291, %v10290
    %v10412 = vpack.c.b16 %v10293, %v10292
    %v10413 = vpack.c.b16 %v10295, %v10294
    %v10414 = vpack.c.b16 %v10297, %v10296
    %v10415 = vpack.c.b16 %v10299, %v10298
    %v10416 = vpack.c.b16 %v10301, %v10300
    %v10417 = vpack.c.b16 %v10303, %v10302
    %v10418 = vpack.c.b16 %v10305, %v10304
    %v10419 = vpack.c.b16 %v10307, %v10306
    %v10420 = vpack.c.b16 %v10309, %v10308
    %v10421 = vpack.c.b16 %v10311, %v10310
    %v10422 = vpack.c.b16 %v10313, %v10312
    %v10423 = vpack.c.b16 %v10315, %v10314
    %v10424 = vpack.c.b16 %v10317, %v10316
    %v10425 = vpack.c.b16 %v10319, %v10318
    %v10426 = vpack.c.b16 %v10321, %v10320
    %v10427 = vpack.c.b16 %v10323, %v10322
    %v10428 = vpack.c.b16 %v10325, %v10324
    %v10429 = vpack.c.b16 %v10327, %v10326
    %v10430 = vpack.c.b16 %v10329, %v10328
    %v10431 = vpack.c.b16 %v10331, %v10330
    %v10432 = vpack.c.b16 %v10333, %v10332
    %v10433 = vpack.c.b16 %v10335, %v10334
    %v10434 = vpack.c.b16 %v10337, %v10336
    %v10435 = vpack.c.b16 %v10339, %v10338
    %v10436 = vpack.c.b16 %v10341, %v10340
    %v10437 = vpack.c.b16 %v10343, %v10342
    %v10438 = vpack.c.b16 %v10345, %v10344
    %v10439 = vpack.c.b16 %v10347, %v10346
    %v10440 = vpack.c.b16 %v10349, %v10348
    %v10441 = vpack.c.b16 %v10351, %v10350
    %v10442 = vpack.c.b16 %v10353, %v10352
    %v10443 = vpack.c.b16 %v10355, %v10354
    %v10444 = vpack.c.b16 %v10357, %v10356
    %v10445 = vpack.c.b16 %v10359, %v10358
    %v10446 = vpack.c.b16 %v10361, %v10360
    %v10447 = vpack.c.b16 %v10363, %v10362
    %v10448 = vpack.c.b16 %v10365, %v10364
    %v10449 = vpack.c.b16 %v10367, %v10366
    %v10450 = vpack.c.b16 %v10369, %v10368
    %v10451 = vpack.c.b16 %v10371, %v10370
    %v10452 = vpack.c.b16 %v10373, %v10372
    %v10453 = vpack.c.b16 %v10375, %v10374
    %v10454 = vpack.c.b16 %v10377, %v10376
    %v10455 = vpack.c.b16 %v10379, %v10378
    %v10456 = vpack.c.b16 %v10381, %v10380
    %v10457 = vpack.c.b16 %v10383, %v10382
    %v10458 = vpack.c.b16 %v10385, %v10384
    %v10459 = vpack.c.b16 %v10387, %v10386
    %v10460 = vpack.c.b16 %v10389, %v10388
    %v10461 = vpack.c.b16 %v10391, %v10390
    %v10462 = vpack.c.b16 %v10393, %v10392
    %v10463 = vpack.c.b16 %v10395, %v10394
    %v10464 = vpack.c.b16 %v10397, %v10396
    %v10465 = vpack.c.b16 %v10399, %v10398
    %v10466 = vpack.c.b16 %v10401, %v10400
    %v10467 = vpack.c.b16 %v10403, %v10402
    %10532 = vmatpush.bf16.msra.mxu0 %v10411
    %10533 = vmatpush.bf16.msra.mxu0 %v10410
    %10534 = vmatpush.bf16.msra.mxu0 %v10409
    %10535 = vmatpush.bf16.msra.mxu0 %v10408
    %10536 = vmatpush.bf16.msra.mxu0 %v10407
    %10537 = vmatpush.bf16.msra.mxu0 %v10406
    %10538 = vmatpush.bf16.msra.mxu0 %v10405
    %10539 = vmatpush.bf16.msra.mxu0 %v10404
    %10540 = vmatmul.bf16.gmra.mxu0 %v10008
    %v10541 = vpop.f32.mrf.mxu0
    %v10542 = vadd.f32 %v10146, %v10541
    %v10543 = vpop.f32.mrf.mxu0
    %10544 = vdwg.mxu0
    %10545 = vmatpush.bf16.msra.mxu0 %v10419
    %10546 = vmatpush.bf16.msra.mxu0 %v10418
    %10547 = vmatpush.bf16.msra.mxu0 %v10417
    %10548 = vmatpush.bf16.msra.mxu0 %v10416
    %10549 = vmatpush.bf16.msra.mxu0 %v10415
    %10550 = vmatpush.bf16.msra.mxu0 %v10414
    %10551 = vmatpush.bf16.msra.mxu0 %v10413
    %10552 = vmatpush.bf16.msra.mxu0 %v10412
    %10553 = vmatmul.bf16.gmra.mxu0 %v10009
    %v10554 = vpop.f32.mrf.mxu0
    %v10555 = vadd.f32 %v10542, %v10554
    %v10556 = vpop.f32.mrf.mxu0
    %10557 = vdwg.mxu0
    %10558 = vmatpush.bf16.msra.mxu0 %v10427
    %10559 = vmatpush.bf16.msra.mxu0 %v10426
    %10560 = vmatpush.bf16.msra.mxu0 %v10425
    %10561 = vmatpush.bf16.msra.mxu0 %v10424
    %10562 = vmatpush.bf16.msra.mxu0 %v10423
    %10563 = vmatpush.bf16.msra.mxu0 %v10422
    %10564 = vmatpush.bf16.msra.mxu0 %v10421
    %10565 = vmatpush.bf16.msra.mxu0 %v10420
    %10566 = vmatmul.bf16.gmra.mxu0 %v10010
    %v10567 = vpop.f32.mrf.mxu0
    %v10568 = vadd.f32 %v10555, %v10567
    %v10569 = vpop.f32.mrf.mxu0
    %10570 = vdwg.mxu0
    %10571 = vmatpush.bf16.msra.mxu0 %v10435
    %10572 = vmatpush.bf16.msra.mxu0 %v10434
    %10573 = vmatpush.bf16.msra.mxu0 %v10433
    %10574 = vmatpush.bf16.msra.mxu0 %v10432
    %10575 = vmatpush.bf16.msra.mxu0 %v10431
    %10576 = vmatpush.bf16.msra.mxu0 %v10430
    %10577 = vmatpush.bf16.msra.mxu0 %v10429
    %10578 = vmatpush.bf16.msra.mxu0 %v10428
    %10579 = vmatmul.bf16.gmra.mxu0 %v10011
    %v10580 = vpop.f32.mrf.mxu0
    %v10581 = vadd.f32 %v10568, %v10580
    %v10582 = vpop.f32.mrf.mxu0
    %10583 = vdwg.mxu0
    %10584 = vmatpush.bf16.msra.mxu0 %v10443
    %10585 = vmatpush.bf16.msra.mxu0 %v10442
    %10586 = vmatpush.bf16.msra.mxu0 %v10441
    %10587 = vmatpush.bf16.msra.mxu0 %v10440
    %10588 = vmatpush.bf16.msra.mxu0 %v10439
    %10589 = vmatpush.bf16.msra.mxu0 %v10438
    %10590 = vmatpush.bf16.msra.mxu0 %v10437
    %10591 = vmatpush.bf16.msra.mxu0 %v10436
    %10592 = vmatmul.bf16.gmra.mxu0 %v10012
    %v10593 = vpop.f32.mrf.mxu0
    %v10594 = vadd.f32 %v10581, %v10593
    %v10595 = vpop.f32.mrf.mxu0
    %10596 = vdwg.mxu0
    %10597 = vmatpush.bf16.msra.mxu0 %v10451
    %10598 = vmatpush.bf16.msra.mxu0 %v10450
    %10599 = vmatpush.bf16.msra.mxu0 %v10449
    %10600 = vmatpush.bf16.msra.mxu0 %v10448
    %10601 = vmatpush.bf16.msra.mxu0 %v10447
    %10602 = vmatpush.bf16.msra.mxu0 %v10446
    %10603 = vmatpush.bf16.msra.mxu0 %v10445
    %10604 = vmatpush.bf16.msra.mxu0 %v10444
    %10605 = vmatmul.bf16.gmra.mxu0 %v10013
    %v10606 = vpop.f32.mrf.mxu0
    %v10607 = vadd.f32 %v10594, %v10606
    %v10608 = vpop.f32.mrf.mxu0
    %10609 = vdwg.mxu0
    %10610 = vmatpush.bf16.msra.mxu0 %v10459
    %10611 = vmatpush.bf16.msra.mxu0 %v10458
    %10612 = vmatpush.bf16.msra.mxu0 %v10457
    %10613 = vmatpush.bf16.msra.mxu0 %v10456
    %10614 = vmatpush.bf16.msra.mxu0 %v10455
    %10615 = vmatpush.bf16.msra.mxu0 %v10454
    %10616 = vmatpush.bf16.msra.mxu0 %v10453
    %10617 = vmatpush.bf16.msra.mxu0 %v10452
    %10618 = vmatmul.bf16.gmra.mxu0 %v10014
    %v10619 = vpop.f32.mrf.mxu0
    %v10620 = vadd.f32 %v10607, %v10619
    %v10621 = vpop.f32.mrf.mxu0
    %10622 = vdwg.mxu0
    %10623 = vmatpush.bf16.msra.mxu0 %v10467
    %10624 = vmatpush.bf16.msra.mxu0 %v10466
    %10625 = vmatpush.bf16.msra.mxu0 %v10465
    %10626 = vmatpush.bf16.msra.mxu0 %v10464
    %10627 = vmatpush.bf16.msra.mxu0 %v10463
    %10628 = vmatpush.bf16.msra.mxu0 %v10462
    %10629 = vmatpush.bf16.msra.mxu0 %v10461
    %10630 = vmatpush.bf16.msra.mxu0 %v10460
    %10631 = vmatmul.bf16.gmra.mxu0 %v10015
    %v10632 = vpop.f32.mrf.mxu0
    %v10633 = vadd.f32 %v10620, %v10632
    %v10634 = vpop.f32.mrf.mxu0
    %10635 = vdwg.mxu0
    %10636 = vst [vmem:[#allocation13] sm:$0xf] %v10633
    // Predicated region
    $region54: #{dqn_forward.3} parent=1 // pred_check
      _
    $region55: #{dqn_forward.3} parent=1 // pred_check_branch
      %10638 = sbr.rel (0) target = $region57
    $region56: #{dqn_forward.3} parent=1 // pred_region
      %10640 = vsyncadd [#allocation4], 0
      %s10642 = sshll.u32 [#allocation13], 4
      %s10643 = int_to_ptr.vmem [resolvable:$true] %s10642
      %s10644 = sshll.u32 %s7, 4
      %s10645 = int_to_ptr.hbm [resolvable:$true] %s10644
      %10647 = dma.vmem_to_hbm [thread:$0]  %s10643, 64, %s10645, [#allocation4]
    $region57: #{dqn_forward.3} parent=1 // pred_fallthru
      _
    // Predicated region
    $region58: #{dqn_forward.3} parent=1 // pred_check
      _
    $region59: #{dqn_forward.3} parent=1 // pred_check_branch
      %10649 = sbr.rel (0) target = $region61
    $region60: #{dqn_forward.3} parent=1 // pred_region
      %10651 = dma.done [#allocation4], 64
    $region61: #{dqn_forward.3} parent=1 // pred_fallthru
      _
    %10652 = vsyncpa [#allocation3], 1
    %10653 = vsyncpa [#allocation6], 1
    %10654 = vsyncpa [#allocation9], 1
    %10655 = vsyncpa [#allocation12], 1
    %10656 = vsyncpa [#allocation4], 1

</llo_original>
